<compile_context>
chip_gen: v6e
topology: v6e:2x2x1
jax: 0.10.0
libtpu: 0.0.40
codegen_flags: <defaults>
</compile_context>

<pallas_src>
import functools
import math

import jax
import jax.numpy as jnp
from jax.experimental import pallas as pl
from jax.experimental.pallas import tpu as pltpu

LANE = 128       # lane width
SUB = 16         # sublane padding unit (bf16 packs 16 rows per vreg)
TM_LANES = 512   # lane tile for the conv matmul (mem-bound sweet spot)


def _round_up(x, m):
    return ((x + m - 1) // m) * m


# ---------------------------------------------------------------------------
# im2col in the transposed (K, M) layout (channels/taps on sublanes, spatial
# positions on lanes).  Plain JAX glue around the fused Pallas conv kernel.
# ---------------------------------------------------------------------------
def _im2col_cm(x_cm, kh, kw, stride, padding):
    """x_cm: (C, N, H, W) -> patches (K = kh*kw*C, M = N*Hout*Wout), Hout, Wout."""
    C, N, H, W = x_cm.shape
    Hout = (H + 2 * padding - kh) // stride + 1
    Wout = (W + 2 * padding - kw) // stride + 1
    if padding:
        x_cm = jnp.pad(x_cm, ((0, 0), (0, 0),
                              (padding, padding), (padding, padding)))
    rows = []
    for i in range(kh):
        for j in range(kw):
            win = x_cm[:, :, i:i + (Hout - 1) * stride + 1:stride,
                             j:j + (Wout - 1) * stride + 1:stride]
            rows.append(win.reshape(C, N * Hout * Wout))
    return jnp.concatenate(rows, axis=0), Hout, Wout


# ---------------------------------------------------------------------------
# Fused conv + BN(batch stats) + optional residual + ReLU Pallas kernel.
# Grid: one "arbitrary" axis streaming M (lane) tiles; conv output tiles and
# per-channel sum / sum-of-squares live in VMEM scratch; the affine epilogue
# runs once at the last grid step on the resident accumulator.
# ---------------------------------------------------------------------------
def _conv_bn_act_kernel(*refs, num_tiles, tm, m_real, relu, has_residual, eps):
    if has_residual:
        p_ref, w_ref, g_ref, b_ref, r_ref, o_ref, y_ref, sum_ref, ssq_ref = refs
    else:
        p_ref, w_ref, g_ref, b_ref, o_ref, y_ref, sum_ref, ssq_ref = refs
        r_ref = None

    t = pl.program_id(0)

    @pl.when(t == 0)
    def _init():
        sum_ref[...] = jnp.zeros_like(sum_ref)
        ssq_ref[...] = jnp.zeros_like(ssq_ref)

    # Transposed, lane-dense matmul: (Cp, Kp) @ (Kp, tm) -> (Cp, tm), f32 acc.
    y = jnp.dot(w_ref[...], p_ref[...], preferred_element_type=jnp.float32)
    y_ref[t] = y
    # Zero-padded M columns contribute 0 to both sums; divide by the real M.
    sum_ref[...] += jnp.sum(y, axis=1, keepdims=True)
    ssq_ref[...] += jnp.sum(y * y, axis=1, keepdims=True)

    @pl.when(t == num_tiles - 1)
    def _finalize():
        inv_m = 1.0 / m_real
        mean = sum_ref[...] * inv_m
        var = jnp.maximum(ssq_ref[...] * inv_m - mean * mean, 0.0)
        scale = g_ref[...] * jax.lax.rsqrt(var + eps)
        bias = b_ref[...] - mean * scale
        for tt in range(num_tiles):                  # static unroll, aligned slices
            out = y_ref[tt] * scale + bias
            if has_residual:
                out = out + r_ref[:, tt * tm:(tt + 1) * tm].astype(jnp.float32)
            if relu:
                out = jnp.maximum(out, 0.0)
            o_ref[:, tt * tm:(tt + 1) * tm] = out.astype(o_ref.dtype)


def conv_bn_act(x_cm, w, gamma, beta, *, stride, padding, relu,
                residual=None, eps=1e-5):
    """Fused conv2d(no bias) -> BatchNorm2d(training batch stats) -> (+res) -> (ReLU).

    x_cm: (Cin, N, H, W) bf16 activation.  w: PyTorch weight (Cout, Cin, kh, kw).
    Returns (Cout, N, Hout, Wout) bf16.
    """
    Cout, Cin, kh, kw = w.shape
    N = x_cm.shape[1]
    patches, Hout, Wout = _im2col_cm(x_cm.astype(jnp.bfloat16),
                                     kh, kw, stride, padding)
    K, M = patches.shape

    Kp = _round_up(K, SUB)                  # pad K to 16 sublanes, not 128
    Cp = _round_up(Cout, SUB)               # pad channels to 16 sublanes
    tm = min(TM_LANES, _round_up(M, LANE))  # lane tile
    Mp = _round_up(M, tm)
    nm = Mp // tm

    p_pad = jnp.pad(patches, ((0, Kp - K), (0, Mp - M)))
    w2d = jnp.transpose(w, (0, 2, 3, 1)).reshape(Cout, K)     # matches patch rows
    w_pad = jnp.pad(w2d, ((0, Cp - Cout), (0, Kp - K))).astype(jnp.bfloat16)
    g_pad = jnp.pad(gamma.astype(jnp.float32), (0, Cp - Cout)).reshape(Cp, 1)
    b_pad = jnp.pad(beta.astype(jnp.float32), (0, Cp - Cout)).reshape(Cp, 1)

    args = [p_pad, w_pad, g_pad, b_pad]
    in_specs = [
        pl.BlockSpec((Kp, tm), lambda t: (0, t)),   # streamed M tiles (bf16)
        pl.BlockSpec((Cp, Kp), lambda t: (0, 0)),   # resident weights (bf16)
        pl.BlockSpec((Cp, 1), lambda t: (0, 0)),    # gamma
        pl.BlockSpec((Cp, 1), lambda t: (0, 0)),    # beta
    ]
    has_residual = residual is not None
    if has_residual:
        r2d = residual.astype(jnp.bfloat16).reshape(Cout, M)
        r_pad = jnp.pad(r2d, ((0, Cp - Cout), (0, Mp - M)))
        args.append(r_pad)
        in_specs.append(pl.BlockSpec((Cp, Mp), lambda t: (0, 0)))  # resident

    kernel = functools.partial(
        _conv_bn_act_kernel, num_tiles=nm, tm=tm, m_real=M,
        relu=relu, has_residual=has_residual, eps=eps)

    out = pl.pallas_call(
        kernel,
        out_shape=jax.ShapeDtypeStruct((Cp, Mp), jnp.bfloat16),
        grid=(nm,),
        in_specs=in_specs,
        out_specs=pl.BlockSpec((Cp, Mp), lambda t: (0, 0)),   # resident output
        scratch_shapes=[pltpu.VMEM((nm, Cp, tm), jnp.float32),  # conv output acc
                        pltpu.VMEM((Cp, 1), jnp.float32),       # sum(y)
                        pltpu.VMEM((Cp, 1), jnp.float32)],      # sum(y*y)
        compiler_params=pltpu.CompilerParams(
            dimension_semantics=("arbitrary",)),
    )(*args)
    return out[:Cout, :M].reshape(Cout, N, Hout, Wout)


# ---------------------------------------------------------------------------
# MaxPool2d(kernel=3, stride=2, padding=1) — Pallas stride-1 3x3 max over the
# -inf padded map (static contiguous window slices, no 9x patch stack), then a
# cheap XLA stride-2 subsample.
# ---------------------------------------------------------------------------
def _maxpool3x3_kernel(x_ref, o_ref):
    Ho, Wo = o_ref.shape[1], o_ref.shape[2]
    m = x_ref[:, 0:Ho, 0:Wo].astype(jnp.float32)
    for i in range(3):
        for j in range(3):
            if i == 0 and j == 0:
                continue
            m = jnp.maximum(m, x_ref[:, i:i + Ho, j:j + Wo].astype(jnp.float32))
    o_ref[...] = m.astype(o_ref.dtype)


def maxpool_3x3_s2_p1(x_cm):
    """Input/output layout (C, N, H, W)."""
    C, N, H, W = x_cm.shape
    Hout = (H + 2 - 3) // 2 + 1
    Wout = (W + 2 - 3) // 2 + 1
    xp = jnp.pad(x_cm, ((0, 0), (0, 0), (1, 1), (1, 1)),
                 constant_values=-jnp.inf).reshape(C * N, H + 2, W + 2)
    dense = pl.pallas_call(
        _maxpool3x3_kernel,
        out_shape=jax.ShapeDtypeStruct((C * N, H, W), x_cm.dtype),
    )(xp)
    return dense[:, ::2, ::2].reshape(C, N, Hout, Wout)


# ---------------------------------------------------------------------------
# BasicBlock (expansion = 1)
# ---------------------------------------------------------------------------
def basic_block(x, p):
    s = p["stride"]
    out = conv_bn_act(x, p["w1"], p["g1"], p["b1"],
                      stride=s, padding=1, relu=True)
    if "w_ds" in p:
        identity = conv_bn_act(x, p["w_ds"], p["g_ds"], p["b_ds"],
                               stride=s, padding=0, relu=False)
    else:
        identity = x
    out = conv_bn_act(out, p["w2"], p["g2"], p["b2"],
                      stride=1, padding=1, relu=True, residual=identity)
    return out


# ---------------------------------------------------------------------------
# Parameter construction (deterministic, kaiming_normal fan_out like PyTorch)
# ---------------------------------------------------------------------------
def init_params(key, layers, num_feats, in_ch):
    keys = iter(jax.random.split(key, 128))

    def conv_w(cout, cin, kh, kw):
        fan_out = cout * kh * kw
        std = math.sqrt(2.0 / fan_out)
        return (jax.random.normal(next(keys), (cout, cin, kh, kw),
                                  dtype=jnp.float32) * std)

    params = {"stem": {"w": conv_w(num_feats[0], in_ch, 7, 7),
                       "g": jnp.ones((num_feats[0],), jnp.float32),
                       "b": jnp.zeros((num_feats[0],), jnp.float32)}}
    inplanes = num_feats[0]
    stages = []
    for li, (planes, nblocks) in enumerate(zip(num_feats, layers)):
        stage_stride = 1 if li == 0 else 2
        blocks = []
        for bi in range(nblocks):
            s = stage_stride if bi == 0 else 1
            blk = {"stride": s,
                   "w1": conv_w(planes, inplanes, 3, 3),
                   "g1": jnp.ones((planes,), jnp.float32),
                   "b1": jnp.zeros((planes,), jnp.float32),
                   "w2": conv_w(planes, planes, 3, 3),
                   "g2": jnp.ones((planes,), jnp.float32),
                   "b2": jnp.zeros((planes,), jnp.float32)}
            if s != 1 or inplanes != planes:          # BasicBlock.expansion == 1
                blk["w_ds"] = conv_w(planes, inplanes, 1, 1)
                blk["g_ds"] = jnp.ones((planes,), jnp.float32)
                blk["b_ds"] = jnp.zeros((planes,), jnp.float32)
            blocks.append(blk)
            inplanes = planes
        stages.append(blocks)
    params["stages"] = stages
    return params


# ---------------------------------------------------------------------------
# Full forward (matches ResNet.forward: returns dict of out1..out4, NCHW)
# ---------------------------------------------------------------------------
def resnet_forward(x_nchw, params):
    # NCHW -> channels-first (C, N, H, W); bf16 activations between layers.
    x = jnp.transpose(x_nchw, (1, 0, 2, 3)).astype(jnp.bfloat16)
    stem = params["stem"]
    x = conv_bn_act(x, stem["w"], stem["g"], stem["b"],
                    stride=2, padding=3, relu=True)        # conv1 + bn1 + relu
    x = maxpool_3x3_s2_p1(x)                               # maxpool

    feats = []
    for stage in params["stages"]:
        for blk in stage:
            x = basic_block(x, blk)
        feats.append(x)

    def to_nchw(a):
        return jnp.transpose(a, (1, 0, 2, 3)).astype(jnp.float32)

    return {"out1": to_nchw(feats[0]), "out2": to_nchw(feats[1]),
            "out3": to_nchw(feats[2]), "out4": to_nchw(feats[3])}


if __name__ == "__main__":
    key = jax.random.PRNGKey(0)
    k_param, k_input = jax.random.split(key)

    layers = [1, 1, 1, 1]
    num_feats = [8, 16, 32, 64]
    params = init_params(k_param, layers, num_feats, in_ch=3)

    x = jax.random.normal(k_input, (2, 3, 64, 64), dtype=jnp.float32)   # NCHW

    fwd = jax.jit(functools.partial(resnet_forward, params=params))
    out = jax.block_until_ready(fwd(x))

    assert out["out1"].shape == (2, 8, 16, 16)
    assert out["out2"].shape == (2, 16, 8, 8)
    assert out["out3"].shape == (2, 32, 4, 4)
    assert out["out4"].shape == (2, 64, 2, 2)
    assert all(bool(jnp.all(jnp.isfinite(v))) for v in out.values())

    print("KERNEL_OK")
</pallas_src>

<mosaic_0001>
module attributes {stable_mosaic.version = 11 : i64} {
  func.func @_conv_bn_act_kernel(%arg0: i32, %arg1: memref<160x512xbf16, #tpu.memory_space<vmem>>, %arg2: memref<16x160xbf16, #tpu.memory_space<vmem>>, %arg3: memref<16x1xf32, #tpu.memory_space<vmem>>, %arg4: memref<16x1xf32, #tpu.memory_space<vmem>>, %arg5: memref<16x2048xbf16, #tpu.memory_space<vmem>>, %arg6: memref<4x16x512xf32, #tpu.memory_space<vmem>>, %arg7: memref<16x1xf32, #tpu.memory_space<vmem>>, %arg8: memref<16x1xf32, #tpu.memory_space<vmem>>) attributes {dimension_semantics = [#tpu.dimension_semantics<arbitrary>], iteration_bounds = array<i64: 4>, scalar_prefetch = 0 : i64, scratch_operands = 3 : i64, tpu.core_type = #tpu.core_type<tc>, window_params = [{transform_indices = @transform_0, window_bounds = array<i64: 160, 512>}, {pipeline_mode = #tpu.pipeline_mode<synchronous>, transform_indices = @transform_1, window_bounds = array<i64: 16, 160>}, {pipeline_mode = #tpu.pipeline_mode<synchronous>, transform_indices = @transform_2, window_bounds = array<i64: 16, 1>}, {pipeline_mode = #tpu.pipeline_mode<synchronous>, transform_indices = @transform_3, window_bounds = array<i64: 16, 1>}, {pipeline_mode = #tpu.pipeline_mode<synchronous>, transform_indices = @transform_4, window_bounds = array<i64: 16, 2048>}]} {
    %c0_i32 = arith.constant 0 : i32
    %0 = arith.cmpi eq, %arg0, %c0_i32 : i32
    %1 = arith.extui %0 : i1 to i32
    %c0_i32_0 = arith.constant 0 : i32
    %2 = arith.cmpi ne, %1, %c0_i32_0 : i32
    scf.if %2 {
      %cst_17 = arith.constant 0.000000e+00 : f32
      %24 = vector.broadcast %cst_17 : f32 to vector<16x1xf32>
      %c0_18 = arith.constant 0 : index
      %c0_19 = arith.constant 0 : index
      %25 = vector.load %arg7[%c0_18, %c0_19] : memref<16x1xf32, #tpu.memory_space<vmem>>, vector<16x1xf32>
      tpu.vector_store %arg7[%c0_18, %c0_19], %24 {strides = array<i32>} : memref<16x1xf32, #tpu.memory_space<vmem>>, vector<16x1xf32>,
      %cst_20 = arith.constant 0.000000e+00 : f32
      %26 = vector.broadcast %cst_20 : f32 to vector<16x1xf32>
      %c0_21 = arith.constant 0 : index
      %c0_22 = arith.constant 0 : index
      %27 = vector.load %arg8[%c0_21, %c0_22] : memref<16x1xf32, #tpu.memory_space<vmem>>, vector<16x1xf32>
      tpu.vector_store %arg8[%c0_21, %c0_22], %26 {strides = array<i32>} : memref<16x1xf32, #tpu.memory_space<vmem>>, vector<16x1xf32>,
    } else {
    }
    %c0 = arith.constant 0 : index
    %c0_1 = arith.constant 0 : index
    %3 = vector.load %arg2[%c0, %c0_1] : memref<16x160xbf16, #tpu.memory_space<vmem>>, vector<16x160xbf16>
    %c0_2 = arith.constant 0 : index
    %c0_3 = arith.constant 0 : index
    %4 = vector.load %arg1[%c0_2, %c0_3] : memref<160x512xbf16, #tpu.memory_space<vmem>>, vector<160x512xbf16>
    %cst = arith.constant dense<0.000000e+00> : vector<16x512xf32>
    %5 = tpu.matmul %3, %4, %cst {dimension_numbers = #tpu.dot_dimension_numbers<[1], [0], [0], [1], [0, 0, 1, 1], [], []>} : vector<16x160xbf16>, vector<160x512xbf16>, vector<16x512xf32> -> vector<16x512xf32>
    %6 = arith.index_cast %arg0 : i32 to index
    %c0_4 = arith.constant 0 : index
    %c0_5 = arith.constant 0 : index
    %7 = vector.load %arg6[%6, %c0_4, %c0_5] : memref<4x16x512xf32, #tpu.memory_space<vmem>>, vector<1x16x512xf32>
    %8 = vector.shape_cast %7 : vector<1x16x512xf32> to vector<16x512xf32>
    %9 = vector.shape_cast %5 : vector<16x512xf32> to vector<1x16x512xf32>
    tpu.vector_store %arg6[%6, %c0_4, %c0_5], %9 {strides = array<i32>} : memref<4x16x512xf32, #tpu.memory_space<vmem>>, vector<1x16x512xf32>,
    %c0_6 = arith.constant 0 : index
    %c0_7 = arith.constant 0 : index
    %10 = vector.load %arg7[%c0_6, %c0_7] : memref<16x1xf32, #tpu.memory_space<vmem>>, vector<16x1xf32>
    %cst_8 = arith.constant dense<0.000000e+00> : vector<16xf32>
    %11 = vector.multi_reduction <add>, %5, %cst_8 [1] : vector<16x512xf32> to vector<16xf32>
    %12 = vector.shape_cast %11 : vector<16xf32> to vector<16x1xf32>
    %13 = arith.addf %10, %12 : vector<16x1xf32>
    %c0_9 = arith.constant 0 : index
    %c0_10 = arith.constant 0 : index
    %14 = vector.load %arg7[%c0_9, %c0_10] : memref<16x1xf32, #tpu.memory_space<vmem>>, vector<16x1xf32>
    tpu.vector_store %arg7[%c0_9, %c0_10], %13 {strides = array<i32>} : memref<16x1xf32, #tpu.memory_space<vmem>>, vector<16x1xf32>,
    %c0_11 = arith.constant 0 : index
    %c0_12 = arith.constant 0 : index
    %15 = vector.load %arg8[%c0_11, %c0_12] : memref<16x1xf32, #tpu.memory_space<vmem>>, vector<16x1xf32>
    %16 = arith.mulf %5, %5 : vector<16x512xf32>
    %cst_13 = arith.constant dense<0.000000e+00> : vector<16xf32>
    %17 = vector.multi_reduction <add>, %16, %cst_13 [1] : vector<16x512xf32> to vector<16xf32>
    %18 = vector.shape_cast %17 : vector<16xf32> to vector<16x1xf32>
    %19 = arith.addf %15, %18 : vector<16x1xf32>
    %c0_14 = arith.constant 0 : index
    %c0_15 = arith.constant 0 : index
    %20 = vector.load %arg8[%c0_14, %c0_15] : memref<16x1xf32, #tpu.memory_space<vmem>>, vector<16x1xf32>
    tpu.vector_store %arg8[%c0_14, %c0_15], %19 {strides = array<i32>} : memref<16x1xf32, #tpu.memory_space<vmem>>, vector<16x1xf32>,
    %c3_i32 = arith.constant 3 : i32
    %21 = arith.cmpi eq, %arg0, %c3_i32 : i32
    %22 = arith.extui %21 : i1 to i32
    %c0_i32_16 = arith.constant 0 : i32
    %23 = arith.cmpi ne, %22, %c0_i32_16 : i32
    scf.if %23 {
      %c0_17 = arith.constant 0 : index
      %c0_18 = arith.constant 0 : index
      %24 = vector.load %arg7[%c0_17, %c0_18] : memref<16x1xf32, #tpu.memory_space<vmem>>, vector<16x1xf32>
      %cst_19 = arith.constant 4.8828125E-4 : f32
      %25 = vector.broadcast %cst_19 : f32 to vector<16x1xf32>
      %26 = arith.mulf %24, %25 : vector<16x1xf32>
      %c0_20 = arith.constant 0 : index
      %c0_21 = arith.constant 0 : index
      %27 = vector.load %arg8[%c0_20, %c0_21] : memref<16x1xf32, #tpu.memory_space<vmem>>, vector<16x1xf32>
      %cst_22 = arith.constant 4.8828125E-4 : f32
      %28 = vector.broadcast %cst_22 : f32 to vector<16x1xf32>
      %29 = arith.mulf %27, %28 : vector<16x1xf32>
      %30 = arith.mulf %26, %26 : vector<16x1xf32>
      %31 = arith.subf %29, %30 : vector<16x1xf32>
      %cst_23 = arith.constant 0.000000e+00 : f32
      %32 = vector.broadcast %cst_23 : f32 to vector<16x1xf32>
      %33 = arith.maximumf %31, %32 : vector<16x1xf32>
      %c0_24 = arith.constant 0 : index
      %c0_25 = arith.constant 0 : index
      %34 = vector.load %arg3[%c0_24, %c0_25] : memref<16x1xf32, #tpu.memory_space<vmem>>, vector<16x1xf32>
      %cst_26 = arith.constant 9.99999974E-6 : f32
      %35 = vector.broadcast %cst_26 : f32 to vector<16x1xf32>
      %36 = arith.addf %33, %35 : vector<16x1xf32>
      %37 = math.rsqrt %36 : vector<16x1xf32>
      %38 = arith.mulf %34, %37 : vector<16x1xf32>
      %c0_27 = arith.constant 0 : index
      %c0_28 = arith.constant 0 : index
      %39 = vector.load %arg4[%c0_27, %c0_28] : memref<16x1xf32, #tpu.memory_space<vmem>>, vector<16x1xf32>
      %40 = arith.mulf %26, %38 : vector<16x1xf32>
      %41 = arith.subf %39, %40 : vector<16x1xf32>
      %c0_29 = arith.constant 0 : index
      %c0_30 = arith.constant 0 : index
      %c0_31 = arith.constant 0 : index
      %42 = vector.load %arg6[%c0_29, %c0_30, %c0_31] : memref<4x16x512xf32, #tpu.memory_space<vmem>>, vector<1x16x512xf32>
      %43 = vector.shape_cast %42 : vector<1x16x512xf32> to vector<16x512xf32>
      %44 = vector.broadcast %38 : vector<16x1xf32> to vector<16x512xf32>
      %45 = arith.mulf %43, %44 : vector<16x512xf32>
      %46 = vector.broadcast %41 : vector<16x1xf32> to vector<16x512xf32>
      %47 = arith.addf %45, %46 : vector<16x512xf32>
      %cst_32 = arith.constant 0.000000e+00 : f32
      %48 = vector.broadcast %cst_32 : f32 to vector<16x512xf32>
      %49 = arith.maximumf %47, %48 : vector<16x512xf32>
      %50 = arith.truncf %49 : vector<16x512xf32> to vector<16x512xbf16>
      %c0_33 = arith.constant 0 : index
      %c0_34 = arith.constant 0 : index
      %51 = vector.load %arg5[%c0_33, %c0_34] : memref<16x2048xbf16, #tpu.memory_space<vmem>>, vector<16x512xbf16>
      tpu.vector_store %arg5[%c0_33, %c0_34], %50 {strides = array<i32>} : memref<16x2048xbf16, #tpu.memory_space<vmem>>, vector<16x512xbf16>,
      %c1 = arith.constant 1 : index
      %c0_35 = arith.constant 0 : index
      %c0_36 = arith.constant 0 : index
      %52 = vector.load %arg6[%c1, %c0_35, %c0_36] : memref<4x16x512xf32, #tpu.memory_space<vmem>>, vector<1x16x512xf32>
      %53 = vector.shape_cast %52 : vector<1x16x512xf32> to vector<16x512xf32>
      %54 = vector.broadcast %38 : vector<16x1xf32> to vector<16x512xf32>
      %55 = arith.mulf %53, %54 : vector<16x512xf32>
      %56 = vector.broadcast %41 : vector<16x1xf32> to vector<16x512xf32>
      %57 = arith.addf %55, %56 : vector<16x512xf32>
      %cst_37 = arith.constant 0.000000e+00 : f32
      %58 = vector.broadcast %cst_37 : f32 to vector<16x512xf32>
      %59 = arith.maximumf %57, %58 : vector<16x512xf32>
      %60 = arith.truncf %59 : vector<16x512xf32> to vector<16x512xbf16>
      %c0_38 = arith.constant 0 : index
      %c512 = arith.constant 512 : index
      %61 = vector.load %arg5[%c0_38, %c512] : memref<16x2048xbf16, #tpu.memory_space<vmem>>, vector<16x512xbf16>
      tpu.vector_store %arg5[%c0_38, %c512], %60 {strides = array<i32>} : memref<16x2048xbf16, #tpu.memory_space<vmem>>, vector<16x512xbf16>,
      %c2 = arith.constant 2 : index
      %c0_39 = arith.constant 0 : index
      %c0_40 = arith.constant 0 : index
      %62 = vector.load %arg6[%c2, %c0_39, %c0_40] : memref<4x16x512xf32, #tpu.memory_space<vmem>>, vector<1x16x512xf32>
      %63 = vector.shape_cast %62 : vector<1x16x512xf32> to vector<16x512xf32>
      %64 = vector.broadcast %38 : vector<16x1xf32> to vector<16x512xf32>
      %65 = arith.mulf %63, %64 : vector<16x512xf32>
      %66 = vector.broadcast %41 : vector<16x1xf32> to vector<16x512xf32>
      %67 = arith.addf %65, %66 : vector<16x512xf32>
      %cst_41 = arith.constant 0.000000e+00 : f32
      %68 = vector.broadcast %cst_41 : f32 to vector<16x512xf32>
      %69 = arith.maximumf %67, %68 : vector<16x512xf32>
      %70 = arith.truncf %69 : vector<16x512xf32> to vector<16x512xbf16>
      %c0_42 = arith.constant 0 : index
      %c1024 = arith.constant 1024 : index
      %71 = vector.load %arg5[%c0_42, %c1024] : memref<16x2048xbf16, #tpu.memory_space<vmem>>, vector<16x512xbf16>
      tpu.vector_store %arg5[%c0_42, %c1024], %70 {strides = array<i32>} : memref<16x2048xbf16, #tpu.memory_space<vmem>>, vector<16x512xbf16>,
      %c3 = arith.constant 3 : index
      %c0_43 = arith.constant 0 : index
      %c0_44 = arith.constant 0 : index
      %72 = vector.load %arg6[%c3, %c0_43, %c0_44] : memref<4x16x512xf32, #tpu.memory_space<vmem>>, vector<1x16x512xf32>
      %73 = vector.shape_cast %72 : vector<1x16x512xf32> to vector<16x512xf32>
      %74 = vector.broadcast %38 : vector<16x1xf32> to vector<16x512xf32>
      %75 = arith.mulf %73, %74 : vector<16x512xf32>
      %76 = vector.broadcast %41 : vector<16x1xf32> to vector<16x512xf32>
      %77 = arith.addf %75, %76 : vector<16x512xf32>
      %cst_45 = arith.constant 0.000000e+00 : f32
      %78 = vector.broadcast %cst_45 : f32 to vector<16x512xf32>
      %79 = arith.maximumf %77, %78 : vector<16x512xf32>
      %80 = arith.truncf %79 : vector<16x512xf32> to vector<16x512xbf16>
      %c0_46 = arith.constant 0 : index
      %c1536 = arith.constant 1536 : index
      %81 = vector.load %arg5[%c0_46, %c1536] : memref<16x2048xbf16, #tpu.memory_space<vmem>>, vector<16x512xbf16>
      tpu.vector_store %arg5[%c0_46, %c1536], %80 {strides = array<i32>} : memref<16x2048xbf16, #tpu.memory_space<vmem>>, vector<16x512xbf16>,
    } else {
    }
    return
  }
  func.func @transform_0(%arg0: i32) -> (i32, i32) {
    %c0_i32 = arith.constant 0 : i32
    %c0_i32_0 = arith.constant 0 : i32
    return %c0_i32, %arg0 : i32, i32
  }
  func.func @transform_1(%arg0: i32) -> (i32, i32) {
    %c0_i32 = arith.constant 0 : i32
    %c0_i32_0 = arith.constant 0 : i32
    %c0_i32_1 = arith.constant 0 : i32
    return %c0_i32, %c0_i32_0 : i32, i32
  }
  func.func @transform_2(%arg0: i32) -> (i32, i32) {
    %c0_i32 = arith.constant 0 : i32
    %c0_i32_0 = arith.constant 0 : i32
    %c0_i32_1 = arith.constant 0 : i32
    return %c0_i32, %c0_i32_0 : i32, i32
  }
  func.func @transform_3(%arg0: i32) -> (i32, i32) {
    %c0_i32 = arith.constant 0 : i32
    %c0_i32_0 = arith.constant 0 : i32
    %c0_i32_1 = arith.constant 0 : i32
    return %c0_i32, %c0_i32_0 : i32, i32
  }
  func.func @transform_4(%arg0: i32) -> (i32, i32) {
    %c0_i32 = arith.constant 0 : i32
    %c0_i32_0 = arith.constant 0 : i32
    %c0_i32_1 = arith.constant 0 : i32
    return %c0_i32, %c0_i32_0 : i32, i32
  }
}

module attributes {stable_mosaic.version = 11 : i64} {
  func.func @_maxpool3x3_kernel(%arg0: memref<16x34x34xbf16, #tpu.memory_space<vmem>>, %arg1: memref<16x32x32xbf16, #tpu.memory_space<vmem>>) attributes {dimension_semantics = [], scalar_prefetch = 0 : i64, scratch_operands = 0 : i64, tpu.core_type = #tpu.core_type<tc>} {
    %c0 = arith.constant 0 : index
    %c0_0 = arith.constant 0 : index
    %c0_1 = arith.constant 0 : index
    %0 = vector.load %arg0[%c0, %c0_0, %c0_1] : memref<16x34x34xbf16, #tpu.memory_space<vmem>>, vector<16x32x32xbf16>
    %1 = arith.extf %0 : vector<16x32x32xbf16> to vector<16x32x32xf32>
    %c0_2 = arith.constant 0 : index
    %c0_3 = arith.constant 0 : index
    %c1 = arith.constant 1 : index
    %2 = vector.load %arg0[%c0_2, %c0_3, %c1] : memref<16x34x34xbf16, #tpu.memory_space<vmem>>, vector<16x32x32xbf16>
    %3 = arith.extf %2 : vector<16x32x32xbf16> to vector<16x32x32xf32>
    %4 = arith.maximumf %1, %3 : vector<16x32x32xf32>
    %c0_4 = arith.constant 0 : index
    %c0_5 = arith.constant 0 : index
    %c2 = arith.constant 2 : index
    %5 = vector.load %arg0[%c0_4, %c0_5, %c2] : memref<16x34x34xbf16, #tpu.memory_space<vmem>>, vector<16x32x32xbf16>
    %6 = arith.extf %5 : vector<16x32x32xbf16> to vector<16x32x32xf32>
    %7 = arith.maximumf %4, %6 : vector<16x32x32xf32>
    %c0_6 = arith.constant 0 : index
    %c1_7 = arith.constant 1 : index
    %c0_8 = arith.constant 0 : index
    %8 = vector.load %arg0[%c0_6, %c1_7, %c0_8] : memref<16x34x34xbf16, #tpu.memory_space<vmem>>, vector<16x32x32xbf16>
    %9 = arith.extf %8 : vector<16x32x32xbf16> to vector<16x32x32xf32>
    %10 = arith.maximumf %7, %9 : vector<16x32x32xf32>
    %c0_9 = arith.constant 0 : index
    %c1_10 = arith.constant 1 : index
    %c1_11 = arith.constant 1 : index
    %11 = vector.load %arg0[%c0_9, %c1_10, %c1_11] : memref<16x34x34xbf16, #tpu.memory_space<vmem>>, vector<16x32x32xbf16>
    %12 = arith.extf %11 : vector<16x32x32xbf16> to vector<16x32x32xf32>
    %13 = arith.maximumf %10, %12 : vector<16x32x32xf32>
    %c0_12 = arith.constant 0 : index
    %c1_13 = arith.constant 1 : index
    %c2_14 = arith.constant 2 : index
    %14 = vector.load %arg0[%c0_12, %c1_13, %c2_14] : memref<16x34x34xbf16, #tpu.memory_space<vmem>>, vector<16x32x32xbf16>
    %15 = arith.extf %14 : vector<16x32x32xbf16> to vector<16x32x32xf32>
    %16 = arith.maximumf %13, %15 : vector<16x32x32xf32>
    %c0_15 = arith.constant 0 : index
    %c2_16 = arith.constant 2 : index
    %c0_17 = arith.constant 0 : index
    %17 = vector.load %arg0[%c0_15, %c2_16, %c0_17] : memref<16x34x34xbf16, #tpu.memory_space<vmem>>, vector<16x32x32xbf16>
    %18 = arith.extf %17 : vector<16x32x32xbf16> to vector<16x32x32xf32>
    %19 = arith.maximumf %16, %18 : vector<16x32x32xf32>
    %c0_18 = arith.constant 0 : index
    %c2_19 = arith.constant 2 : index
    %c1_20 = arith.constant 1 : index
    %20 = vector.load %arg0[%c0_18, %c2_19, %c1_20] : memref<16x34x34xbf16, #tpu.memory_space<vmem>>, vector<16x32x32xbf16>
    %21 = arith.extf %20 : vector<16x32x32xbf16> to vector<16x32x32xf32>
    %22 = arith.maximumf %19, %21 : vector<16x32x32xf32>
    %c0_21 = arith.constant 0 : index
    %c2_22 = arith.constant 2 : index
    %c2_23 = arith.constant 2 : index
    %23 = vector.load %arg0[%c0_21, %c2_22, %c2_23] : memref<16x34x34xbf16, #tpu.memory_space<vmem>>, vector<16x32x32xbf16>
    %24 = arith.extf %23 : vector<16x32x32xbf16> to vector<16x32x32xf32>
    %25 = arith.maximumf %22, %24 : vector<16x32x32xf32>
    %26 = arith.truncf %25 : vector<16x32x32xf32> to vector<16x32x32xbf16>
    %c0_24 = arith.constant 0 : index
    %c0_25 = arith.constant 0 : index
    %c0_26 = arith.constant 0 : index
    %27 = vector.load %arg1[%c0_24, %c0_25, %c0_26] : memref<16x32x32xbf16, #tpu.memory_space<vmem>>, vector<16x32x32xbf16>
    tpu.vector_store %arg1[%c0_24, %c0_25, %c0_26], %26 {strides = array<i32>} : memref<16x32x32xbf16, #tpu.memory_space<vmem>>, vector<16x32x32xbf16>,
    return
  }
}

module attributes {stable_mosaic.version = 11 : i64} {
  func.func @_conv_bn_act_kernel(%arg0: i32, %arg1: memref<80x512xbf16, #tpu.memory_space<vmem>>, %arg2: memref<16x80xbf16, #tpu.memory_space<vmem>>, %arg3: memref<16x1xf32, #tpu.memory_space<vmem>>, %arg4: memref<16x1xf32, #tpu.memory_space<vmem>>, %arg5: memref<16x512xbf16, #tpu.memory_space<vmem>>, %arg6: memref<1x16x512xf32, #tpu.memory_space<vmem>>, %arg7: memref<16x1xf32, #tpu.memory_space<vmem>>, %arg8: memref<16x1xf32, #tpu.memory_space<vmem>>) attributes {dimension_semantics = [#tpu.dimension_semantics<arbitrary>], iteration_bounds = array<i64: 1>, scalar_prefetch = 0 : i64, scratch_operands = 3 : i64, tpu.core_type = #tpu.core_type<tc>, window_params = [{transform_indices = @transform_0, window_bounds = array<i64: 80, 512>}, {pipeline_mode = #tpu.pipeline_mode<synchronous>, transform_indices = @transform_1, window_bounds = array<i64: 16, 80>}, {pipeline_mode = #tpu.pipeline_mode<synchronous>, transform_indices = @transform_2, window_bounds = array<i64: 16, 1>}, {pipeline_mode = #tpu.pipeline_mode<synchronous>, transform_indices = @transform_3, window_bounds = array<i64: 16, 1>}, {pipeline_mode = #tpu.pipeline_mode<synchronous>, transform_indices = @transform_4, window_bounds = array<i64: 16, 512>}]} {
    %c0_i32 = arith.constant 0 : i32
    %0 = arith.cmpi eq, %arg0, %c0_i32 : i32
    %1 = arith.extui %0 : i1 to i32
    %c0_i32_0 = arith.constant 0 : i32
    %2 = arith.cmpi ne, %1, %c0_i32_0 : i32
    scf.if %2 {
      %cst_18 = arith.constant 0.000000e+00 : f32
      %24 = vector.broadcast %cst_18 : f32 to vector<16x1xf32>
      %c0_19 = arith.constant 0 : index
      %c0_20 = arith.constant 0 : index
      %25 = vector.load %arg7[%c0_19, %c0_20] : memref<16x1xf32, #tpu.memory_space<vmem>>, vector<16x1xf32>
      tpu.vector_store %arg7[%c0_19, %c0_20], %24 {strides = array<i32>} : memref<16x1xf32, #tpu.memory_space<vmem>>, vector<16x1xf32>,
      %cst_21 = arith.constant 0.000000e+00 : f32
      %26 = vector.broadcast %cst_21 : f32 to vector<16x1xf32>
      %c0_22 = arith.constant 0 : index
      %c0_23 = arith.constant 0 : index
      %27 = vector.load %arg8[%c0_22, %c0_23] : memref<16x1xf32, #tpu.memory_space<vmem>>, vector<16x1xf32>
      tpu.vector_store %arg8[%c0_22, %c0_23], %26 {strides = array<i32>} : memref<16x1xf32, #tpu.memory_space<vmem>>, vector<16x1xf32>,
    } else {
    }
    %c0 = arith.constant 0 : index
    %c0_1 = arith.constant 0 : index
    %3 = vector.load %arg2[%c0, %c0_1] : memref<16x80xbf16, #tpu.memory_space<vmem>>, vector<16x80xbf16>
    %c0_2 = arith.constant 0 : index
    %c0_3 = arith.constant 0 : index
    %4 = vector.load %arg1[%c0_2, %c0_3] : memref<80x512xbf16, #tpu.memory_space<vmem>>, vector<80x512xbf16>
    %cst = arith.constant dense<0.000000e+00> : vector<16x512xf32>
    %5 = tpu.matmul %3, %4, %cst {dimension_numbers = #tpu.dot_dimension_numbers<[1], [0], [0], [1], [0, 0, 1, 1], [], []>} : vector<16x80xbf16>, vector<80x512xbf16>, vector<16x512xf32> -> vector<16x512xf32>
    %6 = arith.index_cast %arg0 : i32 to index
    %c0_4 = arith.constant 0 : index
    %c0_5 = arith.constant 0 : index
    %7 = vector.load %arg6[%6, %c0_4, %c0_5] : memref<1x16x512xf32, #tpu.memory_space<vmem>>, vector<1x16x512xf32>
    %8 = vector.shape_cast %7 : vector<1x16x512xf32> to vector<16x512xf32>
    %9 = vector.shape_cast %5 : vector<16x512xf32> to vector<1x16x512xf32>
    tpu.vector_store %arg6[%6, %c0_4, %c0_5], %9 {strides = array<i32>} : memref<1x16x512xf32, #tpu.memory_space<vmem>>, vector<1x16x512xf32>,
    %c0_6 = arith.constant 0 : index
    %c0_7 = arith.constant 0 : index
    %10 = vector.load %arg7[%c0_6, %c0_7] : memref<16x1xf32, #tpu.memory_space<vmem>>, vector<16x1xf32>
    %cst_8 = arith.constant dense<0.000000e+00> : vector<16xf32>
    %11 = vector.multi_reduction <add>, %5, %cst_8 [1] : vector<16x512xf32> to vector<16xf32>
    %12 = vector.shape_cast %11 : vector<16xf32> to vector<16x1xf32>
    %13 = arith.addf %10, %12 : vector<16x1xf32>
    %c0_9 = arith.constant 0 : index
    %c0_10 = arith.constant 0 : index
    %14 = vector.load %arg7[%c0_9, %c0_10] : memref<16x1xf32, #tpu.memory_space<vmem>>, vector<16x1xf32>
    tpu.vector_store %arg7[%c0_9, %c0_10], %13 {strides = array<i32>} : memref<16x1xf32, #tpu.memory_space<vmem>>, vector<16x1xf32>,
    %c0_11 = arith.constant 0 : index
    %c0_12 = arith.constant 0 : index
    %15 = vector.load %arg8[%c0_11, %c0_12] : memref<16x1xf32, #tpu.memory_space<vmem>>, vector<16x1xf32>
    %16 = arith.mulf %5, %5 : vector<16x512xf32>
    %cst_13 = arith.constant dense<0.000000e+00> : vector<16xf32>
    %17 = vector.multi_reduction <add>, %16, %cst_13 [1] : vector<16x512xf32> to vector<16xf32>
    %18 = vector.shape_cast %17 : vector<16xf32> to vector<16x1xf32>
    %19 = arith.addf %15, %18 : vector<16x1xf32>
    %c0_14 = arith.constant 0 : index
    %c0_15 = arith.constant 0 : index
    %20 = vector.load %arg8[%c0_14, %c0_15] : memref<16x1xf32, #tpu.memory_space<vmem>>, vector<16x1xf32>
    tpu.vector_store %arg8[%c0_14, %c0_15], %19 {strides = array<i32>} : memref<16x1xf32, #tpu.memory_space<vmem>>, vector<16x1xf32>,
    %c0_i32_16 = arith.constant 0 : i32
    %21 = arith.cmpi eq, %arg0, %c0_i32_16 : i32
    %22 = arith.extui %21 : i1 to i32
    %c0_i32_17 = arith.constant 0 : i32
    %23 = arith.cmpi ne, %22, %c0_i32_17 : i32
    scf.if %23 {
      %c0_18 = arith.constant 0 : index
      %c0_19 = arith.constant 0 : index
      %24 = vector.load %arg7[%c0_18, %c0_19] : memref<16x1xf32, #tpu.memory_space<vmem>>, vector<16x1xf32>
      %cst_20 = arith.constant 0.001953125 : f32
      %25 = vector.broadcast %cst_20 : f32 to vector<16x1xf32>
      %26 = arith.mulf %24, %25 : vector<16x1xf32>
      %c0_21 = arith.constant 0 : index
      %c0_22 = arith.constant 0 : index
      %27 = vector.load %arg8[%c0_21, %c0_22] : memref<16x1xf32, #tpu.memory_space<vmem>>, vector<16x1xf32>
      %cst_23 = arith.constant 0.001953125 : f32
      %28 = vector.broadcast %cst_23 : f32 to vector<16x1xf32>
      %29 = arith.mulf %27, %28 : vector<16x1xf32>
      %30 = arith.mulf %26, %26 : vector<16x1xf32>
      %31 = arith.subf %29, %30 : vector<16x1xf32>
      %cst_24 = arith.constant 0.000000e+00 : f32
      %32 = vector.broadcast %cst_24 : f32 to vector<16x1xf32>
      %33 = arith.maximumf %31, %32 : vector<16x1xf32>
      %c0_25 = arith.constant 0 : index
      %c0_26 = arith.constant 0 : index
      %34 = vector.load %arg3[%c0_25, %c0_26] : memref<16x1xf32, #tpu.memory_space<vmem>>, vector<16x1xf32>
      %cst_27 = arith.constant 9.99999974E-6 : f32
      %35 = vector.broadcast %cst_27 : f32 to vector<16x1xf32>
      %36 = arith.addf %33, %35 : vector<16x1xf32>
      %37 = math.rsqrt %36 : vector<16x1xf32>
      %38 = arith.mulf %34, %37 : vector<16x1xf32>
      %c0_28 = arith.constant 0 : index
      %c0_29 = arith.constant 0 : index
      %39 = vector.load %arg4[%c0_28, %c0_29] : memref<16x1xf32, #tpu.memory_space<vmem>>, vector<16x1xf32>
      %40 = arith.mulf %26, %38 : vector<16x1xf32>
      %41 = arith.subf %39, %40 : vector<16x1xf32>
      %c0_30 = arith.constant 0 : index
      %c0_31 = arith.constant 0 : index
      %c0_32 = arith.constant 0 : index
      %42 = vector.load %arg6[%c0_30, %c0_31, %c0_32] : memref<1x16x512xf32, #tpu.memory_space<vmem>>, vector<1x16x512xf32>
      %43 = vector.shape_cast %42 : vector<1x16x512xf32> to vector<16x512xf32>
      %44 = vector.broadcast %38 : vector<16x1xf32> to vector<16x512xf32>
      %45 = arith.mulf %43, %44 : vector<16x512xf32>
      %46 = vector.broadcast %41 : vector<16x1xf32> to vector<16x512xf32>
      %47 = arith.addf %45, %46 : vector<16x512xf32>
      %cst_33 = arith.constant 0.000000e+00 : f32
      %48 = vector.broadcast %cst_33 : f32 to vector<16x512xf32>
      %49 = arith.maximumf %47, %48 : vector<16x512xf32>
      %50 = arith.truncf %49 : vector<16x512xf32> to vector<16x512xbf16>
      %c0_34 = arith.constant 0 : index
      %c0_35 = arith.constant 0 : index
      %51 = vector.load %arg5[%c0_34, %c0_35] : memref<16x512xbf16, #tpu.memory_space<vmem>>, vector<16x512xbf16>
      tpu.vector_store %arg5[%c0_34, %c0_35], %50 {strides = array<i32>} : memref<16x512xbf16, #tpu.memory_space<vmem>>, vector<16x512xbf16>,
    } else {
    }
    return
  }
  func.func @transform_0(%arg0: i32) -> (i32, i32) {
    %c0_i32 = arith.constant 0 : i32
    %c0_i32_0 = arith.constant 0 : i32
    return %c0_i32, %arg0 : i32, i32
  }
  func.func @transform_1(%arg0: i32) -> (i32, i32) {
    %c0_i32 = arith.constant 0 : i32
    %c0_i32_0 = arith.constant 0 : i32
    %c0_i32_1 = arith.constant 0 : i32
    return %c0_i32, %c0_i32_0 : i32, i32
  }
  func.func @transform_2(%arg0: i32) -> (i32, i32) {
    %c0_i32 = arith.constant 0 : i32
    %c0_i32_0 = arith.constant 0 : i32
    %c0_i32_1 = arith.constant 0 : i32
    return %c0_i32, %c0_i32_0 : i32, i32
  }
  func.func @transform_3(%arg0: i32) -> (i32, i32) {
    %c0_i32 = arith.constant 0 : i32
    %c0_i32_0 = arith.constant 0 : i32
    %c0_i32_1 = arith.constant 0 : i32
    return %c0_i32, %c0_i32_0 : i32, i32
  }
  func.func @transform_4(%arg0: i32) -> (i32, i32) {
    %c0_i32 = arith.constant 0 : i32
    %c0_i32_0 = arith.constant 0 : i32
    %c0_i32_1 = arith.constant 0 : i32
    return %c0_i32, %c0_i32_0 : i32, i32
  }
}

module attributes {stable_mosaic.version = 11 : i64} {
  func.func @_conv_bn_act_kernel(%arg0: i32, %arg1: memref<80x512xbf16, #tpu.memory_space<vmem>>, %arg2: memref<16x80xbf16, #tpu.memory_space<vmem>>, %arg3: memref<16x1xf32, #tpu.memory_space<vmem>>, %arg4: memref<16x1xf32, #tpu.memory_space<vmem>>, %arg5: memref<16x512xbf16, #tpu.memory_space<vmem>>, %arg6: memref<16x512xbf16, #tpu.memory_space<vmem>>, %arg7: memref<1x16x512xf32, #tpu.memory_space<vmem>>, %arg8: memref<16x1xf32, #tpu.memory_space<vmem>>, %arg9: memref<16x1xf32, #tpu.memory_space<vmem>>) attributes {dimension_semantics = [#tpu.dimension_semantics<arbitrary>], iteration_bounds = array<i64: 1>, scalar_prefetch = 0 : i64, scratch_operands = 3 : i64, tpu.core_type = #tpu.core_type<tc>, window_params = [{transform_indices = @transform_0, window_bounds = array<i64: 80, 512>}, {pipeline_mode = #tpu.pipeline_mode<synchronous>, transform_indices = @transform_1, window_bounds = array<i64: 16, 80>}, {pipeline_mode = #tpu.pipeline_mode<synchronous>, transform_indices = @transform_2, window_bounds = array<i64: 16, 1>}, {pipeline_mode = #tpu.pipeline_mode<synchronous>, transform_indices = @transform_3, window_bounds = array<i64: 16, 1>}, {pipeline_mode = #tpu.pipeline_mode<synchronous>, transform_indices = @transform_4, window_bounds = array<i64: 16, 512>}, {pipeline_mode = #tpu.pipeline_mode<synchronous>, transform_indices = @transform_5, window_bounds = array<i64: 16, 512>}]} {
    %c0_i32 = arith.constant 0 : i32
    %0 = arith.cmpi eq, %arg0, %c0_i32 : i32
    %1 = arith.extui %0 : i1 to i32
    %c0_i32_0 = arith.constant 0 : i32
    %2 = arith.cmpi ne, %1, %c0_i32_0 : i32
    scf.if %2 {
      %cst_18 = arith.constant 0.000000e+00 : f32
      %24 = vector.broadcast %cst_18 : f32 to vector<16x1xf32>
      %c0_19 = arith.constant 0 : index
      %c0_20 = arith.constant 0 : index
      %25 = vector.load %arg8[%c0_19, %c0_20] : memref<16x1xf32, #tpu.memory_space<vmem>>, vector<16x1xf32>
      tpu.vector_store %arg8[%c0_19, %c0_20], %24 {strides = array<i32>} : memref<16x1xf32, #tpu.memory_space<vmem>>, vector<16x1xf32>,
      %cst_21 = arith.constant 0.000000e+00 : f32
      %26 = vector.broadcast %cst_21 : f32 to vector<16x1xf32>
      %c0_22 = arith.constant 0 : index
      %c0_23 = arith.constant 0 : index
      %27 = vector.load %arg9[%c0_22, %c0_23] : memref<16x1xf32, #tpu.memory_space<vmem>>, vector<16x1xf32>
      tpu.vector_store %arg9[%c0_22, %c0_23], %26 {strides = array<i32>} : memref<16x1xf32, #tpu.memory_space<vmem>>, vector<16x1xf32>,
    } else {
    }
    %c0 = arith.constant 0 : index
    %c0_1 = arith.constant 0 : index
    %3 = vector.load %arg2[%c0, %c0_1] : memref<16x80xbf16, #tpu.memory_space<vmem>>, vector<16x80xbf16>
    %c0_2 = arith.constant 0 : index
    %c0_3 = arith.constant 0 : index
    %4 = vector.load %arg1[%c0_2, %c0_3] : memref<80x512xbf16, #tpu.memory_space<vmem>>, vector<80x512xbf16>
    %cst = arith.constant dense<0.000000e+00> : vector<16x512xf32>
    %5 = tpu.matmul %3, %4, %cst {dimension_numbers = #tpu.dot_dimension_numbers<[1], [0], [0], [1], [0, 0, 1, 1], [], []>} : vector<16x80xbf16>, vector<80x512xbf16>, vector<16x512xf32> -> vector<16x512xf32>
    %6 = arith.index_cast %arg0 : i32 to index
    %c0_4 = arith.constant 0 : index
    %c0_5 = arith.constant 0 : index
    %7 = vector.load %arg7[%6, %c0_4, %c0_5] : memref<1x16x512xf32, #tpu.memory_space<vmem>>, vector<1x16x512xf32>
    %8 = vector.shape_cast %7 : vector<1x16x512xf32> to vector<16x512xf32>
    %9 = vector.shape_cast %5 : vector<16x512xf32> to vector<1x16x512xf32>
    tpu.vector_store %arg7[%6, %c0_4, %c0_5], %9 {strides = array<i32>} : memref<1x16x512xf32, #tpu.memory_space<vmem>>, vector<1x16x512xf32>,
    %c0_6 = arith.constant 0 : index
    %c0_7 = arith.constant 0 : index
    %10 = vector.load %arg8[%c0_6, %c0_7] : memref<16x1xf32, #tpu.memory_space<vmem>>, vector<16x1xf32>
    %cst_8 = arith.constant dense<0.000000e+00> : vector<16xf32>
    %11 = vector.multi_reduction <add>, %5, %cst_8 [1] : vector<16x512xf32> to vector<16xf32>
    %12 = vector.shape_cast %11 : vector<16xf32> to vector<16x1xf32>
    %13 = arith.addf %10, %12 : vector<16x1xf32>
    %c0_9 = arith.constant 0 : index
    %c0_10 = arith.constant 0 : index
    %14 = vector.load %arg8[%c0_9, %c0_10] : memref<16x1xf32, #tpu.memory_space<vmem>>, vector<16x1xf32>
    tpu.vector_store %arg8[%c0_9, %c0_10], %13 {strides = array<i32>} : memref<16x1xf32, #tpu.memory_space<vmem>>, vector<16x1xf32>,
    %c0_11 = arith.constant 0 : index
    %c0_12 = arith.constant 0 : index
    %15 = vector.load %arg9[%c0_11, %c0_12] : memref<16x1xf32, #tpu.memory_space<vmem>>, vector<16x1xf32>
    %16 = arith.mulf %5, %5 : vector<16x512xf32>
    %cst_13 = arith.constant dense<0.000000e+00> : vector<16xf32>
    %17 = vector.multi_reduction <add>, %16, %cst_13 [1] : vector<16x512xf32> to vector<16xf32>
    %18 = vector.shape_cast %17 : vector<16xf32> to vector<16x1xf32>
    %19 = arith.addf %15, %18 : vector<16x1xf32>
    %c0_14 = arith.constant 0 : index
    %c0_15 = arith.constant 0 : index
    %20 = vector.load %arg9[%c0_14, %c0_15] : memref<16x1xf32, #tpu.memory_space<vmem>>, vector<16x1xf32>
    tpu.vector_store %arg9[%c0_14, %c0_15], %19 {strides = array<i32>} : memref<16x1xf32, #tpu.memory_space<vmem>>, vector<16x1xf32>,
    %c0_i32_16 = arith.constant 0 : i32
    %21 = arith.cmpi eq, %arg0, %c0_i32_16 : i32
    %22 = arith.extui %21 : i1 to i32
    %c0_i32_17 = arith.constant 0 : i32
    %23 = arith.cmpi ne, %22, %c0_i32_17 : i32
    scf.if %23 {
      %c0_18 = arith.constant 0 : index
      %c0_19 = arith.constant 0 : index
      %24 = vector.load %arg8[%c0_18, %c0_19] : memref<16x1xf32, #tpu.memory_space<vmem>>, vector<16x1xf32>
      %cst_20 = arith.constant 0.001953125 : f32
      %25 = vector.broadcast %cst_20 : f32 to vector<16x1xf32>
      %26 = arith.mulf %24, %25 : vector<16x1xf32>
      %c0_21 = arith.constant 0 : index
      %c0_22 = arith.constant 0 : index
      %27 = vector.load %arg9[%c0_21, %c0_22] : memref<16x1xf32, #tpu.memory_space<vmem>>, vector<16x1xf32>
      %cst_23 = arith.constant 0.001953125 : f32
      %28 = vector.broadcast %cst_23 : f32 to vector<16x1xf32>
      %29 = arith.mulf %27, %28 : vector<16x1xf32>
      %30 = arith.mulf %26, %26 : vector<16x1xf32>
      %31 = arith.subf %29, %30 : vector<16x1xf32>
      %cst_24 = arith.constant 0.000000e+00 : f32
      %32 = vector.broadcast %cst_24 : f32 to vector<16x1xf32>
      %33 = arith.maximumf %31, %32 : vector<16x1xf32>
      %c0_25 = arith.constant 0 : index
      %c0_26 = arith.constant 0 : index
      %34 = vector.load %arg3[%c0_25, %c0_26] : memref<16x1xf32, #tpu.memory_space<vmem>>, vector<16x1xf32>
      %cst_27 = arith.constant 9.99999974E-6 : f32
      %35 = vector.broadcast %cst_27 : f32 to vector<16x1xf32>
      %36 = arith.addf %33, %35 : vector<16x1xf32>
      %37 = math.rsqrt %36 : vector<16x1xf32>
      %38 = arith.mulf %34, %37 : vector<16x1xf32>
      %c0_28 = arith.constant 0 : index
      %c0_29 = arith.constant 0 : index
      %39 = vector.load %arg4[%c0_28, %c0_29] : memref<16x1xf32, #tpu.memory_space<vmem>>, vector<16x1xf32>
      %40 = arith.mulf %26, %38 : vector<16x1xf32>
      %41 = arith.subf %39, %40 : vector<16x1xf32>
      %c0_30 = arith.constant 0 : index
      %c0_31 = arith.constant 0 : index
      %c0_32 = arith.constant 0 : index
      %42 = vector.load %arg7[%c0_30, %c0_31, %c0_32] : memref<1x16x512xf32, #tpu.memory_space<vmem>>, vector<1x16x512xf32>
      %43 = vector.shape_cast %42 : vector<1x16x512xf32> to vector<16x512xf32>
      %44 = vector.broadcast %38 : vector<16x1xf32> to vector<16x512xf32>
      %45 = arith.mulf %43, %44 : vector<16x512xf32>
      %46 = vector.broadcast %41 : vector<16x1xf32> to vector<16x512xf32>
      %47 = arith.addf %45, %46 : vector<16x512xf32>
      %c0_33 = arith.constant 0 : index
      %c0_34 = arith.constant 0 : index
      %48 = vector.load %arg5[%c0_33, %c0_34] : memref<16x512xbf16, #tpu.memory_space<vmem>>, vector<16x512xbf16>
      %49 = arith.extf %48 : vector<16x512xbf16> to vector<16x512xf32>
      %50 = arith.addf %47, %49 : vector<16x512xf32>
      %cst_35 = arith.constant 0.000000e+00 : f32
      %51 = vector.broadcast %cst_35 : f32 to vector<16x512xf32>
      %52 = arith.maximumf %50, %51 : vector<16x512xf32>
      %53 = arith.truncf %52 : vector<16x512xf32> to vector<16x512xbf16>
      %c0_36 = arith.constant 0 : index
      %c0_37 = arith.constant 0 : index
      %54 = vector.load %arg6[%c0_36, %c0_37] : memref<16x512xbf16, #tpu.memory_space<vmem>>, vector<16x512xbf16>
      tpu.vector_store %arg6[%c0_36, %c0_37], %53 {strides = array<i32>} : memref<16x512xbf16, #tpu.memory_space<vmem>>, vector<16x512xbf16>,
    } else {
    }
    return
  }
  func.func @transform_0(%arg0: i32) -> (i32, i32) {
    %c0_i32 = arith.constant 0 : i32
    %c0_i32_0 = arith.constant 0 : i32
    return %c0_i32, %arg0 : i32, i32
  }
  func.func @transform_1(%arg0: i32) -> (i32, i32) {
    %c0_i32 = arith.constant 0 : i32
    %c0_i32_0 = arith.constant 0 : i32
    %c0_i32_1 = arith.constant 0 : i32
    return %c0_i32, %c0_i32_0 : i32, i32
  }
  func.func @transform_2(%arg0: i32) -> (i32, i32) {
    %c0_i32 = arith.constant 0 : i32
    %c0_i32_0 = arith.constant 0 : i32
    %c0_i32_1 = arith.constant 0 : i32
    return %c0_i32, %c0_i32_0 : i32, i32
  }
  func.func @transform_3(%arg0: i32) -> (i32, i32) {
    %c0_i32 = arith.constant 0 : i32
    %c0_i32_0 = arith.constant 0 : i32
    %c0_i32_1 = arith.constant 0 : i32
    return %c0_i32, %c0_i32_0 : i32, i32
  }
  func.func @transform_4(%arg0: i32) -> (i32, i32) {
    %c0_i32 = arith.constant 0 : i32
    %c0_i32_0 = arith.constant 0 : i32
    %c0_i32_1 = arith.constant 0 : i32
    return %c0_i32, %c0_i32_0 : i32, i32
  }
  func.func @transform_5(%arg0: i32) -> (i32, i32) {
    %c0_i32 = arith.constant 0 : i32
    %c0_i32_0 = arith.constant 0 : i32
    %c0_i32_1 = arith.constant 0 : i32
    return %c0_i32, %c0_i32_0 : i32, i32
  }
}

module attributes {stable_mosaic.version = 11 : i64} {
  func.func @_conv_bn_act_kernel(%arg0: i32, %arg1: memref<80x128xbf16, #tpu.memory_space<vmem>>, %arg2: memref<16x80xbf16, #tpu.memory_space<vmem>>, %arg3: memref<16x1xf32, #tpu.memory_space<vmem>>, %arg4: memref<16x1xf32, #tpu.memory_space<vmem>>, %arg5: memref<16x128xbf16, #tpu.memory_space<vmem>>, %arg6: memref<1x16x128xf32, #tpu.memory_space<vmem>>, %arg7: memref<16x1xf32, #tpu.memory_space<vmem>>, %arg8: memref<16x1xf32, #tpu.memory_space<vmem>>) attributes {dimension_semantics = [#tpu.dimension_semantics<arbitrary>], iteration_bounds = array<i64: 1>, scalar_prefetch = 0 : i64, scratch_operands = 3 : i64, tpu.core_type = #tpu.core_type<tc>, window_params = [{transform_indices = @transform_0, window_bounds = array<i64: 80, 128>}, {pipeline_mode = #tpu.pipeline_mode<synchronous>, transform_indices = @transform_1, window_bounds = array<i64: 16, 80>}, {pipeline_mode = #tpu.pipeline_mode<synchronous>, transform_indices = @transform_2, window_bounds = array<i64: 16, 1>}, {pipeline_mode = #tpu.pipeline_mode<synchronous>, transform_indices = @transform_3, window_bounds = array<i64: 16, 1>}, {pipeline_mode = #tpu.pipeline_mode<synchronous>, transform_indices = @transform_4, window_bounds = array<i64: 16, 128>}]} {
    %c0_i32 = arith.constant 0 : i32
    %0 = arith.cmpi eq, %arg0, %c0_i32 : i32
    %1 = arith.extui %0 : i1 to i32
    %c0_i32_0 = arith.constant 0 : i32
    %2 = arith.cmpi ne, %1, %c0_i32_0 : i32
    scf.if %2 {
      %cst_18 = arith.constant 0.000000e+00 : f32
      %24 = vector.broadcast %cst_18 : f32 to vector<16x1xf32>
      %c0_19 = arith.constant 0 : index
      %c0_20 = arith.constant 0 : index
      %25 = vector.load %arg7[%c0_19, %c0_20] : memref<16x1xf32, #tpu.memory_space<vmem>>, vector<16x1xf32>
      tpu.vector_store %arg7[%c0_19, %c0_20], %24 {strides = array<i32>} : memref<16x1xf32, #tpu.memory_space<vmem>>, vector<16x1xf32>,
      %cst_21 = arith.constant 0.000000e+00 : f32
      %26 = vector.broadcast %cst_21 : f32 to vector<16x1xf32>
      %c0_22 = arith.constant 0 : index
      %c0_23 = arith.constant 0 : index
      %27 = vector.load %arg8[%c0_22, %c0_23] : memref<16x1xf32, #tpu.memory_space<vmem>>, vector<16x1xf32>
      tpu.vector_store %arg8[%c0_22, %c0_23], %26 {strides = array<i32>} : memref<16x1xf32, #tpu.memory_space<vmem>>, vector<16x1xf32>,
    } else {
    }
    %c0 = arith.constant 0 : index
    %c0_1 = arith.constant 0 : index
    %3 = vector.load %arg2[%c0, %c0_1] : memref<16x80xbf16, #tpu.memory_space<vmem>>, vector<16x80xbf16>
    %c0_2 = arith.constant 0 : index
    %c0_3 = arith.constant 0 : index
    %4 = vector.load %arg1[%c0_2, %c0_3] : memref<80x128xbf16, #tpu.memory_space<vmem>>, vector<80x128xbf16>
    %cst = arith.constant dense<0.000000e+00> : vector<16x128xf32>
    %5 = tpu.matmul %3, %4, %cst {dimension_numbers = #tpu.dot_dimension_numbers<[1], [0], [0], [1], [0, 0, 1, 1], [], []>} : vector<16x80xbf16>, vector<80x128xbf16>, vector<16x128xf32> -> vector<16x128xf32>
    %6 = arith.index_cast %arg0 : i32 to index
    %c0_4 = arith.constant 0 : index
    %c0_5 = arith.constant 0 : index
    %7 = vector.load %arg6[%6, %c0_4, %c0_5] : memref<1x16x128xf32, #tpu.memory_space<vmem>>, vector<1x16x128xf32>
    %8 = vector.shape_cast %7 : vector<1x16x128xf32> to vector<16x128xf32>
    %9 = vector.shape_cast %5 : vector<16x128xf32> to vector<1x16x128xf32>
    tpu.vector_store %arg6[%6, %c0_4, %c0_5], %9 {strides = array<i32>} : memref<1x16x128xf32, #tpu.memory_space<vmem>>, vector<1x16x128xf32>,
    %c0_6 = arith.constant 0 : index
    %c0_7 = arith.constant 0 : index
    %10 = vector.load %arg7[%c0_6, %c0_7] : memref<16x1xf32, #tpu.memory_space<vmem>>, vector<16x1xf32>
    %cst_8 = arith.constant dense<0.000000e+00> : vector<16xf32>
    %11 = vector.multi_reduction <add>, %5, %cst_8 [1] : vector<16x128xf32> to vector<16xf32>
    %12 = vector.shape_cast %11 : vector<16xf32> to vector<16x1xf32>
    %13 = arith.addf %10, %12 : vector<16x1xf32>
    %c0_9 = arith.constant 0 : index
    %c0_10 = arith.constant 0 : index
    %14 = vector.load %arg7[%c0_9, %c0_10] : memref<16x1xf32, #tpu.memory_space<vmem>>, vector<16x1xf32>
    tpu.vector_store %arg7[%c0_9, %c0_10], %13 {strides = array<i32>} : memref<16x1xf32, #tpu.memory_space<vmem>>, vector<16x1xf32>,
    %c0_11 = arith.constant 0 : index
    %c0_12 = arith.constant 0 : index
    %15 = vector.load %arg8[%c0_11, %c0_12] : memref<16x1xf32, #tpu.memory_space<vmem>>, vector<16x1xf32>
    %16 = arith.mulf %5, %5 : vector<16x128xf32>
    %cst_13 = arith.constant dense<0.000000e+00> : vector<16xf32>
    %17 = vector.multi_reduction <add>, %16, %cst_13 [1] : vector<16x128xf32> to vector<16xf32>
    %18 = vector.shape_cast %17 : vector<16xf32> to vector<16x1xf32>
    %19 = arith.addf %15, %18 : vector<16x1xf32>
    %c0_14 = arith.constant 0 : index
    %c0_15 = arith.constant 0 : index
    %20 = vector.load %arg8[%c0_14, %c0_15] : memref<16x1xf32, #tpu.memory_space<vmem>>, vector<16x1xf32>
    tpu.vector_store %arg8[%c0_14, %c0_15], %19 {strides = array<i32>} : memref<16x1xf32, #tpu.memory_space<vmem>>, vector<16x1xf32>,
    %c0_i32_16 = arith.constant 0 : i32
    %21 = arith.cmpi eq, %arg0, %c0_i32_16 : i32
    %22 = arith.extui %21 : i1 to i32
    %c0_i32_17 = arith.constant 0 : i32
    %23 = arith.cmpi ne, %22, %c0_i32_17 : i32
    scf.if %23 {
      %c0_18 = arith.constant 0 : index
      %c0_19 = arith.constant 0 : index
      %24 = vector.load %arg7[%c0_18, %c0_19] : memref<16x1xf32, #tpu.memory_space<vmem>>, vector<16x1xf32>
      %cst_20 = arith.constant 7.812500e-03 : f32
      %25 = vector.broadcast %cst_20 : f32 to vector<16x1xf32>
      %26 = arith.mulf %24, %25 : vector<16x1xf32>
      %c0_21 = arith.constant 0 : index
      %c0_22 = arith.constant 0 : index
      %27 = vector.load %arg8[%c0_21, %c0_22] : memref<16x1xf32, #tpu.memory_space<vmem>>, vector<16x1xf32>
      %cst_23 = arith.constant 7.812500e-03 : f32
      %28 = vector.broadcast %cst_23 : f32 to vector<16x1xf32>
      %29 = arith.mulf %27, %28 : vector<16x1xf32>
      %30 = arith.mulf %26, %26 : vector<16x1xf32>
      %31 = arith.subf %29, %30 : vector<16x1xf32>
      %cst_24 = arith.constant 0.000000e+00 : f32
      %32 = vector.broadcast %cst_24 : f32 to vector<16x1xf32>
      %33 = arith.maximumf %31, %32 : vector<16x1xf32>
      %c0_25 = arith.constant 0 : index
      %c0_26 = arith.constant 0 : index
      %34 = vector.load %arg3[%c0_25, %c0_26] : memref<16x1xf32, #tpu.memory_space<vmem>>, vector<16x1xf32>
      %cst_27 = arith.constant 9.99999974E-6 : f32
      %35 = vector.broadcast %cst_27 : f32 to vector<16x1xf32>
      %36 = arith.addf %33, %35 : vector<16x1xf32>
      %37 = math.rsqrt %36 : vector<16x1xf32>
      %38 = arith.mulf %34, %37 : vector<16x1xf32>
      %c0_28 = arith.constant 0 : index
      %c0_29 = arith.constant 0 : index
      %39 = vector.load %arg4[%c0_28, %c0_29] : memref<16x1xf32, #tpu.memory_space<vmem>>, vector<16x1xf32>
      %40 = arith.mulf %26, %38 : vector<16x1xf32>
      %41 = arith.subf %39, %40 : vector<16x1xf32>
      %c0_30 = arith.constant 0 : index
      %c0_31 = arith.constant 0 : index
      %c0_32 = arith.constant 0 : index
      %42 = vector.load %arg6[%c0_30, %c0_31, %c0_32] : memref<1x16x128xf32, #tpu.memory_space<vmem>>, vector<1x16x128xf32>
      %43 = vector.shape_cast %42 : vector<1x16x128xf32> to vector<16x128xf32>
      %44 = vector.broadcast %38 : vector<16x1xf32> to vector<16x128xf32>
      %45 = arith.mulf %43, %44 : vector<16x128xf32>
      %46 = vector.broadcast %41 : vector<16x1xf32> to vector<16x128xf32>
      %47 = arith.addf %45, %46 : vector<16x128xf32>
      %cst_33 = arith.constant 0.000000e+00 : f32
      %48 = vector.broadcast %cst_33 : f32 to vector<16x128xf32>
      %49 = arith.maximumf %47, %48 : vector<16x128xf32>
      %50 = arith.truncf %49 : vector<16x128xf32> to vector<16x128xbf16>
      %c0_34 = arith.constant 0 : index
      %c0_35 = arith.constant 0 : index
      %51 = vector.load %arg5[%c0_34, %c0_35] : memref<16x128xbf16, #tpu.memory_space<vmem>>, vector<16x128xbf16>
      tpu.vector_store %arg5[%c0_34, %c0_35], %50 {strides = array<i32>} : memref<16x128xbf16, #tpu.memory_space<vmem>>, vector<16x128xbf16>,
    } else {
    }
    return
  }
  func.func @transform_0(%arg0: i32) -> (i32, i32) {
    %c0_i32 = arith.constant 0 : i32
    %c0_i32_0 = arith.constant 0 : i32
    return %c0_i32, %arg0 : i32, i32
  }
  func.func @transform_1(%arg0: i32) -> (i32, i32) {
    %c0_i32 = arith.constant 0 : i32
    %c0_i32_0 = arith.constant 0 : i32
    %c0_i32_1 = arith.constant 0 : i32
    return %c0_i32, %c0_i32_0 : i32, i32
  }
  func.func @transform_2(%arg0: i32) -> (i32, i32) {
    %c0_i32 = arith.constant 0 : i32
    %c0_i32_0 = arith.constant 0 : i32
    %c0_i32_1 = arith.constant 0 : i32
    return %c0_i32, %c0_i32_0 : i32, i32
  }
  func.func @transform_3(%arg0: i32) -> (i32, i32) {
    %c0_i32 = arith.constant 0 : i32
    %c0_i32_0 = arith.constant 0 : i32
    %c0_i32_1 = arith.constant 0 : i32
    return %c0_i32, %c0_i32_0 : i32, i32
  }
  func.func @transform_4(%arg0: i32) -> (i32, i32) {
    %c0_i32 = arith.constant 0 : i32
    %c0_i32_0 = arith.constant 0 : i32
    %c0_i32_1 = arith.constant 0 : i32
    return %c0_i32, %c0_i32_0 : i32, i32
  }
}

module attributes {stable_mosaic.version = 11 : i64} {
  func.func @_conv_bn_act_kernel(%arg0: i32, %arg1: memref<16x128xbf16, #tpu.memory_space<vmem>>, %arg2: memref<16x16xbf16, #tpu.memory_space<vmem>>, %arg3: memref<16x1xf32, #tpu.memory_space<vmem>>, %arg4: memref<16x1xf32, #tpu.memory_space<vmem>>, %arg5: memref<16x128xbf16, #tpu.memory_space<vmem>>, %arg6: memref<1x16x128xf32, #tpu.memory_space<vmem>>, %arg7: memref<16x1xf32, #tpu.memory_space<vmem>>, %arg8: memref<16x1xf32, #tpu.memory_space<vmem>>) attributes {dimension_semantics = [#tpu.dimension_semantics<arbitrary>], iteration_bounds = array<i64: 1>, scalar_prefetch = 0 : i64, scratch_operands = 3 : i64, tpu.core_type = #tpu.core_type<tc>, window_params = [{transform_indices = @transform_0, window_bounds = array<i64: 16, 128>}, {pipeline_mode = #tpu.pipeline_mode<synchronous>, transform_indices = @transform_1, window_bounds = array<i64: 16, 16>}, {pipeline_mode = #tpu.pipeline_mode<synchronous>, transform_indices = @transform_2, window_bounds = array<i64: 16, 1>}, {pipeline_mode = #tpu.pipeline_mode<synchronous>, transform_indices = @transform_3, window_bounds = array<i64: 16, 1>}, {pipeline_mode = #tpu.pipeline_mode<synchronous>, transform_indices = @transform_4, window_bounds = array<i64: 16, 128>}]} {
    %c0_i32 = arith.constant 0 : i32
    %0 = arith.cmpi eq, %arg0, %c0_i32 : i32
    %1 = arith.extui %0 : i1 to i32
    %c0_i32_0 = arith.constant 0 : i32
    %2 = arith.cmpi ne, %1, %c0_i32_0 : i32
    scf.if %2 {
      %cst_18 = arith.constant 0.000000e+00 : f32
      %24 = vector.broadcast %cst_18 : f32 to vector<16x1xf32>
      %c0_19 = arith.constant 0 : index
      %c0_20 = arith.constant 0 : index
      %25 = vector.load %arg7[%c0_19, %c0_20] : memref<16x1xf32, #tpu.memory_space<vmem>>, vector<16x1xf32>
      tpu.vector_store %arg7[%c0_19, %c0_20], %24 {strides = array<i32>} : memref<16x1xf32, #tpu.memory_space<vmem>>, vector<16x1xf32>,
      %cst_21 = arith.constant 0.000000e+00 : f32
      %26 = vector.broadcast %cst_21 : f32 to vector<16x1xf32>
      %c0_22 = arith.constant 0 : index
      %c0_23 = arith.constant 0 : index
      %27 = vector.load %arg8[%c0_22, %c0_23] : memref<16x1xf32, #tpu.memory_space<vmem>>, vector<16x1xf32>
      tpu.vector_store %arg8[%c0_22, %c0_23], %26 {strides = array<i32>} : memref<16x1xf32, #tpu.memory_space<vmem>>, vector<16x1xf32>,
    } else {
    }
    %c0 = arith.constant 0 : index
    %c0_1 = arith.constant 0 : index
    %3 = vector.load %arg2[%c0, %c0_1] : memref<16x16xbf16, #tpu.memory_space<vmem>>, vector<16x16xbf16>
    %c0_2 = arith.constant 0 : index
    %c0_3 = arith.constant 0 : index
    %4 = vector.load %arg1[%c0_2, %c0_3] : memref<16x128xbf16, #tpu.memory_space<vmem>>, vector<16x128xbf16>
    %cst = arith.constant dense<0.000000e+00> : vector<16x128xf32>
    %5 = tpu.matmul %3, %4, %cst {dimension_numbers = #tpu.dot_dimension_numbers<[1], [0], [0], [1], [0, 0, 1, 1], [], []>} : vector<16x16xbf16>, vector<16x128xbf16>, vector<16x128xf32> -> vector<16x128xf32>
    %6 = arith.index_cast %arg0 : i32 to index
    %c0_4 = arith.constant 0 : index
    %c0_5 = arith.constant 0 : index
    %7 = vector.load %arg6[%6, %c0_4, %c0_5] : memref<1x16x128xf32, #tpu.memory_space<vmem>>, vector<1x16x128xf32>
    %8 = vector.shape_cast %7 : vector<1x16x128xf32> to vector<16x128xf32>
    %9 = vector.shape_cast %5 : vector<16x128xf32> to vector<1x16x128xf32>
    tpu.vector_store %arg6[%6, %c0_4, %c0_5], %9 {strides = array<i32>} : memref<1x16x128xf32, #tpu.memory_space<vmem>>, vector<1x16x128xf32>,
    %c0_6 = arith.constant 0 : index
    %c0_7 = arith.constant 0 : index
    %10 = vector.load %arg7[%c0_6, %c0_7] : memref<16x1xf32, #tpu.memory_space<vmem>>, vector<16x1xf32>
    %cst_8 = arith.constant dense<0.000000e+00> : vector<16xf32>
    %11 = vector.multi_reduction <add>, %5, %cst_8 [1] : vector<16x128xf32> to vector<16xf32>
    %12 = vector.shape_cast %11 : vector<16xf32> to vector<16x1xf32>
    %13 = arith.addf %10, %12 : vector<16x1xf32>
    %c0_9 = arith.constant 0 : index
    %c0_10 = arith.constant 0 : index
    %14 = vector.load %arg7[%c0_9, %c0_10] : memref<16x1xf32, #tpu.memory_space<vmem>>, vector<16x1xf32>
    tpu.vector_store %arg7[%c0_9, %c0_10], %13 {strides = array<i32>} : memref<16x1xf32, #tpu.memory_space<vmem>>, vector<16x1xf32>,
    %c0_11 = arith.constant 0 : index
    %c0_12 = arith.constant 0 : index
    %15 = vector.load %arg8[%c0_11, %c0_12] : memref<16x1xf32, #tpu.memory_space<vmem>>, vector<16x1xf32>
    %16 = arith.mulf %5, %5 : vector<16x128xf32>
    %cst_13 = arith.constant dense<0.000000e+00> : vector<16xf32>
    %17 = vector.multi_reduction <add>, %16, %cst_13 [1] : vector<16x128xf32> to vector<16xf32>
    %18 = vector.shape_cast %17 : vector<16xf32> to vector<16x1xf32>
    %19 = arith.addf %15, %18 : vector<16x1xf32>
    %c0_14 = arith.constant 0 : index
    %c0_15 = arith.constant 0 : index
    %20 = vector.load %arg8[%c0_14, %c0_15] : memref<16x1xf32, #tpu.memory_space<vmem>>, vector<16x1xf32>
    tpu.vector_store %arg8[%c0_14, %c0_15], %19 {strides = array<i32>} : memref<16x1xf32, #tpu.memory_space<vmem>>, vector<16x1xf32>,
    %c0_i32_16 = arith.constant 0 : i32
    %21 = arith.cmpi eq, %arg0, %c0_i32_16 : i32
    %22 = arith.extui %21 : i1 to i32
    %c0_i32_17 = arith.constant 0 : i32
    %23 = arith.cmpi ne, %22, %c0_i32_17 : i32
    scf.if %23 {
      %c0_18 = arith.constant 0 : index
      %c0_19 = arith.constant 0 : index
      %24 = vector.load %arg7[%c0_18, %c0_19] : memref<16x1xf32, #tpu.memory_space<vmem>>, vector<16x1xf32>
      %cst_20 = arith.constant 7.812500e-03 : f32
      %25 = vector.broadcast %cst_20 : f32 to vector<16x1xf32>
      %26 = arith.mulf %24, %25 : vector<16x1xf32>
      %c0_21 = arith.constant 0 : index
      %c0_22 = arith.constant 0 : index
      %27 = vector.load %arg8[%c0_21, %c0_22] : memref<16x1xf32, #tpu.memory_space<vmem>>, vector<16x1xf32>
      %cst_23 = arith.constant 7.812500e-03 : f32
      %28 = vector.broadcast %cst_23 : f32 to vector<16x1xf32>
      %29 = arith.mulf %27, %28 : vector<16x1xf32>
      %30 = arith.mulf %26, %26 : vector<16x1xf32>
      %31 = arith.subf %29, %30 : vector<16x1xf32>
      %cst_24 = arith.constant 0.000000e+00 : f32
      %32 = vector.broadcast %cst_24 : f32 to vector<16x1xf32>
      %33 = arith.maximumf %31, %32 : vector<16x1xf32>
      %c0_25 = arith.constant 0 : index
      %c0_26 = arith.constant 0 : index
      %34 = vector.load %arg3[%c0_25, %c0_26] : memref<16x1xf32, #tpu.memory_space<vmem>>, vector<16x1xf32>
      %cst_27 = arith.constant 9.99999974E-6 : f32
      %35 = vector.broadcast %cst_27 : f32 to vector<16x1xf32>
      %36 = arith.addf %33, %35 : vector<16x1xf32>
      %37 = math.rsqrt %36 : vector<16x1xf32>
      %38 = arith.mulf %34, %37 : vector<16x1xf32>
      %c0_28 = arith.constant 0 : index
      %c0_29 = arith.constant 0 : index
      %39 = vector.load %arg4[%c0_28, %c0_29] : memref<16x1xf32, #tpu.memory_space<vmem>>, vector<16x1xf32>
      %40 = arith.mulf %26, %38 : vector<16x1xf32>
      %41 = arith.subf %39, %40 : vector<16x1xf32>
      %c0_30 = arith.constant 0 : index
      %c0_31 = arith.constant 0 : index
      %c0_32 = arith.constant 0 : index
      %42 = vector.load %arg6[%c0_30, %c0_31, %c0_32] : memref<1x16x128xf32, #tpu.memory_space<vmem>>, vector<1x16x128xf32>
      %43 = vector.shape_cast %42 : vector<1x16x128xf32> to vector<16x128xf32>
      %44 = vector.broadcast %38 : vector<16x1xf32> to vector<16x128xf32>
      %45 = arith.mulf %43, %44 : vector<16x128xf32>
      %46 = vector.broadcast %41 : vector<16x1xf32> to vector<16x128xf32>
      %47 = arith.addf %45, %46 : vector<16x128xf32>
      %48 = arith.truncf %47 : vector<16x128xf32> to vector<16x128xbf16>
      %c0_33 = arith.constant 0 : index
      %c0_34 = arith.constant 0 : index
      %49 = vector.load %arg5[%c0_33, %c0_34] : memref<16x128xbf16, #tpu.memory_space<vmem>>, vector<16x128xbf16>
      tpu.vector_store %arg5[%c0_33, %c0_34], %48 {strides = array<i32>} : memref<16x128xbf16, #tpu.memory_space<vmem>>, vector<16x128xbf16>,
    } else {
    }
    return
  }
  func.func @transform_0(%arg0: i32) -> (i32, i32) {
    %c0_i32 = arith.constant 0 : i32
    %c0_i32_0 = arith.constant 0 : i32
    return %c0_i32, %arg0 : i32, i32
  }
  func.func @transform_1(%arg0: i32) -> (i32, i32) {
    %c0_i32 = arith.constant 0 : i32
    %c0_i32_0 = arith.constant 0 : i32
    %c0_i32_1 = arith.constant 0 : i32
    return %c0_i32, %c0_i32_0 : i32, i32
  }
  func.func @transform_2(%arg0: i32) -> (i32, i32) {
    %c0_i32 = arith.constant 0 : i32
    %c0_i32_0 = arith.constant 0 : i32
    %c0_i32_1 = arith.constant 0 : i32
    return %c0_i32, %c0_i32_0 : i32, i32
  }
  func.func @transform_3(%arg0: i32) -> (i32, i32) {
    %c0_i32 = arith.constant 0 : i32
    %c0_i32_0 = arith.constant 0 : i32
    %c0_i32_1 = arith.constant 0 : i32
    return %c0_i32, %c0_i32_0 : i32, i32
  }
  func.func @transform_4(%arg0: i32) -> (i32, i32) {
    %c0_i32 = arith.constant 0 : i32
    %c0_i32_0 = arith.constant 0 : i32
    %c0_i32_1 = arith.constant 0 : i32
    return %c0_i32, %c0_i32_0 : i32, i32
  }
}

module attributes {stable_mosaic.version = 11 : i64} {
  func.func @_conv_bn_act_kernel(%arg0: i32, %arg1: memref<144x128xbf16, #tpu.memory_space<vmem>>, %arg2: memref<16x144xbf16, #tpu.memory_space<vmem>>, %arg3: memref<16x1xf32, #tpu.memory_space<vmem>>, %arg4: memref<16x1xf32, #tpu.memory_space<vmem>>, %arg5: memref<16x128xbf16, #tpu.memory_space<vmem>>, %arg6: memref<16x128xbf16, #tpu.memory_space<vmem>>, %arg7: memref<1x16x128xf32, #tpu.memory_space<vmem>>, %arg8: memref<16x1xf32, #tpu.memory_space<vmem>>, %arg9: memref<16x1xf32, #tpu.memory_space<vmem>>) attributes {dimension_semantics = [#tpu.dimension_semantics<arbitrary>], iteration_bounds = array<i64: 1>, scalar_prefetch = 0 : i64, scratch_operands = 3 : i64, tpu.core_type = #tpu.core_type<tc>, window_params = [{transform_indices = @transform_0, window_bounds = array<i64: 144, 128>}, {pipeline_mode = #tpu.pipeline_mode<synchronous>, transform_indices = @transform_1, window_bounds = array<i64: 16, 144>}, {pipeline_mode = #tpu.pipeline_mode<synchronous>, transform_indices = @transform_2, window_bounds = array<i64: 16, 1>}, {pipeline_mode = #tpu.pipeline_mode<synchronous>, transform_indices = @transform_3, window_bounds = array<i64: 16, 1>}, {pipeline_mode = #tpu.pipeline_mode<synchronous>, transform_indices = @transform_4, window_bounds = array<i64: 16, 128>}, {pipeline_mode = #tpu.pipeline_mode<synchronous>, transform_indices = @transform_5, window_bounds = array<i64: 16, 128>}]} {
    %c0_i32 = arith.constant 0 : i32
    %0 = arith.cmpi eq, %arg0, %c0_i32 : i32
    %1 = arith.extui %0 : i1 to i32
    %c0_i32_0 = arith.constant 0 : i32
    %2 = arith.cmpi ne, %1, %c0_i32_0 : i32
    scf.if %2 {
      %cst_18 = arith.constant 0.000000e+00 : f32
      %24 = vector.broadcast %cst_18 : f32 to vector<16x1xf32>
      %c0_19 = arith.constant 0 : index
      %c0_20 = arith.constant 0 : index
      %25 = vector.load %arg8[%c0_19, %c0_20] : memref<16x1xf32, #tpu.memory_space<vmem>>, vector<16x1xf32>
      tpu.vector_store %arg8[%c0_19, %c0_20], %24 {strides = array<i32>} : memref<16x1xf32, #tpu.memory_space<vmem>>, vector<16x1xf32>,
      %cst_21 = arith.constant 0.000000e+00 : f32
      %26 = vector.broadcast %cst_21 : f32 to vector<16x1xf32>
      %c0_22 = arith.constant 0 : index
      %c0_23 = arith.constant 0 : index
      %27 = vector.load %arg9[%c0_22, %c0_23] : memref<16x1xf32, #tpu.memory_space<vmem>>, vector<16x1xf32>
      tpu.vector_store %arg9[%c0_22, %c0_23], %26 {strides = array<i32>} : memref<16x1xf32, #tpu.memory_space<vmem>>, vector<16x1xf32>,
    } else {
    }
    %c0 = arith.constant 0 : index
    %c0_1 = arith.constant 0 : index
    %3 = vector.load %arg2[%c0, %c0_1] : memref<16x144xbf16, #tpu.memory_space<vmem>>, vector<16x144xbf16>
    %c0_2 = arith.constant 0 : index
    %c0_3 = arith.constant 0 : index
    %4 = vector.load %arg1[%c0_2, %c0_3] : memref<144x128xbf16, #tpu.memory_space<vmem>>, vector<144x128xbf16>
    %cst = arith.constant dense<0.000000e+00> : vector<16x128xf32>
    %5 = tpu.matmul %3, %4, %cst {dimension_numbers = #tpu.dot_dimension_numbers<[1], [0], [0], [1], [0, 0, 1, 1], [], []>} : vector<16x144xbf16>, vector<144x128xbf16>, vector<16x128xf32> -> vector<16x128xf32>
    %6 = arith.index_cast %arg0 : i32 to index
    %c0_4 = arith.constant 0 : index
    %c0_5 = arith.constant 0 : index
    %7 = vector.load %arg7[%6, %c0_4, %c0_5] : memref<1x16x128xf32, #tpu.memory_space<vmem>>, vector<1x16x128xf32>
    %8 = vector.shape_cast %7 : vector<1x16x128xf32> to vector<16x128xf32>
    %9 = vector.shape_cast %5 : vector<16x128xf32> to vector<1x16x128xf32>
    tpu.vector_store %arg7[%6, %c0_4, %c0_5], %9 {strides = array<i32>} : memref<1x16x128xf32, #tpu.memory_space<vmem>>, vector<1x16x128xf32>,
    %c0_6 = arith.constant 0 : index
    %c0_7 = arith.constant 0 : index
    %10 = vector.load %arg8[%c0_6, %c0_7] : memref<16x1xf32, #tpu.memory_space<vmem>>, vector<16x1xf32>
    %cst_8 = arith.constant dense<0.000000e+00> : vector<16xf32>
    %11 = vector.multi_reduction <add>, %5, %cst_8 [1] : vector<16x128xf32> to vector<16xf32>
    %12 = vector.shape_cast %11 : vector<16xf32> to vector<16x1xf32>
    %13 = arith.addf %10, %12 : vector<16x1xf32>
    %c0_9 = arith.constant 0 : index
    %c0_10 = arith.constant 0 : index
    %14 = vector.load %arg8[%c0_9, %c0_10] : memref<16x1xf32, #tpu.memory_space<vmem>>, vector<16x1xf32>
    tpu.vector_store %arg8[%c0_9, %c0_10], %13 {strides = array<i32>} : memref<16x1xf32, #tpu.memory_space<vmem>>, vector<16x1xf32>,
    %c0_11 = arith.constant 0 : index
    %c0_12 = arith.constant 0 : index
    %15 = vector.load %arg9[%c0_11, %c0_12] : memref<16x1xf32, #tpu.memory_space<vmem>>, vector<16x1xf32>
    %16 = arith.mulf %5, %5 : vector<16x128xf32>
    %cst_13 = arith.constant dense<0.000000e+00> : vector<16xf32>
    %17 = vector.multi_reduction <add>, %16, %cst_13 [1] : vector<16x128xf32> to vector<16xf32>
    %18 = vector.shape_cast %17 : vector<16xf32> to vector<16x1xf32>
    %19 = arith.addf %15, %18 : vector<16x1xf32>
    %c0_14 = arith.constant 0 : index
    %c0_15 = arith.constant 0 : index
    %20 = vector.load %arg9[%c0_14, %c0_15] : memref<16x1xf32, #tpu.memory_space<vmem>>, vector<16x1xf32>
    tpu.vector_store %arg9[%c0_14, %c0_15], %19 {strides = array<i32>} : memref<16x1xf32, #tpu.memory_space<vmem>>, vector<16x1xf32>,
    %c0_i32_16 = arith.constant 0 : i32
    %21 = arith.cmpi eq, %arg0, %c0_i32_16 : i32
    %22 = arith.extui %21 : i1 to i32
    %c0_i32_17 = arith.constant 0 : i32
    %23 = arith.cmpi ne, %22, %c0_i32_17 : i32
    scf.if %23 {
      %c0_18 = arith.constant 0 : index
      %c0_19 = arith.constant 0 : index
      %24 = vector.load %arg8[%c0_18, %c0_19] : memref<16x1xf32, #tpu.memory_space<vmem>>, vector<16x1xf32>
      %cst_20 = arith.constant 7.812500e-03 : f32
      %25 = vector.broadcast %cst_20 : f32 to vector<16x1xf32>
      %26 = arith.mulf %24, %25 : vector<16x1xf32>
      %c0_21 = arith.constant 0 : index
      %c0_22 = arith.constant 0 : index
      %27 = vector.load %arg9[%c0_21, %c0_22] : memref<16x1xf32, #tpu.memory_space<vmem>>, vector<16x1xf32>
      %cst_23 = arith.constant 7.812500e-03 : f32
      %28 = vector.broadcast %cst_23 : f32 to vector<16x1xf32>
      %29 = arith.mulf %27, %28 : vector<16x1xf32>
      %30 = arith.mulf %26, %26 : vector<16x1xf32>
      %31 = arith.subf %29, %30 : vector<16x1xf32>
      %cst_24 = arith.constant 0.000000e+00 : f32
      %32 = vector.broadcast %cst_24 : f32 to vector<16x1xf32>
      %33 = arith.maximumf %31, %32 : vector<16x1xf32>
      %c0_25 = arith.constant 0 : index
      %c0_26 = arith.constant 0 : index
      %34 = vector.load %arg3[%c0_25, %c0_26] : memref<16x1xf32, #tpu.memory_space<vmem>>, vector<16x1xf32>
      %cst_27 = arith.constant 9.99999974E-6 : f32
      %35 = vector.broadcast %cst_27 : f32 to vector<16x1xf32>
      %36 = arith.addf %33, %35 : vector<16x1xf32>
      %37 = math.rsqrt %36 : vector<16x1xf32>
      %38 = arith.mulf %34, %37 : vector<16x1xf32>
      %c0_28 = arith.constant 0 : index
      %c0_29 = arith.constant 0 : index
      %39 = vector.load %arg4[%c0_28, %c0_29] : memref<16x1xf32, #tpu.memory_space<vmem>>, vector<16x1xf32>
      %40 = arith.mulf %26, %38 : vector<16x1xf32>
      %41 = arith.subf %39, %40 : vector<16x1xf32>
      %c0_30 = arith.constant 0 : index
      %c0_31 = arith.constant 0 : index
      %c0_32 = arith.constant 0 : index
      %42 = vector.load %arg7[%c0_30, %c0_31, %c0_32] : memref<1x16x128xf32, #tpu.memory_space<vmem>>, vector<1x16x128xf32>
      %43 = vector.shape_cast %42 : vector<1x16x128xf32> to vector<16x128xf32>
      %44 = vector.broadcast %38 : vector<16x1xf32> to vector<16x128xf32>
      %45 = arith.mulf %43, %44 : vector<16x128xf32>
      %46 = vector.broadcast %41 : vector<16x1xf32> to vector<16x128xf32>
      %47 = arith.addf %45, %46 : vector<16x128xf32>
      %c0_33 = arith.constant 0 : index
      %c0_34 = arith.constant 0 : index
      %48 = vector.load %arg5[%c0_33, %c0_34] : memref<16x128xbf16, #tpu.memory_space<vmem>>, vector<16x128xbf16>
      %49 = arith.extf %48 : vector<16x128xbf16> to vector<16x128xf32>
      %50 = arith.addf %47, %49 : vector<16x128xf32>
      %cst_35 = arith.constant 0.000000e+00 : f32
      %51 = vector.broadcast %cst_35 : f32 to vector<16x128xf32>
      %52 = arith.maximumf %50, %51 : vector<16x128xf32>
      %53 = arith.truncf %52 : vector<16x128xf32> to vector<16x128xbf16>
      %c0_36 = arith.constant 0 : index
      %c0_37 = arith.constant 0 : index
      %54 = vector.load %arg6[%c0_36, %c0_37] : memref<16x128xbf16, #tpu.memory_space<vmem>>, vector<16x128xbf16>
      tpu.vector_store %arg6[%c0_36, %c0_37], %53 {strides = array<i32>} : memref<16x128xbf16, #tpu.memory_space<vmem>>, vector<16x128xbf16>,
    } else {
    }
    return
  }
  func.func @transform_0(%arg0: i32) -> (i32, i32) {
    %c0_i32 = arith.constant 0 : i32
    %c0_i32_0 = arith.constant 0 : i32
    return %c0_i32, %arg0 : i32, i32
  }
  func.func @transform_1(%arg0: i32) -> (i32, i32) {
    %c0_i32 = arith.constant 0 : i32
    %c0_i32_0 = arith.constant 0 : i32
    %c0_i32_1 = arith.constant 0 : i32
    return %c0_i32, %c0_i32_0 : i32, i32
  }
  func.func @transform_2(%arg0: i32) -> (i32, i32) {
    %c0_i32 = arith.constant 0 : i32
    %c0_i32_0 = arith.constant 0 : i32
    %c0_i32_1 = arith.constant 0 : i32
    return %c0_i32, %c0_i32_0 : i32, i32
  }
  func.func @transform_3(%arg0: i32) -> (i32, i32) {
    %c0_i32 = arith.constant 0 : i32
    %c0_i32_0 = arith.constant 0 : i32
    %c0_i32_1 = arith.constant 0 : i32
    return %c0_i32, %c0_i32_0 : i32, i32
  }
  func.func @transform_4(%arg0: i32) -> (i32, i32) {
    %c0_i32 = arith.constant 0 : i32
    %c0_i32_0 = arith.constant 0 : i32
    %c0_i32_1 = arith.constant 0 : i32
    return %c0_i32, %c0_i32_0 : i32, i32
  }
  func.func @transform_5(%arg0: i32) -> (i32, i32) {
    %c0_i32 = arith.constant 0 : i32
    %c0_i32_0 = arith.constant 0 : i32
    %c0_i32_1 = arith.constant 0 : i32
    return %c0_i32, %c0_i32_0 : i32, i32
  }
}

module attributes {stable_mosaic.version = 11 : i64} {
  func.func @_conv_bn_act_kernel(%arg0: i32, %arg1: memref<144x128xbf16, #tpu.memory_space<vmem>>, %arg2: memref<32x144xbf16, #tpu.memory_space<vmem>>, %arg3: memref<32x1xf32, #tpu.memory_space<vmem>>, %arg4: memref<32x1xf32, #tpu.memory_space<vmem>>, %arg5: memref<32x128xbf16, #tpu.memory_space<vmem>>, %arg6: memref<1x32x128xf32, #tpu.memory_space<vmem>>, %arg7: memref<32x1xf32, #tpu.memory_space<vmem>>, %arg8: memref<32x1xf32, #tpu.memory_space<vmem>>) attributes {dimension_semantics = [#tpu.dimension_semantics<arbitrary>], iteration_bounds = array<i64: 1>, scalar_prefetch = 0 : i64, scratch_operands = 3 : i64, tpu.core_type = #tpu.core_type<tc>, window_params = [{transform_indices = @transform_0, window_bounds = array<i64: 144, 128>}, {pipeline_mode = #tpu.pipeline_mode<synchronous>, transform_indices = @transform_1, window_bounds = array<i64: 32, 144>}, {pipeline_mode = #tpu.pipeline_mode<synchronous>, transform_indices = @transform_2, window_bounds = array<i64: 32, 1>}, {pipeline_mode = #tpu.pipeline_mode<synchronous>, transform_indices = @transform_3, window_bounds = array<i64: 32, 1>}, {pipeline_mode = #tpu.pipeline_mode<synchronous>, transform_indices = @transform_4, window_bounds = array<i64: 32, 128>}]} {
    %c0_i32 = arith.constant 0 : i32
    %0 = arith.cmpi eq, %arg0, %c0_i32 : i32
    %1 = arith.extui %0 : i1 to i32
    %c0_i32_0 = arith.constant 0 : i32
    %2 = arith.cmpi ne, %1, %c0_i32_0 : i32
    scf.if %2 {
      %cst_18 = arith.constant 0.000000e+00 : f32
      %24 = vector.broadcast %cst_18 : f32 to vector<32x1xf32>
      %c0_19 = arith.constant 0 : index
      %c0_20 = arith.constant 0 : index
      %25 = vector.load %arg7[%c0_19, %c0_20] : memref<32x1xf32, #tpu.memory_space<vmem>>, vector<32x1xf32>
      tpu.vector_store %arg7[%c0_19, %c0_20], %24 {strides = array<i32>} : memref<32x1xf32, #tpu.memory_space<vmem>>, vector<32x1xf32>,
      %cst_21 = arith.constant 0.000000e+00 : f32
      %26 = vector.broadcast %cst_21 : f32 to vector<32x1xf32>
      %c0_22 = arith.constant 0 : index
      %c0_23 = arith.constant 0 : index
      %27 = vector.load %arg8[%c0_22, %c0_23] : memref<32x1xf32, #tpu.memory_space<vmem>>, vector<32x1xf32>
      tpu.vector_store %arg8[%c0_22, %c0_23], %26 {strides = array<i32>} : memref<32x1xf32, #tpu.memory_space<vmem>>, vector<32x1xf32>,
    } else {
    }
    %c0 = arith.constant 0 : index
    %c0_1 = arith.constant 0 : index
    %3 = vector.load %arg2[%c0, %c0_1] : memref<32x144xbf16, #tpu.memory_space<vmem>>, vector<32x144xbf16>
    %c0_2 = arith.constant 0 : index
    %c0_3 = arith.constant 0 : index
    %4 = vector.load %arg1[%c0_2, %c0_3] : memref<144x128xbf16, #tpu.memory_space<vmem>>, vector<144x128xbf16>
    %cst = arith.constant dense<0.000000e+00> : vector<32x128xf32>
    %5 = tpu.matmul %3, %4, %cst {dimension_numbers = #tpu.dot_dimension_numbers<[1], [0], [0], [1], [0, 0, 1, 1], [], []>} : vector<32x144xbf16>, vector<144x128xbf16>, vector<32x128xf32> -> vector<32x128xf32>
    %6 = arith.index_cast %arg0 : i32 to index
    %c0_4 = arith.constant 0 : index
    %c0_5 = arith.constant 0 : index
    %7 = vector.load %arg6[%6, %c0_4, %c0_5] : memref<1x32x128xf32, #tpu.memory_space<vmem>>, vector<1x32x128xf32>
    %8 = vector.shape_cast %7 : vector<1x32x128xf32> to vector<32x128xf32>
    %9 = vector.shape_cast %5 : vector<32x128xf32> to vector<1x32x128xf32>
    tpu.vector_store %arg6[%6, %c0_4, %c0_5], %9 {strides = array<i32>} : memref<1x32x128xf32, #tpu.memory_space<vmem>>, vector<1x32x128xf32>,
    %c0_6 = arith.constant 0 : index
    %c0_7 = arith.constant 0 : index
    %10 = vector.load %arg7[%c0_6, %c0_7] : memref<32x1xf32, #tpu.memory_space<vmem>>, vector<32x1xf32>
    %cst_8 = arith.constant dense<0.000000e+00> : vector<32xf32>
    %11 = vector.multi_reduction <add>, %5, %cst_8 [1] : vector<32x128xf32> to vector<32xf32>
    %12 = vector.shape_cast %11 : vector<32xf32> to vector<32x1xf32>
    %13 = arith.addf %10, %12 : vector<32x1xf32>
    %c0_9 = arith.constant 0 : index
    %c0_10 = arith.constant 0 : index
    %14 = vector.load %arg7[%c0_9, %c0_10] : memref<32x1xf32, #tpu.memory_space<vmem>>, vector<32x1xf32>
    tpu.vector_store %arg7[%c0_9, %c0_10], %13 {strides = array<i32>} : memref<32x1xf32, #tpu.memory_space<vmem>>, vector<32x1xf32>,
    %c0_11 = arith.constant 0 : index
    %c0_12 = arith.constant 0 : index
    %15 = vector.load %arg8[%c0_11, %c0_12] : memref<32x1xf32, #tpu.memory_space<vmem>>, vector<32x1xf32>
    %16 = arith.mulf %5, %5 : vector<32x128xf32>
    %cst_13 = arith.constant dense<0.000000e+00> : vector<32xf32>
    %17 = vector.multi_reduction <add>, %16, %cst_13 [1] : vector<32x128xf32> to vector<32xf32>
    %18 = vector.shape_cast %17 : vector<32xf32> to vector<32x1xf32>
    %19 = arith.addf %15, %18 : vector<32x1xf32>
    %c0_14 = arith.constant 0 : index
    %c0_15 = arith.constant 0 : index
    %20 = vector.load %arg8[%c0_14, %c0_15] : memref<32x1xf32, #tpu.memory_space<vmem>>, vector<32x1xf32>
    tpu.vector_store %arg8[%c0_14, %c0_15], %19 {strides = array<i32>} : memref<32x1xf32, #tpu.memory_space<vmem>>, vector<32x1xf32>,
    %c0_i32_16 = arith.constant 0 : i32
    %21 = arith.cmpi eq, %arg0, %c0_i32_16 : i32
    %22 = arith.extui %21 : i1 to i32
    %c0_i32_17 = arith.constant 0 : i32
    %23 = arith.cmpi ne, %22, %c0_i32_17 : i32
    scf.if %23 {
      %c0_18 = arith.constant 0 : index
      %c0_19 = arith.constant 0 : index
      %24 = vector.load %arg7[%c0_18, %c0_19] : memref<32x1xf32, #tpu.memory_space<vmem>>, vector<32x1xf32>
      %cst_20 = arith.constant 3.125000e-02 : f32
      %25 = vector.broadcast %cst_20 : f32 to vector<32x1xf32>
      %26 = arith.mulf %24, %25 : vector<32x1xf32>
      %c0_21 = arith.constant 0 : index
      %c0_22 = arith.constant 0 : index
      %27 = vector.load %arg8[%c0_21, %c0_22] : memref<32x1xf32, #tpu.memory_space<vmem>>, vector<32x1xf32>
      %cst_23 = arith.constant 3.125000e-02 : f32
      %28 = vector.broadcast %cst_23 : f32 to vector<32x1xf32>
      %29 = arith.mulf %27, %28 : vector<32x1xf32>
      %30 = arith.mulf %26, %26 : vector<32x1xf32>
      %31 = arith.subf %29, %30 : vector<32x1xf32>
      %cst_24 = arith.constant 0.000000e+00 : f32
      %32 = vector.broadcast %cst_24 : f32 to vector<32x1xf32>
      %33 = arith.maximumf %31, %32 : vector<32x1xf32>
      %c0_25 = arith.constant 0 : index
      %c0_26 = arith.constant 0 : index
      %34 = vector.load %arg3[%c0_25, %c0_26] : memref<32x1xf32, #tpu.memory_space<vmem>>, vector<32x1xf32>
      %cst_27 = arith.constant 9.99999974E-6 : f32
      %35 = vector.broadcast %cst_27 : f32 to vector<32x1xf32>
      %36 = arith.addf %33, %35 : vector<32x1xf32>
      %37 = math.rsqrt %36 : vector<32x1xf32>
      %38 = arith.mulf %34, %37 : vector<32x1xf32>
      %c0_28 = arith.constant 0 : index
      %c0_29 = arith.constant 0 : index
      %39 = vector.load %arg4[%c0_28, %c0_29] : memref<32x1xf32, #tpu.memory_space<vmem>>, vector<32x1xf32>
      %40 = arith.mulf %26, %38 : vector<32x1xf32>
      %41 = arith.subf %39, %40 : vector<32x1xf32>
      %c0_30 = arith.constant 0 : index
      %c0_31 = arith.constant 0 : index
      %c0_32 = arith.constant 0 : index
      %42 = vector.load %arg6[%c0_30, %c0_31, %c0_32] : memref<1x32x128xf32, #tpu.memory_space<vmem>>, vector<1x32x128xf32>
      %43 = vector.shape_cast %42 : vector<1x32x128xf32> to vector<32x128xf32>
      %44 = vector.broadcast %38 : vector<32x1xf32> to vector<32x128xf32>
      %45 = arith.mulf %43, %44 : vector<32x128xf32>
      %46 = vector.broadcast %41 : vector<32x1xf32> to vector<32x128xf32>
      %47 = arith.addf %45, %46 : vector<32x128xf32>
      %cst_33 = arith.constant 0.000000e+00 : f32
      %48 = vector.broadcast %cst_33 : f32 to vector<32x128xf32>
      %49 = arith.maximumf %47, %48 : vector<32x128xf32>
      %50 = arith.truncf %49 : vector<32x128xf32> to vector<32x128xbf16>
      %c0_34 = arith.constant 0 : index
      %c0_35 = arith.constant 0 : index
      %51 = vector.load %arg5[%c0_34, %c0_35] : memref<32x128xbf16, #tpu.memory_space<vmem>>, vector<32x128xbf16>
      tpu.vector_store %arg5[%c0_34, %c0_35], %50 {strides = array<i32>} : memref<32x128xbf16, #tpu.memory_space<vmem>>, vector<32x128xbf16>,
    } else {
    }
    return
  }
  func.func @transform_0(%arg0: i32) -> (i32, i32) {
    %c0_i32 = arith.constant 0 : i32
    %c0_i32_0 = arith.constant 0 : i32
    return %c0_i32, %arg0 : i32, i32
  }
  func.func @transform_1(%arg0: i32) -> (i32, i32) {
    %c0_i32 = arith.constant 0 : i32
    %c0_i32_0 = arith.constant 0 : i32
    %c0_i32_1 = arith.constant 0 : i32
    return %c0_i32, %c0_i32_0 : i32, i32
  }
  func.func @transform_2(%arg0: i32) -> (i32, i32) {
    %c0_i32 = arith.constant 0 : i32
    %c0_i32_0 = arith.constant 0 : i32
    %c0_i32_1 = arith.constant 0 : i32
    return %c0_i32, %c0_i32_0 : i32, i32
  }
  func.func @transform_3(%arg0: i32) -> (i32, i32) {
    %c0_i32 = arith.constant 0 : i32
    %c0_i32_0 = arith.constant 0 : i32
    %c0_i32_1 = arith.constant 0 : i32
    return %c0_i32, %c0_i32_0 : i32, i32
  }
  func.func @transform_4(%arg0: i32) -> (i32, i32) {
    %c0_i32 = arith.constant 0 : i32
    %c0_i32_0 = arith.constant 0 : i32
    %c0_i32_1 = arith.constant 0 : i32
    return %c0_i32, %c0_i32_0 : i32, i32
  }
}

module attributes {stable_mosaic.version = 11 : i64} {
  func.func @_conv_bn_act_kernel(%arg0: i32, %arg1: memref<288x128xbf16, #tpu.memory_space<vmem>>, %arg2: memref<32x288xbf16, #tpu.memory_space<vmem>>, %arg3: memref<32x1xf32, #tpu.memory_space<vmem>>, %arg4: memref<32x1xf32, #tpu.memory_space<vmem>>, %arg5: memref<32x128xbf16, #tpu.memory_space<vmem>>, %arg6: memref<32x128xbf16, #tpu.memory_space<vmem>>, %arg7: memref<1x32x128xf32, #tpu.memory_space<vmem>>, %arg8: memref<32x1xf32, #tpu.memory_space<vmem>>, %arg9: memref<32x1xf32, #tpu.memory_space<vmem>>) attributes {dimension_semantics = [#tpu.dimension_semantics<arbitrary>], iteration_bounds = array<i64: 1>, scalar_prefetch = 0 : i64, scratch_operands = 3 : i64, tpu.core_type = #tpu.core_type<tc>, window_params = [{transform_indices = @transform_0, window_bounds = array<i64: 288, 128>}, {pipeline_mode = #tpu.pipeline_mode<synchronous>, transform_indices = @transform_1, window_bounds = array<i64: 32, 288>}, {pipeline_mode = #tpu.pipeline_mode<synchronous>, transform_indices = @transform_2, window_bounds = array<i64: 32, 1>}, {pipeline_mode = #tpu.pipeline_mode<synchronous>, transform_indices = @transform_3, window_bounds = array<i64: 32, 1>}, {pipeline_mode = #tpu.pipeline_mode<synchronous>, transform_indices = @transform_4, window_bounds = array<i64: 32, 128>}, {pipeline_mode = #tpu.pipeline_mode<synchronous>, transform_indices = @transform_5, window_bounds = array<i64: 32, 128>}]} {
    %c0_i32 = arith.constant 0 : i32
    %0 = arith.cmpi eq, %arg0, %c0_i32 : i32
    %1 = arith.extui %0 : i1 to i32
    %c0_i32_0 = arith.constant 0 : i32
    %2 = arith.cmpi ne, %1, %c0_i32_0 : i32
    scf.if %2 {
      %cst_18 = arith.constant 0.000000e+00 : f32
      %24 = vector.broadcast %cst_18 : f32 to vector<32x1xf32>
      %c0_19 = arith.constant 0 : index
      %c0_20 = arith.constant 0 : index
      %25 = vector.load %arg8[%c0_19, %c0_20] : memref<32x1xf32, #tpu.memory_space<vmem>>, vector<32x1xf32>
      tpu.vector_store %arg8[%c0_19, %c0_20], %24 {strides = array<i32>} : memref<32x1xf32, #tpu.memory_space<vmem>>, vector<32x1xf32>,
      %cst_21 = arith.constant 0.000000e+00 : f32
      %26 = vector.broadcast %cst_21 : f32 to vector<32x1xf32>
      %c0_22 = arith.constant 0 : index
      %c0_23 = arith.constant 0 : index
      %27 = vector.load %arg9[%c0_22, %c0_23] : memref<32x1xf32, #tpu.memory_space<vmem>>, vector<32x1xf32>
      tpu.vector_store %arg9[%c0_22, %c0_23], %26 {strides = array<i32>} : memref<32x1xf32, #tpu.memory_space<vmem>>, vector<32x1xf32>,
    } else {
    }
    %c0 = arith.constant 0 : index
    %c0_1 = arith.constant 0 : index
    %3 = vector.load %arg2[%c0, %c0_1] : memref<32x288xbf16, #tpu.memory_space<vmem>>, vector<32x288xbf16>
    %c0_2 = arith.constant 0 : index
    %c0_3 = arith.constant 0 : index
    %4 = vector.load %arg1[%c0_2, %c0_3] : memref<288x128xbf16, #tpu.memory_space<vmem>>, vector<288x128xbf16>
    %cst = arith.constant dense<0.000000e+00> : vector<32x128xf32>
    %5 = tpu.matmul %3, %4, %cst {dimension_numbers = #tpu.dot_dimension_numbers<[1], [0], [0], [1], [0, 0, 1, 1], [], []>} : vector<32x288xbf16>, vector<288x128xbf16>, vector<32x128xf32> -> vector<32x128xf32>
    %6 = arith.index_cast %arg0 : i32 to index
    %c0_4 = arith.constant 0 : index
    %c0_5 = arith.constant 0 : index
    %7 = vector.load %arg7[%6, %c0_4, %c0_5] : memref<1x32x128xf32, #tpu.memory_space<vmem>>, vector<1x32x128xf32>
    %8 = vector.shape_cast %7 : vector<1x32x128xf32> to vector<32x128xf32>
    %9 = vector.shape_cast %5 : vector<32x128xf32> to vector<1x32x128xf32>
    tpu.vector_store %arg7[%6, %c0_4, %c0_5], %9 {strides = array<i32>} : memref<1x32x128xf32, #tpu.memory_space<vmem>>, vector<1x32x128xf32>,
    %c0_6 = arith.constant 0 : index
    %c0_7 = arith.constant 0 : index
    %10 = vector.load %arg8[%c0_6, %c0_7] : memref<32x1xf32, #tpu.memory_space<vmem>>, vector<32x1xf32>
    %cst_8 = arith.constant dense<0.000000e+00> : vector<32xf32>
    %11 = vector.multi_reduction <add>, %5, %cst_8 [1] : vector<32x128xf32> to vector<32xf32>
    %12 = vector.shape_cast %11 : vector<32xf32> to vector<32x1xf32>
    %13 = arith.addf %10, %12 : vector<32x1xf32>
    %c0_9 = arith.constant 0 : index
    %c0_10 = arith.constant 0 : index
    %14 = vector.load %arg8[%c0_9, %c0_10] : memref<32x1xf32, #tpu.memory_space<vmem>>, vector<32x1xf32>
    tpu.vector_store %arg8[%c0_9, %c0_10], %13 {strides = array<i32>} : memref<32x1xf32, #tpu.memory_space<vmem>>, vector<32x1xf32>,
    %c0_11 = arith.constant 0 : index
    %c0_12 = arith.constant 0 : index
    %15 = vector.load %arg9[%c0_11, %c0_12] : memref<32x1xf32, #tpu.memory_space<vmem>>, vector<32x1xf32>
    %16 = arith.mulf %5, %5 : vector<32x128xf32>
    %cst_13 = arith.constant dense<0.000000e+00> : vector<32xf32>
    %17 = vector.multi_reduction <add>, %16, %cst_13 [1] : vector<32x128xf32> to vector<32xf32>
    %18 = vector.shape_cast %17 : vector<32xf32> to vector<32x1xf32>
    %19 = arith.addf %15, %18 : vector<32x1xf32>
    %c0_14 = arith.constant 0 : index
    %c0_15 = arith.constant 0 : index
    %20 = vector.load %arg9[%c0_14, %c0_15] : memref<32x1xf32, #tpu.memory_space<vmem>>, vector<32x1xf32>
    tpu.vector_store %arg9[%c0_14, %c0_15], %19 {strides = array<i32>} : memref<32x1xf32, #tpu.memory_space<vmem>>, vector<32x1xf32>,
    %c0_i32_16 = arith.constant 0 : i32
    %21 = arith.cmpi eq, %arg0, %c0_i32_16 : i32
    %22 = arith.extui %21 : i1 to i32
    %c0_i32_17 = arith.constant 0 : i32
    %23 = arith.cmpi ne, %22, %c0_i32_17 : i32
    scf.if %23 {
      %c0_18 = arith.constant 0 : index
      %c0_19 = arith.constant 0 : index
      %24 = vector.load %arg8[%c0_18, %c0_19] : memref<32x1xf32, #tpu.memory_space<vmem>>, vector<32x1xf32>
      %cst_20 = arith.constant 3.125000e-02 : f32
      %25 = vector.broadcast %cst_20 : f32 to vector<32x1xf32>
      %26 = arith.mulf %24, %25 : vector<32x1xf32>
      %c0_21 = arith.constant 0 : index
      %c0_22 = arith.constant 0 : index
      %27 = vector.load %arg9[%c0_21, %c0_22] : memref<32x1xf32, #tpu.memory_space<vmem>>, vector<32x1xf32>
      %cst_23 = arith.constant 3.125000e-02 : f32
      %28 = vector.broadcast %cst_23 : f32 to vector<32x1xf32>
      %29 = arith.mulf %27, %28 : vector<32x1xf32>
      %30 = arith.mulf %26, %26 : vector<32x1xf32>
      %31 = arith.subf %29, %30 : vector<32x1xf32>
      %cst_24 = arith.constant 0.000000e+00 : f32
      %32 = vector.broadcast %cst_24 : f32 to vector<32x1xf32>
      %33 = arith.maximumf %31, %32 : vector<32x1xf32>
      %c0_25 = arith.constant 0 : index
      %c0_26 = arith.constant 0 : index
      %34 = vector.load %arg3[%c0_25, %c0_26] : memref<32x1xf32, #tpu.memory_space<vmem>>, vector<32x1xf32>
      %cst_27 = arith.constant 9.99999974E-6 : f32
      %35 = vector.broadcast %cst_27 : f32 to vector<32x1xf32>
      %36 = arith.addf %33, %35 : vector<32x1xf32>
      %37 = math.rsqrt %36 : vector<32x1xf32>
      %38 = arith.mulf %34, %37 : vector<32x1xf32>
      %c0_28 = arith.constant 0 : index
      %c0_29 = arith.constant 0 : index
      %39 = vector.load %arg4[%c0_28, %c0_29] : memref<32x1xf32, #tpu.memory_space<vmem>>, vector<32x1xf32>
      %40 = arith.mulf %26, %38 : vector<32x1xf32>
      %41 = arith.subf %39, %40 : vector<32x1xf32>
      %c0_30 = arith.constant 0 : index
      %c0_31 = arith.constant 0 : index
      %c0_32 = arith.constant 0 : index
      %42 = vector.load %arg7[%c0_30, %c0_31, %c0_32] : memref<1x32x128xf32, #tpu.memory_space<vmem>>, vector<1x32x128xf32>
      %43 = vector.shape_cast %42 : vector<1x32x128xf32> to vector<32x128xf32>
      %44 = vector.broadcast %38 : vector<32x1xf32> to vector<32x128xf32>
      %45 = arith.mulf %43, %44 : vector<32x128xf32>
      %46 = vector.broadcast %41 : vector<32x1xf32> to vector<32x128xf32>
      %47 = arith.addf %45, %46 : vector<32x128xf32>
      %c0_33 = arith.constant 0 : index
      %c0_34 = arith.constant 0 : index
      %48 = vector.load %arg5[%c0_33, %c0_34] : memref<32x128xbf16, #tpu.memory_space<vmem>>, vector<32x128xbf16>
      %49 = arith.extf %48 : vector<32x128xbf16> to vector<32x128xf32>
      %50 = arith.addf %47, %49 : vector<32x128xf32>
      %cst_35 = arith.constant 0.000000e+00 : f32
      %51 = vector.broadcast %cst_35 : f32 to vector<32x128xf32>
      %52 = arith.maximumf %50, %51 : vector<32x128xf32>
      %53 = arith.truncf %52 : vector<32x128xf32> to vector<32x128xbf16>
      %c0_36 = arith.constant 0 : index
      %c0_37 = arith.constant 0 : index
      %54 = vector.load %arg6[%c0_36, %c0_37] : memref<32x128xbf16, #tpu.memory_space<vmem>>, vector<32x128xbf16>
      tpu.vector_store %arg6[%c0_36, %c0_37], %53 {strides = array<i32>} : memref<32x128xbf16, #tpu.memory_space<vmem>>, vector<32x128xbf16>,
    } else {
    }
    return
  }
  func.func @transform_0(%arg0: i32) -> (i32, i32) {
    %c0_i32 = arith.constant 0 : i32
    %c0_i32_0 = arith.constant 0 : i32
    return %c0_i32, %arg0 : i32, i32
  }
  func.func @transform_1(%arg0: i32) -> (i32, i32) {
    %c0_i32 = arith.constant 0 : i32
    %c0_i32_0 = arith.constant 0 : i32
    %c0_i32_1 = arith.constant 0 : i32
    return %c0_i32, %c0_i32_0 : i32, i32
  }
  func.func @transform_2(%arg0: i32) -> (i32, i32) {
    %c0_i32 = arith.constant 0 : i32
    %c0_i32_0 = arith.constant 0 : i32
    %c0_i32_1 = arith.constant 0 : i32
    return %c0_i32, %c0_i32_0 : i32, i32
  }
  func.func @transform_3(%arg0: i32) -> (i32, i32) {
    %c0_i32 = arith.constant 0 : i32
    %c0_i32_0 = arith.constant 0 : i32
    %c0_i32_1 = arith.constant 0 : i32
    return %c0_i32, %c0_i32_0 : i32, i32
  }
  func.func @transform_4(%arg0: i32) -> (i32, i32) {
    %c0_i32 = arith.constant 0 : i32
    %c0_i32_0 = arith.constant 0 : i32
    %c0_i32_1 = arith.constant 0 : i32
    return %c0_i32, %c0_i32_0 : i32, i32
  }
  func.func @transform_5(%arg0: i32) -> (i32, i32) {
    %c0_i32 = arith.constant 0 : i32
    %c0_i32_0 = arith.constant 0 : i32
    %c0_i32_1 = arith.constant 0 : i32
    return %c0_i32, %c0_i32_0 : i32, i32
  }
}

module attributes {stable_mosaic.version = 11 : i64} {
  func.func @_conv_bn_act_kernel(%arg0: i32, %arg1: memref<16x128xbf16, #tpu.memory_space<vmem>>, %arg2: memref<32x16xbf16, #tpu.memory_space<vmem>>, %arg3: memref<32x1xf32, #tpu.memory_space<vmem>>, %arg4: memref<32x1xf32, #tpu.memory_space<vmem>>, %arg5: memref<32x128xbf16, #tpu.memory_space<vmem>>, %arg6: memref<1x32x128xf32, #tpu.memory_space<vmem>>, %arg7: memref<32x1xf32, #tpu.memory_space<vmem>>, %arg8: memref<32x1xf32, #tpu.memory_space<vmem>>) attributes {dimension_semantics = [#tpu.dimension_semantics<arbitrary>], iteration_bounds = array<i64: 1>, scalar_prefetch = 0 : i64, scratch_operands = 3 : i64, tpu.core_type = #tpu.core_type<tc>, window_params = [{transform_indices = @transform_0, window_bounds = array<i64: 16, 128>}, {pipeline_mode = #tpu.pipeline_mode<synchronous>, transform_indices = @transform_1, window_bounds = array<i64: 32, 16>}, {pipeline_mode = #tpu.pipeline_mode<synchronous>, transform_indices = @transform_2, window_bounds = array<i64: 32, 1>}, {pipeline_mode = #tpu.pipeline_mode<synchronous>, transform_indices = @transform_3, window_bounds = array<i64: 32, 1>}, {pipeline_mode = #tpu.pipeline_mode<synchronous>, transform_indices = @transform_4, window_bounds = array<i64: 32, 128>}]} {
    %c0_i32 = arith.constant 0 : i32
    %0 = arith.cmpi eq, %arg0, %c0_i32 : i32
    %1 = arith.extui %0 : i1 to i32
    %c0_i32_0 = arith.constant 0 : i32
    %2 = arith.cmpi ne, %1, %c0_i32_0 : i32
    scf.if %2 {
      %cst_18 = arith.constant 0.000000e+00 : f32
      %24 = vector.broadcast %cst_18 : f32 to vector<32x1xf32>
      %c0_19 = arith.constant 0 : index
      %c0_20 = arith.constant 0 : index
      %25 = vector.load %arg7[%c0_19, %c0_20] : memref<32x1xf32, #tpu.memory_space<vmem>>, vector<32x1xf32>
      tpu.vector_store %arg7[%c0_19, %c0_20], %24 {strides = array<i32>} : memref<32x1xf32, #tpu.memory_space<vmem>>, vector<32x1xf32>,
      %cst_21 = arith.constant 0.000000e+00 : f32
      %26 = vector.broadcast %cst_21 : f32 to vector<32x1xf32>
      %c0_22 = arith.constant 0 : index
      %c0_23 = arith.constant 0 : index
      %27 = vector.load %arg8[%c0_22, %c0_23] : memref<32x1xf32, #tpu.memory_space<vmem>>, vector<32x1xf32>
      tpu.vector_store %arg8[%c0_22, %c0_23], %26 {strides = array<i32>} : memref<32x1xf32, #tpu.memory_space<vmem>>, vector<32x1xf32>,
    } else {
    }
    %c0 = arith.constant 0 : index
    %c0_1 = arith.constant 0 : index
    %3 = vector.load %arg2[%c0, %c0_1] : memref<32x16xbf16, #tpu.memory_space<vmem>>, vector<32x16xbf16>
    %c0_2 = arith.constant 0 : index
    %c0_3 = arith.constant 0 : index
    %4 = vector.load %arg1[%c0_2, %c0_3] : memref<16x128xbf16, #tpu.memory_space<vmem>>, vector<16x128xbf16>
    %cst = arith.constant dense<0.000000e+00> : vector<32x128xf32>
    %5 = tpu.matmul %3, %4, %cst {dimension_numbers = #tpu.dot_dimension_numbers<[1], [0], [0], [1], [0, 0, 1, 1], [], []>} : vector<32x16xbf16>, vector<16x128xbf16>, vector<32x128xf32> -> vector<32x128xf32>
    %6 = arith.index_cast %arg0 : i32 to index
    %c0_4 = arith.constant 0 : index
    %c0_5 = arith.constant 0 : index
    %7 = vector.load %arg6[%6, %c0_4, %c0_5] : memref<1x32x128xf32, #tpu.memory_space<vmem>>, vector<1x32x128xf32>
    %8 = vector.shape_cast %7 : vector<1x32x128xf32> to vector<32x128xf32>
    %9 = vector.shape_cast %5 : vector<32x128xf32> to vector<1x32x128xf32>
    tpu.vector_store %arg6[%6, %c0_4, %c0_5], %9 {strides = array<i32>} : memref<1x32x128xf32, #tpu.memory_space<vmem>>, vector<1x32x128xf32>,
    %c0_6 = arith.constant 0 : index
    %c0_7 = arith.constant 0 : index
    %10 = vector.load %arg7[%c0_6, %c0_7] : memref<32x1xf32, #tpu.memory_space<vmem>>, vector<32x1xf32>
    %cst_8 = arith.constant dense<0.000000e+00> : vector<32xf32>
    %11 = vector.multi_reduction <add>, %5, %cst_8 [1] : vector<32x128xf32> to vector<32xf32>
    %12 = vector.shape_cast %11 : vector<32xf32> to vector<32x1xf32>
    %13 = arith.addf %10, %12 : vector<32x1xf32>
    %c0_9 = arith.constant 0 : index
    %c0_10 = arith.constant 0 : index
    %14 = vector.load %arg7[%c0_9, %c0_10] : memref<32x1xf32, #tpu.memory_space<vmem>>, vector<32x1xf32>
    tpu.vector_store %arg7[%c0_9, %c0_10], %13 {strides = array<i32>} : memref<32x1xf32, #tpu.memory_space<vmem>>, vector<32x1xf32>,
    %c0_11 = arith.constant 0 : index
    %c0_12 = arith.constant 0 : index
    %15 = vector.load %arg8[%c0_11, %c0_12] : memref<32x1xf32, #tpu.memory_space<vmem>>, vector<32x1xf32>
    %16 = arith.mulf %5, %5 : vector<32x128xf32>
    %cst_13 = arith.constant dense<0.000000e+00> : vector<32xf32>
    %17 = vector.multi_reduction <add>, %16, %cst_13 [1] : vector<32x128xf32> to vector<32xf32>
    %18 = vector.shape_cast %17 : vector<32xf32> to vector<32x1xf32>
    %19 = arith.addf %15, %18 : vector<32x1xf32>
    %c0_14 = arith.constant 0 : index
    %c0_15 = arith.constant 0 : index
    %20 = vector.load %arg8[%c0_14, %c0_15] : memref<32x1xf32, #tpu.memory_space<vmem>>, vector<32x1xf32>
    tpu.vector_store %arg8[%c0_14, %c0_15], %19 {strides = array<i32>} : memref<32x1xf32, #tpu.memory_space<vmem>>, vector<32x1xf32>,
    %c0_i32_16 = arith.constant 0 : i32
    %21 = arith.cmpi eq, %arg0, %c0_i32_16 : i32
    %22 = arith.extui %21 : i1 to i32
    %c0_i32_17 = arith.constant 0 : i32
    %23 = arith.cmpi ne, %22, %c0_i32_17 : i32
    scf.if %23 {
      %c0_18 = arith.constant 0 : index
      %c0_19 = arith.constant 0 : index
      %24 = vector.load %arg7[%c0_18, %c0_19] : memref<32x1xf32, #tpu.memory_space<vmem>>, vector<32x1xf32>
      %cst_20 = arith.constant 3.125000e-02 : f32
      %25 = vector.broadcast %cst_20 : f32 to vector<32x1xf32>
      %26 = arith.mulf %24, %25 : vector<32x1xf32>
      %c0_21 = arith.constant 0 : index
      %c0_22 = arith.constant 0 : index
      %27 = vector.load %arg8[%c0_21, %c0_22] : memref<32x1xf32, #tpu.memory_space<vmem>>, vector<32x1xf32>
      %cst_23 = arith.constant 3.125000e-02 : f32
      %28 = vector.broadcast %cst_23 : f32 to vector<32x1xf32>
      %29 = arith.mulf %27, %28 : vector<32x1xf32>
      %30 = arith.mulf %26, %26 : vector<32x1xf32>
      %31 = arith.subf %29, %30 : vector<32x1xf32>
      %cst_24 = arith.constant 0.000000e+00 : f32
      %32 = vector.broadcast %cst_24 : f32 to vector<32x1xf32>
      %33 = arith.maximumf %31, %32 : vector<32x1xf32>
      %c0_25 = arith.constant 0 : index
      %c0_26 = arith.constant 0 : index
      %34 = vector.load %arg3[%c0_25, %c0_26] : memref<32x1xf32, #tpu.memory_space<vmem>>, vector<32x1xf32>
      %cst_27 = arith.constant 9.99999974E-6 : f32
      %35 = vector.broadcast %cst_27 : f32 to vector<32x1xf32>
      %36 = arith.addf %33, %35 : vector<32x1xf32>
      %37 = math.rsqrt %36 : vector<32x1xf32>
      %38 = arith.mulf %34, %37 : vector<32x1xf32>
      %c0_28 = arith.constant 0 : index
      %c0_29 = arith.constant 0 : index
      %39 = vector.load %arg4[%c0_28, %c0_29] : memref<32x1xf32, #tpu.memory_space<vmem>>, vector<32x1xf32>
      %40 = arith.mulf %26, %38 : vector<32x1xf32>
      %41 = arith.subf %39, %40 : vector<32x1xf32>
      %c0_30 = arith.constant 0 : index
      %c0_31 = arith.constant 0 : index
      %c0_32 = arith.constant 0 : index
      %42 = vector.load %arg6[%c0_30, %c0_31, %c0_32] : memref<1x32x128xf32, #tpu.memory_space<vmem>>, vector<1x32x128xf32>
      %43 = vector.shape_cast %42 : vector<1x32x128xf32> to vector<32x128xf32>
      %44 = vector.broadcast %38 : vector<32x1xf32> to vector<32x128xf32>
      %45 = arith.mulf %43, %44 : vector<32x128xf32>
      %46 = vector.broadcast %41 : vector<32x1xf32> to vector<32x128xf32>
      %47 = arith.addf %45, %46 : vector<32x128xf32>
      %48 = arith.truncf %47 : vector<32x128xf32> to vector<32x128xbf16>
      %c0_33 = arith.constant 0 : index
      %c0_34 = arith.constant 0 : index
      %49 = vector.load %arg5[%c0_33, %c0_34] : memref<32x128xbf16, #tpu.memory_space<vmem>>, vector<32x128xbf16>
      tpu.vector_store %arg5[%c0_33, %c0_34], %48 {strides = array<i32>} : memref<32x128xbf16, #tpu.memory_space<vmem>>, vector<32x128xbf16>,
    } else {
    }
    return
  }
  func.func @transform_0(%arg0: i32) -> (i32, i32) {
    %c0_i32 = arith.constant 0 : i32
    %c0_i32_0 = arith.constant 0 : i32
    return %c0_i32, %arg0 : i32, i32
  }
  func.func @transform_1(%arg0: i32) -> (i32, i32) {
    %c0_i32 = arith.constant 0 : i32
    %c0_i32_0 = arith.constant 0 : i32
    %c0_i32_1 = arith.constant 0 : i32
    return %c0_i32, %c0_i32_0 : i32, i32
  }
  func.func @transform_2(%arg0: i32) -> (i32, i32) {
    %c0_i32 = arith.constant 0 : i32
    %c0_i32_0 = arith.constant 0 : i32
    %c0_i32_1 = arith.constant 0 : i32
    return %c0_i32, %c0_i32_0 : i32, i32
  }
  func.func @transform_3(%arg0: i32) -> (i32, i32) {
    %c0_i32 = arith.constant 0 : i32
    %c0_i32_0 = arith.constant 0 : i32
    %c0_i32_1 = arith.constant 0 : i32
    return %c0_i32, %c0_i32_0 : i32, i32
  }
  func.func @transform_4(%arg0: i32) -> (i32, i32) {
    %c0_i32 = arith.constant 0 : i32
    %c0_i32_0 = arith.constant 0 : i32
    %c0_i32_1 = arith.constant 0 : i32
    return %c0_i32, %c0_i32_0 : i32, i32
  }
}

module attributes {stable_mosaic.version = 11 : i64} {
  func.func @_conv_bn_act_kernel(%arg0: i32, %arg1: memref<288x128xbf16, #tpu.memory_space<vmem>>, %arg2: memref<64x288xbf16, #tpu.memory_space<vmem>>, %arg3: memref<64x1xf32, #tpu.memory_space<vmem>>, %arg4: memref<64x1xf32, #tpu.memory_space<vmem>>, %arg5: memref<64x128xbf16, #tpu.memory_space<vmem>>, %arg6: memref<1x64x128xf32, #tpu.memory_space<vmem>>, %arg7: memref<64x1xf32, #tpu.memory_space<vmem>>, %arg8: memref<64x1xf32, #tpu.memory_space<vmem>>) attributes {dimension_semantics = [#tpu.dimension_semantics<arbitrary>], iteration_bounds = array<i64: 1>, scalar_prefetch = 0 : i64, scratch_operands = 3 : i64, tpu.core_type = #tpu.core_type<tc>, window_params = [{transform_indices = @transform_0, window_bounds = array<i64: 288, 128>}, {pipeline_mode = #tpu.pipeline_mode<synchronous>, transform_indices = @transform_1, window_bounds = array<i64: 64, 288>}, {pipeline_mode = #tpu.pipeline_mode<synchronous>, transform_indices = @transform_2, window_bounds = array<i64: 64, 1>}, {pipeline_mode = #tpu.pipeline_mode<synchronous>, transform_indices = @transform_3, window_bounds = array<i64: 64, 1>}, {pipeline_mode = #tpu.pipeline_mode<synchronous>, transform_indices = @transform_4, window_bounds = array<i64: 64, 128>}]} {
    %c0_i32 = arith.constant 0 : i32
    %0 = arith.cmpi eq, %arg0, %c0_i32 : i32
    %1 = arith.extui %0 : i1 to i32
    %c0_i32_0 = arith.constant 0 : i32
    %2 = arith.cmpi ne, %1, %c0_i32_0 : i32
    scf.if %2 {
      %cst_18 = arith.constant 0.000000e+00 : f32
      %24 = vector.broadcast %cst_18 : f32 to vector<64x1xf32>
      %c0_19 = arith.constant 0 : index
      %c0_20 = arith.constant 0 : index
      %25 = vector.load %arg7[%c0_19, %c0_20] : memref<64x1xf32, #tpu.memory_space<vmem>>, vector<64x1xf32>
      tpu.vector_store %arg7[%c0_19, %c0_20], %24 {strides = array<i32>} : memref<64x1xf32, #tpu.memory_space<vmem>>, vector<64x1xf32>,
      %cst_21 = arith.constant 0.000000e+00 : f32
      %26 = vector.broadcast %cst_21 : f32 to vector<64x1xf32>
      %c0_22 = arith.constant 0 : index
      %c0_23 = arith.constant 0 : index
      %27 = vector.load %arg8[%c0_22, %c0_23] : memref<64x1xf32, #tpu.memory_space<vmem>>, vector<64x1xf32>
      tpu.vector_store %arg8[%c0_22, %c0_23], %26 {strides = array<i32>} : memref<64x1xf32, #tpu.memory_space<vmem>>, vector<64x1xf32>,
    } else {
    }
    %c0 = arith.constant 0 : index
    %c0_1 = arith.constant 0 : index
    %3 = vector.load %arg2[%c0, %c0_1] : memref<64x288xbf16, #tpu.memory_space<vmem>>, vector<64x288xbf16>
    %c0_2 = arith.constant 0 : index
    %c0_3 = arith.constant 0 : index
    %4 = vector.load %arg1[%c0_2, %c0_3] : memref<288x128xbf16, #tpu.memory_space<vmem>>, vector<288x128xbf16>
    %cst = arith.constant dense<0.000000e+00> : vector<64x128xf32>
    %5 = tpu.matmul %3, %4, %cst {dimension_numbers = #tpu.dot_dimension_numbers<[1], [0], [0], [1], [0, 0, 1, 1], [], []>} : vector<64x288xbf16>, vector<288x128xbf16>, vector<64x128xf32> -> vector<64x128xf32>
    %6 = arith.index_cast %arg0 : i32 to index
    %c0_4 = arith.constant 0 : index
    %c0_5 = arith.constant 0 : index
    %7 = vector.load %arg6[%6, %c0_4, %c0_5] : memref<1x64x128xf32, #tpu.memory_space<vmem>>, vector<1x64x128xf32>
    %8 = vector.shape_cast %7 : vector<1x64x128xf32> to vector<64x128xf32>
    %9 = vector.shape_cast %5 : vector<64x128xf32> to vector<1x64x128xf32>
    tpu.vector_store %arg6[%6, %c0_4, %c0_5], %9 {strides = array<i32>} : memref<1x64x128xf32, #tpu.memory_space<vmem>>, vector<1x64x128xf32>,
    %c0_6 = arith.constant 0 : index
    %c0_7 = arith.constant 0 : index
    %10 = vector.load %arg7[%c0_6, %c0_7] : memref<64x1xf32, #tpu.memory_space<vmem>>, vector<64x1xf32>
    %cst_8 = arith.constant dense<0.000000e+00> : vector<64xf32>
    %11 = vector.multi_reduction <add>, %5, %cst_8 [1] : vector<64x128xf32> to vector<64xf32>
    %12 = vector.shape_cast %11 : vector<64xf32> to vector<64x1xf32>
    %13 = arith.addf %10, %12 : vector<64x1xf32>
    %c0_9 = arith.constant 0 : index
    %c0_10 = arith.constant 0 : index
    %14 = vector.load %arg7[%c0_9, %c0_10] : memref<64x1xf32, #tpu.memory_space<vmem>>, vector<64x1xf32>
    tpu.vector_store %arg7[%c0_9, %c0_10], %13 {strides = array<i32>} : memref<64x1xf32, #tpu.memory_space<vmem>>, vector<64x1xf32>,
    %c0_11 = arith.constant 0 : index
    %c0_12 = arith.constant 0 : index
    %15 = vector.load %arg8[%c0_11, %c0_12] : memref<64x1xf32, #tpu.memory_space<vmem>>, vector<64x1xf32>
    %16 = arith.mulf %5, %5 : vector<64x128xf32>
    %cst_13 = arith.constant dense<0.000000e+00> : vector<64xf32>
    %17 = vector.multi_reduction <add>, %16, %cst_13 [1] : vector<64x128xf32> to vector<64xf32>
    %18 = vector.shape_cast %17 : vector<64xf32> to vector<64x1xf32>
    %19 = arith.addf %15, %18 : vector<64x1xf32>
    %c0_14 = arith.constant 0 : index
    %c0_15 = arith.constant 0 : index
    %20 = vector.load %arg8[%c0_14, %c0_15] : memref<64x1xf32, #tpu.memory_space<vmem>>, vector<64x1xf32>
    tpu.vector_store %arg8[%c0_14, %c0_15], %19 {strides = array<i32>} : memref<64x1xf32, #tpu.memory_space<vmem>>, vector<64x1xf32>,
    %c0_i32_16 = arith.constant 0 : i32
    %21 = arith.cmpi eq, %arg0, %c0_i32_16 : i32
    %22 = arith.extui %21 : i1 to i32
    %c0_i32_17 = arith.constant 0 : i32
    %23 = arith.cmpi ne, %22, %c0_i32_17 : i32
    scf.if %23 {
      %c0_18 = arith.constant 0 : index
      %c0_19 = arith.constant 0 : index
      %24 = vector.load %arg7[%c0_18, %c0_19] : memref<64x1xf32, #tpu.memory_space<vmem>>, vector<64x1xf32>
      %cst_20 = arith.constant 1.250000e-01 : f32
      %25 = vector.broadcast %cst_20 : f32 to vector<64x1xf32>
      %26 = arith.mulf %24, %25 : vector<64x1xf32>
      %c0_21 = arith.constant 0 : index
      %c0_22 = arith.constant 0 : index
      %27 = vector.load %arg8[%c0_21, %c0_22] : memref<64x1xf32, #tpu.memory_space<vmem>>, vector<64x1xf32>
      %cst_23 = arith.constant 1.250000e-01 : f32
      %28 = vector.broadcast %cst_23 : f32 to vector<64x1xf32>
      %29 = arith.mulf %27, %28 : vector<64x1xf32>
      %30 = arith.mulf %26, %26 : vector<64x1xf32>
      %31 = arith.subf %29, %30 : vector<64x1xf32>
      %cst_24 = arith.constant 0.000000e+00 : f32
      %32 = vector.broadcast %cst_24 : f32 to vector<64x1xf32>
      %33 = arith.maximumf %31, %32 : vector<64x1xf32>
      %c0_25 = arith.constant 0 : index
      %c0_26 = arith.constant 0 : index
      %34 = vector.load %arg3[%c0_25, %c0_26] : memref<64x1xf32, #tpu.memory_space<vmem>>, vector<64x1xf32>
      %cst_27 = arith.constant 9.99999974E-6 : f32
      %35 = vector.broadcast %cst_27 : f32 to vector<64x1xf32>
      %36 = arith.addf %33, %35 : vector<64x1xf32>
      %37 = math.rsqrt %36 : vector<64x1xf32>
      %38 = arith.mulf %34, %37 : vector<64x1xf32>
      %c0_28 = arith.constant 0 : index
      %c0_29 = arith.constant 0 : index
      %39 = vector.load %arg4[%c0_28, %c0_29] : memref<64x1xf32, #tpu.memory_space<vmem>>, vector<64x1xf32>
      %40 = arith.mulf %26, %38 : vector<64x1xf32>
      %41 = arith.subf %39, %40 : vector<64x1xf32>
      %c0_30 = arith.constant 0 : index
      %c0_31 = arith.constant 0 : index
      %c0_32 = arith.constant 0 : index
      %42 = vector.load %arg6[%c0_30, %c0_31, %c0_32] : memref<1x64x128xf32, #tpu.memory_space<vmem>>, vector<1x64x128xf32>
      %43 = vector.shape_cast %42 : vector<1x64x128xf32> to vector<64x128xf32>
      %44 = vector.broadcast %38 : vector<64x1xf32> to vector<64x128xf32>
      %45 = arith.mulf %43, %44 : vector<64x128xf32>
      %46 = vector.broadcast %41 : vector<64x1xf32> to vector<64x128xf32>
      %47 = arith.addf %45, %46 : vector<64x128xf32>
      %cst_33 = arith.constant 0.000000e+00 : f32
      %48 = vector.broadcast %cst_33 : f32 to vector<64x128xf32>
      %49 = arith.maximumf %47, %48 : vector<64x128xf32>
      %50 = arith.truncf %49 : vector<64x128xf32> to vector<64x128xbf16>
      %c0_34 = arith.constant 0 : index
      %c0_35 = arith.constant 0 : index
      %51 = vector.load %arg5[%c0_34, %c0_35] : memref<64x128xbf16, #tpu.memory_space<vmem>>, vector<64x128xbf16>
      tpu.vector_store %arg5[%c0_34, %c0_35], %50 {strides = array<i32>} : memref<64x128xbf16, #tpu.memory_space<vmem>>, vector<64x128xbf16>,
    } else {
    }
    return
  }
  func.func @transform_0(%arg0: i32) -> (i32, i32) {
    %c0_i32 = arith.constant 0 : i32
    %c0_i32_0 = arith.constant 0 : i32
    return %c0_i32, %arg0 : i32, i32
  }
  func.func @transform_1(%arg0: i32) -> (i32, i32) {
    %c0_i32 = arith.constant 0 : i32
    %c0_i32_0 = arith.constant 0 : i32
    %c0_i32_1 = arith.constant 0 : i32
    return %c0_i32, %c0_i32_0 : i32, i32
  }
  func.func @transform_2(%arg0: i32) -> (i32, i32) {
    %c0_i32 = arith.constant 0 : i32
    %c0_i32_0 = arith.constant 0 : i32
    %c0_i32_1 = arith.constant 0 : i32
    return %c0_i32, %c0_i32_0 : i32, i32
  }
  func.func @transform_3(%arg0: i32) -> (i32, i32) {
    %c0_i32 = arith.constant 0 : i32
    %c0_i32_0 = arith.constant 0 : i32
    %c0_i32_1 = arith.constant 0 : i32
    return %c0_i32, %c0_i32_0 : i32, i32
  }
  func.func @transform_4(%arg0: i32) -> (i32, i32) {
    %c0_i32 = arith.constant 0 : i32
    %c0_i32_0 = arith.constant 0 : i32
    %c0_i32_1 = arith.constant 0 : i32
    return %c0_i32, %c0_i32_0 : i32, i32
  }
}

module attributes {stable_mosaic.version = 11 : i64} {
  func.func @_conv_bn_act_kernel(%arg0: i32, %arg1: memref<32x128xbf16, #tpu.memory_space<vmem>>, %arg2: memref<64x32xbf16, #tpu.memory_space<vmem>>, %arg3: memref<64x1xf32, #tpu.memory_space<vmem>>, %arg4: memref<64x1xf32, #tpu.memory_space<vmem>>, %arg5: memref<64x128xbf16, #tpu.memory_space<vmem>>, %arg6: memref<1x64x128xf32, #tpu.memory_space<vmem>>, %arg7: memref<64x1xf32, #tpu.memory_space<vmem>>, %arg8: memref<64x1xf32, #tpu.memory_space<vmem>>) attributes {dimension_semantics = [#tpu.dimension_semantics<arbitrary>], iteration_bounds = array<i64: 1>, scalar_prefetch = 0 : i64, scratch_operands = 3 : i64, tpu.core_type = #tpu.core_type<tc>, window_params = [{transform_indices = @transform_0, window_bounds = array<i64: 32, 128>}, {pipeline_mode = #tpu.pipeline_mode<synchronous>, transform_indices = @transform_1, window_bounds = array<i64: 64, 32>}, {pipeline_mode = #tpu.pipeline_mode<synchronous>, transform_indices = @transform_2, window_bounds = array<i64: 64, 1>}, {pipeline_mode = #tpu.pipeline_mode<synchronous>, transform_indices = @transform_3, window_bounds = array<i64: 64, 1>}, {pipeline_mode = #tpu.pipeline_mode<synchronous>, transform_indices = @transform_4, window_bounds = array<i64: 64, 128>}]} {
    %c0_i32 = arith.constant 0 : i32
    %0 = arith.cmpi eq, %arg0, %c0_i32 : i32
    %1 = arith.extui %0 : i1 to i32
    %c0_i32_0 = arith.constant 0 : i32
    %2 = arith.cmpi ne, %1, %c0_i32_0 : i32
    scf.if %2 {
      %cst_18 = arith.constant 0.000000e+00 : f32
      %24 = vector.broadcast %cst_18 : f32 to vector<64x1xf32>
      %c0_19 = arith.constant 0 : index
      %c0_20 = arith.constant 0 : index
      %25 = vector.load %arg7[%c0_19, %c0_20] : memref<64x1xf32, #tpu.memory_space<vmem>>, vector<64x1xf32>
      tpu.vector_store %arg7[%c0_19, %c0_20], %24 {strides = array<i32>} : memref<64x1xf32, #tpu.memory_space<vmem>>, vector<64x1xf32>,
      %cst_21 = arith.constant 0.000000e+00 : f32
      %26 = vector.broadcast %cst_21 : f32 to vector<64x1xf32>
      %c0_22 = arith.constant 0 : index
      %c0_23 = arith.constant 0 : index
      %27 = vector.load %arg8[%c0_22, %c0_23] : memref<64x1xf32, #tpu.memory_space<vmem>>, vector<64x1xf32>
      tpu.vector_store %arg8[%c0_22, %c0_23], %26 {strides = array<i32>} : memref<64x1xf32, #tpu.memory_space<vmem>>, vector<64x1xf32>,
    } else {
    }
    %c0 = arith.constant 0 : index
    %c0_1 = arith.constant 0 : index
    %3 = vector.load %arg2[%c0, %c0_1] : memref<64x32xbf16, #tpu.memory_space<vmem>>, vector<64x32xbf16>
    %c0_2 = arith.constant 0 : index
    %c0_3 = arith.constant 0 : index
    %4 = vector.load %arg1[%c0_2, %c0_3] : memref<32x128xbf16, #tpu.memory_space<vmem>>, vector<32x128xbf16>
    %cst = arith.constant dense<0.000000e+00> : vector<64x128xf32>
    %5 = tpu.matmul %3, %4, %cst {dimension_numbers = #tpu.dot_dimension_numbers<[1], [0], [0], [1], [0, 0, 1, 1], [], []>} : vector<64x32xbf16>, vector<32x128xbf16>, vector<64x128xf32> -> vector<64x128xf32>
    %6 = arith.index_cast %arg0 : i32 to index
    %c0_4 = arith.constant 0 : index
    %c0_5 = arith.constant 0 : index
    %7 = vector.load %arg6[%6, %c0_4, %c0_5] : memref<1x64x128xf32, #tpu.memory_space<vmem>>, vector<1x64x128xf32>
    %8 = vector.shape_cast %7 : vector<1x64x128xf32> to vector<64x128xf32>
    %9 = vector.shape_cast %5 : vector<64x128xf32> to vector<1x64x128xf32>
    tpu.vector_store %arg6[%6, %c0_4, %c0_5], %9 {strides = array<i32>} : memref<1x64x128xf32, #tpu.memory_space<vmem>>, vector<1x64x128xf32>,
    %c0_6 = arith.constant 0 : index
    %c0_7 = arith.constant 0 : index
    %10 = vector.load %arg7[%c0_6, %c0_7] : memref<64x1xf32, #tpu.memory_space<vmem>>, vector<64x1xf32>
    %cst_8 = arith.constant dense<0.000000e+00> : vector<64xf32>
    %11 = vector.multi_reduction <add>, %5, %cst_8 [1] : vector<64x128xf32> to vector<64xf32>
    %12 = vector.shape_cast %11 : vector<64xf32> to vector<64x1xf32>
    %13 = arith.addf %10, %12 : vector<64x1xf32>
    %c0_9 = arith.constant 0 : index
    %c0_10 = arith.constant 0 : index
    %14 = vector.load %arg7[%c0_9, %c0_10] : memref<64x1xf32, #tpu.memory_space<vmem>>, vector<64x1xf32>
    tpu.vector_store %arg7[%c0_9, %c0_10], %13 {strides = array<i32>} : memref<64x1xf32, #tpu.memory_space<vmem>>, vector<64x1xf32>,
    %c0_11 = arith.constant 0 : index
    %c0_12 = arith.constant 0 : index
    %15 = vector.load %arg8[%c0_11, %c0_12] : memref<64x1xf32, #tpu.memory_space<vmem>>, vector<64x1xf32>
    %16 = arith.mulf %5, %5 : vector<64x128xf32>
    %cst_13 = arith.constant dense<0.000000e+00> : vector<64xf32>
    %17 = vector.multi_reduction <add>, %16, %cst_13 [1] : vector<64x128xf32> to vector<64xf32>
    %18 = vector.shape_cast %17 : vector<64xf32> to vector<64x1xf32>
    %19 = arith.addf %15, %18 : vector<64x1xf32>
    %c0_14 = arith.constant 0 : index
    %c0_15 = arith.constant 0 : index
    %20 = vector.load %arg8[%c0_14, %c0_15] : memref<64x1xf32, #tpu.memory_space<vmem>>, vector<64x1xf32>
    tpu.vector_store %arg8[%c0_14, %c0_15], %19 {strides = array<i32>} : memref<64x1xf32, #tpu.memory_space<vmem>>, vector<64x1xf32>,
    %c0_i32_16 = arith.constant 0 : i32
    %21 = arith.cmpi eq, %arg0, %c0_i32_16 : i32
    %22 = arith.extui %21 : i1 to i32
    %c0_i32_17 = arith.constant 0 : i32
    %23 = arith.cmpi ne, %22, %c0_i32_17 : i32
    scf.if %23 {
      %c0_18 = arith.constant 0 : index
      %c0_19 = arith.constant 0 : index
      %24 = vector.load %arg7[%c0_18, %c0_19] : memref<64x1xf32, #tpu.memory_space<vmem>>, vector<64x1xf32>
      %cst_20 = arith.constant 1.250000e-01 : f32
      %25 = vector.broadcast %cst_20 : f32 to vector<64x1xf32>
      %26 = arith.mulf %24, %25 : vector<64x1xf32>
      %c0_21 = arith.constant 0 : index
      %c0_22 = arith.constant 0 : index
      %27 = vector.load %arg8[%c0_21, %c0_22] : memref<64x1xf32, #tpu.memory_space<vmem>>, vector<64x1xf32>
      %cst_23 = arith.constant 1.250000e-01 : f32
      %28 = vector.broadcast %cst_23 : f32 to vector<64x1xf32>
      %29 = arith.mulf %27, %28 : vector<64x1xf32>
      %30 = arith.mulf %26, %26 : vector<64x1xf32>
      %31 = arith.subf %29, %30 : vector<64x1xf32>
      %cst_24 = arith.constant 0.000000e+00 : f32
      %32 = vector.broadcast %cst_24 : f32 to vector<64x1xf32>
      %33 = arith.maximumf %31, %32 : vector<64x1xf32>
      %c0_25 = arith.constant 0 : index
      %c0_26 = arith.constant 0 : index
      %34 = vector.load %arg3[%c0_25, %c0_26] : memref<64x1xf32, #tpu.memory_space<vmem>>, vector<64x1xf32>
      %cst_27 = arith.constant 9.99999974E-6 : f32
      %35 = vector.broadcast %cst_27 : f32 to vector<64x1xf32>
      %36 = arith.addf %33, %35 : vector<64x1xf32>
      %37 = math.rsqrt %36 : vector<64x1xf32>
      %38 = arith.mulf %34, %37 : vector<64x1xf32>
      %c0_28 = arith.constant 0 : index
      %c0_29 = arith.constant 0 : index
      %39 = vector.load %arg4[%c0_28, %c0_29] : memref<64x1xf32, #tpu.memory_space<vmem>>, vector<64x1xf32>
      %40 = arith.mulf %26, %38 : vector<64x1xf32>
      %41 = arith.subf %39, %40 : vector<64x1xf32>
      %c0_30 = arith.constant 0 : index
      %c0_31 = arith.constant 0 : index
      %c0_32 = arith.constant 0 : index
      %42 = vector.load %arg6[%c0_30, %c0_31, %c0_32] : memref<1x64x128xf32, #tpu.memory_space<vmem>>, vector<1x64x128xf32>
      %43 = vector.shape_cast %42 : vector<1x64x128xf32> to vector<64x128xf32>
      %44 = vector.broadcast %38 : vector<64x1xf32> to vector<64x128xf32>
      %45 = arith.mulf %43, %44 : vector<64x128xf32>
      %46 = vector.broadcast %41 : vector<64x1xf32> to vector<64x128xf32>
      %47 = arith.addf %45, %46 : vector<64x128xf32>
      %48 = arith.truncf %47 : vector<64x128xf32> to vector<64x128xbf16>
      %c0_33 = arith.constant 0 : index
      %c0_34 = arith.constant 0 : index
      %49 = vector.load %arg5[%c0_33, %c0_34] : memref<64x128xbf16, #tpu.memory_space<vmem>>, vector<64x128xbf16>
      tpu.vector_store %arg5[%c0_33, %c0_34], %48 {strides = array<i32>} : memref<64x128xbf16, #tpu.memory_space<vmem>>, vector<64x128xbf16>,
    } else {
    }
    return
  }
  func.func @transform_0(%arg0: i32) -> (i32, i32) {
    %c0_i32 = arith.constant 0 : i32
    %c0_i32_0 = arith.constant 0 : i32
    return %c0_i32, %arg0 : i32, i32
  }
  func.func @transform_1(%arg0: i32) -> (i32, i32) {
    %c0_i32 = arith.constant 0 : i32
    %c0_i32_0 = arith.constant 0 : i32
    %c0_i32_1 = arith.constant 0 : i32
    return %c0_i32, %c0_i32_0 : i32, i32
  }
  func.func @transform_2(%arg0: i32) -> (i32, i32) {
    %c0_i32 = arith.constant 0 : i32
    %c0_i32_0 = arith.constant 0 : i32
    %c0_i32_1 = arith.constant 0 : i32
    return %c0_i32, %c0_i32_0 : i32, i32
  }
  func.func @transform_3(%arg0: i32) -> (i32, i32) {
    %c0_i32 = arith.constant 0 : i32
    %c0_i32_0 = arith.constant 0 : i32
    %c0_i32_1 = arith.constant 0 : i32
    return %c0_i32, %c0_i32_0 : i32, i32
  }
  func.func @transform_4(%arg0: i32) -> (i32, i32) {
    %c0_i32 = arith.constant 0 : i32
    %c0_i32_0 = arith.constant 0 : i32
    %c0_i32_1 = arith.constant 0 : i32
    return %c0_i32, %c0_i32_0 : i32, i32
  }
}

module attributes {stable_mosaic.version = 11 : i64} {
  func.func @_conv_bn_act_kernel(%arg0: i32, %arg1: memref<576x128xbf16, #tpu.memory_space<vmem>>, %arg2: memref<64x576xbf16, #tpu.memory_space<vmem>>, %arg3: memref<64x1xf32, #tpu.memory_space<vmem>>, %arg4: memref<64x1xf32, #tpu.memory_space<vmem>>, %arg5: memref<64x128xbf16, #tpu.memory_space<vmem>>, %arg6: memref<64x128xbf16, #tpu.memory_space<vmem>>, %arg7: memref<1x64x128xf32, #tpu.memory_space<vmem>>, %arg8: memref<64x1xf32, #tpu.memory_space<vmem>>, %arg9: memref<64x1xf32, #tpu.memory_space<vmem>>) attributes {dimension_semantics = [#tpu.dimension_semantics<arbitrary>], iteration_bounds = array<i64: 1>, scalar_prefetch = 0 : i64, scratch_operands = 3 : i64, tpu.core_type = #tpu.core_type<tc>, window_params = [{transform_indices = @transform_0, window_bounds = array<i64: 576, 128>}, {pipeline_mode = #tpu.pipeline_mode<synchronous>, transform_indices = @transform_1, window_bounds = array<i64: 64, 576>}, {pipeline_mode = #tpu.pipeline_mode<synchronous>, transform_indices = @transform_2, window_bounds = array<i64: 64, 1>}, {pipeline_mode = #tpu.pipeline_mode<synchronous>, transform_indices = @transform_3, window_bounds = array<i64: 64, 1>}, {pipeline_mode = #tpu.pipeline_mode<synchronous>, transform_indices = @transform_4, window_bounds = array<i64: 64, 128>}, {pipeline_mode = #tpu.pipeline_mode<synchronous>, transform_indices = @transform_5, window_bounds = array<i64: 64, 128>}]} {
    %c0_i32 = arith.constant 0 : i32
    %0 = arith.cmpi eq, %arg0, %c0_i32 : i32
    %1 = arith.extui %0 : i1 to i32
    %c0_i32_0 = arith.constant 0 : i32
    %2 = arith.cmpi ne, %1, %c0_i32_0 : i32
    scf.if %2 {
      %cst_18 = arith.constant 0.000000e+00 : f32
      %24 = vector.broadcast %cst_18 : f32 to vector<64x1xf32>
      %c0_19 = arith.constant 0 : index
      %c0_20 = arith.constant 0 : index
      %25 = vector.load %arg8[%c0_19, %c0_20] : memref<64x1xf32, #tpu.memory_space<vmem>>, vector<64x1xf32>
      tpu.vector_store %arg8[%c0_19, %c0_20], %24 {strides = array<i32>} : memref<64x1xf32, #tpu.memory_space<vmem>>, vector<64x1xf32>,
      %cst_21 = arith.constant 0.000000e+00 : f32
      %26 = vector.broadcast %cst_21 : f32 to vector<64x1xf32>
      %c0_22 = arith.constant 0 : index
      %c0_23 = arith.constant 0 : index
      %27 = vector.load %arg9[%c0_22, %c0_23] : memref<64x1xf32, #tpu.memory_space<vmem>>, vector<64x1xf32>
      tpu.vector_store %arg9[%c0_22, %c0_23], %26 {strides = array<i32>} : memref<64x1xf32, #tpu.memory_space<vmem>>, vector<64x1xf32>,
    } else {
    }
    %c0 = arith.constant 0 : index
    %c0_1 = arith.constant 0 : index
    %3 = vector.load %arg2[%c0, %c0_1] : memref<64x576xbf16, #tpu.memory_space<vmem>>, vector<64x576xbf16>
    %c0_2 = arith.constant 0 : index
    %c0_3 = arith.constant 0 : index
    %4 = vector.load %arg1[%c0_2, %c0_3] : memref<576x128xbf16, #tpu.memory_space<vmem>>, vector<576x128xbf16>
    %cst = arith.constant dense<0.000000e+00> : vector<64x128xf32>
    %5 = tpu.matmul %3, %4, %cst {dimension_numbers = #tpu.dot_dimension_numbers<[1], [0], [0], [1], [0, 0, 1, 1], [], []>} : vector<64x576xbf16>, vector<576x128xbf16>, vector<64x128xf32> -> vector<64x128xf32>
    %6 = arith.index_cast %arg0 : i32 to index
    %c0_4 = arith.constant 0 : index
    %c0_5 = arith.constant 0 : index
    %7 = vector.load %arg7[%6, %c0_4, %c0_5] : memref<1x64x128xf32, #tpu.memory_space<vmem>>, vector<1x64x128xf32>
    %8 = vector.shape_cast %7 : vector<1x64x128xf32> to vector<64x128xf32>
    %9 = vector.shape_cast %5 : vector<64x128xf32> to vector<1x64x128xf32>
    tpu.vector_store %arg7[%6, %c0_4, %c0_5], %9 {strides = array<i32>} : memref<1x64x128xf32, #tpu.memory_space<vmem>>, vector<1x64x128xf32>,
    %c0_6 = arith.constant 0 : index
    %c0_7 = arith.constant 0 : index
    %10 = vector.load %arg8[%c0_6, %c0_7] : memref<64x1xf32, #tpu.memory_space<vmem>>, vector<64x1xf32>
    %cst_8 = arith.constant dense<0.000000e+00> : vector<64xf32>
    %11 = vector.multi_reduction <add>, %5, %cst_8 [1] : vector<64x128xf32> to vector<64xf32>
    %12 = vector.shape_cast %11 : vector<64xf32> to vector<64x1xf32>
    %13 = arith.addf %10, %12 : vector<64x1xf32>
    %c0_9 = arith.constant 0 : index
    %c0_10 = arith.constant 0 : index
    %14 = vector.load %arg8[%c0_9, %c0_10] : memref<64x1xf32, #tpu.memory_space<vmem>>, vector<64x1xf32>
    tpu.vector_store %arg8[%c0_9, %c0_10], %13 {strides = array<i32>} : memref<64x1xf32, #tpu.memory_space<vmem>>, vector<64x1xf32>,
    %c0_11 = arith.constant 0 : index
    %c0_12 = arith.constant 0 : index
    %15 = vector.load %arg9[%c0_11, %c0_12] : memref<64x1xf32, #tpu.memory_space<vmem>>, vector<64x1xf32>
    %16 = arith.mulf %5, %5 : vector<64x128xf32>
    %cst_13 = arith.constant dense<0.000000e+00> : vector<64xf32>
    %17 = vector.multi_reduction <add>, %16, %cst_13 [1] : vector<64x128xf32> to vector<64xf32>
    %18 = vector.shape_cast %17 : vector<64xf32> to vector<64x1xf32>
    %19 = arith.addf %15, %18 : vector<64x1xf32>
    %c0_14 = arith.constant 0 : index
    %c0_15 = arith.constant 0 : index
    %20 = vector.load %arg9[%c0_14, %c0_15] : memref<64x1xf32, #tpu.memory_space<vmem>>, vector<64x1xf32>
    tpu.vector_store %arg9[%c0_14, %c0_15], %19 {strides = array<i32>} : memref<64x1xf32, #tpu.memory_space<vmem>>, vector<64x1xf32>,
    %c0_i32_16 = arith.constant 0 : i32
    %21 = arith.cmpi eq, %arg0, %c0_i32_16 : i32
    %22 = arith.extui %21 : i1 to i32
    %c0_i32_17 = arith.constant 0 : i32
    %23 = arith.cmpi ne, %22, %c0_i32_17 : i32
    scf.if %23 {
      %c0_18 = arith.constant 0 : index
      %c0_19 = arith.constant 0 : index
      %24 = vector.load %arg8[%c0_18, %c0_19] : memref<64x1xf32, #tpu.memory_space<vmem>>, vector<64x1xf32>
      %cst_20 = arith.constant 1.250000e-01 : f32
      %25 = vector.broadcast %cst_20 : f32 to vector<64x1xf32>
      %26 = arith.mulf %24, %25 : vector<64x1xf32>
      %c0_21 = arith.constant 0 : index
      %c0_22 = arith.constant 0 : index
      %27 = vector.load %arg9[%c0_21, %c0_22] : memref<64x1xf32, #tpu.memory_space<vmem>>, vector<64x1xf32>
      %cst_23 = arith.constant 1.250000e-01 : f32
      %28 = vector.broadcast %cst_23 : f32 to vector<64x1xf32>
      %29 = arith.mulf %27, %28 : vector<64x1xf32>
      %30 = arith.mulf %26, %26 : vector<64x1xf32>
      %31 = arith.subf %29, %30 : vector<64x1xf32>
      %cst_24 = arith.constant 0.000000e+00 : f32
      %32 = vector.broadcast %cst_24 : f32 to vector<64x1xf32>
      %33 = arith.maximumf %31, %32 : vector<64x1xf32>
      %c0_25 = arith.constant 0 : index
      %c0_26 = arith.constant 0 : index
      %34 = vector.load %arg3[%c0_25, %c0_26] : memref<64x1xf32, #tpu.memory_space<vmem>>, vector<64x1xf32>
      %cst_27 = arith.constant 9.99999974E-6 : f32
      %35 = vector.broadcast %cst_27 : f32 to vector<64x1xf32>
      %36 = arith.addf %33, %35 : vector<64x1xf32>
      %37 = math.rsqrt %36 : vector<64x1xf32>
      %38 = arith.mulf %34, %37 : vector<64x1xf32>
      %c0_28 = arith.constant 0 : index
      %c0_29 = arith.constant 0 : index
      %39 = vector.load %arg4[%c0_28, %c0_29] : memref<64x1xf32, #tpu.memory_space<vmem>>, vector<64x1xf32>
      %40 = arith.mulf %26, %38 : vector<64x1xf32>
      %41 = arith.subf %39, %40 : vector<64x1xf32>
      %c0_30 = arith.constant 0 : index
      %c0_31 = arith.constant 0 : index
      %c0_32 = arith.constant 0 : index
      %42 = vector.load %arg7[%c0_30, %c0_31, %c0_32] : memref<1x64x128xf32, #tpu.memory_space<vmem>>, vector<1x64x128xf32>
      %43 = vector.shape_cast %42 : vector<1x64x128xf32> to vector<64x128xf32>
      %44 = vector.broadcast %38 : vector<64x1xf32> to vector<64x128xf32>
      %45 = arith.mulf %43, %44 : vector<64x128xf32>
      %46 = vector.broadcast %41 : vector<64x1xf32> to vector<64x128xf32>
      %47 = arith.addf %45, %46 : vector<64x128xf32>
      %c0_33 = arith.constant 0 : index
      %c0_34 = arith.constant 0 : index
      %48 = vector.load %arg5[%c0_33, %c0_34] : memref<64x128xbf16, #tpu.memory_space<vmem>>, vector<64x128xbf16>
      %49 = arith.extf %48 : vector<64x128xbf16> to vector<64x128xf32>
      %50 = arith.addf %47, %49 : vector<64x128xf32>
      %cst_35 = arith.constant 0.000000e+00 : f32
      %51 = vector.broadcast %cst_35 : f32 to vector<64x128xf32>
      %52 = arith.maximumf %50, %51 : vector<64x128xf32>
      %53 = arith.truncf %52 : vector<64x128xf32> to vector<64x128xbf16>
      %c0_36 = arith.constant 0 : index
      %c0_37 = arith.constant 0 : index
      %54 = vector.load %arg6[%c0_36, %c0_37] : memref<64x128xbf16, #tpu.memory_space<vmem>>, vector<64x128xbf16>
      tpu.vector_store %arg6[%c0_36, %c0_37], %53 {strides = array<i32>} : memref<64x128xbf16, #tpu.memory_space<vmem>>, vector<64x128xbf16>,
    } else {
    }
    return
  }
  func.func @transform_0(%arg0: i32) -> (i32, i32) {
    %c0_i32 = arith.constant 0 : i32
    %c0_i32_0 = arith.constant 0 : i32
    return %c0_i32, %arg0 : i32, i32
  }
  func.func @transform_1(%arg0: i32) -> (i32, i32) {
    %c0_i32 = arith.constant 0 : i32
    %c0_i32_0 = arith.constant 0 : i32
    %c0_i32_1 = arith.constant 0 : i32
    return %c0_i32, %c0_i32_0 : i32, i32
  }
  func.func @transform_2(%arg0: i32) -> (i32, i32) {
    %c0_i32 = arith.constant 0 : i32
    %c0_i32_0 = arith.constant 0 : i32
    %c0_i32_1 = arith.constant 0 : i32
    return %c0_i32, %c0_i32_0 : i32, i32
  }
  func.func @transform_3(%arg0: i32) -> (i32, i32) {
    %c0_i32 = arith.constant 0 : i32
    %c0_i32_0 = arith.constant 0 : i32
    %c0_i32_1 = arith.constant 0 : i32
    return %c0_i32, %c0_i32_0 : i32, i32
  }
  func.func @transform_4(%arg0: i32) -> (i32, i32) {
    %c0_i32 = arith.constant 0 : i32
    %c0_i32_0 = arith.constant 0 : i32
    %c0_i32_1 = arith.constant 0 : i32
    return %c0_i32, %c0_i32_0 : i32, i32
  }
  func.func @transform_5(%arg0: i32) -> (i32, i32) {
    %c0_i32 = arith.constant 0 : i32
    %c0_i32_0 = arith.constant 0 : i32
    %c0_i32_1 = arith.constant 0 : i32
    return %c0_i32, %c0_i32_0 : i32, i32
  }
}

</mosaic_0001>

<llo_original>
// kernel: resnet_forward.13
$region0: #{resnet_forward.13}
  #allocation0 [shape = 'u32[]', space=smem, size = 0x4, offset = 0x4, fixed_abs, tag = 'smem constant byte address 0x4 - core index']
  #allocation1 [shape = 'u32[144,128]{1,0:T(1,128)}', space=vmem, size = 0x12000, scoped, tag = 'internal scratch']
  #allocation2 [shape = 'f32[4,16,512]{2,1,0:T(8,128)}', space=vmem, size = 0x20000, scoped, tag = 'scratch operand']
  #allocation3 [shape = 'f32[16,1]{1,0:T(8,128)}', space=vmem, size = 0x2000, scoped, tag = 'scratch operand']
  #allocation4 [shape = 'f32[16,1]{1,0:T(8,128)}', space=vmem, size = 0x2000, scoped, tag = 'scratch operand']
  %s0 = inlined_call_operand.vmem [shape: bf16[160,2048], index: 0, kind: input, shape index: {}]
  %s1 = inlined_call_operand.vmem [shape: bf16[16,160], index: 1, kind: input, shape index: {}]
  %s2 = inlined_call_operand.vmem [shape: f32[16,1], index: 2, kind: input, shape index: {}]
  %s3 = inlined_call_operand.vmem [shape: f32[16,1], index: 3, kind: input, shape index: {}]
  %s4 = inlined_call_operand.vmem [shape: bf16[16,2048], index: 4, kind: output, shape index: {}]
  %s5 = sld [smem:[#allocation0]]
  $region80: #{resnet_forward.13} parent=0
    _
  %s7 = ssub.s32 1, %s5
  %s8 = scalar_select 0, %s7, %s5
  $region1: #{resnet_forward.13} parent=0
    #allocation5 [shape = 'u8[327680]{0}', space=vmem, size = 0x50000, scoped, tag = 'input window, operand 0']
    loop: start=0, step=1, limit=6
    $region2: #{resnet_forward.13} parent=1 // loop_pre_header
      _
    $region3: #{resnet_forward.13} parent=1 // loop_header
      %s10 = sphi 0, %s14
      %p11 = scmp.ge.s32.totalorder %s10, 6
      %s20 = sphi 0, %s22
      %s23 = sphi 0, %s20
      %s24 = sphi 0, %s23
      %s40 = sphi 0, %s24
      %s44 = sphi 0, %s44
      %s46 = sphi 0, %s44
      %s47 = sphi 0, %s46
      %s61 = sphi 0, %s47
      %s65 = sphi 0, %s65
      %s67 = sphi 0, %s65
      %s68 = sphi 0, %s67
      %s82 = sphi 0, %s68
      %s86 = sphi 0, %s86
      %s88 = sphi 0, %s86
      %s89 = sphi 0, %s88
      %s103 = sphi 0, %s89
      %s107 = sphi 0, %s107
      %s109 = sphi 0, %s107
      %s110 = sphi 0, %s109
      %s124 = sphi 0, %s110
    $region4: #{resnet_forward.13} parent=1 // loop_header_branch
      %13 = sbr.rel (%p11) target = $region8
    $region5: #{resnet_forward.13} parent=1 // loop_body
      %s15 = ssub.s32 %s10, 1
      %s16 = ssub.s32 %s10, 2
      %s17 = sadd.s32 %s10, 1
      %s18 = ssub.s32 %s10, %s17
      %p19 = scmp.eq.s32.totalorder %s18, 0
      %s21 = sadd.s32 %s20, 1
      %s22 = scalar_select %p19, %s20, %s21
      %p25 = pneg %p19
      %p26 = scmp.eq.s32.totalorder %s10, 3
      %p27 = por %p25, %p26
      %p28 = scmp.ne.s32.totalorder %s20, %s23
      %p29 = scmp.eq.s32.totalorder %s10, 0
      %p30 = por %p28, %p29
      %p31 = scmp.ne.s32.totalorder %s20, %s23
      %p32 = scmp.eq.s32.totalorder %s15, 3
      %p33 = por %p31, %p32
      %p34 = scmp.ne.s32.totalorder %s23, %s24
      %p35 = scmp.eq.s32.totalorder %s15, 0
      %p36 = por %p34, %p35
      %p37 = scmp.ne.s32.totalorder %s23, %s24
      %p38 = scmp.eq.s32.totalorder %s16, 3
      %p39 = por %p37, %p38
      %p41 = scmp.ne.s32.totalorder %s24, %s40
      %p42 = scmp.eq.s32.totalorder %s16, 0
      %p43 = por %p41, %p42
      %s45 = sadd.s32 %s44, 1
      %p48 = scmp.eq.s32.totalorder %s10, 3
      %p49 = scmp.ne.s32.totalorder %s44, %s46
      %p50 = scmp.eq.s32.totalorder %s10, 0
      %p51 = por %p49, %p50
      %p52 = scmp.ne.s32.totalorder %s44, %s46
      %p53 = scmp.eq.s32.totalorder %s15, 3
      %p54 = por %p52, %p53
      %p55 = scmp.ne.s32.totalorder %s46, %s47
      %p56 = scmp.eq.s32.totalorder %s15, 0
      %p57 = por %p55, %p56
      %p58 = scmp.ne.s32.totalorder %s46, %s47
      %p59 = scmp.eq.s32.totalorder %s16, 3
      %p60 = por %p58, %p59
      %p62 = scmp.ne.s32.totalorder %s47, %s61
      %p63 = scmp.eq.s32.totalorder %s16, 0
      %p64 = por %p62, %p63
      %s66 = sadd.s32 %s65, 1
      %p69 = scmp.eq.s32.totalorder %s10, 3
      %p70 = scmp.ne.s32.totalorder %s65, %s67
      %p71 = scmp.eq.s32.totalorder %s10, 0
      %p72 = por %p70, %p71
      %p73 = scmp.ne.s32.totalorder %s65, %s67
      %p74 = scmp.eq.s32.totalorder %s15, 3
      %p75 = por %p73, %p74
      %p76 = scmp.ne.s32.totalorder %s67, %s68
      %p77 = scmp.eq.s32.totalorder %s15, 0
      %p78 = por %p76, %p77
      %p79 = scmp.ne.s32.totalorder %s67, %s68
      %p80 = scmp.eq.s32.totalorder %s16, 3
      %p81 = por %p79, %p80
      %p83 = scmp.ne.s32.totalorder %s68, %s82
      %p84 = scmp.eq.s32.totalorder %s16, 0
      %p85 = por %p83, %p84
      %s87 = sadd.s32 %s86, 1
      %p90 = scmp.eq.s32.totalorder %s10, 3
      %p91 = scmp.ne.s32.totalorder %s86, %s88
      %p92 = scmp.eq.s32.totalorder %s10, 0
      %p93 = por %p91, %p92
      %p94 = scmp.ne.s32.totalorder %s86, %s88
      %p95 = scmp.eq.s32.totalorder %s15, 3
      %p96 = por %p94, %p95
      %p97 = scmp.ne.s32.totalorder %s88, %s89
      %p98 = scmp.eq.s32.totalorder %s15, 0
      %p99 = por %p97, %p98
      %p100 = scmp.ne.s32.totalorder %s88, %s89
      %p101 = scmp.eq.s32.totalorder %s16, 3
      %p102 = por %p100, %p101
      %p104 = scmp.ne.s32.totalorder %s89, %s103
      %p105 = scmp.eq.s32.totalorder %s16, 0
      %p106 = por %p104, %p105
      %s108 = sadd.s32 %s107, 1
      %p111 = scmp.eq.s32.totalorder %s10, 3
      %p112 = scmp.ne.s32.totalorder %s107, %s109
      %p113 = scmp.eq.s32.totalorder %s10, 0
      %p114 = por %p112, %p113
      %p115 = scmp.ne.s32.totalorder %s107, %s109
      %p116 = scmp.eq.s32.totalorder %s15, 3
      %p117 = por %p115, %p116
      %p118 = scmp.ne.s32.totalorder %s109, %s110
      %p119 = scmp.eq.s32.totalorder %s15, 0
      %p120 = por %p118, %p119
      %p121 = scmp.ne.s32.totalorder %s109, %s110
      %p122 = scmp.eq.s32.totalorder %s16, 3
      %p123 = por %p121, %p122
      %p125 = scmp.ne.s32.totalorder %s110, %s124
      %p126 = scmp.eq.s32.totalorder %s16, 0
      %p127 = por %p125, %p126
      %p128 = scmp.le.s32.totalorder 1, %s10
      %p129 = scmp.lt.s32.totalorder %s10, 5
      %p130 = pnand %p128, %p129
      %p131 = pneg %p130
      // Predicated region
      $region9: #{resnet_forward.13} parent=5 // pred_check
        _
      $region10: #{resnet_forward.13} parent=5 // pred_check_branch
        %133 = sbr.rel (%p130) target = $region12
      $region11: #{resnet_forward.13} parent=5 // pred_region
        %s134 = ssub.s32 %s10, 1
        // Predicated region
        $region13: #{resnet_forward.13} parent=11 // pred_check
          %p135 = pneg %p57
        $region14: #{resnet_forward.13} parent=11 // pred_check_branch
          %137 = sbr.rel (%p135) target = $region16
        $region15: #{resnet_forward.13} parent=11 // pred_region
          _
        $region16: #{resnet_forward.13} parent=11 // pred_fallthru
          _
        // Predicated region
        $region17: #{resnet_forward.13} parent=11 // pred_check
          %p138 = pneg %p78
        $region18: #{resnet_forward.13} parent=11 // pred_check_branch
          %140 = sbr.rel (%p138) target = $region20
        $region19: #{resnet_forward.13} parent=11 // pred_region
          _
        $region20: #{resnet_forward.13} parent=11 // pred_fallthru
          _
        // Predicated region
        $region21: #{resnet_forward.13} parent=11 // pred_check
          %p141 = pneg %p99
        $region22: #{resnet_forward.13} parent=11 // pred_check_branch
          %143 = sbr.rel (%p141) target = $region24
        $region23: #{resnet_forward.13} parent=11 // pred_region
          _
        $region24: #{resnet_forward.13} parent=11 // pred_fallthru
          _
      $region12: #{resnet_forward.13} parent=5 // pred_fallthru
        _
      %p144 = scmp.lt.s32.totalorder %s10, 4
      // Predicated region
      $region25: #{resnet_forward.13} parent=5 // pred_check
        %p145 = pneg %p144
      $region26: #{resnet_forward.13} parent=5 // pred_check_branch
        %147 = sbr.rel (%p145) target = $region28
      $region27: #{resnet_forward.13} parent=5 // pred_region
        // Predicated region
        $region29: #{resnet_forward.13} parent=27 // pred_check
          %p148 = pneg %p30
        $region30: #{resnet_forward.13} parent=27 // pred_check_branch
          %150 = sbr.rel (%p148) target = $region32
        $region31: #{resnet_forward.13} parent=27 // pred_region
          %s151 = sand.u32 %s20, 1
          %s152 = sand.u32 %s20, 1
          %s153 = smul.addr %s152, 320
          %s154 = scalar_lea.vmem [#allocation5], %s153
          %s155 = smul.u32 4, %s10
          %s156 = smul.addr %s155, 4
          %s157 = scalar_lea.vmem %s0, %s156
          // Predicated region
          $region33: #{resnet_forward.13} parent=31 // pred_check
            _
          $region34: #{resnet_forward.13} parent=31 // pred_check_branch
            %159 = sbr.rel (0) target = $region36
          $region35: #{resnet_forward.13} parent=31 // pred_region
            // Predicated region
            $region37: #{resnet_forward.13} parent=35 // pred_check
              _
            $region38: #{resnet_forward.13} parent=35 // pred_check_branch
              %161 = sbr.rel (0) target = $region40
            $region39: #{resnet_forward.13} parent=35 // pred_region
              loop: start=0, step=1, limit=1
              $region41: #{resnet_forward.13} parent=39 // loop_pre_header
                _
              $region42: #{resnet_forward.13} parent=39 // loop_header
                %s163 = sphi 0, %s167
                %p164 = scmp.ge.s32.totalorder %s163, 1
                %s168 = sphi %s157, %s157
                %s169 = sphi %s154, %s154
              $region43: #{resnet_forward.13} parent=39 // loop_header_branch
                %166 = sbr.rel (%p164) target = $region47
              $region44: #{resnet_forward.13} parent=39 // loop_body
                %v170 = vld [vmem:[%s168] sm:$0xff]
                %171 = vst [vmem:[%s169] sm:$0xff] %v170
                %v172 = vld [vmem:[%s168 + $0x8] sm:$0xff]
                %173 = vst [vmem:[%s169 + $0x8] sm:$0xff] %v172
                %v174 = vld [vmem:[%s168 + $0x40] sm:$0xff]
                %175 = vst [vmem:[%s169 + $0x10] sm:$0xff] %v174
                %v176 = vld [vmem:[%s168 + $0x48] sm:$0xff]
                %177 = vst [vmem:[%s169 + $0x18] sm:$0xff] %v176
                %v178 = vld [vmem:[%s168 + $0x80] sm:$0xff]
                %179 = vst [vmem:[%s169 + $0x20] sm:$0xff] %v178
                %v180 = vld [vmem:[%s168 + $0x88] sm:$0xff]
                %181 = vst [vmem:[%s169 + $0x28] sm:$0xff] %v180
                %v182 = vld [vmem:[%s168 + $0xc0] sm:$0xff]
                %183 = vst [vmem:[%s169 + $0x30] sm:$0xff] %v182
                %v184 = vld [vmem:[%s168 + $0xc8] sm:$0xff]
                %185 = vst [vmem:[%s169 + $0x38] sm:$0xff] %v184
                %v186 = vld [vmem:[%s168 + $0x100] sm:$0xff]
                %187 = vst [vmem:[%s169 + $0x40] sm:$0xff] %v186
                %v188 = vld [vmem:[%s168 + $0x108] sm:$0xff]
                %189 = vst [vmem:[%s169 + $0x48] sm:$0xff] %v188
                %v190 = vld [vmem:[%s168 + $0x140] sm:$0xff]
                %191 = vst [vmem:[%s169 + $0x50] sm:$0xff] %v190
                %v192 = vld [vmem:[%s168 + $0x148] sm:$0xff]
                %193 = vst [vmem:[%s169 + $0x58] sm:$0xff] %v192
                %v194 = vld [vmem:[%s168 + $0x180] sm:$0xff]
                %195 = vst [vmem:[%s169 + $0x60] sm:$0xff] %v194
                %v196 = vld [vmem:[%s168 + $0x188] sm:$0xff]
                %197 = vst [vmem:[%s169 + $0x68] sm:$0xff] %v196
                %v198 = vld [vmem:[%s168 + $0x1c0] sm:$0xff]
                %199 = vst [vmem:[%s169 + $0x70] sm:$0xff] %v198
                %v200 = vld [vmem:[%s168 + $0x1c8] sm:$0xff]
                %201 = vst [vmem:[%s169 + $0x78] sm:$0xff] %v200
                %v202 = vld [vmem:[%s168 + $0x200] sm:$0xff]
                %203 = vst [vmem:[%s169 + $0x80] sm:$0xff] %v202
                %v204 = vld [vmem:[%s168 + $0x208] sm:$0xff]
                %205 = vst [vmem:[%s169 + $0x88] sm:$0xff] %v204
                %v206 = vld [vmem:[%s168 + $0x240] sm:$0xff]
                %207 = vst [vmem:[%s169 + $0x90] sm:$0xff] %v206
                %v208 = vld [vmem:[%s168 + $0x248] sm:$0xff]
                %209 = vst [vmem:[%s169 + $0x98] sm:$0xff] %v208
                %v210 = vld [vmem:[%s168 + $0x280] sm:$0xff]
                %211 = vst [vmem:[%s169 + $0xa0] sm:$0xff] %v210
                %v212 = vld [vmem:[%s168 + $0x288] sm:$0xff]
                %213 = vst [vmem:[%s169 + $0xa8] sm:$0xff] %v212
                %v214 = vld [vmem:[%s168 + $0x2c0] sm:$0xff]
                %215 = vst [vmem:[%s169 + $0xb0] sm:$0xff] %v214
                %v216 = vld [vmem:[%s168 + $0x2c8] sm:$0xff]
                %217 = vst [vmem:[%s169 + $0xb8] sm:$0xff] %v216
                %v218 = vld [vmem:[%s168 + $0x300] sm:$0xff]
                %219 = vst [vmem:[%s169 + $0xc0] sm:$0xff] %v218
                %v220 = vld [vmem:[%s168 + $0x308] sm:$0xff]
                %221 = vst [vmem:[%s169 + $0xc8] sm:$0xff] %v220
                %v222 = vld [vmem:[%s168 + $0x340] sm:$0xff]
                %223 = vst [vmem:[%s169 + $0xd0] sm:$0xff] %v222
                %v224 = vld [vmem:[%s168 + $0x348] sm:$0xff]
                %225 = vst [vmem:[%s169 + $0xd8] sm:$0xff] %v224
                %v226 = vld [vmem:[%s168 + $0x380] sm:$0xff]
                %227 = vst [vmem:[%s169 + $0xe0] sm:$0xff] %v226
                %v228 = vld [vmem:[%s168 + $0x388] sm:$0xff]
                %229 = vst [vmem:[%s169 + $0xe8] sm:$0xff] %v228
                %v230 = vld [vmem:[%s168 + $0x3c0] sm:$0xff]
                %231 = vst [vmem:[%s169 + $0xf0] sm:$0xff] %v230
                %v232 = vld [vmem:[%s168 + $0x3c8] sm:$0xff]
                %233 = vst [vmem:[%s169 + $0xf8] sm:$0xff] %v232
                %v234 = vld [vmem:[%s168 + $0x400] sm:$0xff]
                %235 = vst [vmem:[%s169 + $0x100] sm:$0xff] %v234
                %v236 = vld [vmem:[%s168 + $0x408] sm:$0xff]
                %237 = vst [vmem:[%s169 + $0x108] sm:$0xff] %v236
                %v238 = vld [vmem:[%s168 + $0x440] sm:$0xff]
                %239 = vst [vmem:[%s169 + $0x110] sm:$0xff] %v238
                %v240 = vld [vmem:[%s168 + $0x448] sm:$0xff]
                %241 = vst [vmem:[%s169 + $0x118] sm:$0xff] %v240
                %v242 = vld [vmem:[%s168 + $0x480] sm:$0xff]
                %243 = vst [vmem:[%s169 + $0x120] sm:$0xff] %v242
                %v244 = vld [vmem:[%s168 + $0x488] sm:$0xff]
                %245 = vst [vmem:[%s169 + $0x128] sm:$0xff] %v244
                %v246 = vld [vmem:[%s168 + $0x4c0] sm:$0xff]
                %247 = vst [vmem:[%s169 + $0x130] sm:$0xff] %v246
                %v248 = vld [vmem:[%s168 + $0x4c8] sm:$0xff]
                %249 = vst [vmem:[%s169 + $0x138] sm:$0xff] %v248
              $region45: #{resnet_forward.13} parent=39 // loop_footer
                %s167 = sadd.s32 1, %s163
              $region46: #{resnet_forward.13} parent=39 // loop_footer_branch
                %162 = sbr.rel target = $region42
              $region47: #{resnet_forward.13} parent=39 // loop_exit
                _
            $region40: #{resnet_forward.13} parent=35 // pred_fallthru
              _
            // Predicated region
            $region48: #{resnet_forward.13} parent=35 // pred_check
              _
            $region49: #{resnet_forward.13} parent=35 // pred_check_branch
              %251 = sbr.rel target = $region51
            $region50: #{resnet_forward.13} parent=35 // pred_region
              _
            $region51: #{resnet_forward.13} parent=35 // pred_fallthru
              _
          $region36: #{resnet_forward.13} parent=31 // pred_fallthru
            _
          %252 = vnop
        $region32: #{resnet_forward.13} parent=27 // pred_fallthru
          _
      $region28: #{resnet_forward.13} parent=5 // pred_fallthru
        _
      %p253 = scmp.le.s32.totalorder 1, %s10
      %p254 = scmp.lt.s32.totalorder %s10, 5
      %p255 = pnand %p253, %p254
      %p256 = pneg %p255
      // Predicated region
      $region52: #{resnet_forward.13} parent=5 // pred_check
        _
      $region53: #{resnet_forward.13} parent=5 // pred_check_branch
        %258 = sbr.rel (%p255) target = $region55
      $region54: #{resnet_forward.13} parent=5 // pred_region
        %s259 = ssub.s32 %s10, 1
        %s260 = sand.u32 %s23, 1
        %s261 = sand.u32 %s23, 1
        %s262 = smul.addr %s261, 320
        %s263 = scalar_lea.vmem [#allocation5], %s262
        // Predicated region
        $region56: #{resnet_forward.13} parent=54 // pred_check
          %p264 = pneg %p36
        $region57: #{resnet_forward.13} parent=54 // pred_check_branch
          %266 = sbr.rel (%p264) target = $region59
        $region58: #{resnet_forward.13} parent=54 // pred_region
          _
        $region59: #{resnet_forward.13} parent=54 // pred_fallthru
          _
        %s267 = sand.u32 %s23, 1
        %s268 = sand.u32 %s23, 1
        %s269 = smul.addr %s268, 320
        %s270 = scalar_lea.vmem [#allocation5], %s269
        %p271 = pneg %p36
        %p272 = pneg %p33
        %p273 = pneg %p57
        %p274 = pneg %p54
        %p275 = pneg %p78
        %p276 = pneg %p75
        %p277 = pneg %p99
        %p278 = pneg %p96
        %p279 = pneg %p120
        %p280 = pneg %p117
        %s281 = smul.u32 4, %s15
        %p283 = scmp.eq.s32.totalorder %s15, 0
        // Predicated region
        $region60: #{resnet_forward.13} parent=54 // pred_check
          %p284 = pneg %p283
        $region61: #{resnet_forward.13} parent=54 // pred_check_branch
          %286 = sbr.rel (%p284) target = $region63
        $region62: #{resnet_forward.13} parent=54 // pred_region
          %vm287 = vcmask 7168
          %288 = vst.msk [vmem:[#allocation3] sm:$0xff] %vm287, 0.0
          %289 = vst.msk [vmem:[#allocation3 + $0x8] sm:$0xff] %vm287, 0.0
          %290 = vst.msk [vmem:[#allocation4] sm:$0xff] %vm287, 0.0
          %291 = vst.msk [vmem:[#allocation4 + $0x8] sm:$0xff] %vm287, 0.0
        $region63: #{resnet_forward.13} parent=54 // pred_fallthru
          _
        %v292 = vld [vmem:[%s1] sm:$0xff]
        %v293 = vld [vmem:[%s1 + $0x8] sm:$0xff]
        %v294 = vld [vmem:[%s263] sm:$0xff]
        %v295 = vld [vmem:[%s263 + $0x8] sm:$0xff]
        %v296 = vld [vmem:[%s263 + $0x10] sm:$0xff]
        %v297 = vld [vmem:[%s263 + $0x18] sm:$0xff]
        %v298 = vld [vmem:[%s263 + $0x20] sm:$0xff]
        %v299 = vld [vmem:[%s263 + $0x28] sm:$0xff]
        %v300 = vld [vmem:[%s263 + $0x30] sm:$0xff]
        %v301 = vld [vmem:[%s263 + $0x38] sm:$0xff]
        %v302 = vld [vmem:[%s263 + $0x40] sm:$0xff]
        %v303 = vld [vmem:[%s263 + $0x48] sm:$0xff]
        %v304 = vld [vmem:[%s263 + $0x50] sm:$0xff]
        %v305 = vld [vmem:[%s263 + $0x58] sm:$0xff]
        %v306 = vld [vmem:[%s263 + $0x60] sm:$0xff]
        %v307 = vld [vmem:[%s263 + $0x68] sm:$0xff]
        %v308 = vld [vmem:[%s263 + $0x70] sm:$0xff]
        %v309 = vld [vmem:[%s263 + $0x78] sm:$0xff]
        %v310 = vld [vmem:[%s263 + $0x80] sm:$0xff]
        %v311 = vld [vmem:[%s263 + $0x88] sm:$0xff]
        %v312 = vld [vmem:[%s263 + $0x90] sm:$0xff]
        %v313 = vld [vmem:[%s263 + $0x98] sm:$0xff]
        %v314 = vld [vmem:[%s263 + $0xa0] sm:$0xff]
        %v315 = vld [vmem:[%s263 + $0xa8] sm:$0xff]
        %v316 = vld [vmem:[%s263 + $0xb0] sm:$0xff]
        %v317 = vld [vmem:[%s263 + $0xb8] sm:$0xff]
        %v318 = vld [vmem:[%s263 + $0xc0] sm:$0xff]
        %v319 = vld [vmem:[%s263 + $0xc8] sm:$0xff]
        %v320 = vld [vmem:[%s263 + $0xd0] sm:$0xff]
        %v321 = vld [vmem:[%s263 + $0xd8] sm:$0xff]
        %v322 = vld [vmem:[%s263 + $0xe0] sm:$0xff]
        %v323 = vld [vmem:[%s263 + $0xe8] sm:$0xff]
        %v324 = vld [vmem:[%s263 + $0xf0] sm:$0xff]
        %v325 = vld [vmem:[%s263 + $0xf8] sm:$0xff]
        %v326 = vld [vmem:[%s263 + $0x100] sm:$0xff]
        %v327 = vld [vmem:[%s263 + $0x108] sm:$0xff]
        %v328 = vld [vmem:[%s263 + $0x110] sm:$0xff]
        %v329 = vld [vmem:[%s263 + $0x118] sm:$0xff]
        %v330 = vld [vmem:[%s263 + $0x120] sm:$0xff]
        %v331 = vld [vmem:[%s263 + $0x128] sm:$0xff]
        %v332 = vld [vmem:[%s263 + $0x130] sm:$0xff]
        %v333 = vld [vmem:[%s263 + $0x138] sm:$0xff]
        %v336 = vunpack.c.l.b16 %v292
        %v337 = vunpack.c.h.b16 %v292
        %v338 = vunpack.c.l.b16 %v293
        %v339 = vunpack.c.h.b16 %v293
        %v340 = vpack.c.b16 %v338, %v336
        %v341 = vpack.c.b16 %v339, %v337
        %v383 = vunpack.c.l.b16 %v294
        %v384 = vunpack.c.h.b16 %v294
        %v385 = vunpack.c.l.b16 %v295
        %v386 = vunpack.c.h.b16 %v295
        %v387 = vunpack.c.l.b16 %v296
        %v388 = vunpack.c.h.b16 %v296
        %v389 = vunpack.c.l.b16 %v297
        %v390 = vunpack.c.h.b16 %v297
        %v391 = vunpack.c.l.b16 %v298
        %v392 = vunpack.c.h.b16 %v298
        %v393 = vunpack.c.l.b16 %v299
        %v394 = vunpack.c.h.b16 %v299
        %v395 = vunpack.c.l.b16 %v300
        %v396 = vunpack.c.h.b16 %v300
        %v397 = vunpack.c.l.b16 %v301
        %v398 = vunpack.c.h.b16 %v301
        %v399 = vunpack.c.l.b16 %v302
        %v400 = vunpack.c.h.b16 %v302
        %v401 = vunpack.c.l.b16 %v303
        %v402 = vunpack.c.h.b16 %v303
        %v403 = vunpack.c.l.b16 %v304
        %v404 = vunpack.c.h.b16 %v304
        %v405 = vunpack.c.l.b16 %v305
        %v406 = vunpack.c.h.b16 %v305
        %v407 = vunpack.c.l.b16 %v306
        %v408 = vunpack.c.h.b16 %v306
        %v409 = vunpack.c.l.b16 %v307
        %v410 = vunpack.c.h.b16 %v307
        %v411 = vunpack.c.l.b16 %v308
        %v412 = vunpack.c.h.b16 %v308
        %v413 = vunpack.c.l.b16 %v309
        %v414 = vunpack.c.h.b16 %v309
        %v415 = vunpack.c.l.b16 %v310
        %v416 = vunpack.c.h.b16 %v310
        %v417 = vunpack.c.l.b16 %v311
        %v418 = vunpack.c.h.b16 %v311
        %v419 = vunpack.c.l.b16 %v312
        %v420 = vunpack.c.h.b16 %v312
        %v421 = vunpack.c.l.b16 %v313
        %v422 = vunpack.c.h.b16 %v313
        %v423 = vunpack.c.l.b16 %v314
        %v424 = vunpack.c.h.b16 %v314
        %v425 = vunpack.c.l.b16 %v315
        %v426 = vunpack.c.h.b16 %v315
        %v427 = vunpack.c.l.b16 %v316
        %v428 = vunpack.c.h.b16 %v316
        %v429 = vunpack.c.l.b16 %v317
        %v430 = vunpack.c.h.b16 %v317
        %v431 = vunpack.c.l.b16 %v318
        %v432 = vunpack.c.h.b16 %v318
        %v433 = vunpack.c.l.b16 %v319
        %v434 = vunpack.c.h.b16 %v319
        %v435 = vunpack.c.l.b16 %v320
        %v436 = vunpack.c.h.b16 %v320
        %v437 = vunpack.c.l.b16 %v321
        %v438 = vunpack.c.h.b16 %v321
        %v439 = vunpack.c.l.b16 %v322
        %v440 = vunpack.c.h.b16 %v322
        %v441 = vunpack.c.l.b16 %v323
        %v442 = vunpack.c.h.b16 %v323
        %v443 = vunpack.c.l.b16 %v324
        %v444 = vunpack.c.h.b16 %v324
        %v445 = vunpack.c.l.b16 %v325
        %v446 = vunpack.c.h.b16 %v325
        %v447 = vunpack.c.l.b16 %v326
        %v448 = vunpack.c.h.b16 %v326
        %v449 = vunpack.c.l.b16 %v327
        %v450 = vunpack.c.h.b16 %v327
        %v451 = vunpack.c.l.b16 %v328
        %v452 = vunpack.c.h.b16 %v328
        %v453 = vunpack.c.l.b16 %v329
        %v454 = vunpack.c.h.b16 %v329
        %v455 = vunpack.c.l.b16 %v330
        %v456 = vunpack.c.h.b16 %v330
        %v457 = vunpack.c.l.b16 %v331
        %v458 = vunpack.c.h.b16 %v331
        %v459 = vunpack.c.l.b16 %v332
        %v460 = vunpack.c.h.b16 %v332
        %v461 = vunpack.c.l.b16 %v333
        %v462 = vunpack.c.h.b16 %v333
        %v463 = vpack.c.b16 %v387, %v383
        %v464 = vpack.c.b16 %v388, %v384
        %v465 = vpack.c.b16 %v389, %v385
        %v466 = vpack.c.b16 %v390, %v386
        %v467 = vpack.c.b16 %v395, %v391
        %v468 = vpack.c.b16 %v396, %v392
        %v469 = vpack.c.b16 %v397, %v393
        %v470 = vpack.c.b16 %v398, %v394
        %v471 = vpack.c.b16 %v403, %v399
        %v472 = vpack.c.b16 %v404, %v400
        %v473 = vpack.c.b16 %v405, %v401
        %v474 = vpack.c.b16 %v406, %v402
        %v475 = vpack.c.b16 %v411, %v407
        %v476 = vpack.c.b16 %v412, %v408
        %v477 = vpack.c.b16 %v413, %v409
        %v478 = vpack.c.b16 %v414, %v410
        %v479 = vpack.c.b16 %v419, %v415
        %v480 = vpack.c.b16 %v420, %v416
        %v481 = vpack.c.b16 %v421, %v417
        %v482 = vpack.c.b16 %v422, %v418
        %v483 = vpack.c.b16 %v427, %v423
        %v484 = vpack.c.b16 %v428, %v424
        %v485 = vpack.c.b16 %v429, %v425
        %v486 = vpack.c.b16 %v430, %v426
        %v487 = vpack.c.b16 %v435, %v431
        %v488 = vpack.c.b16 %v436, %v432
        %v489 = vpack.c.b16 %v437, %v433
        %v490 = vpack.c.b16 %v438, %v434
        %v491 = vpack.c.b16 %v443, %v439
        %v492 = vpack.c.b16 %v444, %v440
        %v493 = vpack.c.b16 %v445, %v441
        %v494 = vpack.c.b16 %v446, %v442
        %v495 = vpack.c.b16 %v451, %v447
        %v496 = vpack.c.b16 %v452, %v448
        %v497 = vpack.c.b16 %v453, %v449
        %v498 = vpack.c.b16 %v454, %v450
        %v499 = vpack.c.b16 %v459, %v455
        %v500 = vpack.c.b16 %v460, %v456
        %v501 = vpack.c.b16 %v461, %v457
        %v502 = vpack.c.b16 %v462, %v458
        %vm543 = vcmask 261120
        %v545 = vsel %vm543, %v341, 0
        %547 = vmatprep.subr.bf16.mxu0 %v492
        %548 = vmatpush1.bf16.msra.mxu0 %v491
        %549 = vmatprep.subr.bf16.mxu0 %v488
        %550 = vmatpush1.bf16.msra.mxu0 %v487
        %551 = vmatprep.subr.bf16.mxu0 %v484
        %552 = vmatpush1.bf16.msra.mxu0 %v483
        %553 = vmatprep.subr.bf16.mxu0 %v480
        %554 = vmatpush1.bf16.msra.mxu0 %v479
        %555 = vmatprep.subr.bf16.mxu0 %v476
        %556 = vmatpush1.bf16.msra.mxu0 %v475
        %557 = vmatprep.subr.bf16.mxu0 %v472
        %558 = vmatpush1.bf16.msra.mxu0 %v471
        %559 = vmatprep.subr.bf16.mxu0 %v468
        %560 = vmatpush1.bf16.msra.mxu0 %v467
        %561 = vmatprep.subr.bf16.mxu0 %v464
        %562 = vmatpush1.bf16.msra.mxu0 %v463
        %563 = vmatprep.subr.bf16.mxu0 0
        %564 = vmatpush2.bf16.msra.mxu0 0
        %565 = vmatprep.subr.bf16.mxu0 0
        %566 = vmatpush2.bf16.msra.mxu0 0
        %567 = vmatprep.subr.bf16.mxu0 0
        %568 = vmatpush2.bf16.msra.mxu0 0
        %569 = vmatprep.subr.bf16.mxu0 0
        %570 = vmatpush2.bf16.msra.mxu0 0
        %571 = vmatprep.subr.bf16.mxu0 0
        %572 = vmatpush2.bf16.msra.mxu0 0
        %573 = vmatprep.subr.bf16.mxu0 0
        %574 = vmatpush2.bf16.msra.mxu0 0
        %575 = vmatprep.subr.bf16.mxu0 %v500
        %576 = vmatpush2.bf16.msra.mxu0 %v499
        %577 = vmatprep.subr.bf16.mxu0 %v496
        %578 = vmatpush2.bf16.msra.mxu0 %v495
        %579 = vmatprep.mubr.bf16.mxu0 %v545
        %580 = vmatmul.mubr.bf16.gmra.mxu0 %v340
        %v581 = vpop.f32.mrf.mxu0
        %v582 = vadd.f32 0.0, %v581
        %v583 = vpop.f32.mrf.mxu0
        %v584 = vadd.f32 0.0, %v583
        %v585 = vpop.f32.mrf.mxu0
        %v586 = vadd.f32 0.0, %v585
        %v587 = vpop.f32.mrf.mxu0
        %v588 = vadd.f32 0.0, %v587
        %589 = vdwg.mxu0
        %590 = vmatprep.subr.bf16.mxu0 %v494
        %591 = vmatpush1.bf16.msra.mxu0 %v493
        %592 = vmatprep.subr.bf16.mxu0 %v490
        %593 = vmatpush1.bf16.msra.mxu0 %v489
        %594 = vmatprep.subr.bf16.mxu0 %v486
        %595 = vmatpush1.bf16.msra.mxu0 %v485
        %596 = vmatprep.subr.bf16.mxu0 %v482
        %597 = vmatpush1.bf16.msra.mxu0 %v481
        %598 = vmatprep.subr.bf16.mxu0 %v478
        %599 = vmatpush1.bf16.msra.mxu0 %v477
        %600 = vmatprep.subr.bf16.mxu0 %v474
        %601 = vmatpush1.bf16.msra.mxu0 %v473
        %602 = vmatprep.subr.bf16.mxu0 %v470
        %603 = vmatpush1.bf16.msra.mxu0 %v469
        %604 = vmatprep.subr.bf16.mxu0 %v466
        %605 = vmatpush1.bf16.msra.mxu0 %v465
        %606 = vmatprep.subr.bf16.mxu0 0
        %607 = vmatpush2.bf16.msra.mxu0 0
        %608 = vmatprep.subr.bf16.mxu0 0
        %609 = vmatpush2.bf16.msra.mxu0 0
        %610 = vmatprep.subr.bf16.mxu0 0
        %611 = vmatpush2.bf16.msra.mxu0 0
        %612 = vmatprep.subr.bf16.mxu0 0
        %613 = vmatpush2.bf16.msra.mxu0 0
        %614 = vmatprep.subr.bf16.mxu0 0
        %615 = vmatpush2.bf16.msra.mxu0 0
        %616 = vmatprep.subr.bf16.mxu0 0
        %617 = vmatpush2.bf16.msra.mxu0 0
        %618 = vmatprep.subr.bf16.mxu0 %v502
        %619 = vmatpush2.bf16.msra.mxu0 %v501
        %620 = vmatprep.subr.bf16.mxu0 %v498
        %621 = vmatpush2.bf16.msra.mxu0 %v497
        %622 = vmatprep.mubr.bf16.mxu0 %v545
        %623 = vmatmul.mubr.bf16.gmra.mxu0 %v340
        %v624 = vpop.f32.mrf.mxu0
        %v625 = vadd.f32 0.0, %v624
        %v626 = vpop.f32.mrf.mxu0
        %v627 = vadd.f32 0.0, %v626
        %v628 = vpop.f32.mrf.mxu0
        %v629 = vadd.f32 0.0, %v628
        %v630 = vpop.f32.mrf.mxu0
        %v631 = vadd.f32 0.0, %v630
        %632 = vdwg.mxu0
        %s633 = smul.u32 %s15, 8
        %s634 = smul.addr %s633, 8
        %s635 = scalar_lea.vmem [#allocation2], %s634
        %636 = vst [vmem:[%s635] sm:$0xff] %v582
        %637 = vst [vmem:[%s635 + $0x8] sm:$0xff] %v584
        %638 = vst [vmem:[%s635 + $0x10] sm:$0xff] %v625
        %639 = vst [vmem:[%s635 + $0x18] sm:$0xff] %v627
        %640 = vst [vmem:[%s635 + $0x20] sm:$0xff] %v586
        %641 = vst [vmem:[%s635 + $0x28] sm:$0xff] %v588
        %642 = vst [vmem:[%s635 + $0x30] sm:$0xff] %v629
        %643 = vst [vmem:[%s635 + $0x38] sm:$0xff] %v631
        %v644 = vld [vmem:[#allocation3] sm:$0xff]
        %v645 = vld [vmem:[#allocation3 + $0x8] sm:$0xff]
        %v646 = vadd.f32 %v582, %v584
        %v647 = vadd.f32 %v646, %v625
        %v648 = vadd.f32 %v647, %v627
        %649 = vadd.xlane.f32.xlu0 %v648
        %v650 = vpop.xlane.xlu0 %649
        %v651 = vadd.f32 %v586, %v588
        %v652 = vadd.f32 %v651, %v629
        %v653 = vadd.f32 %v652, %v631
        %654 = vadd.xlane.f32.xlu0 %v653
        %v655 = vpop.xlane.xlu0 %654
        %v656 = vadd.f32 %v644, %v650
        %v657 = vadd.f32 %v645, %v655
        %vm658 = vcmask 7168
        %659 = vst.msk [vmem:[#allocation3] sm:$0xff] %vm658, %v656
        %660 = vst.msk [vmem:[#allocation3 + $0x8] sm:$0xff] %vm658, %v657
        %v661 = vld [vmem:[#allocation4] sm:$0xff]
        %v662 = vld [vmem:[#allocation4 + $0x8] sm:$0xff]
        %v663 = vmul.f32 %v582, %v582
        %v664 = vmul.f32 %v584, %v584
        %v665 = vmul.f32 %v625, %v625
        %v666 = vmul.f32 %v627, %v627
        %v667 = vmul.f32 %v586, %v586
        %v668 = vmul.f32 %v588, %v588
        %v669 = vmul.f32 %v629, %v629
        %v670 = vmul.f32 %v631, %v631
        %v671 = vadd.f32 %v663, %v664
        %v672 = vadd.f32 %v671, %v665
        %v673 = vadd.f32 %v672, %v666
        %674 = vadd.xlane.f32.xlu0 %v673
        %v675 = vpop.xlane.xlu0 %674
        %v676 = vadd.f32 %v667, %v668
        %v677 = vadd.f32 %v676, %v669
        %v678 = vadd.f32 %v677, %v670
        %679 = vadd.xlane.f32.xlu0 %v678
        %v680 = vpop.xlane.xlu0 %679
        %v681 = vadd.f32 %v661, %v675
        %v682 = vadd.f32 %v662, %v680
        %683 = vst.msk [vmem:[#allocation4] sm:$0xff] %vm658, %v681
        %684 = vst.msk [vmem:[#allocation4 + $0x8] sm:$0xff] %vm658, %v682
        %p685 = scmp.eq.s32.totalorder %s15, 3
        // Predicated region
        $region64: #{resnet_forward.13} parent=54 // pred_check
          %p686 = pneg %p685
        $region65: #{resnet_forward.13} parent=54 // pred_check_branch
          %688 = sbr.rel (%p686) target = $region67
        $region66: #{resnet_forward.13} parent=54 // pred_region
          %v689 = vld [vmem:[#allocation3] sm:$0xff]
          %v690 = vld [vmem:[#allocation3 + $0x8] sm:$0xff]
          %v691 = vmul.f32 %v689, 0.00048828125
          %v692 = vmul.f32 %v690, 0.00048828125
          %v693 = vld [vmem:[#allocation4] sm:$0xff]
          %v694 = vld [vmem:[#allocation4 + $0x8] sm:$0xff]
          %v695 = vmul.f32 %v693, 0.00048828125
          %v696 = vmul.f32 %v694, 0.00048828125
          %v697 = vmul.f32 %v691, %v691
          %v698 = vmul.f32 %v692, %v692
          %v699 = vsub.f32 %v695, %v697
          %v700 = vsub.f32 %v696, %v698
          %v701 = vmax.f32 %v699, 0.0
          %v702 = vmax.f32 %v700, 0.0
          %v703 = vld [vmem:[%s2] sm:$0xff]
          %v704 = vld [vmem:[%s2 + $0x8] sm:$0xff]
          %v705 = vadd.f32 %v701, 1e-05
          %v706 = vadd.f32 %v702, 1e-05
          %v707 = vrsqrt.pop %v705
          %v708 = vrsqrt.pop %v706
          %v709 = vmul.f32 %v703, %v707
          %v710 = vmul.f32 %v704, %v708
          %v711 = vld [vmem:[%s3] sm:$0xff]
          %v712 = vld [vmem:[%s3 + $0x8] sm:$0xff]
          %v713 = vmul.f32 %v691, %v709
          %v714 = vmul.f32 %v692, %v710
          %v715 = vsub.f32 %v711, %v713
          %v716 = vsub.f32 %v712, %v714
          %v717 = vld [vmem:[#allocation2] sm:$0xff]
          %v718 = vld [vmem:[#allocation2 + $0x8] sm:$0xff]
          %v719 = vld [vmem:[#allocation2 + $0x10] sm:$0xff]
          %v720 = vld [vmem:[#allocation2 + $0x18] sm:$0xff]
          %v721 = vld [vmem:[#allocation2 + $0x20] sm:$0xff]
          %v722 = vld [vmem:[#allocation2 + $0x28] sm:$0xff]
          %v723 = vld [vmem:[#allocation2 + $0x30] sm:$0xff]
          %v724 = vld [vmem:[#allocation2 + $0x38] sm:$0xff]
          %726 = vset.pattern.permute.xlu0 0
          %727 = vperm.xlu0 %726, %v709
          %v728 = vpop.permute.xlu0 %727
          %731 = vset.pattern.permute.xlu0 0
          %732 = vperm.xlu0 %731, %v710
          %v733 = vpop.permute.xlu0 %732
          %v735 = vmul.f32 %v717, %v728
          %v736 = vmul.f32 %v718, %v728
          %v737 = vmul.f32 %v719, %v728
          %v738 = vmul.f32 %v720, %v728
          %v739 = vmul.f32 %v721, %v733
          %v740 = vmul.f32 %v722, %v733
          %v741 = vmul.f32 %v723, %v733
          %v742 = vmul.f32 %v724, %v733
          %744 = vset.pattern.permute.xlu0 0
          %745 = vperm.xlu0 %744, %v715
          %v746 = vpop.permute.xlu0 %745
          %749 = vset.pattern.permute.xlu0 0
          %750 = vperm.xlu0 %749, %v716
          %v751 = vpop.permute.xlu0 %750
          %v753 = vadd.f32 %v735, %v746
          %v754 = vadd.f32 %v736, %v746
          %v755 = vadd.f32 %v737, %v746
          %v756 = vadd.f32 %v738, %v746
          %v757 = vadd.f32 %v739, %v751
          %v758 = vadd.f32 %v740, %v751
          %v759 = vadd.f32 %v741, %v751
          %v760 = vadd.f32 %v742, %v751
          %v761 = vmax.f32 %v753, 0.0
          %v762 = vmax.f32 %v754, 0.0
          %v763 = vmax.f32 %v755, 0.0
          %v764 = vmax.f32 %v756, 0.0
          %v765 = vmax.f32 %v757, 0.0
          %v766 = vmax.f32 %v758, 0.0
          %v767 = vmax.f32 %v759, 0.0
          %v768 = vmax.f32 %v760, 0.0
          %v769 = vpack.c.bf16 %v765, %v761
          %v770 = vpack.c.bf16 %v766, %v762
          %v771 = vpack.c.bf16 %v767, %v763
          %v772 = vpack.c.bf16 %v768, %v764
          %v777 = vunpack.c.l.b16 %v769
          %v778 = vunpack.c.l.b16 %v770
          %v779 = vunpack.c.l.b16 %v771
          %v780 = vunpack.c.l.b16 %v772
          %v781 = vunpack.c.h.b16 %v769
          %v782 = vunpack.c.h.b16 %v770
          %v783 = vunpack.c.h.b16 %v771
          %v784 = vunpack.c.h.b16 %v772
          %v785 = vpack.c.b16 %v778, %v777
          %v786 = vpack.c.b16 %v780, %v779
          %v787 = vpack.c.b16 %v782, %v781
          %v788 = vpack.c.b16 %v784, %v783
          %793 = vst [vmem:[%s4] sm:$0xff] %v785
          %794 = vst [vmem:[%s4 + $0x8] sm:$0xff] %v786
          %795 = vst [vmem:[%s4 + $0x40] sm:$0xff] %v787
          %796 = vst [vmem:[%s4 + $0x48] sm:$0xff] %v788
          %s797 = scalar_lea.vmem [#allocation2], 64
          %v798 = vld [vmem:[%s797] sm:$0xff]
          %v799 = vld [vmem:[%s797 + $0x8] sm:$0xff]
          %v800 = vld [vmem:[%s797 + $0x10] sm:$0xff]
          %v801 = vld [vmem:[%s797 + $0x18] sm:$0xff]
          %v802 = vld [vmem:[%s797 + $0x20] sm:$0xff]
          %v803 = vld [vmem:[%s797 + $0x28] sm:$0xff]
          %v804 = vld [vmem:[%s797 + $0x30] sm:$0xff]
          %v805 = vld [vmem:[%s797 + $0x38] sm:$0xff]
          %v806 = vmul.f32 %v798, %v728
          %v807 = vmul.f32 %v799, %v728
          %v808 = vmul.f32 %v800, %v728
          %v809 = vmul.f32 %v801, %v728
          %v810 = vmul.f32 %v802, %v733
          %v811 = vmul.f32 %v803, %v733
          %v812 = vmul.f32 %v804, %v733
          %v813 = vmul.f32 %v805, %v733
          %v814 = vadd.f32 %v806, %v746
          %v815 = vadd.f32 %v807, %v746
          %v816 = vadd.f32 %v808, %v746
          %v817 = vadd.f32 %v809, %v746
          %v818 = vadd.f32 %v810, %v751
          %v819 = vadd.f32 %v811, %v751
          %v820 = vadd.f32 %v812, %v751
          %v821 = vadd.f32 %v813, %v751
          %v822 = vmax.f32 %v814, 0.0
          %v823 = vmax.f32 %v815, 0.0
          %v824 = vmax.f32 %v816, 0.0
          %v825 = vmax.f32 %v817, 0.0
          %v826 = vmax.f32 %v818, 0.0
          %v827 = vmax.f32 %v819, 0.0
          %v828 = vmax.f32 %v820, 0.0
          %v829 = vmax.f32 %v821, 0.0
          %v830 = vpack.c.bf16 %v826, %v822
          %v831 = vpack.c.bf16 %v827, %v823
          %v832 = vpack.c.bf16 %v828, %v824
          %v833 = vpack.c.bf16 %v829, %v825
          %v838 = vunpack.c.l.b16 %v830
          %v839 = vunpack.c.l.b16 %v831
          %v840 = vunpack.c.l.b16 %v832
          %v841 = vunpack.c.l.b16 %v833
          %v842 = vunpack.c.h.b16 %v830
          %v843 = vunpack.c.h.b16 %v831
          %v844 = vunpack.c.h.b16 %v832
          %v845 = vunpack.c.h.b16 %v833
          %v846 = vpack.c.b16 %v839, %v838
          %v847 = vpack.c.b16 %v841, %v840
          %v848 = vpack.c.b16 %v843, %v842
          %v849 = vpack.c.b16 %v845, %v844
          %854 = vst [vmem:[%s4 + $0x10] sm:$0xff] %v846
          %855 = vst [vmem:[%s4 + $0x18] sm:$0xff] %v847
          %856 = vst [vmem:[%s4 + $0x50] sm:$0xff] %v848
          %857 = vst [vmem:[%s4 + $0x58] sm:$0xff] %v849
          %s858 = scalar_lea.vmem [#allocation2], 128
          %v859 = vld [vmem:[%s858] sm:$0xff]
          %v860 = vld [vmem:[%s858 + $0x8] sm:$0xff]
          %v861 = vld [vmem:[%s858 + $0x10] sm:$0xff]
          %v862 = vld [vmem:[%s858 + $0x18] sm:$0xff]
          %v863 = vld [vmem:[%s858 + $0x20] sm:$0xff]
          %v864 = vld [vmem:[%s858 + $0x28] sm:$0xff]
          %v865 = vld [vmem:[%s858 + $0x30] sm:$0xff]
          %v866 = vld [vmem:[%s858 + $0x38] sm:$0xff]
          %v867 = vmul.f32 %v859, %v728
          %v868 = vmul.f32 %v860, %v728
          %v869 = vmul.f32 %v861, %v728
          %v870 = vmul.f32 %v862, %v728
          %v871 = vmul.f32 %v863, %v733
          %v872 = vmul.f32 %v864, %v733
          %v873 = vmul.f32 %v865, %v733
          %v874 = vmul.f32 %v866, %v733
          %v875 = vadd.f32 %v867, %v746
          %v876 = vadd.f32 %v868, %v746
          %v877 = vadd.f32 %v869, %v746
          %v878 = vadd.f32 %v870, %v746
          %v879 = vadd.f32 %v871, %v751
          %v880 = vadd.f32 %v872, %v751
          %v881 = vadd.f32 %v873, %v751
          %v882 = vadd.f32 %v874, %v751
          %v883 = vmax.f32 %v875, 0.0
          %v884 = vmax.f32 %v876, 0.0
          %v885 = vmax.f32 %v877, 0.0
          %v886 = vmax.f32 %v878, 0.0
          %v887 = vmax.f32 %v879, 0.0
          %v888 = vmax.f32 %v880, 0.0
          %v889 = vmax.f32 %v881, 0.0
          %v890 = vmax.f32 %v882, 0.0
          %v891 = vpack.c.bf16 %v887, %v883
          %v892 = vpack.c.bf16 %v888, %v884
          %v893 = vpack.c.bf16 %v889, %v885
          %v894 = vpack.c.bf16 %v890, %v886
          %v899 = vunpack.c.l.b16 %v891
          %v900 = vunpack.c.l.b16 %v892
          %v901 = vunpack.c.l.b16 %v893
          %v902 = vunpack.c.l.b16 %v894
          %v903 = vunpack.c.h.b16 %v891
          %v904 = vunpack.c.h.b16 %v892
          %v905 = vunpack.c.h.b16 %v893
          %v906 = vunpack.c.h.b16 %v894
          %v907 = vpack.c.b16 %v900, %v899
          %v908 = vpack.c.b16 %v902, %v901
          %v909 = vpack.c.b16 %v904, %v903
          %v910 = vpack.c.b16 %v906, %v905
          %915 = vst [vmem:[%s4 + $0x20] sm:$0xff] %v907
          %916 = vst [vmem:[%s4 + $0x28] sm:$0xff] %v908
          %917 = vst [vmem:[%s4 + $0x60] sm:$0xff] %v909
          %918 = vst [vmem:[%s4 + $0x68] sm:$0xff] %v910
          %s919 = scalar_lea.vmem [#allocation2], 192
          %v920 = vld [vmem:[%s919] sm:$0xff]
          %v921 = vld [vmem:[%s919 + $0x8] sm:$0xff]
          %v922 = vld [vmem:[%s919 + $0x10] sm:$0xff]
          %v923 = vld [vmem:[%s919 + $0x18] sm:$0xff]
          %v924 = vld [vmem:[%s919 + $0x20] sm:$0xff]
          %v925 = vld [vmem:[%s919 + $0x28] sm:$0xff]
          %v926 = vld [vmem:[%s919 + $0x30] sm:$0xff]
          %v927 = vld [vmem:[%s919 + $0x38] sm:$0xff]
          %v928 = vmul.f32 %v920, %v728
          %v929 = vmul.f32 %v921, %v728
          %v930 = vmul.f32 %v922, %v728
          %v931 = vmul.f32 %v923, %v728
          %v932 = vmul.f32 %v924, %v733
          %v933 = vmul.f32 %v925, %v733
          %v934 = vmul.f32 %v926, %v733
          %v935 = vmul.f32 %v927, %v733
          %v936 = vadd.f32 %v928, %v746
          %v937 = vadd.f32 %v929, %v746
          %v938 = vadd.f32 %v930, %v746
          %v939 = vadd.f32 %v931, %v746
          %v940 = vadd.f32 %v932, %v751
          %v941 = vadd.f32 %v933, %v751
          %v942 = vadd.f32 %v934, %v751
          %v943 = vadd.f32 %v935, %v751
          %v944 = vmax.f32 %v936, 0.0
          %v945 = vmax.f32 %v937, 0.0
          %v946 = vmax.f32 %v938, 0.0
          %v947 = vmax.f32 %v939, 0.0
          %v948 = vmax.f32 %v940, 0.0
          %v949 = vmax.f32 %v941, 0.0
          %v950 = vmax.f32 %v942, 0.0
          %v951 = vmax.f32 %v943, 0.0
          %v952 = vpack.c.bf16 %v948, %v944
          %v953 = vpack.c.bf16 %v949, %v945
          %v954 = vpack.c.bf16 %v950, %v946
          %v955 = vpack.c.bf16 %v951, %v947
          %v960 = vunpack.c.l.b16 %v952
          %v961 = vunpack.c.l.b16 %v953
          %v962 = vunpack.c.l.b16 %v954
          %v963 = vunpack.c.l.b16 %v955
          %v964 = vunpack.c.h.b16 %v952
          %v965 = vunpack.c.h.b16 %v953
          %v966 = vunpack.c.h.b16 %v954
          %v967 = vunpack.c.h.b16 %v955
          %v968 = vpack.c.b16 %v961, %v960
          %v969 = vpack.c.b16 %v963, %v962
          %v970 = vpack.c.b16 %v965, %v964
          %v971 = vpack.c.b16 %v967, %v966
          %976 = vst [vmem:[%s4 + $0x30] sm:$0xff] %v968
          %977 = vst [vmem:[%s4 + $0x38] sm:$0xff] %v969
          %978 = vst [vmem:[%s4 + $0x70] sm:$0xff] %v970
          %979 = vst [vmem:[%s4 + $0x78] sm:$0xff] %v971
        $region67: #{resnet_forward.13} parent=54 // pred_fallthru
          _
        // Predicated region
        $region68: #{resnet_forward.13} parent=54 // pred_check
          %p980 = pneg %p117
        $region69: #{resnet_forward.13} parent=54 // pred_check_branch
          %982 = sbr.rel (%p980) target = $region71
        $region70: #{resnet_forward.13} parent=54 // pred_region
          _
        $region71: #{resnet_forward.13} parent=54 // pred_fallthru
          _
        // Predicated region
        $region72: #{resnet_forward.13} parent=54 // pred_check
          %p983 = pneg %p117
        $region73: #{resnet_forward.13} parent=54 // pred_check_branch
          %985 = sbr.rel (%p983) target = $region75
        $region74: #{resnet_forward.13} parent=54 // pred_region
          _
        $region75: #{resnet_forward.13} parent=54 // pred_fallthru
          _
      $region55: #{resnet_forward.13} parent=5 // pred_fallthru
        _
      %p986 = scmp.le.s32.totalorder 2, %s10
      // Predicated region
      $region76: #{resnet_forward.13} parent=5 // pred_check
        %p987 = pneg %p986
      $region77: #{resnet_forward.13} parent=5 // pred_check_branch
        %989 = sbr.rel (%p987) target = $region79
      $region78: #{resnet_forward.13} parent=5 // pred_region
        %s990 = ssub.s32 %s10, 2
      $region79: #{resnet_forward.13} parent=5 // pred_fallthru
        _
    $region6: #{resnet_forward.13} parent=1 // loop_footer
      %s14 = sadd.s32 1, %s10
    $region7: #{resnet_forward.13} parent=1 // loop_footer_branch
      %9 = sbr.rel target = $region3
    $region8: #{resnet_forward.13} parent=1 // loop_exit
      _

// kernel: resnet_forward.14
$region0: #{resnet_forward.14}
  #allocation0 [shape = 'u32[]', space=smem, size = 0x4, offset = 0x4, fixed_abs, tag = 'smem constant byte address 0x4 - core index']
  #allocation1 [shape = 'u32[144,128]{1,0:T(1,128)}', space=vmem, size = 0x12000, scoped, tag = 'internal scratch']
  %s0 = inlined_call_operand.vmem [shape: bf16[16,34,34], index: 0, kind: input, shape index: {}]
  %s1 = inlined_call_operand.vmem [shape: bf16[16,32,32], index: 1, kind: output, shape index: {}]
  %s2 = sld [smem:[#allocation0]]
  $region14: #{resnet_forward.14} parent=0
    _
  %s4 = ssub.s32 1, %s2
  %s5 = scalar_select 0, %s4, %s2
  // Predicated region
  $region2: #{resnet_forward.14} parent=0 // pred_check
    _
  $region3: #{resnet_forward.14} parent=0 // pred_check_branch
    %7 = sbr.rel (0) target = $region5
  $region4: #{resnet_forward.14} parent=0 // pred_region
    _
  $region5: #{resnet_forward.14} parent=0 // pred_fallthru
    _
  %v8 = vld [vmem:[%s0] sm:$0xf]
  %v9 = vld [vmem:[%s0 + $0x4] sm:$0xf]
  %v10 = vld [vmem:[%s0 + $0x8] sm:$0xf]
  %v11 = vld [vmem:[%s0 + $0xc] sm:$0xf]
  %v12 = vld [vmem:[%s0 + $0x14] sm:$0xf]
  %v13 = vld [vmem:[%s0 + $0x18] sm:$0xf]
  %v14 = vld [vmem:[%s0 + $0x1c] sm:$0xf]
  %v15 = vld [vmem:[%s0 + $0x20] sm:$0xf]
  %v16 = vld [vmem:[%s0 + $0x28] sm:$0xf]
  %v17 = vld [vmem:[%s0 + $0x2c] sm:$0xf]
  %v18 = vld [vmem:[%s0 + $0x30] sm:$0xf]
  %v19 = vld [vmem:[%s0 + $0x34] sm:$0xf]
  %v20 = vld [vmem:[%s0 + $0x3c] sm:$0xf]
  %v21 = vld [vmem:[%s0 + $0x40] sm:$0xf]
  %v22 = vld [vmem:[%s0 + $0x44] sm:$0xf]
  %v23 = vld [vmem:[%s0 + $0x48] sm:$0xf]
  %v24 = vld [vmem:[%s0 + $0x50] sm:$0xf]
  %v25 = vld [vmem:[%s0 + $0x54] sm:$0xf]
  %v26 = vld [vmem:[%s0 + $0x58] sm:$0xf]
  %v27 = vld [vmem:[%s0 + $0x5c] sm:$0xf]
  %v28 = vld [vmem:[%s0 + $0x64] sm:$0xf]
  %v29 = vld [vmem:[%s0 + $0x68] sm:$0xf]
  %v30 = vld [vmem:[%s0 + $0x6c] sm:$0xf]
  %v31 = vld [vmem:[%s0 + $0x70] sm:$0xf]
  %v32 = vld [vmem:[%s0 + $0x78] sm:$0xf]
  %v33 = vld [vmem:[%s0 + $0x7c] sm:$0xf]
  %v34 = vld [vmem:[%s0 + $0x80] sm:$0xf]
  %v35 = vld [vmem:[%s0 + $0x84] sm:$0xf]
  %v36 = vld [vmem:[%s0 + $0x8c] sm:$0xf]
  %v37 = vld [vmem:[%s0 + $0x90] sm:$0xf]
  %v38 = vld [vmem:[%s0 + $0x94] sm:$0xf]
  %v39 = vld [vmem:[%s0 + $0x98] sm:$0xf]
  %v40 = vld [vmem:[%s0 + $0xa0] sm:$0xf]
  %v41 = vld [vmem:[%s0 + $0xa4] sm:$0xf]
  %v42 = vld [vmem:[%s0 + $0xa8] sm:$0xf]
  %v43 = vld [vmem:[%s0 + $0xac] sm:$0xf]
  %v44 = vld [vmem:[%s0 + $0xb4] sm:$0xf]
  %v45 = vld [vmem:[%s0 + $0xb8] sm:$0xf]
  %v46 = vld [vmem:[%s0 + $0xbc] sm:$0xf]
  %v47 = vld [vmem:[%s0 + $0xc0] sm:$0xf]
  %v48 = vld [vmem:[%s0 + $0xc8] sm:$0xf]
  %v49 = vld [vmem:[%s0 + $0xcc] sm:$0xf]
  %v50 = vld [vmem:[%s0 + $0xd0] sm:$0xf]
  %v51 = vld [vmem:[%s0 + $0xd4] sm:$0xf]
  %v52 = vld [vmem:[%s0 + $0xdc] sm:$0xf]
  %v53 = vld [vmem:[%s0 + $0xe0] sm:$0xf]
  %v54 = vld [vmem:[%s0 + $0xe4] sm:$0xf]
  %v55 = vld [vmem:[%s0 + $0xe8] sm:$0xf]
  %v56 = vld [vmem:[%s0 + $0xf0] sm:$0xf]
  %v57 = vld [vmem:[%s0 + $0xf4] sm:$0xf]
  %v58 = vld [vmem:[%s0 + $0xf8] sm:$0xf]
  %v59 = vld [vmem:[%s0 + $0xfc] sm:$0xf]
  %v60 = vld [vmem:[%s0 + $0x104] sm:$0xf]
  %v61 = vld [vmem:[%s0 + $0x108] sm:$0xf]
  %v62 = vld [vmem:[%s0 + $0x10c] sm:$0xf]
  %v63 = vld [vmem:[%s0 + $0x110] sm:$0xf]
  %v64 = vld [vmem:[%s0 + $0x118] sm:$0xf]
  %v65 = vld [vmem:[%s0 + $0x11c] sm:$0xf]
  %v66 = vld [vmem:[%s0 + $0x120] sm:$0xf]
  %v67 = vld [vmem:[%s0 + $0x124] sm:$0xf]
  %v68 = vld [vmem:[%s0 + $0x12c] sm:$0xf]
  %v69 = vld [vmem:[%s0 + $0x130] sm:$0xf]
  %v70 = vld [vmem:[%s0 + $0x134] sm:$0xf]
  %v71 = vld [vmem:[%s0 + $0x138] sm:$0xf]
  %v72 = vunpack.c.l.bf16 %v8
  %v73 = vunpack.c.l.bf16 %v9
  %v74 = vunpack.c.l.bf16 %v10
  %v75 = vunpack.c.l.bf16 %v11
  %v76 = vunpack.c.l.bf16 %v12
  %v77 = vunpack.c.l.bf16 %v13
  %v78 = vunpack.c.l.bf16 %v14
  %v79 = vunpack.c.l.bf16 %v15
  %v80 = vunpack.c.l.bf16 %v16
  %v81 = vunpack.c.l.bf16 %v17
  %v82 = vunpack.c.l.bf16 %v18
  %v83 = vunpack.c.l.bf16 %v19
  %v84 = vunpack.c.l.bf16 %v20
  %v85 = vunpack.c.l.bf16 %v21
  %v86 = vunpack.c.l.bf16 %v22
  %v87 = vunpack.c.l.bf16 %v23
  %v88 = vunpack.c.l.bf16 %v24
  %v89 = vunpack.c.l.bf16 %v25
  %v90 = vunpack.c.l.bf16 %v26
  %v91 = vunpack.c.l.bf16 %v27
  %v92 = vunpack.c.l.bf16 %v28
  %v93 = vunpack.c.l.bf16 %v29
  %v94 = vunpack.c.l.bf16 %v30
  %v95 = vunpack.c.l.bf16 %v31
  %v96 = vunpack.c.l.bf16 %v32
  %v97 = vunpack.c.l.bf16 %v33
  %v98 = vunpack.c.l.bf16 %v34
  %v99 = vunpack.c.l.bf16 %v35
  %v100 = vunpack.c.l.bf16 %v36
  %v101 = vunpack.c.l.bf16 %v37
  %v102 = vunpack.c.l.bf16 %v38
  %v103 = vunpack.c.l.bf16 %v39
  %v104 = vunpack.c.l.bf16 %v40
  %v105 = vunpack.c.l.bf16 %v41
  %v106 = vunpack.c.l.bf16 %v42
  %v107 = vunpack.c.l.bf16 %v43
  %v108 = vunpack.c.l.bf16 %v44
  %v109 = vunpack.c.l.bf16 %v45
  %v110 = vunpack.c.l.bf16 %v46
  %v111 = vunpack.c.l.bf16 %v47
  %v112 = vunpack.c.l.bf16 %v48
  %v113 = vunpack.c.l.bf16 %v49
  %v114 = vunpack.c.l.bf16 %v50
  %v115 = vunpack.c.l.bf16 %v51
  %v116 = vunpack.c.l.bf16 %v52
  %v117 = vunpack.c.l.bf16 %v53
  %v118 = vunpack.c.l.bf16 %v54
  %v119 = vunpack.c.l.bf16 %v55
  %v120 = vunpack.c.l.bf16 %v56
  %v121 = vunpack.c.l.bf16 %v57
  %v122 = vunpack.c.l.bf16 %v58
  %v123 = vunpack.c.l.bf16 %v59
  %v124 = vunpack.c.l.bf16 %v60
  %v125 = vunpack.c.l.bf16 %v61
  %v126 = vunpack.c.l.bf16 %v62
  %v127 = vunpack.c.l.bf16 %v63
  %v128 = vunpack.c.l.bf16 %v64
  %v129 = vunpack.c.l.bf16 %v65
  %v130 = vunpack.c.l.bf16 %v66
  %v131 = vunpack.c.l.bf16 %v67
  %v132 = vunpack.c.l.bf16 %v68
  %v133 = vunpack.c.l.bf16 %v69
  %v134 = vunpack.c.l.bf16 %v70
  %v135 = vunpack.c.l.bf16 %v71
  %200 = vrot.lane.b32.xlu0 %v72, 127
  %v201 = vpop.permute.xlu0 %200
  %202 = vrot.lane.b32.xlu0 %v73, 127
  %v203 = vpop.permute.xlu0 %202
  %204 = vrot.lane.b32.xlu0 %v74, 127
  %v205 = vpop.permute.xlu0 %204
  %206 = vrot.lane.b32.xlu0 %v75, 127
  %v207 = vpop.permute.xlu0 %206
  %208 = vrot.lane.b32.xlu0 %v76, 127
  %v209 = vpop.permute.xlu0 %208
  %210 = vrot.lane.b32.xlu0 %v77, 127
  %v211 = vpop.permute.xlu0 %210
  %212 = vrot.lane.b32.xlu0 %v78, 127
  %v213 = vpop.permute.xlu0 %212
  %214 = vrot.lane.b32.xlu0 %v79, 127
  %v215 = vpop.permute.xlu0 %214
  %216 = vrot.lane.b32.xlu0 %v80, 127
  %v217 = vpop.permute.xlu0 %216
  %218 = vrot.lane.b32.xlu0 %v81, 127
  %v219 = vpop.permute.xlu0 %218
  %220 = vrot.lane.b32.xlu0 %v82, 127
  %v221 = vpop.permute.xlu0 %220
  %222 = vrot.lane.b32.xlu0 %v83, 127
  %v223 = vpop.permute.xlu0 %222
  %224 = vrot.lane.b32.xlu0 %v84, 127
  %v225 = vpop.permute.xlu0 %224
  %226 = vrot.lane.b32.xlu0 %v85, 127
  %v227 = vpop.permute.xlu0 %226
  %228 = vrot.lane.b32.xlu0 %v86, 127
  %v229 = vpop.permute.xlu0 %228
  %230 = vrot.lane.b32.xlu0 %v87, 127
  %v231 = vpop.permute.xlu0 %230
  %232 = vrot.lane.b32.xlu0 %v88, 127
  %v233 = vpop.permute.xlu0 %232
  %234 = vrot.lane.b32.xlu0 %v89, 127
  %v235 = vpop.permute.xlu0 %234
  %236 = vrot.lane.b32.xlu0 %v90, 127
  %v237 = vpop.permute.xlu0 %236
  %238 = vrot.lane.b32.xlu0 %v91, 127
  %v239 = vpop.permute.xlu0 %238
  %240 = vrot.lane.b32.xlu0 %v92, 127
  %v241 = vpop.permute.xlu0 %240
  %242 = vrot.lane.b32.xlu0 %v93, 127
  %v243 = vpop.permute.xlu0 %242
  %244 = vrot.lane.b32.xlu0 %v94, 127
  %v245 = vpop.permute.xlu0 %244
  %246 = vrot.lane.b32.xlu0 %v95, 127
  %v247 = vpop.permute.xlu0 %246
  %248 = vrot.lane.b32.xlu0 %v96, 127
  %v249 = vpop.permute.xlu0 %248
  %250 = vrot.lane.b32.xlu0 %v97, 127
  %v251 = vpop.permute.xlu0 %250
  %252 = vrot.lane.b32.xlu0 %v98, 127
  %v253 = vpop.permute.xlu0 %252
  %254 = vrot.lane.b32.xlu0 %v99, 127
  %v255 = vpop.permute.xlu0 %254
  %256 = vrot.lane.b32.xlu0 %v100, 127
  %v257 = vpop.permute.xlu0 %256
  %258 = vrot.lane.b32.xlu0 %v101, 127
  %v259 = vpop.permute.xlu0 %258
  %260 = vrot.lane.b32.xlu0 %v102, 127
  %v261 = vpop.permute.xlu0 %260
  %262 = vrot.lane.b32.xlu0 %v103, 127
  %v263 = vpop.permute.xlu0 %262
  %264 = vrot.lane.b32.xlu0 %v104, 127
  %v265 = vpop.permute.xlu0 %264
  %266 = vrot.lane.b32.xlu0 %v105, 127
  %v267 = vpop.permute.xlu0 %266
  %268 = vrot.lane.b32.xlu0 %v106, 127
  %v269 = vpop.permute.xlu0 %268
  %270 = vrot.lane.b32.xlu0 %v107, 127
  %v271 = vpop.permute.xlu0 %270
  %272 = vrot.lane.b32.xlu0 %v108, 127
  %v273 = vpop.permute.xlu0 %272
  %274 = vrot.lane.b32.xlu0 %v109, 127
  %v275 = vpop.permute.xlu0 %274
  %276 = vrot.lane.b32.xlu0 %v110, 127
  %v277 = vpop.permute.xlu0 %276
  %278 = vrot.lane.b32.xlu0 %v111, 127
  %v279 = vpop.permute.xlu0 %278
  %280 = vrot.lane.b32.xlu0 %v112, 127
  %v281 = vpop.permute.xlu0 %280
  %282 = vrot.lane.b32.xlu0 %v113, 127
  %v283 = vpop.permute.xlu0 %282
  %284 = vrot.lane.b32.xlu0 %v114, 127
  %v285 = vpop.permute.xlu0 %284
  %286 = vrot.lane.b32.xlu0 %v115, 127
  %v287 = vpop.permute.xlu0 %286
  %288 = vrot.lane.b32.xlu0 %v116, 127
  %v289 = vpop.permute.xlu0 %288
  %290 = vrot.lane.b32.xlu0 %v117, 127
  %v291 = vpop.permute.xlu0 %290
  %292 = vrot.lane.b32.xlu0 %v118, 127
  %v293 = vpop.permute.xlu0 %292
  %294 = vrot.lane.b32.xlu0 %v119, 127
  %v295 = vpop.permute.xlu0 %294
  %296 = vrot.lane.b32.xlu0 %v120, 127
  %v297 = vpop.permute.xlu0 %296
  %298 = vrot.lane.b32.xlu0 %v121, 127
  %v299 = vpop.permute.xlu0 %298
  %300 = vrot.lane.b32.xlu0 %v122, 127
  %v301 = vpop.permute.xlu0 %300
  %302 = vrot.lane.b32.xlu0 %v123, 127
  %v303 = vpop.permute.xlu0 %302
  %304 = vrot.lane.b32.xlu0 %v124, 127
  %v305 = vpop.permute.xlu0 %304
  %306 = vrot.lane.b32.xlu0 %v125, 127
  %v307 = vpop.permute.xlu0 %306
  %308 = vrot.lane.b32.xlu0 %v126, 127
  %v309 = vpop.permute.xlu0 %308
  %310 = vrot.lane.b32.xlu0 %v127, 127
  %v311 = vpop.permute.xlu0 %310
  %312 = vrot.lane.b32.xlu0 %v128, 127
  %v313 = vpop.permute.xlu0 %312
  %314 = vrot.lane.b32.xlu0 %v129, 127
  %v315 = vpop.permute.xlu0 %314
  %316 = vrot.lane.b32.xlu0 %v130, 127
  %v317 = vpop.permute.xlu0 %316
  %318 = vrot.lane.b32.xlu0 %v131, 127
  %v319 = vpop.permute.xlu0 %318
  %320 = vrot.lane.b32.xlu0 %v132, 127
  %v321 = vpop.permute.xlu0 %320
  %322 = vrot.lane.b32.xlu0 %v133, 127
  %v323 = vpop.permute.xlu0 %322
  %324 = vrot.lane.b32.xlu0 %v134, 127
  %v325 = vpop.permute.xlu0 %324
  %326 = vrot.lane.b32.xlu0 %v135, 127
  %v327 = vpop.permute.xlu0 %326
  %v392 = vmax.f32 %v72, %v201
  %v393 = vmax.f32 %v73, %v203
  %v394 = vmax.f32 %v74, %v205
  %v395 = vmax.f32 %v75, %v207
  %v396 = vmax.f32 %v76, %v209
  %v397 = vmax.f32 %v77, %v211
  %v398 = vmax.f32 %v78, %v213
  %v399 = vmax.f32 %v79, %v215
  %v400 = vmax.f32 %v80, %v217
  %v401 = vmax.f32 %v81, %v219
  %v402 = vmax.f32 %v82, %v221
  %v403 = vmax.f32 %v83, %v223
  %v404 = vmax.f32 %v84, %v225
  %v405 = vmax.f32 %v85, %v227
  %v406 = vmax.f32 %v86, %v229
  %v407 = vmax.f32 %v87, %v231
  %v408 = vmax.f32 %v88, %v233
  %v409 = vmax.f32 %v89, %v235
  %v410 = vmax.f32 %v90, %v237
  %v411 = vmax.f32 %v91, %v239
  %v412 = vmax.f32 %v92, %v241
  %v413 = vmax.f32 %v93, %v243
  %v414 = vmax.f32 %v94, %v245
  %v415 = vmax.f32 %v95, %v247
  %v416 = vmax.f32 %v96, %v249
  %v417 = vmax.f32 %v97, %v251
  %v418 = vmax.f32 %v98, %v253
  %v419 = vmax.f32 %v99, %v255
  %v420 = vmax.f32 %v100, %v257
  %v421 = vmax.f32 %v101, %v259
  %v422 = vmax.f32 %v102, %v261
  %v423 = vmax.f32 %v103, %v263
  %v424 = vmax.f32 %v104, %v265
  %v425 = vmax.f32 %v105, %v267
  %v426 = vmax.f32 %v106, %v269
  %v427 = vmax.f32 %v107, %v271
  %v428 = vmax.f32 %v108, %v273
  %v429 = vmax.f32 %v109, %v275
  %v430 = vmax.f32 %v110, %v277
  %v431 = vmax.f32 %v111, %v279
  %v432 = vmax.f32 %v112, %v281
  %v433 = vmax.f32 %v113, %v283
  %v434 = vmax.f32 %v114, %v285
  %v435 = vmax.f32 %v115, %v287
  %v436 = vmax.f32 %v116, %v289
  %v437 = vmax.f32 %v117, %v291
  %v438 = vmax.f32 %v118, %v293
  %v439 = vmax.f32 %v119, %v295
  %v440 = vmax.f32 %v120, %v297
  %v441 = vmax.f32 %v121, %v299
  %v442 = vmax.f32 %v122, %v301
  %v443 = vmax.f32 %v123, %v303
  %v444 = vmax.f32 %v124, %v305
  %v445 = vmax.f32 %v125, %v307
  %v446 = vmax.f32 %v126, %v309
  %v447 = vmax.f32 %v127, %v311
  %v448 = vmax.f32 %v128, %v313
  %v449 = vmax.f32 %v129, %v315
  %v450 = vmax.f32 %v130, %v317
  %v451 = vmax.f32 %v131, %v319
  %v452 = vmax.f32 %v132, %v321
  %v453 = vmax.f32 %v133, %v323
  %v454 = vmax.f32 %v134, %v325
  %v455 = vmax.f32 %v135, %v327
  %456 = vrot.lane.b32.xlu0 %v72, 126
  %v457 = vpop.permute.xlu0 %456
  %458 = vrot.lane.b32.xlu0 %v73, 126
  %v459 = vpop.permute.xlu0 %458
  %460 = vrot.lane.b32.xlu0 %v74, 126
  %v461 = vpop.permute.xlu0 %460
  %462 = vrot.lane.b32.xlu0 %v75, 126
  %v463 = vpop.permute.xlu0 %462
  %464 = vrot.lane.b32.xlu0 %v76, 126
  %v465 = vpop.permute.xlu0 %464
  %466 = vrot.lane.b32.xlu0 %v77, 126
  %v467 = vpop.permute.xlu0 %466
  %468 = vrot.lane.b32.xlu0 %v78, 126
  %v469 = vpop.permute.xlu0 %468
  %470 = vrot.lane.b32.xlu0 %v79, 126
  %v471 = vpop.permute.xlu0 %470
  %472 = vrot.lane.b32.xlu0 %v80, 126
  %v473 = vpop.permute.xlu0 %472
  %474 = vrot.lane.b32.xlu0 %v81, 126
  %v475 = vpop.permute.xlu0 %474
  %476 = vrot.lane.b32.xlu0 %v82, 126
  %v477 = vpop.permute.xlu0 %476
  %478 = vrot.lane.b32.xlu0 %v83, 126
  %v479 = vpop.permute.xlu0 %478
  %480 = vrot.lane.b32.xlu0 %v84, 126
  %v481 = vpop.permute.xlu0 %480
  %482 = vrot.lane.b32.xlu0 %v85, 126
  %v483 = vpop.permute.xlu0 %482
  %484 = vrot.lane.b32.xlu0 %v86, 126
  %v485 = vpop.permute.xlu0 %484
  %486 = vrot.lane.b32.xlu0 %v87, 126
  %v487 = vpop.permute.xlu0 %486
  %488 = vrot.lane.b32.xlu0 %v88, 126
  %v489 = vpop.permute.xlu0 %488
  %490 = vrot.lane.b32.xlu0 %v89, 126
  %v491 = vpop.permute.xlu0 %490
  %492 = vrot.lane.b32.xlu0 %v90, 126
  %v493 = vpop.permute.xlu0 %492
  %494 = vrot.lane.b32.xlu0 %v91, 126
  %v495 = vpop.permute.xlu0 %494
  %496 = vrot.lane.b32.xlu0 %v92, 126
  %v497 = vpop.permute.xlu0 %496
  %498 = vrot.lane.b32.xlu0 %v93, 126
  %v499 = vpop.permute.xlu0 %498
  %500 = vrot.lane.b32.xlu0 %v94, 126
  %v501 = vpop.permute.xlu0 %500
  %502 = vrot.lane.b32.xlu0 %v95, 126
  %v503 = vpop.permute.xlu0 %502
  %504 = vrot.lane.b32.xlu0 %v96, 126
  %v505 = vpop.permute.xlu0 %504
  %506 = vrot.lane.b32.xlu0 %v97, 126
  %v507 = vpop.permute.xlu0 %506
  %508 = vrot.lane.b32.xlu0 %v98, 126
  %v509 = vpop.permute.xlu0 %508
  %510 = vrot.lane.b32.xlu0 %v99, 126
  %v511 = vpop.permute.xlu0 %510
  %512 = vrot.lane.b32.xlu0 %v100, 126
  %v513 = vpop.permute.xlu0 %512
  %514 = vrot.lane.b32.xlu0 %v101, 126
  %v515 = vpop.permute.xlu0 %514
  %516 = vrot.lane.b32.xlu0 %v102, 126
  %v517 = vpop.permute.xlu0 %516
  %518 = vrot.lane.b32.xlu0 %v103, 126
  %v519 = vpop.permute.xlu0 %518
  %520 = vrot.lane.b32.xlu0 %v104, 126
  %v521 = vpop.permute.xlu0 %520
  %522 = vrot.lane.b32.xlu0 %v105, 126
  %v523 = vpop.permute.xlu0 %522
  %524 = vrot.lane.b32.xlu0 %v106, 126
  %v525 = vpop.permute.xlu0 %524
  %526 = vrot.lane.b32.xlu0 %v107, 126
  %v527 = vpop.permute.xlu0 %526
  %528 = vrot.lane.b32.xlu0 %v108, 126
  %v529 = vpop.permute.xlu0 %528
  %530 = vrot.lane.b32.xlu0 %v109, 126
  %v531 = vpop.permute.xlu0 %530
  %532 = vrot.lane.b32.xlu0 %v110, 126
  %v533 = vpop.permute.xlu0 %532
  %534 = vrot.lane.b32.xlu0 %v111, 126
  %v535 = vpop.permute.xlu0 %534
  %536 = vrot.lane.b32.xlu0 %v112, 126
  %v537 = vpop.permute.xlu0 %536
  %538 = vrot.lane.b32.xlu0 %v113, 126
  %v539 = vpop.permute.xlu0 %538
  %540 = vrot.lane.b32.xlu0 %v114, 126
  %v541 = vpop.permute.xlu0 %540
  %542 = vrot.lane.b32.xlu0 %v115, 126
  %v543 = vpop.permute.xlu0 %542
  %544 = vrot.lane.b32.xlu0 %v116, 126
  %v545 = vpop.permute.xlu0 %544
  %546 = vrot.lane.b32.xlu0 %v117, 126
  %v547 = vpop.permute.xlu0 %546
  %548 = vrot.lane.b32.xlu0 %v118, 126
  %v549 = vpop.permute.xlu0 %548
  %550 = vrot.lane.b32.xlu0 %v119, 126
  %v551 = vpop.permute.xlu0 %550
  %552 = vrot.lane.b32.xlu0 %v120, 126
  %v553 = vpop.permute.xlu0 %552
  %554 = vrot.lane.b32.xlu0 %v121, 126
  %v555 = vpop.permute.xlu0 %554
  %556 = vrot.lane.b32.xlu0 %v122, 126
  %v557 = vpop.permute.xlu0 %556
  %558 = vrot.lane.b32.xlu0 %v123, 126
  %v559 = vpop.permute.xlu0 %558
  %560 = vrot.lane.b32.xlu0 %v124, 126
  %v561 = vpop.permute.xlu0 %560
  %562 = vrot.lane.b32.xlu0 %v125, 126
  %v563 = vpop.permute.xlu0 %562
  %564 = vrot.lane.b32.xlu0 %v126, 126
  %v565 = vpop.permute.xlu0 %564
  %566 = vrot.lane.b32.xlu0 %v127, 126
  %v567 = vpop.permute.xlu0 %566
  %568 = vrot.lane.b32.xlu0 %v128, 126
  %v569 = vpop.permute.xlu0 %568
  %570 = vrot.lane.b32.xlu0 %v129, 126
  %v571 = vpop.permute.xlu0 %570
  %572 = vrot.lane.b32.xlu0 %v130, 126
  %v573 = vpop.permute.xlu0 %572
  %574 = vrot.lane.b32.xlu0 %v131, 126
  %v575 = vpop.permute.xlu0 %574
  %576 = vrot.lane.b32.xlu0 %v132, 126
  %v577 = vpop.permute.xlu0 %576
  %578 = vrot.lane.b32.xlu0 %v133, 126
  %v579 = vpop.permute.xlu0 %578
  %580 = vrot.lane.b32.xlu0 %v134, 126
  %v581 = vpop.permute.xlu0 %580
  %582 = vrot.lane.b32.xlu0 %v135, 126
  %v583 = vpop.permute.xlu0 %582
  %v648 = vmax.f32 %v392, %v457
  %v649 = vmax.f32 %v393, %v459
  %v650 = vmax.f32 %v394, %v461
  %v651 = vmax.f32 %v395, %v463
  %v652 = vmax.f32 %v396, %v465
  %v653 = vmax.f32 %v397, %v467
  %v654 = vmax.f32 %v398, %v469
  %v655 = vmax.f32 %v399, %v471
  %v656 = vmax.f32 %v400, %v473
  %v657 = vmax.f32 %v401, %v475
  %v658 = vmax.f32 %v402, %v477
  %v659 = vmax.f32 %v403, %v479
  %v660 = vmax.f32 %v404, %v481
  %v661 = vmax.f32 %v405, %v483
  %v662 = vmax.f32 %v406, %v485
  %v663 = vmax.f32 %v407, %v487
  %v664 = vmax.f32 %v408, %v489
  %v665 = vmax.f32 %v409, %v491
  %v666 = vmax.f32 %v410, %v493
  %v667 = vmax.f32 %v411, %v495
  %v668 = vmax.f32 %v412, %v497
  %v669 = vmax.f32 %v413, %v499
  %v670 = vmax.f32 %v414, %v501
  %v671 = vmax.f32 %v415, %v503
  %v672 = vmax.f32 %v416, %v505
  %v673 = vmax.f32 %v417, %v507
  %v674 = vmax.f32 %v418, %v509
  %v675 = vmax.f32 %v419, %v511
  %v676 = vmax.f32 %v420, %v513
  %v677 = vmax.f32 %v421, %v515
  %v678 = vmax.f32 %v422, %v517
  %v679 = vmax.f32 %v423, %v519
  %v680 = vmax.f32 %v424, %v521
  %v681 = vmax.f32 %v425, %v523
  %v682 = vmax.f32 %v426, %v525
  %v683 = vmax.f32 %v427, %v527
  %v684 = vmax.f32 %v428, %v529
  %v685 = vmax.f32 %v429, %v531
  %v686 = vmax.f32 %v430, %v533
  %v687 = vmax.f32 %v431, %v535
  %v688 = vmax.f32 %v432, %v537
  %v689 = vmax.f32 %v433, %v539
  %v690 = vmax.f32 %v434, %v541
  %v691 = vmax.f32 %v435, %v543
  %v692 = vmax.f32 %v436, %v545
  %v693 = vmax.f32 %v437, %v547
  %v694 = vmax.f32 %v438, %v549
  %v695 = vmax.f32 %v439, %v551
  %v696 = vmax.f32 %v440, %v553
  %v697 = vmax.f32 %v441, %v555
  %v698 = vmax.f32 %v442, %v557
  %v699 = vmax.f32 %v443, %v559
  %v700 = vmax.f32 %v444, %v561
  %v701 = vmax.f32 %v445, %v563
  %v702 = vmax.f32 %v446, %v565
  %v703 = vmax.f32 %v447, %v567
  %v704 = vmax.f32 %v448, %v569
  %v705 = vmax.f32 %v449, %v571
  %v706 = vmax.f32 %v450, %v573
  %v707 = vmax.f32 %v451, %v575
  %v708 = vmax.f32 %v452, %v577
  %v709 = vmax.f32 %v453, %v579
  %v710 = vmax.f32 %v454, %v581
  %v711 = vmax.f32 %v455, %v583
  %v712 = vld [vmem:[%s0 + $0x10] sm:$0x1]
  %v713 = vld [vmem:[%s0 + $0x24] sm:$0x1]
  %v714 = vld [vmem:[%s0 + $0x38] sm:$0x1]
  %v715 = vld [vmem:[%s0 + $0x4c] sm:$0x1]
  %v716 = vld [vmem:[%s0 + $0x60] sm:$0x1]
  %v717 = vld [vmem:[%s0 + $0x74] sm:$0x1]
  %v718 = vld [vmem:[%s0 + $0x88] sm:$0x1]
  %v719 = vld [vmem:[%s0 + $0x9c] sm:$0x1]
  %v720 = vld [vmem:[%s0 + $0xb0] sm:$0x1]
  %v721 = vld [vmem:[%s0 + $0xc4] sm:$0x1]
  %v722 = vld [vmem:[%s0 + $0xd8] sm:$0x1]
  %v723 = vld [vmem:[%s0 + $0xec] sm:$0x1]
  %v724 = vld [vmem:[%s0 + $0x100] sm:$0x1]
  %v725 = vld [vmem:[%s0 + $0x114] sm:$0x1]
  %v726 = vld [vmem:[%s0 + $0x128] sm:$0x1]
  %v727 = vld [vmem:[%s0 + $0x13c] sm:$0x1]
  %v728 = vunpack.c.l.bf16 %v712
  %v729 = vunpack.c.l.bf16 %v713
  %v730 = vunpack.c.l.bf16 %v714
  %v731 = vunpack.c.l.bf16 %v715
  %v732 = vunpack.c.l.bf16 %v716
  %v733 = vunpack.c.l.bf16 %v717
  %v734 = vunpack.c.l.bf16 %v718
  %v735 = vunpack.c.l.bf16 %v719
  %v736 = vunpack.c.l.bf16 %v720
  %v737 = vunpack.c.l.bf16 %v721
  %v738 = vunpack.c.l.bf16 %v722
  %v739 = vunpack.c.l.bf16 %v723
  %v740 = vunpack.c.l.bf16 %v724
  %v741 = vunpack.c.l.bf16 %v725
  %v742 = vunpack.c.l.bf16 %v726
  %v743 = vunpack.c.l.bf16 %v727
  %vm760 = vcmask 1046528
  %v761 = vrot.slane %v72, 1
  %v762 = vrot.slane %v73, 1
  %v763 = vsel %vm760, %v761, %v762
  %v764 = vrot.slane %v74, 1
  %v765 = vsel %vm760, %v762, %v764
  %v766 = vrot.slane %v75, 1
  %v767 = vsel %vm760, %v764, %v766
  %v768 = vrot.slane %v728, 1
  %v769 = vsel %vm760, %v766, %v768
  %v770 = vrot.slane %v76, 1
  %v771 = vrot.slane %v77, 1
  %v772 = vsel %vm760, %v770, %v771
  %v773 = vrot.slane %v78, 1
  %v774 = vsel %vm760, %v771, %v773
  %v775 = vrot.slane %v79, 1
  %v776 = vsel %vm760, %v773, %v775
  %v777 = vrot.slane %v729, 1
  %v778 = vsel %vm760, %v775, %v777
  %v779 = vrot.slane %v80, 1
  %v780 = vrot.slane %v81, 1
  %v781 = vsel %vm760, %v779, %v780
  %v782 = vrot.slane %v82, 1
  %v783 = vsel %vm760, %v780, %v782
  %v784 = vrot.slane %v83, 1
  %v785 = vsel %vm760, %v782, %v784
  %v786 = vrot.slane %v730, 1
  %v787 = vsel %vm760, %v784, %v786
  %v788 = vrot.slane %v84, 1
  %v789 = vrot.slane %v85, 1
  %v790 = vsel %vm760, %v788, %v789
  %v791 = vrot.slane %v86, 1
  %v792 = vsel %vm760, %v789, %v791
  %v793 = vrot.slane %v87, 1
  %v794 = vsel %vm760, %v791, %v793
  %v795 = vrot.slane %v731, 1
  %v796 = vsel %vm760, %v793, %v795
  %v797 = vrot.slane %v88, 1
  %v798 = vrot.slane %v89, 1
  %v799 = vsel %vm760, %v797, %v798
  %v800 = vrot.slane %v90, 1
  %v801 = vsel %vm760, %v798, %v800
  %v802 = vrot.slane %v91, 1
  %v803 = vsel %vm760, %v800, %v802
  %v804 = vrot.slane %v732, 1
  %v805 = vsel %vm760, %v802, %v804
  %v806 = vrot.slane %v92, 1
  %v807 = vrot.slane %v93, 1
  %v808 = vsel %vm760, %v806, %v807
  %v809 = vrot.slane %v94, 1
  %v810 = vsel %vm760, %v807, %v809
  %v811 = vrot.slane %v95, 1
  %v812 = vsel %vm760, %v809, %v811
  %v813 = vrot.slane %v733, 1
  %v814 = vsel %vm760, %v811, %v813
  %v815 = vrot.slane %v96, 1
  %v816 = vrot.slane %v97, 1
  %v817 = vsel %vm760, %v815, %v816
  %v818 = vrot.slane %v98, 1
  %v819 = vsel %vm760, %v816, %v818
  %v820 = vrot.slane %v99, 1
  %v821 = vsel %vm760, %v818, %v820
  %v822 = vrot.slane %v734, 1
  %v823 = vsel %vm760, %v820, %v822
  %v824 = vrot.slane %v100, 1
  %v825 = vrot.slane %v101, 1
  %v826 = vsel %vm760, %v824, %v825
  %v827 = vrot.slane %v102, 1
  %v828 = vsel %vm760, %v825, %v827
  %v829 = vrot.slane %v103, 1
  %v830 = vsel %vm760, %v827, %v829
  %v831 = vrot.slane %v735, 1
  %v832 = vsel %vm760, %v829, %v831
  %v833 = vrot.slane %v104, 1
  %v834 = vrot.slane %v105, 1
  %v835 = vsel %vm760, %v833, %v834
  %v836 = vrot.slane %v106, 1
  %v837 = vsel %vm760, %v834, %v836
  %v838 = vrot.slane %v107, 1
  %v839 = vsel %vm760, %v836, %v838
  %v840 = vrot.slane %v736, 1
  %v841 = vsel %vm760, %v838, %v840
  %v842 = vrot.slane %v108, 1
  %v843 = vrot.slane %v109, 1
  %v844 = vsel %vm760, %v842, %v843
  %v845 = vrot.slane %v110, 1
  %v846 = vsel %vm760, %v843, %v845
  %v847 = vrot.slane %v111, 1
  %v848 = vsel %vm760, %v845, %v847
  %v849 = vrot.slane %v737, 1
  %v850 = vsel %vm760, %v847, %v849
  %v851 = vrot.slane %v112, 1
  %v852 = vrot.slane %v113, 1
  %v853 = vsel %vm760, %v851, %v852
  %v854 = vrot.slane %v114, 1
  %v855 = vsel %vm760, %v852, %v854
  %v856 = vrot.slane %v115, 1
  %v857 = vsel %vm760, %v854, %v856
  %v858 = vrot.slane %v738, 1
  %v859 = vsel %vm760, %v856, %v858
  %v860 = vrot.slane %v116, 1
  %v861 = vrot.slane %v117, 1
  %v862 = vsel %vm760, %v860, %v861
  %v863 = vrot.slane %v118, 1
  %v864 = vsel %vm760, %v861, %v863
  %v865 = vrot.slane %v119, 1
  %v866 = vsel %vm760, %v863, %v865
  %v867 = vrot.slane %v739, 1
  %v868 = vsel %vm760, %v865, %v867
  %v869 = vrot.slane %v120, 1
  %v870 = vrot.slane %v121, 1
  %v871 = vsel %vm760, %v869, %v870
  %v872 = vrot.slane %v122, 1
  %v873 = vsel %vm760, %v870, %v872
  %v874 = vrot.slane %v123, 1
  %v875 = vsel %vm760, %v872, %v874
  %v876 = vrot.slane %v740, 1
  %v877 = vsel %vm760, %v874, %v876
  %v878 = vrot.slane %v124, 1
  %v879 = vrot.slane %v125, 1
  %v880 = vsel %vm760, %v878, %v879
  %v881 = vrot.slane %v126, 1
  %v882 = vsel %vm760, %v879, %v881
  %v883 = vrot.slane %v127, 1
  %v884 = vsel %vm760, %v881, %v883
  %v885 = vrot.slane %v741, 1
  %v886 = vsel %vm760, %v883, %v885
  %v887 = vrot.slane %v128, 1
  %v888 = vrot.slane %v129, 1
  %v889 = vsel %vm760, %v887, %v888
  %v890 = vrot.slane %v130, 1
  %v891 = vsel %vm760, %v888, %v890
  %v892 = vrot.slane %v131, 1
  %v893 = vsel %vm760, %v890, %v892
  %v894 = vrot.slane %v742, 1
  %v895 = vsel %vm760, %v892, %v894
  %v896 = vrot.slane %v132, 1
  %v897 = vrot.slane %v133, 1
  %v898 = vsel %vm760, %v896, %v897
  %v899 = vrot.slane %v134, 1
  %v900 = vsel %vm760, %v897, %v899
  %v901 = vrot.slane %v135, 1
  %v902 = vsel %vm760, %v899, %v901
  %v903 = vrot.slane %v743, 1
  %v904 = vsel %vm760, %v901, %v903
  %v969 = vmax.f32 %v648, %v763
  %v970 = vmax.f32 %v649, %v765
  %v971 = vmax.f32 %v650, %v767
  %v972 = vmax.f32 %v651, %v769
  %v973 = vmax.f32 %v652, %v772
  %v974 = vmax.f32 %v653, %v774
  %v975 = vmax.f32 %v654, %v776
  %v976 = vmax.f32 %v655, %v778
  %v977 = vmax.f32 %v656, %v781
  %v978 = vmax.f32 %v657, %v783
  %v979 = vmax.f32 %v658, %v785
  %v980 = vmax.f32 %v659, %v787
  %v981 = vmax.f32 %v660, %v790
  %v982 = vmax.f32 %v661, %v792
  %v983 = vmax.f32 %v662, %v794
  %v984 = vmax.f32 %v663, %v796
  %v985 = vmax.f32 %v664, %v799
  %v986 = vmax.f32 %v665, %v801
  %v987 = vmax.f32 %v666, %v803
  %v988 = vmax.f32 %v667, %v805
  %v989 = vmax.f32 %v668, %v808
  %v990 = vmax.f32 %v669, %v810
  %v991 = vmax.f32 %v670, %v812
  %v992 = vmax.f32 %v671, %v814
  %v993 = vmax.f32 %v672, %v817
  %v994 = vmax.f32 %v673, %v819
  %v995 = vmax.f32 %v674, %v821
  %v996 = vmax.f32 %v675, %v823
  %v997 = vmax.f32 %v676, %v826
  %v998 = vmax.f32 %v677, %v828
  %v999 = vmax.f32 %v678, %v830
  %v1000 = vmax.f32 %v679, %v832
  %v1001 = vmax.f32 %v680, %v835
  %v1002 = vmax.f32 %v681, %v837
  %v1003 = vmax.f32 %v682, %v839
  %v1004 = vmax.f32 %v683, %v841
  %v1005 = vmax.f32 %v684, %v844
  %v1006 = vmax.f32 %v685, %v846
  %v1007 = vmax.f32 %v686, %v848
  %v1008 = vmax.f32 %v687, %v850
  %v1009 = vmax.f32 %v688, %v853
  %v1010 = vmax.f32 %v689, %v855
  %v1011 = vmax.f32 %v690, %v857
  %v1012 = vmax.f32 %v691, %v859
  %v1013 = vmax.f32 %v692, %v862
  %v1014 = vmax.f32 %v693, %v864
  %v1015 = vmax.f32 %v694, %v866
  %v1016 = vmax.f32 %v695, %v868
  %v1017 = vmax.f32 %v696, %v871
  %v1018 = vmax.f32 %v697, %v873
  %v1019 = vmax.f32 %v698, %v875
  %v1020 = vmax.f32 %v699, %v877
  %v1021 = vmax.f32 %v700, %v880
  %v1022 = vmax.f32 %v701, %v882
  %v1023 = vmax.f32 %v702, %v884
  %v1024 = vmax.f32 %v703, %v886
  %v1025 = vmax.f32 %v704, %v889
  %v1026 = vmax.f32 %v705, %v891
  %v1027 = vmax.f32 %v706, %v893
  %v1028 = vmax.f32 %v707, %v895
  %v1029 = vmax.f32 %v708, %v898
  %v1030 = vmax.f32 %v709, %v900
  %v1031 = vmax.f32 %v710, %v902
  %v1032 = vmax.f32 %v711, %v904
  %1033 = vrot.lane.b32.xlu0 %v763, 127
  %v1034 = vpop.permute.xlu0 %1033
  %1035 = vrot.lane.b32.xlu0 %v765, 127
  %v1036 = vpop.permute.xlu0 %1035
  %1037 = vrot.lane.b32.xlu0 %v767, 127
  %v1038 = vpop.permute.xlu0 %1037
  %1039 = vrot.lane.b32.xlu0 %v769, 127
  %v1040 = vpop.permute.xlu0 %1039
  %1041 = vrot.lane.b32.xlu0 %v772, 127
  %v1042 = vpop.permute.xlu0 %1041
  %1043 = vrot.lane.b32.xlu0 %v774, 127
  %v1044 = vpop.permute.xlu0 %1043
  %1045 = vrot.lane.b32.xlu0 %v776, 127
  %v1046 = vpop.permute.xlu0 %1045
  %1047 = vrot.lane.b32.xlu0 %v778, 127
  %v1048 = vpop.permute.xlu0 %1047
  %1049 = vrot.lane.b32.xlu0 %v781, 127
  %v1050 = vpop.permute.xlu0 %1049
  %1051 = vrot.lane.b32.xlu0 %v783, 127
  %v1052 = vpop.permute.xlu0 %1051
  %1053 = vrot.lane.b32.xlu0 %v785, 127
  %v1054 = vpop.permute.xlu0 %1053
  %1055 = vrot.lane.b32.xlu0 %v787, 127
  %v1056 = vpop.permute.xlu0 %1055
  %1057 = vrot.lane.b32.xlu0 %v790, 127
  %v1058 = vpop.permute.xlu0 %1057
  %1059 = vrot.lane.b32.xlu0 %v792, 127
  %v1060 = vpop.permute.xlu0 %1059
  %1061 = vrot.lane.b32.xlu0 %v794, 127
  %v1062 = vpop.permute.xlu0 %1061
  %1063 = vrot.lane.b32.xlu0 %v796, 127
  %v1064 = vpop.permute.xlu0 %1063
  %1065 = vrot.lane.b32.xlu0 %v799, 127
  %v1066 = vpop.permute.xlu0 %1065
  %1067 = vrot.lane.b32.xlu0 %v801, 127
  %v1068 = vpop.permute.xlu0 %1067
  %1069 = vrot.lane.b32.xlu0 %v803, 127
  %v1070 = vpop.permute.xlu0 %1069
  %1071 = vrot.lane.b32.xlu0 %v805, 127
  %v1072 = vpop.permute.xlu0 %1071
  %1073 = vrot.lane.b32.xlu0 %v808, 127
  %v1074 = vpop.permute.xlu0 %1073
  %1075 = vrot.lane.b32.xlu0 %v810, 127
  %v1076 = vpop.permute.xlu0 %1075
  %1077 = vrot.lane.b32.xlu0 %v812, 127
  %v1078 = vpop.permute.xlu0 %1077
  %1079 = vrot.lane.b32.xlu0 %v814, 127
  %v1080 = vpop.permute.xlu0 %1079
  %1081 = vrot.lane.b32.xlu0 %v817, 127
  %v1082 = vpop.permute.xlu0 %1081
  %1083 = vrot.lane.b32.xlu0 %v819, 127
  %v1084 = vpop.permute.xlu0 %1083
  %1085 = vrot.lane.b32.xlu0 %v821, 127
  %v1086 = vpop.permute.xlu0 %1085
  %1087 = vrot.lane.b32.xlu0 %v823, 127
  %v1088 = vpop.permute.xlu0 %1087
  %1089 = vrot.lane.b32.xlu0 %v826, 127
  %v1090 = vpop.permute.xlu0 %1089
  %1091 = vrot.lane.b32.xlu0 %v828, 127
  %v1092 = vpop.permute.xlu0 %1091
  %1093 = vrot.lane.b32.xlu0 %v830, 127
  %v1094 = vpop.permute.xlu0 %1093
  %1095 = vrot.lane.b32.xlu0 %v832, 127
  %v1096 = vpop.permute.xlu0 %1095
  %1097 = vrot.lane.b32.xlu0 %v835, 127
  %v1098 = vpop.permute.xlu0 %1097
  %1099 = vrot.lane.b32.xlu0 %v837, 127
  %v1100 = vpop.permute.xlu0 %1099
  %1101 = vrot.lane.b32.xlu0 %v839, 127
  %v1102 = vpop.permute.xlu0 %1101
  %1103 = vrot.lane.b32.xlu0 %v841, 127
  %v1104 = vpop.permute.xlu0 %1103
  %1105 = vrot.lane.b32.xlu0 %v844, 127
  %v1106 = vpop.permute.xlu0 %1105
  %1107 = vrot.lane.b32.xlu0 %v846, 127
  %v1108 = vpop.permute.xlu0 %1107
  %1109 = vrot.lane.b32.xlu0 %v848, 127
  %v1110 = vpop.permute.xlu0 %1109
  %1111 = vrot.lane.b32.xlu0 %v850, 127
  %v1112 = vpop.permute.xlu0 %1111
  %1113 = vrot.lane.b32.xlu0 %v853, 127
  %v1114 = vpop.permute.xlu0 %1113
  %1115 = vrot.lane.b32.xlu0 %v855, 127
  %v1116 = vpop.permute.xlu0 %1115
  %1117 = vrot.lane.b32.xlu0 %v857, 127
  %v1118 = vpop.permute.xlu0 %1117
  %1119 = vrot.lane.b32.xlu0 %v859, 127
  %v1120 = vpop.permute.xlu0 %1119
  %1121 = vrot.lane.b32.xlu0 %v862, 127
  %v1122 = vpop.permute.xlu0 %1121
  %1123 = vrot.lane.b32.xlu0 %v864, 127
  %v1124 = vpop.permute.xlu0 %1123
  %1125 = vrot.lane.b32.xlu0 %v866, 127
  %v1126 = vpop.permute.xlu0 %1125
  %1127 = vrot.lane.b32.xlu0 %v868, 127
  %v1128 = vpop.permute.xlu0 %1127
  %1129 = vrot.lane.b32.xlu0 %v871, 127
  %v1130 = vpop.permute.xlu0 %1129
  %1131 = vrot.lane.b32.xlu0 %v873, 127
  %v1132 = vpop.permute.xlu0 %1131
  %1133 = vrot.lane.b32.xlu0 %v875, 127
  %v1134 = vpop.permute.xlu0 %1133
  %1135 = vrot.lane.b32.xlu0 %v877, 127
  %v1136 = vpop.permute.xlu0 %1135
  %1137 = vrot.lane.b32.xlu0 %v880, 127
  %v1138 = vpop.permute.xlu0 %1137
  %1139 = vrot.lane.b32.xlu0 %v882, 127
  %v1140 = vpop.permute.xlu0 %1139
  %1141 = vrot.lane.b32.xlu0 %v884, 127
  %v1142 = vpop.permute.xlu0 %1141
  %1143 = vrot.lane.b32.xlu0 %v886, 127
  %v1144 = vpop.permute.xlu0 %1143
  %1145 = vrot.lane.b32.xlu0 %v889, 127
  %v1146 = vpop.permute.xlu0 %1145
  %1147 = vrot.lane.b32.xlu0 %v891, 127
  %v1148 = vpop.permute.xlu0 %1147
  %1149 = vrot.lane.b32.xlu0 %v893, 127
  %v1150 = vpop.permute.xlu0 %1149
  %1151 = vrot.lane.b32.xlu0 %v895, 127
  %v1152 = vpop.permute.xlu0 %1151
  %1153 = vrot.lane.b32.xlu0 %v898, 127
  %v1154 = vpop.permute.xlu0 %1153
  %1155 = vrot.lane.b32.xlu0 %v900, 127
  %v1156 = vpop.permute.xlu0 %1155
  %1157 = vrot.lane.b32.xlu0 %v902, 127
  %v1158 = vpop.permute.xlu0 %1157
  %1159 = vrot.lane.b32.xlu0 %v904, 127
  %v1160 = vpop.permute.xlu0 %1159
  %v1225 = vmax.f32 %v969, %v1034
  %v1226 = vmax.f32 %v970, %v1036
  %v1227 = vmax.f32 %v971, %v1038
  %v1228 = vmax.f32 %v972, %v1040
  %v1229 = vmax.f32 %v973, %v1042
  %v1230 = vmax.f32 %v974, %v1044
  %v1231 = vmax.f32 %v975, %v1046
  %v1232 = vmax.f32 %v976, %v1048
  %v1233 = vmax.f32 %v977, %v1050
  %v1234 = vmax.f32 %v978, %v1052
  %v1235 = vmax.f32 %v979, %v1054
  %v1236 = vmax.f32 %v980, %v1056
  %v1237 = vmax.f32 %v981, %v1058
  %v1238 = vmax.f32 %v982, %v1060
  %v1239 = vmax.f32 %v983, %v1062
  %v1240 = vmax.f32 %v984, %v1064
  %v1241 = vmax.f32 %v985, %v1066
  %v1242 = vmax.f32 %v986, %v1068
  %v1243 = vmax.f32 %v987, %v1070
  %v1244 = vmax.f32 %v988, %v1072
  %v1245 = vmax.f32 %v989, %v1074
  %v1246 = vmax.f32 %v990, %v1076
  %v1247 = vmax.f32 %v991, %v1078
  %v1248 = vmax.f32 %v992, %v1080
  %v1249 = vmax.f32 %v993, %v1082
  %v1250 = vmax.f32 %v994, %v1084
  %v1251 = vmax.f32 %v995, %v1086
  %v1252 = vmax.f32 %v996, %v1088
  %v1253 = vmax.f32 %v997, %v1090
  %v1254 = vmax.f32 %v998, %v1092
  %v1255 = vmax.f32 %v999, %v1094
  %v1256 = vmax.f32 %v1000, %v1096
  %v1257 = vmax.f32 %v1001, %v1098
  %v1258 = vmax.f32 %v1002, %v1100
  %v1259 = vmax.f32 %v1003, %v1102
  %v1260 = vmax.f32 %v1004, %v1104
  %v1261 = vmax.f32 %v1005, %v1106
  %v1262 = vmax.f32 %v1006, %v1108
  %v1263 = vmax.f32 %v1007, %v1110
  %v1264 = vmax.f32 %v1008, %v1112
  %v1265 = vmax.f32 %v1009, %v1114
  %v1266 = vmax.f32 %v1010, %v1116
  %v1267 = vmax.f32 %v1011, %v1118
  %v1268 = vmax.f32 %v1012, %v1120
  %v1269 = vmax.f32 %v1013, %v1122
  %v1270 = vmax.f32 %v1014, %v1124
  %v1271 = vmax.f32 %v1015, %v1126
  %v1272 = vmax.f32 %v1016, %v1128
  %v1273 = vmax.f32 %v1017, %v1130
  %v1274 = vmax.f32 %v1018, %v1132
  %v1275 = vmax.f32 %v1019, %v1134
  %v1276 = vmax.f32 %v1020, %v1136
  %v1277 = vmax.f32 %v1021, %v1138
  %v1278 = vmax.f32 %v1022, %v1140
  %v1279 = vmax.f32 %v1023, %v1142
  %v1280 = vmax.f32 %v1024, %v1144
  %v1281 = vmax.f32 %v1025, %v1146
  %v1282 = vmax.f32 %v1026, %v1148
  %v1283 = vmax.f32 %v1027, %v1150
  %v1284 = vmax.f32 %v1028, %v1152
  %v1285 = vmax.f32 %v1029, %v1154
  %v1286 = vmax.f32 %v1030, %v1156
  %v1287 = vmax.f32 %v1031, %v1158
  %v1288 = vmax.f32 %v1032, %v1160
  %1289 = vrot.lane.b32.xlu0 %v763, 126
  %v1290 = vpop.permute.xlu0 %1289
  %1291 = vrot.lane.b32.xlu0 %v765, 126
  %v1292 = vpop.permute.xlu0 %1291
  %1293 = vrot.lane.b32.xlu0 %v767, 126
  %v1294 = vpop.permute.xlu0 %1293
  %1295 = vrot.lane.b32.xlu0 %v769, 126
  %v1296 = vpop.permute.xlu0 %1295
  %1297 = vrot.lane.b32.xlu0 %v772, 126
  %v1298 = vpop.permute.xlu0 %1297
  %1299 = vrot.lane.b32.xlu0 %v774, 126
  %v1300 = vpop.permute.xlu0 %1299
  %1301 = vrot.lane.b32.xlu0 %v776, 126
  %v1302 = vpop.permute.xlu0 %1301
  %1303 = vrot.lane.b32.xlu0 %v778, 126
  %v1304 = vpop.permute.xlu0 %1303
  %1305 = vrot.lane.b32.xlu0 %v781, 126
  %v1306 = vpop.permute.xlu0 %1305
  %1307 = vrot.lane.b32.xlu0 %v783, 126
  %v1308 = vpop.permute.xlu0 %1307
  %1309 = vrot.lane.b32.xlu0 %v785, 126
  %v1310 = vpop.permute.xlu0 %1309
  %1311 = vrot.lane.b32.xlu0 %v787, 126
  %v1312 = vpop.permute.xlu0 %1311
  %1313 = vrot.lane.b32.xlu0 %v790, 126
  %v1314 = vpop.permute.xlu0 %1313
  %1315 = vrot.lane.b32.xlu0 %v792, 126
  %v1316 = vpop.permute.xlu0 %1315
  %1317 = vrot.lane.b32.xlu0 %v794, 126
  %v1318 = vpop.permute.xlu0 %1317
  %1319 = vrot.lane.b32.xlu0 %v796, 126
  %v1320 = vpop.permute.xlu0 %1319
  %1321 = vrot.lane.b32.xlu0 %v799, 126
  %v1322 = vpop.permute.xlu0 %1321
  %1323 = vrot.lane.b32.xlu0 %v801, 126
  %v1324 = vpop.permute.xlu0 %1323
  %1325 = vrot.lane.b32.xlu0 %v803, 126
  %v1326 = vpop.permute.xlu0 %1325
  %1327 = vrot.lane.b32.xlu0 %v805, 126
  %v1328 = vpop.permute.xlu0 %1327
  %1329 = vrot.lane.b32.xlu0 %v808, 126
  %v1330 = vpop.permute.xlu0 %1329
  %1331 = vrot.lane.b32.xlu0 %v810, 126
  %v1332 = vpop.permute.xlu0 %1331
  %1333 = vrot.lane.b32.xlu0 %v812, 126
  %v1334 = vpop.permute.xlu0 %1333
  %1335 = vrot.lane.b32.xlu0 %v814, 126
  %v1336 = vpop.permute.xlu0 %1335
  %1337 = vrot.lane.b32.xlu0 %v817, 126
  %v1338 = vpop.permute.xlu0 %1337
  %1339 = vrot.lane.b32.xlu0 %v819, 126
  %v1340 = vpop.permute.xlu0 %1339
  %1341 = vrot.lane.b32.xlu0 %v821, 126
  %v1342 = vpop.permute.xlu0 %1341
  %1343 = vrot.lane.b32.xlu0 %v823, 126
  %v1344 = vpop.permute.xlu0 %1343
  %1345 = vrot.lane.b32.xlu0 %v826, 126
  %v1346 = vpop.permute.xlu0 %1345
  %1347 = vrot.lane.b32.xlu0 %v828, 126
  %v1348 = vpop.permute.xlu0 %1347
  %1349 = vrot.lane.b32.xlu0 %v830, 126
  %v1350 = vpop.permute.xlu0 %1349
  %1351 = vrot.lane.b32.xlu0 %v832, 126
  %v1352 = vpop.permute.xlu0 %1351
  %1353 = vrot.lane.b32.xlu0 %v835, 126
  %v1354 = vpop.permute.xlu0 %1353
  %1355 = vrot.lane.b32.xlu0 %v837, 126
  %v1356 = vpop.permute.xlu0 %1355
  %1357 = vrot.lane.b32.xlu0 %v839, 126
  %v1358 = vpop.permute.xlu0 %1357
  %1359 = vrot.lane.b32.xlu0 %v841, 126
  %v1360 = vpop.permute.xlu0 %1359
  %1361 = vrot.lane.b32.xlu0 %v844, 126
  %v1362 = vpop.permute.xlu0 %1361
  %1363 = vrot.lane.b32.xlu0 %v846, 126
  %v1364 = vpop.permute.xlu0 %1363
  %1365 = vrot.lane.b32.xlu0 %v848, 126
  %v1366 = vpop.permute.xlu0 %1365
  %1367 = vrot.lane.b32.xlu0 %v850, 126
  %v1368 = vpop.permute.xlu0 %1367
  %1369 = vrot.lane.b32.xlu0 %v853, 126
  %v1370 = vpop.permute.xlu0 %1369
  %1371 = vrot.lane.b32.xlu0 %v855, 126
  %v1372 = vpop.permute.xlu0 %1371
  %1373 = vrot.lane.b32.xlu0 %v857, 126
  %v1374 = vpop.permute.xlu0 %1373
  %1375 = vrot.lane.b32.xlu0 %v859, 126
  %v1376 = vpop.permute.xlu0 %1375
  %1377 = vrot.lane.b32.xlu0 %v862, 126
  %v1378 = vpop.permute.xlu0 %1377
  %1379 = vrot.lane.b32.xlu0 %v864, 126
  %v1380 = vpop.permute.xlu0 %1379
  %1381 = vrot.lane.b32.xlu0 %v866, 126
  %v1382 = vpop.permute.xlu0 %1381
  %1383 = vrot.lane.b32.xlu0 %v868, 126
  %v1384 = vpop.permute.xlu0 %1383
  %1385 = vrot.lane.b32.xlu0 %v871, 126
  %v1386 = vpop.permute.xlu0 %1385
  %1387 = vrot.lane.b32.xlu0 %v873, 126
  %v1388 = vpop.permute.xlu0 %1387
  %1389 = vrot.lane.b32.xlu0 %v875, 126
  %v1390 = vpop.permute.xlu0 %1389
  %1391 = vrot.lane.b32.xlu0 %v877, 126
  %v1392 = vpop.permute.xlu0 %1391
  %1393 = vrot.lane.b32.xlu0 %v880, 126
  %v1394 = vpop.permute.xlu0 %1393
  %1395 = vrot.lane.b32.xlu0 %v882, 126
  %v1396 = vpop.permute.xlu0 %1395
  %1397 = vrot.lane.b32.xlu0 %v884, 126
  %v1398 = vpop.permute.xlu0 %1397
  %1399 = vrot.lane.b32.xlu0 %v886, 126
  %v1400 = vpop.permute.xlu0 %1399
  %1401 = vrot.lane.b32.xlu0 %v889, 126
  %v1402 = vpop.permute.xlu0 %1401
  %1403 = vrot.lane.b32.xlu0 %v891, 126
  %v1404 = vpop.permute.xlu0 %1403
  %1405 = vrot.lane.b32.xlu0 %v893, 126
  %v1406 = vpop.permute.xlu0 %1405
  %1407 = vrot.lane.b32.xlu0 %v895, 126
  %v1408 = vpop.permute.xlu0 %1407
  %1409 = vrot.lane.b32.xlu0 %v898, 126
  %v1410 = vpop.permute.xlu0 %1409
  %1411 = vrot.lane.b32.xlu0 %v900, 126
  %v1412 = vpop.permute.xlu0 %1411
  %1413 = vrot.lane.b32.xlu0 %v902, 126
  %v1414 = vpop.permute.xlu0 %1413
  %1415 = vrot.lane.b32.xlu0 %v904, 126
  %v1416 = vpop.permute.xlu0 %1415
  %v1481 = vmax.f32 %v1225, %v1290
  %v1482 = vmax.f32 %v1226, %v1292
  %v1483 = vmax.f32 %v1227, %v1294
  %v1484 = vmax.f32 %v1228, %v1296
  %v1485 = vmax.f32 %v1229, %v1298
  %v1486 = vmax.f32 %v1230, %v1300
  %v1487 = vmax.f32 %v1231, %v1302
  %v1488 = vmax.f32 %v1232, %v1304
  %v1489 = vmax.f32 %v1233, %v1306
  %v1490 = vmax.f32 %v1234, %v1308
  %v1491 = vmax.f32 %v1235, %v1310
  %v1492 = vmax.f32 %v1236, %v1312
  %v1493 = vmax.f32 %v1237, %v1314
  %v1494 = vmax.f32 %v1238, %v1316
  %v1495 = vmax.f32 %v1239, %v1318
  %v1496 = vmax.f32 %v1240, %v1320
  %v1497 = vmax.f32 %v1241, %v1322
  %v1498 = vmax.f32 %v1242, %v1324
  %v1499 = vmax.f32 %v1243, %v1326
  %v1500 = vmax.f32 %v1244, %v1328
  %v1501 = vmax.f32 %v1245, %v1330
  %v1502 = vmax.f32 %v1246, %v1332
  %v1503 = vmax.f32 %v1247, %v1334
  %v1504 = vmax.f32 %v1248, %v1336
  %v1505 = vmax.f32 %v1249, %v1338
  %v1506 = vmax.f32 %v1250, %v1340
  %v1507 = vmax.f32 %v1251, %v1342
  %v1508 = vmax.f32 %v1252, %v1344
  %v1509 = vmax.f32 %v1253, %v1346
  %v1510 = vmax.f32 %v1254, %v1348
  %v1511 = vmax.f32 %v1255, %v1350
  %v1512 = vmax.f32 %v1256, %v1352
  %v1513 = vmax.f32 %v1257, %v1354
  %v1514 = vmax.f32 %v1258, %v1356
  %v1515 = vmax.f32 %v1259, %v1358
  %v1516 = vmax.f32 %v1260, %v1360
  %v1517 = vmax.f32 %v1261, %v1362
  %v1518 = vmax.f32 %v1262, %v1364
  %v1519 = vmax.f32 %v1263, %v1366
  %v1520 = vmax.f32 %v1264, %v1368
  %v1521 = vmax.f32 %v1265, %v1370
  %v1522 = vmax.f32 %v1266, %v1372
  %v1523 = vmax.f32 %v1267, %v1374
  %v1524 = vmax.f32 %v1268, %v1376
  %v1525 = vmax.f32 %v1269, %v1378
  %v1526 = vmax.f32 %v1270, %v1380
  %v1527 = vmax.f32 %v1271, %v1382
  %v1528 = vmax.f32 %v1272, %v1384
  %v1529 = vmax.f32 %v1273, %v1386
  %v1530 = vmax.f32 %v1274, %v1388
  %v1531 = vmax.f32 %v1275, %v1390
  %v1532 = vmax.f32 %v1276, %v1392
  %v1533 = vmax.f32 %v1277, %v1394
  %v1534 = vmax.f32 %v1278, %v1396
  %v1535 = vmax.f32 %v1279, %v1398
  %v1536 = vmax.f32 %v1280, %v1400
  %v1537 = vmax.f32 %v1281, %v1402
  %v1538 = vmax.f32 %v1282, %v1404
  %v1539 = vmax.f32 %v1283, %v1406
  %v1540 = vmax.f32 %v1284, %v1408
  %v1541 = vmax.f32 %v1285, %v1410
  %v1542 = vmax.f32 %v1286, %v1412
  %v1543 = vmax.f32 %v1287, %v1414
  %v1544 = vmax.f32 %v1288, %v1416
  %v1545 = vld [vmem:[%s0] sm:$0xe]
  %v1546 = vld [vmem:[%s0 + $0x14] sm:$0xe]
  %v1547 = vld [vmem:[%s0 + $0x28] sm:$0xe]
  %v1548 = vld [vmem:[%s0 + $0x3c] sm:$0xe]
  %v1549 = vld [vmem:[%s0 + $0x50] sm:$0xe]
  %v1550 = vld [vmem:[%s0 + $0x64] sm:$0xe]
  %v1551 = vld [vmem:[%s0 + $0x78] sm:$0xe]
  %v1552 = vld [vmem:[%s0 + $0x8c] sm:$0xe]
  %v1553 = vld [vmem:[%s0 + $0xa0] sm:$0xe]
  %v1554 = vld [vmem:[%s0 + $0xb4] sm:$0xe]
  %v1555 = vld [vmem:[%s0 + $0xc8] sm:$0xe]
  %v1556 = vld [vmem:[%s0 + $0xdc] sm:$0xe]
  %v1557 = vld [vmem:[%s0 + $0xf0] sm:$0xe]
  %v1558 = vld [vmem:[%s0 + $0x104] sm:$0xe]
  %v1559 = vld [vmem:[%s0 + $0x118] sm:$0xe]
  %v1560 = vld [vmem:[%s0 + $0x12c] sm:$0xe]
  %v1561 = vunpack.c.l.bf16 %v1545
  %v1562 = vunpack.c.l.bf16 %v1546
  %v1563 = vunpack.c.l.bf16 %v1547
  %v1564 = vunpack.c.l.bf16 %v1548
  %v1565 = vunpack.c.l.bf16 %v1549
  %v1566 = vunpack.c.l.bf16 %v1550
  %v1567 = vunpack.c.l.bf16 %v1551
  %v1568 = vunpack.c.l.bf16 %v1552
  %v1569 = vunpack.c.l.bf16 %v1553
  %v1570 = vunpack.c.l.bf16 %v1554
  %v1571 = vunpack.c.l.bf16 %v1555
  %v1572 = vunpack.c.l.bf16 %v1556
  %v1573 = vunpack.c.l.bf16 %v1557
  %v1574 = vunpack.c.l.bf16 %v1558
  %v1575 = vunpack.c.l.bf16 %v1559
  %v1576 = vunpack.c.l.bf16 %v1560
  %vm1593 = vcmask 1045504
  %v1594 = vrot.slane %v1561, 2
  %v1595 = vrot.slane %v73, 2
  %v1596 = vsel %vm1593, %v1594, %v1595
  %v1597 = vrot.slane %v74, 2
  %v1598 = vsel %vm1593, %v1595, %v1597
  %v1599 = vrot.slane %v75, 2
  %v1600 = vsel %vm1593, %v1597, %v1599
  %v1601 = vrot.slane %v728, 2
  %v1602 = vsel %vm1593, %v1599, %v1601
  %v1603 = vrot.slane %v1562, 2
  %v1604 = vrot.slane %v77, 2
  %v1605 = vsel %vm1593, %v1603, %v1604
  %v1606 = vrot.slane %v78, 2
  %v1607 = vsel %vm1593, %v1604, %v1606
  %v1608 = vrot.slane %v79, 2
  %v1609 = vsel %vm1593, %v1606, %v1608
  %v1610 = vrot.slane %v729, 2
  %v1611 = vsel %vm1593, %v1608, %v1610
  %v1612 = vrot.slane %v1563, 2
  %v1613 = vrot.slane %v81, 2
  %v1614 = vsel %vm1593, %v1612, %v1613
  %v1615 = vrot.slane %v82, 2
  %v1616 = vsel %vm1593, %v1613, %v1615
  %v1617 = vrot.slane %v83, 2
  %v1618 = vsel %vm1593, %v1615, %v1617
  %v1619 = vrot.slane %v730, 2
  %v1620 = vsel %vm1593, %v1617, %v1619
  %v1621 = vrot.slane %v1564, 2
  %v1622 = vrot.slane %v85, 2
  %v1623 = vsel %vm1593, %v1621, %v1622
  %v1624 = vrot.slane %v86, 2
  %v1625 = vsel %vm1593, %v1622, %v1624
  %v1626 = vrot.slane %v87, 2
  %v1627 = vsel %vm1593, %v1624, %v1626
  %v1628 = vrot.slane %v731, 2
  %v1629 = vsel %vm1593, %v1626, %v1628
  %v1630 = vrot.slane %v1565, 2
  %v1631 = vrot.slane %v89, 2
  %v1632 = vsel %vm1593, %v1630, %v1631
  %v1633 = vrot.slane %v90, 2
  %v1634 = vsel %vm1593, %v1631, %v1633
  %v1635 = vrot.slane %v91, 2
  %v1636 = vsel %vm1593, %v1633, %v1635
  %v1637 = vrot.slane %v732, 2
  %v1638 = vsel %vm1593, %v1635, %v1637
  %v1639 = vrot.slane %v1566, 2
  %v1640 = vrot.slane %v93, 2
  %v1641 = vsel %vm1593, %v1639, %v1640
  %v1642 = vrot.slane %v94, 2
  %v1643 = vsel %vm1593, %v1640, %v1642
  %v1644 = vrot.slane %v95, 2
  %v1645 = vsel %vm1593, %v1642, %v1644
  %v1646 = vrot.slane %v733, 2
  %v1647 = vsel %vm1593, %v1644, %v1646
  %v1648 = vrot.slane %v1567, 2
  %v1649 = vrot.slane %v97, 2
  %v1650 = vsel %vm1593, %v1648, %v1649
  %v1651 = vrot.slane %v98, 2
  %v1652 = vsel %vm1593, %v1649, %v1651
  %v1653 = vrot.slane %v99, 2
  %v1654 = vsel %vm1593, %v1651, %v1653
  %v1655 = vrot.slane %v734, 2
  %v1656 = vsel %vm1593, %v1653, %v1655
  %v1657 = vrot.slane %v1568, 2
  %v1658 = vrot.slane %v101, 2
  %v1659 = vsel %vm1593, %v1657, %v1658
  %v1660 = vrot.slane %v102, 2
  %v1661 = vsel %vm1593, %v1658, %v1660
  %v1662 = vrot.slane %v103, 2
  %v1663 = vsel %vm1593, %v1660, %v1662
  %v1664 = vrot.slane %v735, 2
  %v1665 = vsel %vm1593, %v1662, %v1664
  %v1666 = vrot.slane %v1569, 2
  %v1667 = vrot.slane %v105, 2
  %v1668 = vsel %vm1593, %v1666, %v1667
  %v1669 = vrot.slane %v106, 2
  %v1670 = vsel %vm1593, %v1667, %v1669
  %v1671 = vrot.slane %v107, 2
  %v1672 = vsel %vm1593, %v1669, %v1671
  %v1673 = vrot.slane %v736, 2
  %v1674 = vsel %vm1593, %v1671, %v1673
  %v1675 = vrot.slane %v1570, 2
  %v1676 = vrot.slane %v109, 2
  %v1677 = vsel %vm1593, %v1675, %v1676
  %v1678 = vrot.slane %v110, 2
  %v1679 = vsel %vm1593, %v1676, %v1678
  %v1680 = vrot.slane %v111, 2
  %v1681 = vsel %vm1593, %v1678, %v1680
  %v1682 = vrot.slane %v737, 2
  %v1683 = vsel %vm1593, %v1680, %v1682
  %v1684 = vrot.slane %v1571, 2
  %v1685 = vrot.slane %v113, 2
  %v1686 = vsel %vm1593, %v1684, %v1685
  %v1687 = vrot.slane %v114, 2
  %v1688 = vsel %vm1593, %v1685, %v1687
  %v1689 = vrot.slane %v115, 2
  %v1690 = vsel %vm1593, %v1687, %v1689
  %v1691 = vrot.slane %v738, 2
  %v1692 = vsel %vm1593, %v1689, %v1691
  %v1693 = vrot.slane %v1572, 2
  %v1694 = vrot.slane %v117, 2
  %v1695 = vsel %vm1593, %v1693, %v1694
  %v1696 = vrot.slane %v118, 2
  %v1697 = vsel %vm1593, %v1694, %v1696
  %v1698 = vrot.slane %v119, 2
  %v1699 = vsel %vm1593, %v1696, %v1698
  %v1700 = vrot.slane %v739, 2
  %v1701 = vsel %vm1593, %v1698, %v1700
  %v1702 = vrot.slane %v1573, 2
  %v1703 = vrot.slane %v121, 2
  %v1704 = vsel %vm1593, %v1702, %v1703
  %v1705 = vrot.slane %v122, 2
  %v1706 = vsel %vm1593, %v1703, %v1705
  %v1707 = vrot.slane %v123, 2
  %v1708 = vsel %vm1593, %v1705, %v1707
  %v1709 = vrot.slane %v740, 2
  %v1710 = vsel %vm1593, %v1707, %v1709
  %v1711 = vrot.slane %v1574, 2
  %v1712 = vrot.slane %v125, 2
  %v1713 = vsel %vm1593, %v1711, %v1712
  %v1714 = vrot.slane %v126, 2
  %v1715 = vsel %vm1593, %v1712, %v1714
  %v1716 = vrot.slane %v127, 2
  %v1717 = vsel %vm1593, %v1714, %v1716
  %v1718 = vrot.slane %v741, 2
  %v1719 = vsel %vm1593, %v1716, %v1718
  %v1720 = vrot.slane %v1575, 2
  %v1721 = vrot.slane %v129, 2
  %v1722 = vsel %vm1593, %v1720, %v1721
  %v1723 = vrot.slane %v130, 2
  %v1724 = vsel %vm1593, %v1721, %v1723
  %v1725 = vrot.slane %v131, 2
  %v1726 = vsel %vm1593, %v1723, %v1725
  %v1727 = vrot.slane %v742, 2
  %v1728 = vsel %vm1593, %v1725, %v1727
  %v1729 = vrot.slane %v1576, 2
  %v1730 = vrot.slane %v133, 2
  %v1731 = vsel %vm1593, %v1729, %v1730
  %v1732 = vrot.slane %v134, 2
  %v1733 = vsel %vm1593, %v1730, %v1732
  %v1734 = vrot.slane %v135, 2
  %v1735 = vsel %vm1593, %v1732, %v1734
  %v1736 = vrot.slane %v743, 2
  %v1737 = vsel %vm1593, %v1734, %v1736
  %v1802 = vmax.f32 %v1481, %v1596
  %v1803 = vmax.f32 %v1482, %v1598
  %v1804 = vmax.f32 %v1483, %v1600
  %v1805 = vmax.f32 %v1484, %v1602
  %v1806 = vmax.f32 %v1485, %v1605
  %v1807 = vmax.f32 %v1486, %v1607
  %v1808 = vmax.f32 %v1487, %v1609
  %v1809 = vmax.f32 %v1488, %v1611
  %v1810 = vmax.f32 %v1489, %v1614
  %v1811 = vmax.f32 %v1490, %v1616
  %v1812 = vmax.f32 %v1491, %v1618
  %v1813 = vmax.f32 %v1492, %v1620
  %v1814 = vmax.f32 %v1493, %v1623
  %v1815 = vmax.f32 %v1494, %v1625
  %v1816 = vmax.f32 %v1495, %v1627
  %v1817 = vmax.f32 %v1496, %v1629
  %v1818 = vmax.f32 %v1497, %v1632
  %v1819 = vmax.f32 %v1498, %v1634
  %v1820 = vmax.f32 %v1499, %v1636
  %v1821 = vmax.f32 %v1500, %v1638
  %v1822 = vmax.f32 %v1501, %v1641
  %v1823 = vmax.f32 %v1502, %v1643
  %v1824 = vmax.f32 %v1503, %v1645
  %v1825 = vmax.f32 %v1504, %v1647
  %v1826 = vmax.f32 %v1505, %v1650
  %v1827 = vmax.f32 %v1506, %v1652
  %v1828 = vmax.f32 %v1507, %v1654
  %v1829 = vmax.f32 %v1508, %v1656
  %v1830 = vmax.f32 %v1509, %v1659
  %v1831 = vmax.f32 %v1510, %v1661
  %v1832 = vmax.f32 %v1511, %v1663
  %v1833 = vmax.f32 %v1512, %v1665
  %v1834 = vmax.f32 %v1513, %v1668
  %v1835 = vmax.f32 %v1514, %v1670
  %v1836 = vmax.f32 %v1515, %v1672
  %v1837 = vmax.f32 %v1516, %v1674
  %v1838 = vmax.f32 %v1517, %v1677
  %v1839 = vmax.f32 %v1518, %v1679
  %v1840 = vmax.f32 %v1519, %v1681
  %v1841 = vmax.f32 %v1520, %v1683
  %v1842 = vmax.f32 %v1521, %v1686
  %v1843 = vmax.f32 %v1522, %v1688
  %v1844 = vmax.f32 %v1523, %v1690
  %v1845 = vmax.f32 %v1524, %v1692
  %v1846 = vmax.f32 %v1525, %v1695
  %v1847 = vmax.f32 %v1526, %v1697
  %v1848 = vmax.f32 %v1527, %v1699
  %v1849 = vmax.f32 %v1528, %v1701
  %v1850 = vmax.f32 %v1529, %v1704
  %v1851 = vmax.f32 %v1530, %v1706
  %v1852 = vmax.f32 %v1531, %v1708
  %v1853 = vmax.f32 %v1532, %v1710
  %v1854 = vmax.f32 %v1533, %v1713
  %v1855 = vmax.f32 %v1534, %v1715
  %v1856 = vmax.f32 %v1535, %v1717
  %v1857 = vmax.f32 %v1536, %v1719
  %v1858 = vmax.f32 %v1537, %v1722
  %v1859 = vmax.f32 %v1538, %v1724
  %v1860 = vmax.f32 %v1539, %v1726
  %v1861 = vmax.f32 %v1540, %v1728
  %v1862 = vmax.f32 %v1541, %v1731
  %v1863 = vmax.f32 %v1542, %v1733
  %v1864 = vmax.f32 %v1543, %v1735
  %v1865 = vmax.f32 %v1544, %v1737
  %1866 = vrot.lane.b32.xlu0 %v1596, 127
  %v1867 = vpop.permute.xlu0 %1866
  %1868 = vrot.lane.b32.xlu0 %v1598, 127
  %v1869 = vpop.permute.xlu0 %1868
  %1870 = vrot.lane.b32.xlu0 %v1600, 127
  %v1871 = vpop.permute.xlu0 %1870
  %1872 = vrot.lane.b32.xlu0 %v1602, 127
  %v1873 = vpop.permute.xlu0 %1872
  %1874 = vrot.lane.b32.xlu0 %v1605, 127
  %v1875 = vpop.permute.xlu0 %1874
  %1876 = vrot.lane.b32.xlu0 %v1607, 127
  %v1877 = vpop.permute.xlu0 %1876
  %1878 = vrot.lane.b32.xlu0 %v1609, 127
  %v1879 = vpop.permute.xlu0 %1878
  %1880 = vrot.lane.b32.xlu0 %v1611, 127
  %v1881 = vpop.permute.xlu0 %1880
  %1882 = vrot.lane.b32.xlu0 %v1614, 127
  %v1883 = vpop.permute.xlu0 %1882
  %1884 = vrot.lane.b32.xlu0 %v1616, 127
  %v1885 = vpop.permute.xlu0 %1884
  %1886 = vrot.lane.b32.xlu0 %v1618, 127
  %v1887 = vpop.permute.xlu0 %1886
  %1888 = vrot.lane.b32.xlu0 %v1620, 127
  %v1889 = vpop.permute.xlu0 %1888
  %1890 = vrot.lane.b32.xlu0 %v1623, 127
  %v1891 = vpop.permute.xlu0 %1890
  %1892 = vrot.lane.b32.xlu0 %v1625, 127
  %v1893 = vpop.permute.xlu0 %1892
  %1894 = vrot.lane.b32.xlu0 %v1627, 127
  %v1895 = vpop.permute.xlu0 %1894
  %1896 = vrot.lane.b32.xlu0 %v1629, 127
  %v1897 = vpop.permute.xlu0 %1896
  %1898 = vrot.lane.b32.xlu0 %v1632, 127
  %v1899 = vpop.permute.xlu0 %1898
  %1900 = vrot.lane.b32.xlu0 %v1634, 127
  %v1901 = vpop.permute.xlu0 %1900
  %1902 = vrot.lane.b32.xlu0 %v1636, 127
  %v1903 = vpop.permute.xlu0 %1902
  %1904 = vrot.lane.b32.xlu0 %v1638, 127
  %v1905 = vpop.permute.xlu0 %1904
  %1906 = vrot.lane.b32.xlu0 %v1641, 127
  %v1907 = vpop.permute.xlu0 %1906
  %1908 = vrot.lane.b32.xlu0 %v1643, 127
  %v1909 = vpop.permute.xlu0 %1908
  %1910 = vrot.lane.b32.xlu0 %v1645, 127
  %v1911 = vpop.permute.xlu0 %1910
  %1912 = vrot.lane.b32.xlu0 %v1647, 127
  %v1913 = vpop.permute.xlu0 %1912
  %1914 = vrot.lane.b32.xlu0 %v1650, 127
  %v1915 = vpop.permute.xlu0 %1914
  %1916 = vrot.lane.b32.xlu0 %v1652, 127
  %v1917 = vpop.permute.xlu0 %1916
  %1918 = vrot.lane.b32.xlu0 %v1654, 127
  %v1919 = vpop.permute.xlu0 %1918
  %1920 = vrot.lane.b32.xlu0 %v1656, 127
  %v1921 = vpop.permute.xlu0 %1920
  %1922 = vrot.lane.b32.xlu0 %v1659, 127
  %v1923 = vpop.permute.xlu0 %1922
  %1924 = vrot.lane.b32.xlu0 %v1661, 127
  %v1925 = vpop.permute.xlu0 %1924
  %1926 = vrot.lane.b32.xlu0 %v1663, 127
  %v1927 = vpop.permute.xlu0 %1926
  %1928 = vrot.lane.b32.xlu0 %v1665, 127
  %v1929 = vpop.permute.xlu0 %1928
  %1930 = vrot.lane.b32.xlu0 %v1668, 127
  %v1931 = vpop.permute.xlu0 %1930
  %1932 = vrot.lane.b32.xlu0 %v1670, 127
  %v1933 = vpop.permute.xlu0 %1932
  %1934 = vrot.lane.b32.xlu0 %v1672, 127
  %v1935 = vpop.permute.xlu0 %1934
  %1936 = vrot.lane.b32.xlu0 %v1674, 127
  %v1937 = vpop.permute.xlu0 %1936
  %1938 = vrot.lane.b32.xlu0 %v1677, 127
  %v1939 = vpop.permute.xlu0 %1938
  %1940 = vrot.lane.b32.xlu0 %v1679, 127
  %v1941 = vpop.permute.xlu0 %1940
  %1942 = vrot.lane.b32.xlu0 %v1681, 127
  %v1943 = vpop.permute.xlu0 %1942
  %1944 = vrot.lane.b32.xlu0 %v1683, 127
  %v1945 = vpop.permute.xlu0 %1944
  %1946 = vrot.lane.b32.xlu0 %v1686, 127
  %v1947 = vpop.permute.xlu0 %1946
  %1948 = vrot.lane.b32.xlu0 %v1688, 127
  %v1949 = vpop.permute.xlu0 %1948
  %1950 = vrot.lane.b32.xlu0 %v1690, 127
  %v1951 = vpop.permute.xlu0 %1950
  %1952 = vrot.lane.b32.xlu0 %v1692, 127
  %v1953 = vpop.permute.xlu0 %1952
  %1954 = vrot.lane.b32.xlu0 %v1695, 127
  %v1955 = vpop.permute.xlu0 %1954
  %1956 = vrot.lane.b32.xlu0 %v1697, 127
  %v1957 = vpop.permute.xlu0 %1956
  %1958 = vrot.lane.b32.xlu0 %v1699, 127
  %v1959 = vpop.permute.xlu0 %1958
  %1960 = vrot.lane.b32.xlu0 %v1701, 127
  %v1961 = vpop.permute.xlu0 %1960
  %1962 = vrot.lane.b32.xlu0 %v1704, 127
  %v1963 = vpop.permute.xlu0 %1962
  %1964 = vrot.lane.b32.xlu0 %v1706, 127
  %v1965 = vpop.permute.xlu0 %1964
  %1966 = vrot.lane.b32.xlu0 %v1708, 127
  %v1967 = vpop.permute.xlu0 %1966
  %1968 = vrot.lane.b32.xlu0 %v1710, 127
  %v1969 = vpop.permute.xlu0 %1968
  %1970 = vrot.lane.b32.xlu0 %v1713, 127
  %v1971 = vpop.permute.xlu0 %1970
  %1972 = vrot.lane.b32.xlu0 %v1715, 127
  %v1973 = vpop.permute.xlu0 %1972
  %1974 = vrot.lane.b32.xlu0 %v1717, 127
  %v1975 = vpop.permute.xlu0 %1974
  %1976 = vrot.lane.b32.xlu0 %v1719, 127
  %v1977 = vpop.permute.xlu0 %1976
  %1978 = vrot.lane.b32.xlu0 %v1722, 127
  %v1979 = vpop.permute.xlu0 %1978
  %1980 = vrot.lane.b32.xlu0 %v1724, 127
  %v1981 = vpop.permute.xlu0 %1980
  %1982 = vrot.lane.b32.xlu0 %v1726, 127
  %v1983 = vpop.permute.xlu0 %1982
  %1984 = vrot.lane.b32.xlu0 %v1728, 127
  %v1985 = vpop.permute.xlu0 %1984
  %1986 = vrot.lane.b32.xlu0 %v1731, 127
  %v1987 = vpop.permute.xlu0 %1986
  %1988 = vrot.lane.b32.xlu0 %v1733, 127
  %v1989 = vpop.permute.xlu0 %1988
  %1990 = vrot.lane.b32.xlu0 %v1735, 127
  %v1991 = vpop.permute.xlu0 %1990
  %1992 = vrot.lane.b32.xlu0 %v1737, 127
  %v1993 = vpop.permute.xlu0 %1992
  %v2058 = vmax.f32 %v1802, %v1867
  %v2059 = vmax.f32 %v1803, %v1869
  %v2060 = vmax.f32 %v1804, %v1871
  %v2061 = vmax.f32 %v1805, %v1873
  %v2062 = vmax.f32 %v1806, %v1875
  %v2063 = vmax.f32 %v1807, %v1877
  %v2064 = vmax.f32 %v1808, %v1879
  %v2065 = vmax.f32 %v1809, %v1881
  %v2066 = vmax.f32 %v1810, %v1883
  %v2067 = vmax.f32 %v1811, %v1885
  %v2068 = vmax.f32 %v1812, %v1887
  %v2069 = vmax.f32 %v1813, %v1889
  %v2070 = vmax.f32 %v1814, %v1891
  %v2071 = vmax.f32 %v1815, %v1893
  %v2072 = vmax.f32 %v1816, %v1895
  %v2073 = vmax.f32 %v1817, %v1897
  %v2074 = vmax.f32 %v1818, %v1899
  %v2075 = vmax.f32 %v1819, %v1901
  %v2076 = vmax.f32 %v1820, %v1903
  %v2077 = vmax.f32 %v1821, %v1905
  %v2078 = vmax.f32 %v1822, %v1907
  %v2079 = vmax.f32 %v1823, %v1909
  %v2080 = vmax.f32 %v1824, %v1911
  %v2081 = vmax.f32 %v1825, %v1913
  %v2082 = vmax.f32 %v1826, %v1915
  %v2083 = vmax.f32 %v1827, %v1917
  %v2084 = vmax.f32 %v1828, %v1919
  %v2085 = vmax.f32 %v1829, %v1921
  %v2086 = vmax.f32 %v1830, %v1923
  %v2087 = vmax.f32 %v1831, %v1925
  %v2088 = vmax.f32 %v1832, %v1927
  %v2089 = vmax.f32 %v1833, %v1929
  %v2090 = vmax.f32 %v1834, %v1931
  %v2091 = vmax.f32 %v1835, %v1933
  %v2092 = vmax.f32 %v1836, %v1935
  %v2093 = vmax.f32 %v1837, %v1937
  %v2094 = vmax.f32 %v1838, %v1939
  %v2095 = vmax.f32 %v1839, %v1941
  %v2096 = vmax.f32 %v1840, %v1943
  %v2097 = vmax.f32 %v1841, %v1945
  %v2098 = vmax.f32 %v1842, %v1947
  %v2099 = vmax.f32 %v1843, %v1949
  %v2100 = vmax.f32 %v1844, %v1951
  %v2101 = vmax.f32 %v1845, %v1953
  %v2102 = vmax.f32 %v1846, %v1955
  %v2103 = vmax.f32 %v1847, %v1957
  %v2104 = vmax.f32 %v1848, %v1959
  %v2105 = vmax.f32 %v1849, %v1961
  %v2106 = vmax.f32 %v1850, %v1963
  %v2107 = vmax.f32 %v1851, %v1965
  %v2108 = vmax.f32 %v1852, %v1967
  %v2109 = vmax.f32 %v1853, %v1969
  %v2110 = vmax.f32 %v1854, %v1971
  %v2111 = vmax.f32 %v1855, %v1973
  %v2112 = vmax.f32 %v1856, %v1975
  %v2113 = vmax.f32 %v1857, %v1977
  %v2114 = vmax.f32 %v1858, %v1979
  %v2115 = vmax.f32 %v1859, %v1981
  %v2116 = vmax.f32 %v1860, %v1983
  %v2117 = vmax.f32 %v1861, %v1985
  %v2118 = vmax.f32 %v1862, %v1987
  %v2119 = vmax.f32 %v1863, %v1989
  %v2120 = vmax.f32 %v1864, %v1991
  %v2121 = vmax.f32 %v1865, %v1993
  %2122 = vrot.lane.b32.xlu0 %v1596, 126
  %v2123 = vpop.permute.xlu0 %2122
  %2124 = vrot.lane.b32.xlu0 %v1598, 126
  %v2125 = vpop.permute.xlu0 %2124
  %2126 = vrot.lane.b32.xlu0 %v1600, 126
  %v2127 = vpop.permute.xlu0 %2126
  %2128 = vrot.lane.b32.xlu0 %v1602, 126
  %v2129 = vpop.permute.xlu0 %2128
  %2130 = vrot.lane.b32.xlu0 %v1605, 126
  %v2131 = vpop.permute.xlu0 %2130
  %2132 = vrot.lane.b32.xlu0 %v1607, 126
  %v2133 = vpop.permute.xlu0 %2132
  %2134 = vrot.lane.b32.xlu0 %v1609, 126
  %v2135 = vpop.permute.xlu0 %2134
  %2136 = vrot.lane.b32.xlu0 %v1611, 126
  %v2137 = vpop.permute.xlu0 %2136
  %2138 = vrot.lane.b32.xlu0 %v1614, 126
  %v2139 = vpop.permute.xlu0 %2138
  %2140 = vrot.lane.b32.xlu0 %v1616, 126
  %v2141 = vpop.permute.xlu0 %2140
  %2142 = vrot.lane.b32.xlu0 %v1618, 126
  %v2143 = vpop.permute.xlu0 %2142
  %2144 = vrot.lane.b32.xlu0 %v1620, 126
  %v2145 = vpop.permute.xlu0 %2144
  %2146 = vrot.lane.b32.xlu0 %v1623, 126
  %v2147 = vpop.permute.xlu0 %2146
  %2148 = vrot.lane.b32.xlu0 %v1625, 126
  %v2149 = vpop.permute.xlu0 %2148
  %2150 = vrot.lane.b32.xlu0 %v1627, 126
  %v2151 = vpop.permute.xlu0 %2150
  %2152 = vrot.lane.b32.xlu0 %v1629, 126
  %v2153 = vpop.permute.xlu0 %2152
  %2154 = vrot.lane.b32.xlu0 %v1632, 126
  %v2155 = vpop.permute.xlu0 %2154
  %2156 = vrot.lane.b32.xlu0 %v1634, 126
  %v2157 = vpop.permute.xlu0 %2156
  %2158 = vrot.lane.b32.xlu0 %v1636, 126
  %v2159 = vpop.permute.xlu0 %2158
  %2160 = vrot.lane.b32.xlu0 %v1638, 126
  %v2161 = vpop.permute.xlu0 %2160
  %2162 = vrot.lane.b32.xlu0 %v1641, 126
  %v2163 = vpop.permute.xlu0 %2162
  %2164 = vrot.lane.b32.xlu0 %v1643, 126
  %v2165 = vpop.permute.xlu0 %2164
  %2166 = vrot.lane.b32.xlu0 %v1645, 126
  %v2167 = vpop.permute.xlu0 %2166
  %2168 = vrot.lane.b32.xlu0 %v1647, 126
  %v2169 = vpop.permute.xlu0 %2168
  %2170 = vrot.lane.b32.xlu0 %v1650, 126
  %v2171 = vpop.permute.xlu0 %2170
  %2172 = vrot.lane.b32.xlu0 %v1652, 126
  %v2173 = vpop.permute.xlu0 %2172
  %2174 = vrot.lane.b32.xlu0 %v1654, 126
  %v2175 = vpop.permute.xlu0 %2174
  %2176 = vrot.lane.b32.xlu0 %v1656, 126
  %v2177 = vpop.permute.xlu0 %2176
  %2178 = vrot.lane.b32.xlu0 %v1659, 126
  %v2179 = vpop.permute.xlu0 %2178
  %2180 = vrot.lane.b32.xlu0 %v1661, 126
  %v2181 = vpop.permute.xlu0 %2180
  %2182 = vrot.lane.b32.xlu0 %v1663, 126
  %v2183 = vpop.permute.xlu0 %2182
  %2184 = vrot.lane.b32.xlu0 %v1665, 126
  %v2185 = vpop.permute.xlu0 %2184
  %2186 = vrot.lane.b32.xlu0 %v1668, 126
  %v2187 = vpop.permute.xlu0 %2186
  %2188 = vrot.lane.b32.xlu0 %v1670, 126
  %v2189 = vpop.permute.xlu0 %2188
  %2190 = vrot.lane.b32.xlu0 %v1672, 126
  %v2191 = vpop.permute.xlu0 %2190
  %2192 = vrot.lane.b32.xlu0 %v1674, 126
  %v2193 = vpop.permute.xlu0 %2192
  %2194 = vrot.lane.b32.xlu0 %v1677, 126
  %v2195 = vpop.permute.xlu0 %2194
  %2196 = vrot.lane.b32.xlu0 %v1679, 126
  %v2197 = vpop.permute.xlu0 %2196
  %2198 = vrot.lane.b32.xlu0 %v1681, 126
  %v2199 = vpop.permute.xlu0 %2198
  %2200 = vrot.lane.b32.xlu0 %v1683, 126
  %v2201 = vpop.permute.xlu0 %2200
  %2202 = vrot.lane.b32.xlu0 %v1686, 126
  %v2203 = vpop.permute.xlu0 %2202
  %2204 = vrot.lane.b32.xlu0 %v1688, 126
  %v2205 = vpop.permute.xlu0 %2204
  %2206 = vrot.lane.b32.xlu0 %v1690, 126
  %v2207 = vpop.permute.xlu0 %2206
  %2208 = vrot.lane.b32.xlu0 %v1692, 126
  %v2209 = vpop.permute.xlu0 %2208
  %2210 = vrot.lane.b32.xlu0 %v1695, 126
  %v2211 = vpop.permute.xlu0 %2210
  %2212 = vrot.lane.b32.xlu0 %v1697, 126
  %v2213 = vpop.permute.xlu0 %2212
  %2214 = vrot.lane.b32.xlu0 %v1699, 126
  %v2215 = vpop.permute.xlu0 %2214
  %2216 = vrot.lane.b32.xlu0 %v1701, 126
  %v2217 = vpop.permute.xlu0 %2216
  %2218 = vrot.lane.b32.xlu0 %v1704, 126
  %v2219 = vpop.permute.xlu0 %2218
  %2220 = vrot.lane.b32.xlu0 %v1706, 126
  %v2221 = vpop.permute.xlu0 %2220
  %2222 = vrot.lane.b32.xlu0 %v1708, 126
  %v2223 = vpop.permute.xlu0 %2222
  %2224 = vrot.lane.b32.xlu0 %v1710, 126
  %v2225 = vpop.permute.xlu0 %2224
  %2226 = vrot.lane.b32.xlu0 %v1713, 126
  %v2227 = vpop.permute.xlu0 %2226
  %2228 = vrot.lane.b32.xlu0 %v1715, 126
  %v2229 = vpop.permute.xlu0 %2228
  %2230 = vrot.lane.b32.xlu0 %v1717, 126
  %v2231 = vpop.permute.xlu0 %2230
  %2232 = vrot.lane.b32.xlu0 %v1719, 126
  %v2233 = vpop.permute.xlu0 %2232
  %2234 = vrot.lane.b32.xlu0 %v1722, 126
  %v2235 = vpop.permute.xlu0 %2234
  %2236 = vrot.lane.b32.xlu0 %v1724, 126
  %v2237 = vpop.permute.xlu0 %2236
  %2238 = vrot.lane.b32.xlu0 %v1726, 126
  %v2239 = vpop.permute.xlu0 %2238
  %2240 = vrot.lane.b32.xlu0 %v1728, 126
  %v2241 = vpop.permute.xlu0 %2240
  %2242 = vrot.lane.b32.xlu0 %v1731, 126
  %v2243 = vpop.permute.xlu0 %2242
  %2244 = vrot.lane.b32.xlu0 %v1733, 126
  %v2245 = vpop.permute.xlu0 %2244
  %2246 = vrot.lane.b32.xlu0 %v1735, 126
  %v2247 = vpop.permute.xlu0 %2246
  %2248 = vrot.lane.b32.xlu0 %v1737, 126
  %v2249 = vpop.permute.xlu0 %2248
  %v2314 = vmax.f32 %v2058, %v2123
  %v2315 = vmax.f32 %v2059, %v2125
  %v2316 = vmax.f32 %v2060, %v2127
  %v2317 = vmax.f32 %v2061, %v2129
  %v2318 = vmax.f32 %v2062, %v2131
  %v2319 = vmax.f32 %v2063, %v2133
  %v2320 = vmax.f32 %v2064, %v2135
  %v2321 = vmax.f32 %v2065, %v2137
  %v2322 = vmax.f32 %v2066, %v2139
  %v2323 = vmax.f32 %v2067, %v2141
  %v2324 = vmax.f32 %v2068, %v2143
  %v2325 = vmax.f32 %v2069, %v2145
  %v2326 = vmax.f32 %v2070, %v2147
  %v2327 = vmax.f32 %v2071, %v2149
  %v2328 = vmax.f32 %v2072, %v2151
  %v2329 = vmax.f32 %v2073, %v2153
  %v2330 = vmax.f32 %v2074, %v2155
  %v2331 = vmax.f32 %v2075, %v2157
  %v2332 = vmax.f32 %v2076, %v2159
  %v2333 = vmax.f32 %v2077, %v2161
  %v2334 = vmax.f32 %v2078, %v2163
  %v2335 = vmax.f32 %v2079, %v2165
  %v2336 = vmax.f32 %v2080, %v2167
  %v2337 = vmax.f32 %v2081, %v2169
  %v2338 = vmax.f32 %v2082, %v2171
  %v2339 = vmax.f32 %v2083, %v2173
  %v2340 = vmax.f32 %v2084, %v2175
  %v2341 = vmax.f32 %v2085, %v2177
  %v2342 = vmax.f32 %v2086, %v2179
  %v2343 = vmax.f32 %v2087, %v2181
  %v2344 = vmax.f32 %v2088, %v2183
  %v2345 = vmax.f32 %v2089, %v2185
  %v2346 = vmax.f32 %v2090, %v2187
  %v2347 = vmax.f32 %v2091, %v2189
  %v2348 = vmax.f32 %v2092, %v2191
  %v2349 = vmax.f32 %v2093, %v2193
  %v2350 = vmax.f32 %v2094, %v2195
  %v2351 = vmax.f32 %v2095, %v2197
  %v2352 = vmax.f32 %v2096, %v2199
  %v2353 = vmax.f32 %v2097, %v2201
  %v2354 = vmax.f32 %v2098, %v2203
  %v2355 = vmax.f32 %v2099, %v2205
  %v2356 = vmax.f32 %v2100, %v2207
  %v2357 = vmax.f32 %v2101, %v2209
  %v2358 = vmax.f32 %v2102, %v2211
  %v2359 = vmax.f32 %v2103, %v2213
  %v2360 = vmax.f32 %v2104, %v2215
  %v2361 = vmax.f32 %v2105, %v2217
  %v2362 = vmax.f32 %v2106, %v2219
  %v2363 = vmax.f32 %v2107, %v2221
  %v2364 = vmax.f32 %v2108, %v2223
  %v2365 = vmax.f32 %v2109, %v2225
  %v2366 = vmax.f32 %v2110, %v2227
  %v2367 = vmax.f32 %v2111, %v2229
  %v2368 = vmax.f32 %v2112, %v2231
  %v2369 = vmax.f32 %v2113, %v2233
  %v2370 = vmax.f32 %v2114, %v2235
  %v2371 = vmax.f32 %v2115, %v2237
  %v2372 = vmax.f32 %v2116, %v2239
  %v2373 = vmax.f32 %v2117, %v2241
  %v2374 = vmax.f32 %v2118, %v2243
  %v2375 = vmax.f32 %v2119, %v2245
  %v2376 = vmax.f32 %v2120, %v2247
  %v2377 = vmax.f32 %v2121, %v2249
  %v2378 = vpack.c.bf16 %v2315, %v2314
  %v2379 = vpack.c.bf16 %v2317, %v2316
  %v2380 = vpack.c.bf16 %v2319, %v2318
  %v2381 = vpack.c.bf16 %v2321, %v2320
  %v2382 = vpack.c.bf16 %v2323, %v2322
  %v2383 = vpack.c.bf16 %v2325, %v2324
  %v2384 = vpack.c.bf16 %v2327, %v2326
  %v2385 = vpack.c.bf16 %v2329, %v2328
  %v2386 = vpack.c.bf16 %v2331, %v2330
  %v2387 = vpack.c.bf16 %v2333, %v2332
  %v2388 = vpack.c.bf16 %v2335, %v2334
  %v2389 = vpack.c.bf16 %v2337, %v2336
  %v2390 = vpack.c.bf16 %v2339, %v2338
  %v2391 = vpack.c.bf16 %v2341, %v2340
  %v2392 = vpack.c.bf16 %v2343, %v2342
  %v2393 = vpack.c.bf16 %v2345, %v2344
  %v2394 = vpack.c.bf16 %v2347, %v2346
  %v2395 = vpack.c.bf16 %v2349, %v2348
  %v2396 = vpack.c.bf16 %v2351, %v2350
  %v2397 = vpack.c.bf16 %v2353, %v2352
  %v2398 = vpack.c.bf16 %v2355, %v2354
  %v2399 = vpack.c.bf16 %v2357, %v2356
  %v2400 = vpack.c.bf16 %v2359, %v2358
  %v2401 = vpack.c.bf16 %v2361, %v2360
  %v2402 = vpack.c.bf16 %v2363, %v2362
  %v2403 = vpack.c.bf16 %v2365, %v2364
  %v2404 = vpack.c.bf16 %v2367, %v2366
  %v2405 = vpack.c.bf16 %v2369, %v2368
  %v2406 = vpack.c.bf16 %v2371, %v2370
  %v2407 = vpack.c.bf16 %v2373, %v2372
  %v2408 = vpack.c.bf16 %v2375, %v2374
  %v2409 = vpack.c.bf16 %v2377, %v2376
  %v2442 = vunpack.c.l.b16 %v2378
  %v2443 = vunpack.c.h.b16 %v2378
  %v2444 = vunpack.c.l.b16 %v2379
  %v2445 = vunpack.c.h.b16 %v2379
  %v2446 = vunpack.c.l.b16 %v2380
  %v2447 = vunpack.c.h.b16 %v2380
  %v2448 = vunpack.c.l.b16 %v2381
  %v2449 = vunpack.c.h.b16 %v2381
  %v2450 = vunpack.c.l.b16 %v2382
  %v2451 = vunpack.c.h.b16 %v2382
  %v2452 = vunpack.c.l.b16 %v2383
  %v2453 = vunpack.c.h.b16 %v2383
  %v2454 = vunpack.c.l.b16 %v2384
  %v2455 = vunpack.c.h.b16 %v2384
  %v2456 = vunpack.c.l.b16 %v2385
  %v2457 = vunpack.c.h.b16 %v2385
  %v2458 = vunpack.c.l.b16 %v2386
  %v2459 = vunpack.c.h.b16 %v2386
  %v2460 = vunpack.c.l.b16 %v2387
  %v2461 = vunpack.c.h.b16 %v2387
  %v2462 = vunpack.c.l.b16 %v2388
  %v2463 = vunpack.c.h.b16 %v2388
  %v2464 = vunpack.c.l.b16 %v2389
  %v2465 = vunpack.c.h.b16 %v2389
  %v2466 = vunpack.c.l.b16 %v2390
  %v2467 = vunpack.c.h.b16 %v2390
  %v2468 = vunpack.c.l.b16 %v2391
  %v2469 = vunpack.c.h.b16 %v2391
  %v2470 = vunpack.c.l.b16 %v2392
  %v2471 = vunpack.c.h.b16 %v2392
  %v2472 = vunpack.c.l.b16 %v2393
  %v2473 = vunpack.c.h.b16 %v2393
  %v2474 = vunpack.c.l.b16 %v2394
  %v2475 = vunpack.c.h.b16 %v2394
  %v2476 = vunpack.c.l.b16 %v2395
  %v2477 = vunpack.c.h.b16 %v2395
  %v2478 = vunpack.c.l.b16 %v2396
  %v2479 = vunpack.c.h.b16 %v2396
  %v2480 = vunpack.c.l.b16 %v2397
  %v2481 = vunpack.c.h.b16 %v2397
  %v2482 = vunpack.c.l.b16 %v2398
  %v2483 = vunpack.c.h.b16 %v2398
  %v2484 = vunpack.c.l.b16 %v2399
  %v2485 = vunpack.c.h.b16 %v2399
  %v2486 = vunpack.c.l.b16 %v2400
  %v2487 = vunpack.c.h.b16 %v2400
  %v2488 = vunpack.c.l.b16 %v2401
  %v2489 = vunpack.c.h.b16 %v2401
  %v2490 = vunpack.c.l.b16 %v2402
  %v2491 = vunpack.c.h.b16 %v2402
  %v2492 = vunpack.c.l.b16 %v2403
  %v2493 = vunpack.c.h.b16 %v2403
  %v2494 = vunpack.c.l.b16 %v2404
  %v2495 = vunpack.c.h.b16 %v2404
  %v2496 = vunpack.c.l.b16 %v2405
  %v2497 = vunpack.c.h.b16 %v2405
  %v2498 = vunpack.c.l.b16 %v2406
  %v2499 = vunpack.c.h.b16 %v2406
  %v2500 = vunpack.c.l.b16 %v2407
  %v2501 = vunpack.c.h.b16 %v2407
  %v2502 = vunpack.c.l.b16 %v2408
  %v2503 = vunpack.c.h.b16 %v2408
  %v2504 = vunpack.c.l.b16 %v2409
  %v2505 = vunpack.c.h.b16 %v2409
  %v2506 = vpack.c.b16 %v2442, %v2442
  %v2507 = vpack.c.b16 %v2443, %v2443
  %v2508 = vpack.c.b16 %v2444, %v2444
  %v2509 = vpack.c.b16 %v2445, %v2445
  %v2510 = vpack.c.b16 %v2446, %v2446
  %v2511 = vpack.c.b16 %v2447, %v2447
  %v2512 = vpack.c.b16 %v2448, %v2448
  %v2513 = vpack.c.b16 %v2449, %v2449
  %v2514 = vpack.c.b16 %v2450, %v2450
  %v2515 = vpack.c.b16 %v2451, %v2451
  %v2516 = vpack.c.b16 %v2452, %v2452
  %v2517 = vpack.c.b16 %v2453, %v2453
  %v2518 = vpack.c.b16 %v2454, %v2454
  %v2519 = vpack.c.b16 %v2455, %v2455
  %v2520 = vpack.c.b16 %v2456, %v2456
  %v2521 = vpack.c.b16 %v2457, %v2457
  %v2522 = vpack.c.b16 %v2458, %v2458
  %v2523 = vpack.c.b16 %v2459, %v2459
  %v2524 = vpack.c.b16 %v2460, %v2460
  %v2525 = vpack.c.b16 %v2461, %v2461
  %v2526 = vpack.c.b16 %v2462, %v2462
  %v2527 = vpack.c.b16 %v2463, %v2463
  %v2528 = vpack.c.b16 %v2464, %v2464
  %v2529 = vpack.c.b16 %v2465, %v2465
  %v2530 = vpack.c.b16 %v2466, %v2466
  %v2531 = vpack.c.b16 %v2467, %v2467
  %v2532 = vpack.c.b16 %v2468, %v2468
  %v2533 = vpack.c.b16 %v2469, %v2469
  %v2534 = vpack.c.b16 %v2470, %v2470
  %v2535 = vpack.c.b16 %v2471, %v2471
  %v2536 = vpack.c.b16 %v2472, %v2472
  %v2537 = vpack.c.b16 %v2473, %v2473
  %v2538 = vpack.c.b16 %v2474, %v2474
  %v2539 = vpack.c.b16 %v2475, %v2475
  %v2540 = vpack.c.b16 %v2476, %v2476
  %v2541 = vpack.c.b16 %v2477, %v2477
  %v2542 = vpack.c.b16 %v2478, %v2478
  %v2543 = vpack.c.b16 %v2479, %v2479
  %v2544 = vpack.c.b16 %v2480, %v2480
  %v2545 = vpack.c.b16 %v2481, %v2481
  %v2546 = vpack.c.b16 %v2482, %v2482
  %v2547 = vpack.c.b16 %v2483, %v2483
  %v2548 = vpack.c.b16 %v2484, %v2484
  %v2549 = vpack.c.b16 %v2485, %v2485
  %v2550 = vpack.c.b16 %v2486, %v2486
  %v2551 = vpack.c.b16 %v2487, %v2487
  %v2552 = vpack.c.b16 %v2488, %v2488
  %v2553 = vpack.c.b16 %v2489, %v2489
  %v2554 = vpack.c.b16 %v2490, %v2490
  %v2555 = vpack.c.b16 %v2491, %v2491
  %v2556 = vpack.c.b16 %v2492, %v2492
  %v2557 = vpack.c.b16 %v2493, %v2493
  %v2558 = vpack.c.b16 %v2494, %v2494
  %v2559 = vpack.c.b16 %v2495, %v2495
  %v2560 = vpack.c.b16 %v2496, %v2496
  %v2561 = vpack.c.b16 %v2497, %v2497
  %v2562 = vpack.c.b16 %v2498, %v2498
  %v2563 = vpack.c.b16 %v2499, %v2499
  %v2564 = vpack.c.b16 %v2500, %v2500
  %v2565 = vpack.c.b16 %v2501, %v2501
  %v2566 = vpack.c.b16 %v2502, %v2502
  %v2567 = vpack.c.b16 %v2503, %v2503
  %v2568 = vpack.c.b16 %v2504, %v2504
  %v2569 = vpack.c.b16 %v2505, %v2505
  %vm2634 = vcmask 257024
  %2635 = vst.msk [vmem:[%s1] sm:$0xf] %vm2634, %v2506
  %2636 = vst.msk [vmem:[%s1 + $0x4] sm:$0xf] %vm2634, %v2507
  %2637 = vst.msk [vmem:[%s1 + $0x8] sm:$0xf] %vm2634, %v2508
  %2638 = vst.msk [vmem:[%s1 + $0xc] sm:$0xf] %vm2634, %v2509
  %2639 = vst.msk [vmem:[%s1 + $0x10] sm:$0xf] %vm2634, %v2510
  %2640 = vst.msk [vmem:[%s1 + $0x14] sm:$0xf] %vm2634, %v2511
  %2641 = vst.msk [vmem:[%s1 + $0x18] sm:$0xf] %vm2634, %v2512
  %2642 = vst.msk [vmem:[%s1 + $0x1c] sm:$0xf] %vm2634, %v2513
  %2643 = vst.msk [vmem:[%s1 + $0x20] sm:$0xf] %vm2634, %v2514
  %2644 = vst.msk [vmem:[%s1 + $0x24] sm:$0xf] %vm2634, %v2515
  %2645 = vst.msk [vmem:[%s1 + $0x28] sm:$0xf] %vm2634, %v2516
  %2646 = vst.msk [vmem:[%s1 + $0x2c] sm:$0xf] %vm2634, %v2517
  %2647 = vst.msk [vmem:[%s1 + $0x30] sm:$0xf] %vm2634, %v2518
  %2648 = vst.msk [vmem:[%s1 + $0x34] sm:$0xf] %vm2634, %v2519
  %2649 = vst.msk [vmem:[%s1 + $0x38] sm:$0xf] %vm2634, %v2520
  %2650 = vst.msk [vmem:[%s1 + $0x3c] sm:$0xf] %vm2634, %v2521
  %2651 = vst.msk [vmem:[%s1 + $0x40] sm:$0xf] %vm2634, %v2522
  %2652 = vst.msk [vmem:[%s1 + $0x44] sm:$0xf] %vm2634, %v2523
  %2653 = vst.msk [vmem:[%s1 + $0x48] sm:$0xf] %vm2634, %v2524
  %2654 = vst.msk [vmem:[%s1 + $0x4c] sm:$0xf] %vm2634, %v2525
  %2655 = vst.msk [vmem:[%s1 + $0x50] sm:$0xf] %vm2634, %v2526
  %2656 = vst.msk [vmem:[%s1 + $0x54] sm:$0xf] %vm2634, %v2527
  %2657 = vst.msk [vmem:[%s1 + $0x58] sm:$0xf] %vm2634, %v2528
  %2658 = vst.msk [vmem:[%s1 + $0x5c] sm:$0xf] %vm2634, %v2529
  %2659 = vst.msk [vmem:[%s1 + $0x60] sm:$0xf] %vm2634, %v2530
  %2660 = vst.msk [vmem:[%s1 + $0x64] sm:$0xf] %vm2634, %v2531
  %2661 = vst.msk [vmem:[%s1 + $0x68] sm:$0xf] %vm2634, %v2532
  %2662 = vst.msk [vmem:[%s1 + $0x6c] sm:$0xf] %vm2634, %v2533
  %2663 = vst.msk [vmem:[%s1 + $0x70] sm:$0xf] %vm2634, %v2534
  %2664 = vst.msk [vmem:[%s1 + $0x74] sm:$0xf] %vm2634, %v2535
  %2665 = vst.msk [vmem:[%s1 + $0x78] sm:$0xf] %vm2634, %v2536
  %2666 = vst.msk [vmem:[%s1 + $0x7c] sm:$0xf] %vm2634, %v2537
  %2667 = vst.msk [vmem:[%s1 + $0x80] sm:$0xf] %vm2634, %v2538
  %2668 = vst.msk [vmem:[%s1 + $0x84] sm:$0xf] %vm2634, %v2539
  %2669 = vst.msk [vmem:[%s1 + $0x88] sm:$0xf] %vm2634, %v2540
  %2670 = vst.msk [vmem:[%s1 + $0x8c] sm:$0xf] %vm2634, %v2541
  %2671 = vst.msk [vmem:[%s1 + $0x90] sm:$0xf] %vm2634, %v2542
  %2672 = vst.msk [vmem:[%s1 + $0x94] sm:$0xf] %vm2634, %v2543
  %2673 = vst.msk [vmem:[%s1 + $0x98] sm:$0xf] %vm2634, %v2544
  %2674 = vst.msk [vmem:[%s1 + $0x9c] sm:$0xf] %vm2634, %v2545
  %2675 = vst.msk [vmem:[%s1 + $0xa0] sm:$0xf] %vm2634, %v2546
  %2676 = vst.msk [vmem:[%s1 + $0xa4] sm:$0xf] %vm2634, %v2547
  %2677 = vst.msk [vmem:[%s1 + $0xa8] sm:$0xf] %vm2634, %v2548
  %2678 = vst.msk [vmem:[%s1 + $0xac] sm:$0xf] %vm2634, %v2549
  %2679 = vst.msk [vmem:[%s1 + $0xb0] sm:$0xf] %vm2634, %v2550
  %2680 = vst.msk [vmem:[%s1 + $0xb4] sm:$0xf] %vm2634, %v2551
  %2681 = vst.msk [vmem:[%s1 + $0xb8] sm:$0xf] %vm2634, %v2552
  %2682 = vst.msk [vmem:[%s1 + $0xbc] sm:$0xf] %vm2634, %v2553
  %2683 = vst.msk [vmem:[%s1 + $0xc0] sm:$0xf] %vm2634, %v2554
  %2684 = vst.msk [vmem:[%s1 + $0xc4] sm:$0xf] %vm2634, %v2555
  %2685 = vst.msk [vmem:[%s1 + $0xc8] sm:$0xf] %vm2634, %v2556
  %2686 = vst.msk [vmem:[%s1 + $0xcc] sm:$0xf] %vm2634, %v2557
  %2687 = vst.msk [vmem:[%s1 + $0xd0] sm:$0xf] %vm2634, %v2558
  %2688 = vst.msk [vmem:[%s1 + $0xd4] sm:$0xf] %vm2634, %v2559
  %2689 = vst.msk [vmem:[%s1 + $0xd8] sm:$0xf] %vm2634, %v2560
  %2690 = vst.msk [vmem:[%s1 + $0xdc] sm:$0xf] %vm2634, %v2561
  %2691 = vst.msk [vmem:[%s1 + $0xe0] sm:$0xf] %vm2634, %v2562
  %2692 = vst.msk [vmem:[%s1 + $0xe4] sm:$0xf] %vm2634, %v2563
  %2693 = vst.msk [vmem:[%s1 + $0xe8] sm:$0xf] %vm2634, %v2564
  %2694 = vst.msk [vmem:[%s1 + $0xec] sm:$0xf] %vm2634, %v2565
  %2695 = vst.msk [vmem:[%s1 + $0xf0] sm:$0xf] %vm2634, %v2566
  %2696 = vst.msk [vmem:[%s1 + $0xf4] sm:$0xf] %vm2634, %v2567
  %2697 = vst.msk [vmem:[%s1 + $0xf8] sm:$0xf] %vm2634, %v2568
  %2698 = vst.msk [vmem:[%s1 + $0xfc] sm:$0xf] %vm2634, %v2569
  // Predicated region
  $region6: #{resnet_forward.14} parent=0 // pred_check
    _
  $region7: #{resnet_forward.14} parent=0 // pred_check_branch
    %2700 = sbr.rel (0) target = $region9
  $region8: #{resnet_forward.14} parent=0 // pred_region
    _
  $region9: #{resnet_forward.14} parent=0 // pred_fallthru
    _
  // Predicated region
  $region10: #{resnet_forward.14} parent=0 // pred_check
    _
  $region11: #{resnet_forward.14} parent=0 // pred_check_branch
    %2702 = sbr.rel (0) target = $region13
  $region12: #{resnet_forward.14} parent=0 // pred_region
    _
  $region13: #{resnet_forward.14} parent=0 // pred_fallthru
    _

// kernel: resnet_forward.15
$region0: #{resnet_forward.15}
  #allocation0 [shape = 'u32[]', space=smem, size = 0x4, offset = 0x4, fixed_abs, tag = 'smem constant byte address 0x4 - core index']
  #allocation1 [shape = 'u32[144,128]{1,0:T(1,128)}', space=vmem, size = 0x12000, scoped, tag = 'internal scratch']
  #allocation2 [shape = 'f32[1,16,512]{2,1,0:T(8,128)}', space=vmem, size = 0x8000, scoped, tag = 'scratch operand']
  #allocation3 [shape = 'f32[16,1]{1,0:T(8,128)}', space=vmem, size = 0x2000, scoped, tag = 'scratch operand']
  #allocation4 [shape = 'f32[16,1]{1,0:T(8,128)}', space=vmem, size = 0x2000, scoped, tag = 'scratch operand']
  %s0 = inlined_call_operand.vmem [shape: bf16[80,512], index: 0, kind: input, shape index: {}]
  %s1 = inlined_call_operand.vmem [shape: bf16[16,80], index: 1, kind: input, shape index: {}]
  %s2 = inlined_call_operand.vmem [shape: f32[16,1], index: 2, kind: input, shape index: {}]
  %s3 = inlined_call_operand.vmem [shape: f32[16,1], index: 3, kind: input, shape index: {}]
  %s4 = inlined_call_operand.vmem [shape: bf16[16,512], index: 4, kind: output, shape index: {}]
  %s5 = sld [smem:[#allocation0]]
  $region34: #{resnet_forward.15} parent=0
    _
  %s7 = ssub.s32 1, %s5
  %s8 = scalar_select 0, %s7, %s5
  // Predicated region
  $region2: #{resnet_forward.15} parent=0 // pred_check
    _
  $region3: #{resnet_forward.15} parent=0 // pred_check_branch
    %10 = sbr.rel (0) target = $region5
  $region4: #{resnet_forward.15} parent=0 // pred_region
    _
  $region5: #{resnet_forward.15} parent=0 // pred_fallthru
    _
  // Predicated region
  $region6: #{resnet_forward.15} parent=0 // pred_check
    _
  $region7: #{resnet_forward.15} parent=0 // pred_check_branch
    %12 = sbr.rel (0) target = $region9
  $region8: #{resnet_forward.15} parent=0 // pred_region
    _
  $region9: #{resnet_forward.15} parent=0 // pred_fallthru
    _
  // Predicated region
  $region10: #{resnet_forward.15} parent=0 // pred_check
    _
  $region11: #{resnet_forward.15} parent=0 // pred_check_branch
    %14 = sbr.rel (0) target = $region13
  $region12: #{resnet_forward.15} parent=0 // pred_region
    _
  $region13: #{resnet_forward.15} parent=0 // pred_fallthru
    _
  // Predicated region
  $region14: #{resnet_forward.15} parent=0 // pred_check
    _
  $region15: #{resnet_forward.15} parent=0 // pred_check_branch
    %16 = sbr.rel (0) target = $region17
  $region16: #{resnet_forward.15} parent=0 // pred_region
    _
  $region17: #{resnet_forward.15} parent=0 // pred_fallthru
    _
  %p18 = scmp.eq.s32.totalorder 0, 0
  // Predicated region
  $region18: #{resnet_forward.15} parent=0 // pred_check
    %p19 = pneg %p18
  $region19: #{resnet_forward.15} parent=0 // pred_check_branch
    %21 = sbr.rel (%p19) target = $region21
  $region20: #{resnet_forward.15} parent=0 // pred_region
    %vm22 = vcmask 7168
    %23 = vst.msk [vmem:[#allocation3] sm:$0xff] %vm22, 0.0
    %24 = vst.msk [vmem:[#allocation3 + $0x8] sm:$0xff] %vm22, 0.0
    %25 = vst.msk [vmem:[#allocation4] sm:$0xff] %vm22, 0.0
    %26 = vst.msk [vmem:[#allocation4 + $0x8] sm:$0xff] %vm22, 0.0
  $region21: #{resnet_forward.15} parent=0 // pred_fallthru
    _
  %v27 = vld [vmem:[%s1] sm:$0xf]
  %v28 = vld [vmem:[%s1 + $0x4] sm:$0xf]
  %v29 = vld [vmem:[%s0] sm:$0xff]
  %v30 = vld [vmem:[%s0 + $0x8] sm:$0xff]
  %v31 = vld [vmem:[%s0 + $0x10] sm:$0xff]
  %v32 = vld [vmem:[%s0 + $0x18] sm:$0xff]
  %v33 = vld [vmem:[%s0 + $0x20] sm:$0xff]
  %v34 = vld [vmem:[%s0 + $0x28] sm:$0xff]
  %v35 = vld [vmem:[%s0 + $0x30] sm:$0xff]
  %v36 = vld [vmem:[%s0 + $0x38] sm:$0xff]
  %v37 = vld [vmem:[%s0 + $0x40] sm:$0xff]
  %v38 = vld [vmem:[%s0 + $0x48] sm:$0xff]
  %v39 = vld [vmem:[%s0 + $0x50] sm:$0xff]
  %v40 = vld [vmem:[%s0 + $0x58] sm:$0xff]
  %v41 = vld [vmem:[%s0 + $0x60] sm:$0xff]
  %v42 = vld [vmem:[%s0 + $0x68] sm:$0xff]
  %v43 = vld [vmem:[%s0 + $0x70] sm:$0xff]
  %v44 = vld [vmem:[%s0 + $0x78] sm:$0xff]
  %v45 = vld [vmem:[%s0 + $0x80] sm:$0xff]
  %v46 = vld [vmem:[%s0 + $0x88] sm:$0xff]
  %v47 = vld [vmem:[%s0 + $0x90] sm:$0xff]
  %v48 = vld [vmem:[%s0 + $0x98] sm:$0xff]
  %v51 = vunpack.c.l.b16 %v27
  %v52 = vunpack.c.l.b16 %v28
  %v53 = vpack.c.b16 %v52, %v51
  %v74 = vunpack.c.l.b16 %v29
  %v75 = vunpack.c.h.b16 %v29
  %v76 = vunpack.c.l.b16 %v30
  %v77 = vunpack.c.h.b16 %v30
  %v78 = vunpack.c.l.b16 %v31
  %v79 = vunpack.c.h.b16 %v31
  %v80 = vunpack.c.l.b16 %v32
  %v81 = vunpack.c.h.b16 %v32
  %v82 = vunpack.c.l.b16 %v33
  %v83 = vunpack.c.h.b16 %v33
  %v84 = vunpack.c.l.b16 %v34
  %v85 = vunpack.c.h.b16 %v34
  %v86 = vunpack.c.l.b16 %v35
  %v87 = vunpack.c.h.b16 %v35
  %v88 = vunpack.c.l.b16 %v36
  %v89 = vunpack.c.h.b16 %v36
  %v90 = vunpack.c.l.b16 %v37
  %v91 = vunpack.c.h.b16 %v37
  %v92 = vunpack.c.l.b16 %v38
  %v93 = vunpack.c.h.b16 %v38
  %v94 = vunpack.c.l.b16 %v39
  %v95 = vunpack.c.h.b16 %v39
  %v96 = vunpack.c.l.b16 %v40
  %v97 = vunpack.c.h.b16 %v40
  %v98 = vunpack.c.l.b16 %v41
  %v99 = vunpack.c.h.b16 %v41
  %v100 = vunpack.c.l.b16 %v42
  %v101 = vunpack.c.h.b16 %v42
  %v102 = vunpack.c.l.b16 %v43
  %v103 = vunpack.c.h.b16 %v43
  %v104 = vunpack.c.l.b16 %v44
  %v105 = vunpack.c.h.b16 %v44
  %v106 = vunpack.c.l.b16 %v45
  %v107 = vunpack.c.h.b16 %v45
  %v108 = vunpack.c.l.b16 %v46
  %v109 = vunpack.c.h.b16 %v46
  %v110 = vunpack.c.l.b16 %v47
  %v111 = vunpack.c.h.b16 %v47
  %v112 = vunpack.c.l.b16 %v48
  %v113 = vunpack.c.h.b16 %v48
  %v114 = vpack.c.b16 %v78, %v74
  %v115 = vpack.c.b16 %v79, %v75
  %v116 = vpack.c.b16 %v80, %v76
  %v117 = vpack.c.b16 %v81, %v77
  %v118 = vpack.c.b16 %v86, %v82
  %v119 = vpack.c.b16 %v87, %v83
  %v120 = vpack.c.b16 %v88, %v84
  %v121 = vpack.c.b16 %v89, %v85
  %v122 = vpack.c.b16 %v94, %v90
  %v123 = vpack.c.b16 %v95, %v91
  %v124 = vpack.c.b16 %v96, %v92
  %v125 = vpack.c.b16 %v97, %v93
  %v126 = vpack.c.b16 %v102, %v98
  %v127 = vpack.c.b16 %v103, %v99
  %v128 = vpack.c.b16 %v104, %v100
  %v129 = vpack.c.b16 %v105, %v101
  %v130 = vpack.c.b16 %v110, %v106
  %v131 = vpack.c.b16 %v111, %v107
  %v132 = vpack.c.b16 %v112, %v108
  %v133 = vpack.c.b16 %v113, %v109
  %vm154 = vcmask 654336
  %v156 = vsel %vm154, %v53, 0
  %158 = vmatprep.subr.bf16.mxu0 0
  %159 = vmatpush1.bf16.msra.mxu0 0
  %160 = vmatprep.subr.bf16.mxu0 0
  %161 = vmatpush1.bf16.msra.mxu0 0
  %162 = vmatprep.subr.bf16.mxu0 0
  %163 = vmatpush1.bf16.msra.mxu0 0
  %164 = vmatprep.subr.bf16.mxu0 %v131
  %165 = vmatpush1.bf16.msra.mxu0 %v130
  %166 = vmatprep.subr.bf16.mxu0 %v127
  %167 = vmatpush1.bf16.msra.mxu0 %v126
  %168 = vmatprep.subr.bf16.mxu0 %v123
  %169 = vmatpush1.bf16.msra.mxu0 %v122
  %170 = vmatprep.subr.bf16.mxu0 %v119
  %171 = vmatpush1.bf16.msra.mxu0 %v118
  %172 = vmatprep.subr.bf16.mxu0 %v115
  %173 = vmatpush1.bf16.msra.mxu0 %v114
  %174 = vmatprep.subr.bf16.mxu0 0
  %175 = vmatpush2.bf16.msra.mxu0 0
  %176 = vmatprep.subr.bf16.mxu0 0
  %177 = vmatpush2.bf16.msra.mxu0 0
  %178 = vmatprep.subr.bf16.mxu0 0
  %179 = vmatpush2.bf16.msra.mxu0 0
  %180 = vmatprep.subr.bf16.mxu0 0
  %181 = vmatpush2.bf16.msra.mxu0 0
  %182 = vmatprep.subr.bf16.mxu0 0
  %183 = vmatpush2.bf16.msra.mxu0 0
  %184 = vmatprep.subr.bf16.mxu0 0
  %185 = vmatpush2.bf16.msra.mxu0 0
  %186 = vmatprep.subr.bf16.mxu0 0
  %187 = vmatpush2.bf16.msra.mxu0 0
  %188 = vmatprep.subr.bf16.mxu0 0
  %189 = vmatpush2.bf16.msra.mxu0 0
  %190 = vmatprep.mubr.bf16.mxu0 0
  %191 = vmatmul.mubr.bf16.gmra.mxu0 %v156
  %v192 = vpop.f32.mrf.mxu0
  %v193 = vadd.f32 0.0, %v192
  %v194 = vpop.f32.mrf.mxu0
  %v195 = vadd.f32 0.0, %v194
  %v196 = vpop.f32.mrf.mxu0
  %v197 = vadd.f32 0.0, %v196
  %v198 = vpop.f32.mrf.mxu0
  %v199 = vadd.f32 0.0, %v198
  %200 = vdwg.mxu0
  %201 = vmatprep.subr.bf16.mxu0 0
  %202 = vmatpush1.bf16.msra.mxu0 0
  %203 = vmatprep.subr.bf16.mxu0 0
  %204 = vmatpush1.bf16.msra.mxu0 0
  %205 = vmatprep.subr.bf16.mxu0 0
  %206 = vmatpush1.bf16.msra.mxu0 0
  %207 = vmatprep.subr.bf16.mxu0 %v133
  %208 = vmatpush1.bf16.msra.mxu0 %v132
  %209 = vmatprep.subr.bf16.mxu0 %v129
  %210 = vmatpush1.bf16.msra.mxu0 %v128
  %211 = vmatprep.subr.bf16.mxu0 %v125
  %212 = vmatpush1.bf16.msra.mxu0 %v124
  %213 = vmatprep.subr.bf16.mxu0 %v121
  %214 = vmatpush1.bf16.msra.mxu0 %v120
  %215 = vmatprep.subr.bf16.mxu0 %v117
  %216 = vmatpush1.bf16.msra.mxu0 %v116
  %217 = vmatprep.subr.bf16.mxu0 0
  %218 = vmatpush2.bf16.msra.mxu0 0
  %219 = vmatprep.subr.bf16.mxu0 0
  %220 = vmatpush2.bf16.msra.mxu0 0
  %221 = vmatprep.subr.bf16.mxu0 0
  %222 = vmatpush2.bf16.msra.mxu0 0
  %223 = vmatprep.subr.bf16.mxu0 0
  %224 = vmatpush2.bf16.msra.mxu0 0
  %225 = vmatprep.subr.bf16.mxu0 0
  %226 = vmatpush2.bf16.msra.mxu0 0
  %227 = vmatprep.subr.bf16.mxu0 0
  %228 = vmatpush2.bf16.msra.mxu0 0
  %229 = vmatprep.subr.bf16.mxu0 0
  %230 = vmatpush2.bf16.msra.mxu0 0
  %231 = vmatprep.subr.bf16.mxu0 0
  %232 = vmatpush2.bf16.msra.mxu0 0
  %233 = vmatprep.mubr.bf16.mxu0 0
  %234 = vmatmul.mubr.bf16.gmra.mxu0 %v156
  %v235 = vpop.f32.mrf.mxu0
  %v236 = vadd.f32 0.0, %v235
  %v237 = vpop.f32.mrf.mxu0
  %v238 = vadd.f32 0.0, %v237
  %v239 = vpop.f32.mrf.mxu0
  %v240 = vadd.f32 0.0, %v239
  %v241 = vpop.f32.mrf.mxu0
  %v242 = vadd.f32 0.0, %v241
  %243 = vdwg.mxu0
  %s244 = smul.u32 0, 8
  %s245 = smul.addr %s244, 8
  %s246 = scalar_lea.vmem [#allocation2], %s245
  %247 = vst [vmem:[%s246] sm:$0xff] %v193
  %248 = vst [vmem:[%s246 + $0x8] sm:$0xff] %v195
  %249 = vst [vmem:[%s246 + $0x10] sm:$0xff] %v236
  %250 = vst [vmem:[%s246 + $0x18] sm:$0xff] %v238
  %251 = vst [vmem:[%s246 + $0x20] sm:$0xff] %v197
  %252 = vst [vmem:[%s246 + $0x28] sm:$0xff] %v199
  %253 = vst [vmem:[%s246 + $0x30] sm:$0xff] %v240
  %254 = vst [vmem:[%s246 + $0x38] sm:$0xff] %v242
  %v255 = vld [vmem:[#allocation3] sm:$0xff]
  %v256 = vld [vmem:[#allocation3 + $0x8] sm:$0xff]
  %v257 = vadd.f32 %v193, %v195
  %v258 = vadd.f32 %v257, %v236
  %v259 = vadd.f32 %v258, %v238
  %260 = vadd.xlane.f32.xlu0 %v259
  %v261 = vpop.xlane.xlu0 %260
  %v262 = vadd.f32 %v197, %v199
  %v263 = vadd.f32 %v262, %v240
  %v264 = vadd.f32 %v263, %v242
  %265 = vadd.xlane.f32.xlu0 %v264
  %v266 = vpop.xlane.xlu0 %265
  %v267 = vadd.f32 %v255, %v261
  %v268 = vadd.f32 %v256, %v266
  %vm269 = vcmask 7168
  %270 = vst.msk [vmem:[#allocation3] sm:$0xff] %vm269, %v267
  %271 = vst.msk [vmem:[#allocation3 + $0x8] sm:$0xff] %vm269, %v268
  %v272 = vld [vmem:[#allocation4] sm:$0xff]
  %v273 = vld [vmem:[#allocation4 + $0x8] sm:$0xff]
  %v274 = vmul.f32 %v193, %v193
  %v275 = vmul.f32 %v195, %v195
  %v276 = vmul.f32 %v236, %v236
  %v277 = vmul.f32 %v238, %v238
  %v278 = vmul.f32 %v197, %v197
  %v279 = vmul.f32 %v199, %v199
  %v280 = vmul.f32 %v240, %v240
  %v281 = vmul.f32 %v242, %v242
  %v282 = vadd.f32 %v274, %v275
  %v283 = vadd.f32 %v282, %v276
  %v284 = vadd.f32 %v283, %v277
  %285 = vadd.xlane.f32.xlu0 %v284
  %v286 = vpop.xlane.xlu0 %285
  %v287 = vadd.f32 %v278, %v279
  %v288 = vadd.f32 %v287, %v280
  %v289 = vadd.f32 %v288, %v281
  %290 = vadd.xlane.f32.xlu0 %v289
  %v291 = vpop.xlane.xlu0 %290
  %v292 = vadd.f32 %v272, %v286
  %v293 = vadd.f32 %v273, %v291
  %294 = vst.msk [vmem:[#allocation4] sm:$0xff] %vm269, %v292
  %295 = vst.msk [vmem:[#allocation4 + $0x8] sm:$0xff] %vm269, %v293
  // Predicated region
  $region22: #{resnet_forward.15} parent=0 // pred_check
    %p296 = pneg %p18
  $region23: #{resnet_forward.15} parent=0 // pred_check_branch
    %298 = sbr.rel (%p296) target = $region25
  $region24: #{resnet_forward.15} parent=0 // pred_region
    %v299 = vld [vmem:[#allocation3] sm:$0xff]
    %v300 = vld [vmem:[#allocation3 + $0x8] sm:$0xff]
    %v301 = vmul.f32 %v299, 0.001953125
    %v302 = vmul.f32 %v300, 0.001953125
    %v303 = vld [vmem:[#allocation4] sm:$0xff]
    %v304 = vld [vmem:[#allocation4 + $0x8] sm:$0xff]
    %v305 = vmul.f32 %v303, 0.001953125
    %v306 = vmul.f32 %v304, 0.001953125
    %v307 = vmul.f32 %v301, %v301
    %v308 = vmul.f32 %v302, %v302
    %v309 = vsub.f32 %v305, %v307
    %v310 = vsub.f32 %v306, %v308
    %v311 = vmax.f32 %v309, 0.0
    %v312 = vmax.f32 %v310, 0.0
    %v313 = vld [vmem:[%s2] sm:$0xff]
    %v314 = vld [vmem:[%s2 + $0x8] sm:$0xff]
    %v315 = vadd.f32 %v311, 1e-05
    %v316 = vadd.f32 %v312, 1e-05
    %v317 = vrsqrt.pop %v315
    %v318 = vrsqrt.pop %v316
    %v319 = vmul.f32 %v313, %v317
    %v320 = vmul.f32 %v314, %v318
    %v321 = vld [vmem:[%s3] sm:$0xff]
    %v322 = vld [vmem:[%s3 + $0x8] sm:$0xff]
    %v323 = vmul.f32 %v301, %v319
    %v324 = vmul.f32 %v302, %v320
    %v325 = vsub.f32 %v321, %v323
    %v326 = vsub.f32 %v322, %v324
    %v327 = vld [vmem:[#allocation2] sm:$0xff]
    %v328 = vld [vmem:[#allocation2 + $0x8] sm:$0xff]
    %v329 = vld [vmem:[#allocation2 + $0x10] sm:$0xff]
    %v330 = vld [vmem:[#allocation2 + $0x18] sm:$0xff]
    %v331 = vld [vmem:[#allocation2 + $0x20] sm:$0xff]
    %v332 = vld [vmem:[#allocation2 + $0x28] sm:$0xff]
    %v333 = vld [vmem:[#allocation2 + $0x30] sm:$0xff]
    %v334 = vld [vmem:[#allocation2 + $0x38] sm:$0xff]
    %336 = vset.pattern.permute.xlu0 0
    %337 = vperm.xlu0 %336, %v319
    %v338 = vpop.permute.xlu0 %337
    %341 = vset.pattern.permute.xlu0 0
    %342 = vperm.xlu0 %341, %v320
    %v343 = vpop.permute.xlu0 %342
    %v345 = vmul.f32 %v327, %v338
    %v346 = vmul.f32 %v328, %v338
    %v347 = vmul.f32 %v329, %v338
    %v348 = vmul.f32 %v330, %v338
    %v349 = vmul.f32 %v331, %v343
    %v350 = vmul.f32 %v332, %v343
    %v351 = vmul.f32 %v333, %v343
    %v352 = vmul.f32 %v334, %v343
    %354 = vset.pattern.permute.xlu0 0
    %355 = vperm.xlu0 %354, %v325
    %v356 = vpop.permute.xlu0 %355
    %359 = vset.pattern.permute.xlu0 0
    %360 = vperm.xlu0 %359, %v326
    %v361 = vpop.permute.xlu0 %360
    %v363 = vadd.f32 %v345, %v356
    %v364 = vadd.f32 %v346, %v356
    %v365 = vadd.f32 %v347, %v356
    %v366 = vadd.f32 %v348, %v356
    %v367 = vadd.f32 %v349, %v361
    %v368 = vadd.f32 %v350, %v361
    %v369 = vadd.f32 %v351, %v361
    %v370 = vadd.f32 %v352, %v361
    %v371 = vmax.f32 %v363, 0.0
    %v372 = vmax.f32 %v364, 0.0
    %v373 = vmax.f32 %v365, 0.0
    %v374 = vmax.f32 %v366, 0.0
    %v375 = vmax.f32 %v367, 0.0
    %v376 = vmax.f32 %v368, 0.0
    %v377 = vmax.f32 %v369, 0.0
    %v378 = vmax.f32 %v370, 0.0
    %v379 = vpack.c.bf16 %v375, %v371
    %v380 = vpack.c.bf16 %v376, %v372
    %v381 = vpack.c.bf16 %v377, %v373
    %v382 = vpack.c.bf16 %v378, %v374
    %v387 = vunpack.c.l.b16 %v379
    %v388 = vunpack.c.l.b16 %v380
    %v389 = vunpack.c.l.b16 %v381
    %v390 = vunpack.c.l.b16 %v382
    %v391 = vunpack.c.h.b16 %v379
    %v392 = vunpack.c.h.b16 %v380
    %v393 = vunpack.c.h.b16 %v381
    %v394 = vunpack.c.h.b16 %v382
    %v395 = vpack.c.b16 %v388, %v387
    %v396 = vpack.c.b16 %v390, %v389
    %v397 = vpack.c.b16 %v392, %v391
    %v398 = vpack.c.b16 %v394, %v393
    %403 = vst [vmem:[%s4] sm:$0xff] %v395
    %404 = vst [vmem:[%s4 + $0x8] sm:$0xff] %v396
    %405 = vst [vmem:[%s4 + $0x10] sm:$0xff] %v397
    %406 = vst [vmem:[%s4 + $0x18] sm:$0xff] %v398
  $region25: #{resnet_forward.15} parent=0 // pred_fallthru
    _
  // Predicated region
  $region26: #{resnet_forward.15} parent=0 // pred_check
    _
  $region27: #{resnet_forward.15} parent=0 // pred_check_branch
    %408 = sbr.rel (0) target = $region29
  $region28: #{resnet_forward.15} parent=0 // pred_region
    _
  $region29: #{resnet_forward.15} parent=0 // pred_fallthru
    _
  // Predicated region
  $region30: #{resnet_forward.15} parent=0 // pred_check
    _
  $region31: #{resnet_forward.15} parent=0 // pred_check_branch
    %410 = sbr.rel (0) target = $region33
  $region32: #{resnet_forward.15} parent=0 // pred_region
    _
  $region33: #{resnet_forward.15} parent=0 // pred_fallthru
    _

// kernel: resnet_forward.16
$region0: #{resnet_forward.16}
  #allocation0 [shape = 'u32[]', space=smem, size = 0x4, offset = 0x4, fixed_abs, tag = 'smem constant byte address 0x4 - core index']
  #allocation1 [shape = 'u32[144,128]{1,0:T(1,128)}', space=vmem, size = 0x12000, scoped, tag = 'internal scratch']
  #allocation2 [shape = 'f32[1,16,512]{2,1,0:T(8,128)}', space=vmem, size = 0x8000, scoped, tag = 'scratch operand']
  #allocation3 [shape = 'f32[16,1]{1,0:T(8,128)}', space=vmem, size = 0x2000, scoped, tag = 'scratch operand']
  #allocation4 [shape = 'f32[16,1]{1,0:T(8,128)}', space=vmem, size = 0x2000, scoped, tag = 'scratch operand']
  %s0 = inlined_call_operand.vmem [shape: bf16[80,512], index: 0, kind: input, shape index: {}]
  %s1 = inlined_call_operand.vmem [shape: bf16[16,80], index: 1, kind: input, shape index: {}]
  %s2 = inlined_call_operand.vmem [shape: f32[16,1], index: 2, kind: input, shape index: {}]
  %s3 = inlined_call_operand.vmem [shape: f32[16,1], index: 3, kind: input, shape index: {}]
  %s4 = inlined_call_operand.vmem [shape: bf16[16,512], index: 4, kind: input, shape index: {}]
  %s5 = inlined_call_operand.vmem [shape: bf16[16,512], index: 5, kind: output, shape index: {}]
  %s6 = sld [smem:[#allocation0]]
  $region38: #{resnet_forward.16} parent=0
    _
  %s8 = ssub.s32 1, %s6
  %s9 = scalar_select 0, %s8, %s6
  // Predicated region
  $region2: #{resnet_forward.16} parent=0 // pred_check
    _
  $region3: #{resnet_forward.16} parent=0 // pred_check_branch
    %11 = sbr.rel (0) target = $region5
  $region4: #{resnet_forward.16} parent=0 // pred_region
    _
  $region5: #{resnet_forward.16} parent=0 // pred_fallthru
    _
  // Predicated region
  $region6: #{resnet_forward.16} parent=0 // pred_check
    _
  $region7: #{resnet_forward.16} parent=0 // pred_check_branch
    %13 = sbr.rel (0) target = $region9
  $region8: #{resnet_forward.16} parent=0 // pred_region
    _
  $region9: #{resnet_forward.16} parent=0 // pred_fallthru
    _
  // Predicated region
  $region10: #{resnet_forward.16} parent=0 // pred_check
    _
  $region11: #{resnet_forward.16} parent=0 // pred_check_branch
    %15 = sbr.rel (0) target = $region13
  $region12: #{resnet_forward.16} parent=0 // pred_region
    _
  $region13: #{resnet_forward.16} parent=0 // pred_fallthru
    _
  // Predicated region
  $region14: #{resnet_forward.16} parent=0 // pred_check
    _
  $region15: #{resnet_forward.16} parent=0 // pred_check_branch
    %17 = sbr.rel (0) target = $region17
  $region16: #{resnet_forward.16} parent=0 // pred_region
    _
  $region17: #{resnet_forward.16} parent=0 // pred_fallthru
    _
  // Predicated region
  $region18: #{resnet_forward.16} parent=0 // pred_check
    _
  $region19: #{resnet_forward.16} parent=0 // pred_check_branch
    %19 = sbr.rel (0) target = $region21
  $region20: #{resnet_forward.16} parent=0 // pred_region
    _
  $region21: #{resnet_forward.16} parent=0 // pred_fallthru
    _
  %p21 = scmp.eq.s32.totalorder 0, 0
  // Predicated region
  $region22: #{resnet_forward.16} parent=0 // pred_check
    %p22 = pneg %p21
  $region23: #{resnet_forward.16} parent=0 // pred_check_branch
    %24 = sbr.rel (%p22) target = $region25
  $region24: #{resnet_forward.16} parent=0 // pred_region
    %vm25 = vcmask 7168
    %26 = vst.msk [vmem:[#allocation3] sm:$0xff] %vm25, 0.0
    %27 = vst.msk [vmem:[#allocation3 + $0x8] sm:$0xff] %vm25, 0.0
    %28 = vst.msk [vmem:[#allocation4] sm:$0xff] %vm25, 0.0
    %29 = vst.msk [vmem:[#allocation4 + $0x8] sm:$0xff] %vm25, 0.0
  $region25: #{resnet_forward.16} parent=0 // pred_fallthru
    _
  %v30 = vld [vmem:[%s1] sm:$0xf]
  %v31 = vld [vmem:[%s1 + $0x4] sm:$0xf]
  %v32 = vld [vmem:[%s0] sm:$0xff]
  %v33 = vld [vmem:[%s0 + $0x8] sm:$0xff]
  %v34 = vld [vmem:[%s0 + $0x10] sm:$0xff]
  %v35 = vld [vmem:[%s0 + $0x18] sm:$0xff]
  %v36 = vld [vmem:[%s0 + $0x20] sm:$0xff]
  %v37 = vld [vmem:[%s0 + $0x28] sm:$0xff]
  %v38 = vld [vmem:[%s0 + $0x30] sm:$0xff]
  %v39 = vld [vmem:[%s0 + $0x38] sm:$0xff]
  %v40 = vld [vmem:[%s0 + $0x40] sm:$0xff]
  %v41 = vld [vmem:[%s0 + $0x48] sm:$0xff]
  %v42 = vld [vmem:[%s0 + $0x50] sm:$0xff]
  %v43 = vld [vmem:[%s0 + $0x58] sm:$0xff]
  %v44 = vld [vmem:[%s0 + $0x60] sm:$0xff]
  %v45 = vld [vmem:[%s0 + $0x68] sm:$0xff]
  %v46 = vld [vmem:[%s0 + $0x70] sm:$0xff]
  %v47 = vld [vmem:[%s0 + $0x78] sm:$0xff]
  %v48 = vld [vmem:[%s0 + $0x80] sm:$0xff]
  %v49 = vld [vmem:[%s0 + $0x88] sm:$0xff]
  %v50 = vld [vmem:[%s0 + $0x90] sm:$0xff]
  %v51 = vld [vmem:[%s0 + $0x98] sm:$0xff]
  %v54 = vunpack.c.l.b16 %v30
  %v55 = vunpack.c.l.b16 %v31
  %v56 = vpack.c.b16 %v55, %v54
  %v77 = vunpack.c.l.b16 %v32
  %v78 = vunpack.c.h.b16 %v32
  %v79 = vunpack.c.l.b16 %v33
  %v80 = vunpack.c.h.b16 %v33
  %v81 = vunpack.c.l.b16 %v34
  %v82 = vunpack.c.h.b16 %v34
  %v83 = vunpack.c.l.b16 %v35
  %v84 = vunpack.c.h.b16 %v35
  %v85 = vunpack.c.l.b16 %v36
  %v86 = vunpack.c.h.b16 %v36
  %v87 = vunpack.c.l.b16 %v37
  %v88 = vunpack.c.h.b16 %v37
  %v89 = vunpack.c.l.b16 %v38
  %v90 = vunpack.c.h.b16 %v38
  %v91 = vunpack.c.l.b16 %v39
  %v92 = vunpack.c.h.b16 %v39
  %v93 = vunpack.c.l.b16 %v40
  %v94 = vunpack.c.h.b16 %v40
  %v95 = vunpack.c.l.b16 %v41
  %v96 = vunpack.c.h.b16 %v41
  %v97 = vunpack.c.l.b16 %v42
  %v98 = vunpack.c.h.b16 %v42
  %v99 = vunpack.c.l.b16 %v43
  %v100 = vunpack.c.h.b16 %v43
  %v101 = vunpack.c.l.b16 %v44
  %v102 = vunpack.c.h.b16 %v44
  %v103 = vunpack.c.l.b16 %v45
  %v104 = vunpack.c.h.b16 %v45
  %v105 = vunpack.c.l.b16 %v46
  %v106 = vunpack.c.h.b16 %v46
  %v107 = vunpack.c.l.b16 %v47
  %v108 = vunpack.c.h.b16 %v47
  %v109 = vunpack.c.l.b16 %v48
  %v110 = vunpack.c.h.b16 %v48
  %v111 = vunpack.c.l.b16 %v49
  %v112 = vunpack.c.h.b16 %v49
  %v113 = vunpack.c.l.b16 %v50
  %v114 = vunpack.c.h.b16 %v50
  %v115 = vunpack.c.l.b16 %v51
  %v116 = vunpack.c.h.b16 %v51
  %v117 = vpack.c.b16 %v81, %v77
  %v118 = vpack.c.b16 %v82, %v78
  %v119 = vpack.c.b16 %v83, %v79
  %v120 = vpack.c.b16 %v84, %v80
  %v121 = vpack.c.b16 %v89, %v85
  %v122 = vpack.c.b16 %v90, %v86
  %v123 = vpack.c.b16 %v91, %v87
  %v124 = vpack.c.b16 %v92, %v88
  %v125 = vpack.c.b16 %v97, %v93
  %v126 = vpack.c.b16 %v98, %v94
  %v127 = vpack.c.b16 %v99, %v95
  %v128 = vpack.c.b16 %v100, %v96
  %v129 = vpack.c.b16 %v105, %v101
  %v130 = vpack.c.b16 %v106, %v102
  %v131 = vpack.c.b16 %v107, %v103
  %v132 = vpack.c.b16 %v108, %v104
  %v133 = vpack.c.b16 %v113, %v109
  %v134 = vpack.c.b16 %v114, %v110
  %v135 = vpack.c.b16 %v115, %v111
  %v136 = vpack.c.b16 %v116, %v112
  %vm157 = vcmask 654336
  %v159 = vsel %vm157, %v56, 0
  %161 = vmatprep.subr.bf16.mxu0 0
  %162 = vmatpush1.bf16.msra.mxu0 0
  %163 = vmatprep.subr.bf16.mxu0 0
  %164 = vmatpush1.bf16.msra.mxu0 0
  %165 = vmatprep.subr.bf16.mxu0 0
  %166 = vmatpush1.bf16.msra.mxu0 0
  %167 = vmatprep.subr.bf16.mxu0 %v134
  %168 = vmatpush1.bf16.msra.mxu0 %v133
  %169 = vmatprep.subr.bf16.mxu0 %v130
  %170 = vmatpush1.bf16.msra.mxu0 %v129
  %171 = vmatprep.subr.bf16.mxu0 %v126
  %172 = vmatpush1.bf16.msra.mxu0 %v125
  %173 = vmatprep.subr.bf16.mxu0 %v122
  %174 = vmatpush1.bf16.msra.mxu0 %v121
  %175 = vmatprep.subr.bf16.mxu0 %v118
  %176 = vmatpush1.bf16.msra.mxu0 %v117
  %177 = vmatprep.subr.bf16.mxu0 0
  %178 = vmatpush2.bf16.msra.mxu0 0
  %179 = vmatprep.subr.bf16.mxu0 0
  %180 = vmatpush2.bf16.msra.mxu0 0
  %181 = vmatprep.subr.bf16.mxu0 0
  %182 = vmatpush2.bf16.msra.mxu0 0
  %183 = vmatprep.subr.bf16.mxu0 0
  %184 = vmatpush2.bf16.msra.mxu0 0
  %185 = vmatprep.subr.bf16.mxu0 0
  %186 = vmatpush2.bf16.msra.mxu0 0
  %187 = vmatprep.subr.bf16.mxu0 0
  %188 = vmatpush2.bf16.msra.mxu0 0
  %189 = vmatprep.subr.bf16.mxu0 0
  %190 = vmatpush2.bf16.msra.mxu0 0
  %191 = vmatprep.subr.bf16.mxu0 0
  %192 = vmatpush2.bf16.msra.mxu0 0
  %193 = vmatprep.mubr.bf16.mxu0 0
  %194 = vmatmul.mubr.bf16.gmra.mxu0 %v159
  %v195 = vpop.f32.mrf.mxu0
  %v196 = vadd.f32 0.0, %v195
  %v197 = vpop.f32.mrf.mxu0
  %v198 = vadd.f32 0.0, %v197
  %v199 = vpop.f32.mrf.mxu0
  %v200 = vadd.f32 0.0, %v199
  %v201 = vpop.f32.mrf.mxu0
  %v202 = vadd.f32 0.0, %v201
  %203 = vdwg.mxu0
  %204 = vmatprep.subr.bf16.mxu0 0
  %205 = vmatpush1.bf16.msra.mxu0 0
  %206 = vmatprep.subr.bf16.mxu0 0
  %207 = vmatpush1.bf16.msra.mxu0 0
  %208 = vmatprep.subr.bf16.mxu0 0
  %209 = vmatpush1.bf16.msra.mxu0 0
  %210 = vmatprep.subr.bf16.mxu0 %v136
  %211 = vmatpush1.bf16.msra.mxu0 %v135
  %212 = vmatprep.subr.bf16.mxu0 %v132
  %213 = vmatpush1.bf16.msra.mxu0 %v131
  %214 = vmatprep.subr.bf16.mxu0 %v128
  %215 = vmatpush1.bf16.msra.mxu0 %v127
  %216 = vmatprep.subr.bf16.mxu0 %v124
  %217 = vmatpush1.bf16.msra.mxu0 %v123
  %218 = vmatprep.subr.bf16.mxu0 %v120
  %219 = vmatpush1.bf16.msra.mxu0 %v119
  %220 = vmatprep.subr.bf16.mxu0 0
  %221 = vmatpush2.bf16.msra.mxu0 0
  %222 = vmatprep.subr.bf16.mxu0 0
  %223 = vmatpush2.bf16.msra.mxu0 0
  %224 = vmatprep.subr.bf16.mxu0 0
  %225 = vmatpush2.bf16.msra.mxu0 0
  %226 = vmatprep.subr.bf16.mxu0 0
  %227 = vmatpush2.bf16.msra.mxu0 0
  %228 = vmatprep.subr.bf16.mxu0 0
  %229 = vmatpush2.bf16.msra.mxu0 0
  %230 = vmatprep.subr.bf16.mxu0 0
  %231 = vmatpush2.bf16.msra.mxu0 0
  %232 = vmatprep.subr.bf16.mxu0 0
  %233 = vmatpush2.bf16.msra.mxu0 0
  %234 = vmatprep.subr.bf16.mxu0 0
  %235 = vmatpush2.bf16.msra.mxu0 0
  %236 = vmatprep.mubr.bf16.mxu0 0
  %237 = vmatmul.mubr.bf16.gmra.mxu0 %v159
  %v238 = vpop.f32.mrf.mxu0
  %v239 = vadd.f32 0.0, %v238
  %v240 = vpop.f32.mrf.mxu0
  %v241 = vadd.f32 0.0, %v240
  %v242 = vpop.f32.mrf.mxu0
  %v243 = vadd.f32 0.0, %v242
  %v244 = vpop.f32.mrf.mxu0
  %v245 = vadd.f32 0.0, %v244
  %246 = vdwg.mxu0
  %s247 = smul.u32 0, 8
  %s248 = smul.addr %s247, 8
  %s249 = scalar_lea.vmem [#allocation2], %s248
  %250 = vst [vmem:[%s249] sm:$0xff] %v196
  %251 = vst [vmem:[%s249 + $0x8] sm:$0xff] %v198
  %252 = vst [vmem:[%s249 + $0x10] sm:$0xff] %v239
  %253 = vst [vmem:[%s249 + $0x18] sm:$0xff] %v241
  %254 = vst [vmem:[%s249 + $0x20] sm:$0xff] %v200
  %255 = vst [vmem:[%s249 + $0x28] sm:$0xff] %v202
  %256 = vst [vmem:[%s249 + $0x30] sm:$0xff] %v243
  %257 = vst [vmem:[%s249 + $0x38] sm:$0xff] %v245
  %v258 = vld [vmem:[#allocation3] sm:$0xff]
  %v259 = vld [vmem:[#allocation3 + $0x8] sm:$0xff]
  %v260 = vadd.f32 %v196, %v198
  %v261 = vadd.f32 %v260, %v239
  %v262 = vadd.f32 %v261, %v241
  %263 = vadd.xlane.f32.xlu0 %v262
  %v264 = vpop.xlane.xlu0 %263
  %v265 = vadd.f32 %v200, %v202
  %v266 = vadd.f32 %v265, %v243
  %v267 = vadd.f32 %v266, %v245
  %268 = vadd.xlane.f32.xlu0 %v267
  %v269 = vpop.xlane.xlu0 %268
  %v270 = vadd.f32 %v258, %v264
  %v271 = vadd.f32 %v259, %v269
  %vm272 = vcmask 7168
  %273 = vst.msk [vmem:[#allocation3] sm:$0xff] %vm272, %v270
  %274 = vst.msk [vmem:[#allocation3 + $0x8] sm:$0xff] %vm272, %v271
  %v275 = vld [vmem:[#allocation4] sm:$0xff]
  %v276 = vld [vmem:[#allocation4 + $0x8] sm:$0xff]
  %v277 = vmul.f32 %v196, %v196
  %v278 = vmul.f32 %v198, %v198
  %v279 = vmul.f32 %v239, %v239
  %v280 = vmul.f32 %v241, %v241
  %v281 = vmul.f32 %v200, %v200
  %v282 = vmul.f32 %v202, %v202
  %v283 = vmul.f32 %v243, %v243
  %v284 = vmul.f32 %v245, %v245
  %v285 = vadd.f32 %v277, %v278
  %v286 = vadd.f32 %v285, %v279
  %v287 = vadd.f32 %v286, %v280
  %288 = vadd.xlane.f32.xlu0 %v287
  %v289 = vpop.xlane.xlu0 %288
  %v290 = vadd.f32 %v281, %v282
  %v291 = vadd.f32 %v290, %v283
  %v292 = vadd.f32 %v291, %v284
  %293 = vadd.xlane.f32.xlu0 %v292
  %v294 = vpop.xlane.xlu0 %293
  %v295 = vadd.f32 %v275, %v289
  %v296 = vadd.f32 %v276, %v294
  %297 = vst.msk [vmem:[#allocation4] sm:$0xff] %vm272, %v295
  %298 = vst.msk [vmem:[#allocation4 + $0x8] sm:$0xff] %vm272, %v296
  // Predicated region
  $region26: #{resnet_forward.16} parent=0 // pred_check
    %p299 = pneg %p21
  $region27: #{resnet_forward.16} parent=0 // pred_check_branch
    %301 = sbr.rel (%p299) target = $region29
  $region28: #{resnet_forward.16} parent=0 // pred_region
    %v302 = vld [vmem:[#allocation3] sm:$0xff]
    %v303 = vld [vmem:[#allocation3 + $0x8] sm:$0xff]
    %v304 = vmul.f32 %v302, 0.001953125
    %v305 = vmul.f32 %v303, 0.001953125
    %v306 = vld [vmem:[#allocation4] sm:$0xff]
    %v307 = vld [vmem:[#allocation4 + $0x8] sm:$0xff]
    %v308 = vmul.f32 %v306, 0.001953125
    %v309 = vmul.f32 %v307, 0.001953125
    %v310 = vmul.f32 %v304, %v304
    %v311 = vmul.f32 %v305, %v305
    %v312 = vsub.f32 %v308, %v310
    %v313 = vsub.f32 %v309, %v311
    %v314 = vmax.f32 %v312, 0.0
    %v315 = vmax.f32 %v313, 0.0
    %v316 = vld [vmem:[%s2] sm:$0xff]
    %v317 = vld [vmem:[%s2 + $0x8] sm:$0xff]
    %v318 = vadd.f32 %v314, 1e-05
    %v319 = vadd.f32 %v315, 1e-05
    %v320 = vrsqrt.pop %v318
    %v321 = vrsqrt.pop %v319
    %v322 = vmul.f32 %v316, %v320
    %v323 = vmul.f32 %v317, %v321
    %v324 = vld [vmem:[%s3] sm:$0xff]
    %v325 = vld [vmem:[%s3 + $0x8] sm:$0xff]
    %v326 = vmul.f32 %v304, %v322
    %v327 = vmul.f32 %v305, %v323
    %v328 = vsub.f32 %v324, %v326
    %v329 = vsub.f32 %v325, %v327
    %v330 = vld [vmem:[#allocation2] sm:$0xff]
    %v331 = vld [vmem:[#allocation2 + $0x8] sm:$0xff]
    %v332 = vld [vmem:[#allocation2 + $0x10] sm:$0xff]
    %v333 = vld [vmem:[#allocation2 + $0x18] sm:$0xff]
    %v334 = vld [vmem:[#allocation2 + $0x20] sm:$0xff]
    %v335 = vld [vmem:[#allocation2 + $0x28] sm:$0xff]
    %v336 = vld [vmem:[#allocation2 + $0x30] sm:$0xff]
    %v337 = vld [vmem:[#allocation2 + $0x38] sm:$0xff]
    %339 = vset.pattern.permute.xlu0 0
    %340 = vperm.xlu0 %339, %v322
    %v341 = vpop.permute.xlu0 %340
    %344 = vset.pattern.permute.xlu0 0
    %345 = vperm.xlu0 %344, %v323
    %v346 = vpop.permute.xlu0 %345
    %v348 = vmul.f32 %v330, %v341
    %v349 = vmul.f32 %v331, %v341
    %v350 = vmul.f32 %v332, %v341
    %v351 = vmul.f32 %v333, %v341
    %v352 = vmul.f32 %v334, %v346
    %v353 = vmul.f32 %v335, %v346
    %v354 = vmul.f32 %v336, %v346
    %v355 = vmul.f32 %v337, %v346
    %357 = vset.pattern.permute.xlu0 0
    %358 = vperm.xlu0 %357, %v328
    %v359 = vpop.permute.xlu0 %358
    %362 = vset.pattern.permute.xlu0 0
    %363 = vperm.xlu0 %362, %v329
    %v364 = vpop.permute.xlu0 %363
    %v366 = vadd.f32 %v348, %v359
    %v367 = vadd.f32 %v349, %v359
    %v368 = vadd.f32 %v350, %v359
    %v369 = vadd.f32 %v351, %v359
    %v370 = vadd.f32 %v352, %v364
    %v371 = vadd.f32 %v353, %v364
    %v372 = vadd.f32 %v354, %v364
    %v373 = vadd.f32 %v355, %v364
    %v374 = vld [vmem:[%s4] sm:$0xff]
    %v375 = vld [vmem:[%s4 + $0x8] sm:$0xff]
    %v376 = vld [vmem:[%s4 + $0x10] sm:$0xff]
    %v377 = vld [vmem:[%s4 + $0x18] sm:$0xff]
    %v378 = vunpack.c.l.bf16 %v374
    %v379 = vunpack.c.h.bf16 %v374
    %v380 = vunpack.c.l.bf16 %v375
    %v381 = vunpack.c.h.bf16 %v375
    %v382 = vunpack.c.l.bf16 %v376
    %v383 = vunpack.c.h.bf16 %v376
    %v384 = vunpack.c.l.bf16 %v377
    %v385 = vunpack.c.h.bf16 %v377
    %v386 = vadd.f32 %v366, %v378
    %v387 = vadd.f32 %v367, %v379
    %v388 = vadd.f32 %v368, %v380
    %v389 = vadd.f32 %v369, %v381
    %v390 = vadd.f32 %v370, %v382
    %v391 = vadd.f32 %v371, %v383
    %v392 = vadd.f32 %v372, %v384
    %v393 = vadd.f32 %v373, %v385
    %v394 = vmax.f32 %v386, 0.0
    %v395 = vmax.f32 %v387, 0.0
    %v396 = vmax.f32 %v388, 0.0
    %v397 = vmax.f32 %v389, 0.0
    %v398 = vmax.f32 %v390, 0.0
    %v399 = vmax.f32 %v391, 0.0
    %v400 = vmax.f32 %v392, 0.0
    %v401 = vmax.f32 %v393, 0.0
    %v402 = vpack.c.bf16 %v398, %v394
    %v403 = vpack.c.bf16 %v399, %v395
    %v404 = vpack.c.bf16 %v400, %v396
    %v405 = vpack.c.bf16 %v401, %v397
    %v410 = vunpack.c.l.b16 %v402
    %v411 = vunpack.c.l.b16 %v403
    %v412 = vunpack.c.l.b16 %v404
    %v413 = vunpack.c.l.b16 %v405
    %v414 = vunpack.c.h.b16 %v402
    %v415 = vunpack.c.h.b16 %v403
    %v416 = vunpack.c.h.b16 %v404
    %v417 = vunpack.c.h.b16 %v405
    %v418 = vpack.c.b16 %v411, %v410
    %v419 = vpack.c.b16 %v413, %v412
    %v420 = vpack.c.b16 %v415, %v414
    %v421 = vpack.c.b16 %v417, %v416
    %426 = vst [vmem:[%s5] sm:$0xff] %v418
    %427 = vst [vmem:[%s5 + $0x8] sm:$0xff] %v419
    %428 = vst [vmem:[%s5 + $0x10] sm:$0xff] %v420
    %429 = vst [vmem:[%s5 + $0x18] sm:$0xff] %v421
  $region29: #{resnet_forward.16} parent=0 // pred_fallthru
    _
  // Predicated region
  $region30: #{resnet_forward.16} parent=0 // pred_check
    _
  $region31: #{resnet_forward.16} parent=0 // pred_check_branch
    %431 = sbr.rel (0) target = $region33
  $region32: #{resnet_forward.16} parent=0 // pred_region
    _
  $region33: #{resnet_forward.16} parent=0 // pred_fallthru
    _
  // Predicated region
  $region34: #{resnet_forward.16} parent=0 // pred_check
    _
  $region35: #{resnet_forward.16} parent=0 // pred_check_branch
    %433 = sbr.rel (0) target = $region37
  $region36: #{resnet_forward.16} parent=0 // pred_region
    _
  $region37: #{resnet_forward.16} parent=0 // pred_fallthru
    _

// kernel: resnet_forward.17
$region0: #{resnet_forward.17}
  #allocation0 [shape = 'u32[]', space=smem, size = 0x4, offset = 0x4, fixed_abs, tag = 'smem constant byte address 0x4 - core index']
  #allocation1 [shape = 'u32[144,128]{1,0:T(1,128)}', space=vmem, size = 0x12000, scoped, tag = 'internal scratch']
  #allocation2 [shape = 'f32[1,16,128]{2,1,0:T(8,128)}', space=vmem, size = 0x2000, scoped, tag = 'scratch operand']
  #allocation3 [shape = 'f32[16,1]{1,0:T(8,128)}', space=vmem, size = 0x2000, scoped, tag = 'scratch operand']
  #allocation4 [shape = 'f32[16,1]{1,0:T(8,128)}', space=vmem, size = 0x2000, scoped, tag = 'scratch operand']
  %s0 = inlined_call_operand.vmem [shape: bf16[80,128], index: 0, kind: input, shape index: {}]
  %s1 = inlined_call_operand.vmem [shape: bf16[16,80], index: 1, kind: input, shape index: {}]
  %s2 = inlined_call_operand.vmem [shape: f32[16,1], index: 2, kind: input, shape index: {}]
  %s3 = inlined_call_operand.vmem [shape: f32[16,1], index: 3, kind: input, shape index: {}]
  %s4 = inlined_call_operand.vmem [shape: bf16[16,128], index: 4, kind: output, shape index: {}]
  %s5 = sld [smem:[#allocation0]]
  $region34: #{resnet_forward.17} parent=0
    _
  %s7 = ssub.s32 1, %s5
  %s8 = scalar_select 0, %s7, %s5
  // Predicated region
  $region2: #{resnet_forward.17} parent=0 // pred_check
    _
  $region3: #{resnet_forward.17} parent=0 // pred_check_branch
    %10 = sbr.rel (0) target = $region5
  $region4: #{resnet_forward.17} parent=0 // pred_region
    _
  $region5: #{resnet_forward.17} parent=0 // pred_fallthru
    _
  // Predicated region
  $region6: #{resnet_forward.17} parent=0 // pred_check
    _
  $region7: #{resnet_forward.17} parent=0 // pred_check_branch
    %12 = sbr.rel (0) target = $region9
  $region8: #{resnet_forward.17} parent=0 // pred_region
    _
  $region9: #{resnet_forward.17} parent=0 // pred_fallthru
    _
  // Predicated region
  $region10: #{resnet_forward.17} parent=0 // pred_check
    _
  $region11: #{resnet_forward.17} parent=0 // pred_check_branch
    %14 = sbr.rel (0) target = $region13
  $region12: #{resnet_forward.17} parent=0 // pred_region
    _
  $region13: #{resnet_forward.17} parent=0 // pred_fallthru
    _
  // Predicated region
  $region14: #{resnet_forward.17} parent=0 // pred_check
    _
  $region15: #{resnet_forward.17} parent=0 // pred_check_branch
    %16 = sbr.rel (0) target = $region17
  $region16: #{resnet_forward.17} parent=0 // pred_region
    _
  $region17: #{resnet_forward.17} parent=0 // pred_fallthru
    _
  %p18 = scmp.eq.s32.totalorder 0, 0
  // Predicated region
  $region18: #{resnet_forward.17} parent=0 // pred_check
    %p19 = pneg %p18
  $region19: #{resnet_forward.17} parent=0 // pred_check_branch
    %21 = sbr.rel (%p19) target = $region21
  $region20: #{resnet_forward.17} parent=0 // pred_region
    %vm22 = vcmask 7168
    %23 = vst.msk [vmem:[#allocation3] sm:$0xff] %vm22, 0.0
    %24 = vst.msk [vmem:[#allocation3 + $0x8] sm:$0xff] %vm22, 0.0
    %25 = vst.msk [vmem:[#allocation4] sm:$0xff] %vm22, 0.0
    %26 = vst.msk [vmem:[#allocation4 + $0x8] sm:$0xff] %vm22, 0.0
  $region21: #{resnet_forward.17} parent=0 // pred_fallthru
    _
  %v27 = vld [vmem:[%s1] sm:$0xf]
  %v28 = vld [vmem:[%s1 + $0x4] sm:$0xf]
  %v29 = vld [vmem:[%s0] sm:$0xf]
  %v30 = vld [vmem:[%s0 + $0x4] sm:$0xf]
  %v31 = vld [vmem:[%s0 + $0x8] sm:$0xf]
  %v32 = vld [vmem:[%s0 + $0xc] sm:$0xf]
  %v33 = vld [vmem:[%s0 + $0x10] sm:$0xf]
  %v34 = vld [vmem:[%s0 + $0x14] sm:$0xf]
  %v35 = vld [vmem:[%s0 + $0x18] sm:$0xf]
  %v36 = vld [vmem:[%s0 + $0x1c] sm:$0xf]
  %v37 = vld [vmem:[%s0 + $0x20] sm:$0xf]
  %v38 = vld [vmem:[%s0 + $0x24] sm:$0xf]
  %v41 = vunpack.c.l.b16 %v27
  %v42 = vunpack.c.l.b16 %v28
  %v43 = vpack.c.b16 %v42, %v41
  %v54 = vunpack.c.l.b16 %v29
  %v55 = vunpack.c.l.b16 %v30
  %v56 = vunpack.c.l.b16 %v31
  %v57 = vunpack.c.l.b16 %v32
  %v58 = vunpack.c.l.b16 %v33
  %v59 = vunpack.c.l.b16 %v34
  %v60 = vunpack.c.l.b16 %v35
  %v61 = vunpack.c.l.b16 %v36
  %v62 = vunpack.c.l.b16 %v37
  %v63 = vunpack.c.l.b16 %v38
  %v64 = vpack.c.b16 %v55, %v54
  %v65 = vpack.c.b16 %v57, %v56
  %v66 = vpack.c.b16 %v59, %v58
  %v67 = vpack.c.b16 %v61, %v60
  %v68 = vpack.c.b16 %v63, %v62
  %vm74 = vcmask 654336
  %v76 = vsel %vm74, %v43, 0
  %78 = vmatprep.subr.bf16.mxu0 0
  %79 = vmatpush1.bf16.msra.mxu0 0
  %80 = vmatprep.subr.bf16.mxu0 0
  %81 = vmatpush1.bf16.msra.mxu0 0
  %82 = vmatprep.subr.bf16.mxu0 0
  %83 = vmatpush1.bf16.msra.mxu0 0
  %84 = vmatprep.subr.bf16.mxu0 0
  %85 = vmatpush1.bf16.msra.mxu0 %v68
  %86 = vmatprep.subr.bf16.mxu0 0
  %87 = vmatpush1.bf16.msra.mxu0 %v67
  %88 = vmatprep.subr.bf16.mxu0 0
  %89 = vmatpush1.bf16.msra.mxu0 %v66
  %90 = vmatprep.subr.bf16.mxu0 0
  %91 = vmatpush1.bf16.msra.mxu0 %v65
  %92 = vmatprep.subr.bf16.mxu0 0
  %93 = vmatpush1.bf16.msra.mxu0 %v64
  %94 = vmatprep.subr.bf16.mxu0 0
  %95 = vmatpush2.bf16.msra.mxu0 0
  %96 = vmatprep.subr.bf16.mxu0 0
  %97 = vmatpush2.bf16.msra.mxu0 0
  %98 = vmatprep.subr.bf16.mxu0 0
  %99 = vmatpush2.bf16.msra.mxu0 0
  %100 = vmatprep.subr.bf16.mxu0 0
  %101 = vmatpush2.bf16.msra.mxu0 0
  %102 = vmatprep.subr.bf16.mxu0 0
  %103 = vmatpush2.bf16.msra.mxu0 0
  %104 = vmatprep.subr.bf16.mxu0 0
  %105 = vmatpush2.bf16.msra.mxu0 0
  %106 = vmatprep.subr.bf16.mxu0 0
  %107 = vmatpush2.bf16.msra.mxu0 0
  %108 = vmatprep.subr.bf16.mxu0 0
  %109 = vmatpush2.bf16.msra.mxu0 0
  %110 = vmatprep.mubr.bf16.mxu0 0
  %111 = vmatmul.mubr.bf16.gmra.mxu0 %v76
  %v112 = vpop.f32.mrf.mxu0
  %v113 = vadd.f32 0.0, %v112
  %v114 = vpop.f32.mrf.mxu0
  %v115 = vpop.f32.mrf.mxu0
  %v116 = vadd.f32 0.0, %v115
  %v117 = vpop.f32.mrf.mxu0
  %118 = vdwg.mxu0
  %s119 = smul.u32 0, 16
  %s120 = scalar_lea.vmem [#allocation2], %s119
  %121 = vst [vmem:[%s120] sm:$0xff] %v113
  %122 = vst [vmem:[%s120 + $0x8] sm:$0xff] %v116
  %v123 = vld [vmem:[#allocation3] sm:$0xff]
  %v124 = vld [vmem:[#allocation3 + $0x8] sm:$0xff]
  %125 = vadd.xlane.f32.xlu0 %v113
  %v126 = vpop.xlane.xlu0 %125
  %127 = vadd.xlane.f32.xlu0 %v116
  %v128 = vpop.xlane.xlu0 %127
  %v129 = vadd.f32 %v123, %v126
  %v130 = vadd.f32 %v124, %v128
  %vm131 = vcmask 7168
  %132 = vst.msk [vmem:[#allocation3] sm:$0xff] %vm131, %v129
  %133 = vst.msk [vmem:[#allocation3 + $0x8] sm:$0xff] %vm131, %v130
  %v134 = vld [vmem:[#allocation4] sm:$0xff]
  %v135 = vld [vmem:[#allocation4 + $0x8] sm:$0xff]
  %v136 = vmul.f32 %v113, %v113
  %v137 = vmul.f32 %v116, %v116
  %138 = vadd.xlane.f32.xlu0 %v136
  %v139 = vpop.xlane.xlu0 %138
  %140 = vadd.xlane.f32.xlu0 %v137
  %v141 = vpop.xlane.xlu0 %140
  %v142 = vadd.f32 %v134, %v139
  %v143 = vadd.f32 %v135, %v141
  %144 = vst.msk [vmem:[#allocation4] sm:$0xff] %vm131, %v142
  %145 = vst.msk [vmem:[#allocation4 + $0x8] sm:$0xff] %vm131, %v143
  // Predicated region
  $region22: #{resnet_forward.17} parent=0 // pred_check
    %p146 = pneg %p18
  $region23: #{resnet_forward.17} parent=0 // pred_check_branch
    %148 = sbr.rel (%p146) target = $region25
  $region24: #{resnet_forward.17} parent=0 // pred_region
    %v149 = vld [vmem:[#allocation3] sm:$0xff]
    %v150 = vld [vmem:[#allocation3 + $0x8] sm:$0xff]
    %v151 = vmul.f32 %v149, 0.0078125
    %v152 = vmul.f32 %v150, 0.0078125
    %v153 = vld [vmem:[#allocation4] sm:$0xff]
    %v154 = vld [vmem:[#allocation4 + $0x8] sm:$0xff]
    %v155 = vmul.f32 %v153, 0.0078125
    %v156 = vmul.f32 %v154, 0.0078125
    %v157 = vmul.f32 %v151, %v151
    %v158 = vmul.f32 %v152, %v152
    %v159 = vsub.f32 %v155, %v157
    %v160 = vsub.f32 %v156, %v158
    %v161 = vmax.f32 %v159, 0.0
    %v162 = vmax.f32 %v160, 0.0
    %v163 = vld [vmem:[%s2] sm:$0xff]
    %v164 = vld [vmem:[%s2 + $0x8] sm:$0xff]
    %v165 = vadd.f32 %v161, 1e-05
    %v166 = vadd.f32 %v162, 1e-05
    %v167 = vrsqrt.pop %v165
    %v168 = vrsqrt.pop %v166
    %v169 = vmul.f32 %v163, %v167
    %v170 = vmul.f32 %v164, %v168
    %v171 = vld [vmem:[%s3] sm:$0xff]
    %v172 = vld [vmem:[%s3 + $0x8] sm:$0xff]
    %v173 = vmul.f32 %v151, %v169
    %v174 = vmul.f32 %v152, %v170
    %v175 = vsub.f32 %v171, %v173
    %v176 = vsub.f32 %v172, %v174
    %v177 = vld [vmem:[#allocation2] sm:$0xff]
    %v178 = vld [vmem:[#allocation2 + $0x8] sm:$0xff]
    %180 = vset.pattern.permute.xlu0 0
    %181 = vperm.xlu0 %180, %v169
    %v182 = vpop.permute.xlu0 %181
    %185 = vset.pattern.permute.xlu0 0
    %186 = vperm.xlu0 %185, %v170
    %v187 = vpop.permute.xlu0 %186
    %v189 = vmul.f32 %v177, %v182
    %v190 = vmul.f32 %v178, %v187
    %192 = vset.pattern.permute.xlu0 0
    %193 = vperm.xlu0 %192, %v175
    %v194 = vpop.permute.xlu0 %193
    %197 = vset.pattern.permute.xlu0 0
    %198 = vperm.xlu0 %197, %v176
    %v199 = vpop.permute.xlu0 %198
    %v201 = vadd.f32 %v189, %v194
    %v202 = vadd.f32 %v190, %v199
    %v203 = vmax.f32 %v201, 0.0
    %v204 = vmax.f32 %v202, 0.0
    %v205 = vpack.c.bf16 %v204, %v203
    %v207 = vunpack.c.l.b16 %v205
    %v208 = vunpack.c.h.b16 %v205
    %v209 = vpack.c.b16 %v207, %v207
    %v210 = vpack.c.b16 %v208, %v208
    %213 = vst [vmem:[%s4] sm:$0xf] %v209
    %214 = vst [vmem:[%s4 + $0x4] sm:$0xf] %v210
  $region25: #{resnet_forward.17} parent=0 // pred_fallthru
    _
  // Predicated region
  $region26: #{resnet_forward.17} parent=0 // pred_check
    _
  $region27: #{resnet_forward.17} parent=0 // pred_check_branch
    %216 = sbr.rel (0) target = $region29
  $region28: #{resnet_forward.17} parent=0 // pred_region
    _
  $region29: #{resnet_forward.17} parent=0 // pred_fallthru
    _
  // Predicated region
  $region30: #{resnet_forward.17} parent=0 // pred_check
    _
  $region31: #{resnet_forward.17} parent=0 // pred_check_branch
    %218 = sbr.rel (0) target = $region33
  $region32: #{resnet_forward.17} parent=0 // pred_region
    _
  $region33: #{resnet_forward.17} parent=0 // pred_fallthru
    _

// kernel: resnet_forward.18
$region0: #{resnet_forward.18}
  #allocation0 [shape = 'u32[]', space=smem, size = 0x4, offset = 0x4, fixed_abs, tag = 'smem constant byte address 0x4 - core index']
  #allocation1 [shape = 'u32[144,128]{1,0:T(1,128)}', space=vmem, size = 0x12000, scoped, tag = 'internal scratch']
  #allocation2 [shape = 'f32[1,16,128]{2,1,0:T(8,128)}', space=vmem, size = 0x2000, scoped, tag = 'scratch operand']
  #allocation3 [shape = 'f32[16,1]{1,0:T(8,128)}', space=vmem, size = 0x2000, scoped, tag = 'scratch operand']
  #allocation4 [shape = 'f32[16,1]{1,0:T(8,128)}', space=vmem, size = 0x2000, scoped, tag = 'scratch operand']
  %s0 = inlined_call_operand.vmem [shape: bf16[16,128], index: 0, kind: input, shape index: {}]
  %s1 = inlined_call_operand.vmem [shape: bf16[16,16], index: 1, kind: input, shape index: {}]
  %s2 = inlined_call_operand.vmem [shape: f32[16,1], index: 2, kind: input, shape index: {}]
  %s3 = inlined_call_operand.vmem [shape: f32[16,1], index: 3, kind: input, shape index: {}]
  %s4 = inlined_call_operand.vmem [shape: bf16[16,128], index: 4, kind: output, shape index: {}]
  %s5 = sld [smem:[#allocation0]]
  $region34: #{resnet_forward.18} parent=0
    _
  %s7 = ssub.s32 1, %s5
  %s8 = scalar_select 0, %s7, %s5
  // Predicated region
  $region2: #{resnet_forward.18} parent=0 // pred_check
    _
  $region3: #{resnet_forward.18} parent=0 // pred_check_branch
    %10 = sbr.rel (0) target = $region5
  $region4: #{resnet_forward.18} parent=0 // pred_region
    _
  $region5: #{resnet_forward.18} parent=0 // pred_fallthru
    _
  // Predicated region
  $region6: #{resnet_forward.18} parent=0 // pred_check
    _
  $region7: #{resnet_forward.18} parent=0 // pred_check_branch
    %12 = sbr.rel (0) target = $region9
  $region8: #{resnet_forward.18} parent=0 // pred_region
    _
  $region9: #{resnet_forward.18} parent=0 // pred_fallthru
    _
  // Predicated region
  $region10: #{resnet_forward.18} parent=0 // pred_check
    _
  $region11: #{resnet_forward.18} parent=0 // pred_check_branch
    %14 = sbr.rel (0) target = $region13
  $region12: #{resnet_forward.18} parent=0 // pred_region
    _
  $region13: #{resnet_forward.18} parent=0 // pred_fallthru
    _
  // Predicated region
  $region14: #{resnet_forward.18} parent=0 // pred_check
    _
  $region15: #{resnet_forward.18} parent=0 // pred_check_branch
    %16 = sbr.rel (0) target = $region17
  $region16: #{resnet_forward.18} parent=0 // pred_region
    _
  $region17: #{resnet_forward.18} parent=0 // pred_fallthru
    _
  %p18 = scmp.eq.s32.totalorder 0, 0
  // Predicated region
  $region18: #{resnet_forward.18} parent=0 // pred_check
    %p19 = pneg %p18
  $region19: #{resnet_forward.18} parent=0 // pred_check_branch
    %21 = sbr.rel (%p19) target = $region21
  $region20: #{resnet_forward.18} parent=0 // pred_region
    %vm22 = vcmask 7168
    %23 = vst.msk [vmem:[#allocation3] sm:$0xff] %vm22, 0.0
    %24 = vst.msk [vmem:[#allocation3 + $0x8] sm:$0xff] %vm22, 0.0
    %25 = vst.msk [vmem:[#allocation4] sm:$0xff] %vm22, 0.0
    %26 = vst.msk [vmem:[#allocation4 + $0x8] sm:$0xff] %vm22, 0.0
  $region21: #{resnet_forward.18} parent=0 // pred_fallthru
    _
  %v27 = vld [vmem:[%s1] sm:$0xf]
  %v28 = vld [vmem:[%s1 + $0x4] sm:$0xf]
  %v29 = vld [vmem:[%s0] sm:$0xf]
  %v30 = vld [vmem:[%s0 + $0x4] sm:$0xf]
  %v33 = vunpack.c.l.b16 %v27
  %v34 = vunpack.c.l.b16 %v28
  %v35 = vpack.c.b16 %v34, %v33
  %v38 = vunpack.c.l.b16 %v29
  %v39 = vunpack.c.l.b16 %v30
  %v40 = vpack.c.b16 %v39, %v38
  %vm42 = vcmask 130048
  %v44 = vsel %vm42, %v35, 0
  %46 = vmatprep.subr.bf16.mxu0 0
  %47 = vmatpush1.bf16.msra.mxu0 0
  %48 = vmatprep.subr.bf16.mxu0 0
  %49 = vmatpush1.bf16.msra.mxu0 0
  %50 = vmatprep.subr.bf16.mxu0 0
  %51 = vmatpush1.bf16.msra.mxu0 0
  %52 = vmatprep.subr.bf16.mxu0 0
  %53 = vmatpush1.bf16.msra.mxu0 0
  %54 = vmatprep.subr.bf16.mxu0 0
  %55 = vmatpush1.bf16.msra.mxu0 0
  %56 = vmatprep.subr.bf16.mxu0 0
  %57 = vmatpush1.bf16.msra.mxu0 0
  %58 = vmatprep.subr.bf16.mxu0 0
  %59 = vmatpush1.bf16.msra.mxu0 0
  %60 = vmatprep.subr.bf16.mxu0 0
  %61 = vmatpush1.bf16.msra.mxu0 %v40
  %62 = vmatprep.subr.bf16.mxu0 0
  %63 = vmatpush2.bf16.msra.mxu0 0
  %64 = vmatprep.subr.bf16.mxu0 0
  %65 = vmatpush2.bf16.msra.mxu0 0
  %66 = vmatprep.subr.bf16.mxu0 0
  %67 = vmatpush2.bf16.msra.mxu0 0
  %68 = vmatprep.subr.bf16.mxu0 0
  %69 = vmatpush2.bf16.msra.mxu0 0
  %70 = vmatprep.subr.bf16.mxu0 0
  %71 = vmatpush2.bf16.msra.mxu0 0
  %72 = vmatprep.subr.bf16.mxu0 0
  %73 = vmatpush2.bf16.msra.mxu0 0
  %74 = vmatprep.subr.bf16.mxu0 0
  %75 = vmatpush2.bf16.msra.mxu0 0
  %76 = vmatprep.subr.bf16.mxu0 0
  %77 = vmatpush2.bf16.msra.mxu0 0
  %78 = vmatprep.mubr.bf16.mxu0 0
  %79 = vmatmul.mubr.bf16.gmra.mxu0 %v44
  %v80 = vpop.f32.mrf.mxu0
  %v81 = vadd.f32 0.0, %v80
  %v82 = vpop.f32.mrf.mxu0
  %v83 = vpop.f32.mrf.mxu0
  %v84 = vadd.f32 0.0, %v83
  %v85 = vpop.f32.mrf.mxu0
  %86 = vdwg.mxu0
  %s87 = smul.u32 0, 16
  %s88 = scalar_lea.vmem [#allocation2], %s87
  %89 = vst [vmem:[%s88] sm:$0xff] %v81
  %90 = vst [vmem:[%s88 + $0x8] sm:$0xff] %v84
  %v91 = vld [vmem:[#allocation3] sm:$0xff]
  %v92 = vld [vmem:[#allocation3 + $0x8] sm:$0xff]
  %93 = vadd.xlane.f32.xlu0 %v81
  %v94 = vpop.xlane.xlu0 %93
  %95 = vadd.xlane.f32.xlu0 %v84
  %v96 = vpop.xlane.xlu0 %95
  %v97 = vadd.f32 %v91, %v94
  %v98 = vadd.f32 %v92, %v96
  %vm99 = vcmask 7168
  %100 = vst.msk [vmem:[#allocation3] sm:$0xff] %vm99, %v97
  %101 = vst.msk [vmem:[#allocation3 + $0x8] sm:$0xff] %vm99, %v98
  %v102 = vld [vmem:[#allocation4] sm:$0xff]
  %v103 = vld [vmem:[#allocation4 + $0x8] sm:$0xff]
  %v104 = vmul.f32 %v81, %v81
  %v105 = vmul.f32 %v84, %v84
  %106 = vadd.xlane.f32.xlu0 %v104
  %v107 = vpop.xlane.xlu0 %106
  %108 = vadd.xlane.f32.xlu0 %v105
  %v109 = vpop.xlane.xlu0 %108
  %v110 = vadd.f32 %v102, %v107
  %v111 = vadd.f32 %v103, %v109
  %112 = vst.msk [vmem:[#allocation4] sm:$0xff] %vm99, %v110
  %113 = vst.msk [vmem:[#allocation4 + $0x8] sm:$0xff] %vm99, %v111
  // Predicated region
  $region22: #{resnet_forward.18} parent=0 // pred_check
    %p114 = pneg %p18
  $region23: #{resnet_forward.18} parent=0 // pred_check_branch
    %116 = sbr.rel (%p114) target = $region25
  $region24: #{resnet_forward.18} parent=0 // pred_region
    %v117 = vld [vmem:[#allocation3] sm:$0xff]
    %v118 = vld [vmem:[#allocation3 + $0x8] sm:$0xff]
    %v119 = vmul.f32 %v117, 0.0078125
    %v120 = vmul.f32 %v118, 0.0078125
    %v121 = vld [vmem:[#allocation4] sm:$0xff]
    %v122 = vld [vmem:[#allocation4 + $0x8] sm:$0xff]
    %v123 = vmul.f32 %v121, 0.0078125
    %v124 = vmul.f32 %v122, 0.0078125
    %v125 = vmul.f32 %v119, %v119
    %v126 = vmul.f32 %v120, %v120
    %v127 = vsub.f32 %v123, %v125
    %v128 = vsub.f32 %v124, %v126
    %v129 = vmax.f32 %v127, 0.0
    %v130 = vmax.f32 %v128, 0.0
    %v131 = vld [vmem:[%s2] sm:$0xff]
    %v132 = vld [vmem:[%s2 + $0x8] sm:$0xff]
    %v133 = vadd.f32 %v129, 1e-05
    %v134 = vadd.f32 %v130, 1e-05
    %v135 = vrsqrt.pop %v133
    %v136 = vrsqrt.pop %v134
    %v137 = vmul.f32 %v131, %v135
    %v138 = vmul.f32 %v132, %v136
    %v139 = vld [vmem:[%s3] sm:$0xff]
    %v140 = vld [vmem:[%s3 + $0x8] sm:$0xff]
    %v141 = vmul.f32 %v119, %v137
    %v142 = vmul.f32 %v120, %v138
    %v143 = vsub.f32 %v139, %v141
    %v144 = vsub.f32 %v140, %v142
    %v145 = vld [vmem:[#allocation2] sm:$0xff]
    %v146 = vld [vmem:[#allocation2 + $0x8] sm:$0xff]
    %148 = vset.pattern.permute.xlu0 0
    %149 = vperm.xlu0 %148, %v137
    %v150 = vpop.permute.xlu0 %149
    %153 = vset.pattern.permute.xlu0 0
    %154 = vperm.xlu0 %153, %v138
    %v155 = vpop.permute.xlu0 %154
    %v157 = vmul.f32 %v145, %v150
    %v158 = vmul.f32 %v146, %v155
    %160 = vset.pattern.permute.xlu0 0
    %161 = vperm.xlu0 %160, %v143
    %v162 = vpop.permute.xlu0 %161
    %165 = vset.pattern.permute.xlu0 0
    %166 = vperm.xlu0 %165, %v144
    %v167 = vpop.permute.xlu0 %166
    %v169 = vadd.f32 %v157, %v162
    %v170 = vadd.f32 %v158, %v167
    %v171 = vpack.c.bf16 %v170, %v169
    %v173 = vunpack.c.l.b16 %v171
    %v174 = vunpack.c.h.b16 %v171
    %v175 = vpack.c.b16 %v173, %v173
    %v176 = vpack.c.b16 %v174, %v174
    %179 = vst [vmem:[%s4] sm:$0xf] %v175
    %180 = vst [vmem:[%s4 + $0x4] sm:$0xf] %v176
  $region25: #{resnet_forward.18} parent=0 // pred_fallthru
    _
  // Predicated region
  $region26: #{resnet_forward.18} parent=0 // pred_check
    _
  $region27: #{resnet_forward.18} parent=0 // pred_check_branch
    %182 = sbr.rel (0) target = $region29
  $region28: #{resnet_forward.18} parent=0 // pred_region
    _
  $region29: #{resnet_forward.18} parent=0 // pred_fallthru
    _
  // Predicated region
  $region30: #{resnet_forward.18} parent=0 // pred_check
    _
  $region31: #{resnet_forward.18} parent=0 // pred_check_branch
    %184 = sbr.rel (0) target = $region33
  $region32: #{resnet_forward.18} parent=0 // pred_region
    _
  $region33: #{resnet_forward.18} parent=0 // pred_fallthru
    _

// kernel: resnet_forward.19
$region0: #{resnet_forward.19}
  #allocation0 [shape = 'u32[]', space=smem, size = 0x4, offset = 0x4, fixed_abs, tag = 'smem constant byte address 0x4 - core index']
  #allocation1 [shape = 'u32[144,128]{1,0:T(1,128)}', space=vmem, size = 0x12000, scoped, tag = 'internal scratch']
  #allocation2 [shape = 'f32[1,16,128]{2,1,0:T(8,128)}', space=vmem, size = 0x2000, scoped, tag = 'scratch operand']
  #allocation3 [shape = 'f32[16,1]{1,0:T(8,128)}', space=vmem, size = 0x2000, scoped, tag = 'scratch operand']
  #allocation4 [shape = 'f32[16,1]{1,0:T(8,128)}', space=vmem, size = 0x2000, scoped, tag = 'scratch operand']
  %s0 = inlined_call_operand.vmem [shape: bf16[144,128], index: 0, kind: input, shape index: {}]
  %s1 = inlined_call_operand.vmem [shape: bf16[16,144], index: 1, kind: input, shape index: {}]
  %s2 = inlined_call_operand.vmem [shape: f32[16,1], index: 2, kind: input, shape index: {}]
  %s3 = inlined_call_operand.vmem [shape: f32[16,1], index: 3, kind: input, shape index: {}]
  %s4 = inlined_call_operand.vmem [shape: bf16[16,128], index: 4, kind: input, shape index: {}]
  %s5 = inlined_call_operand.vmem [shape: bf16[16,128], index: 5, kind: output, shape index: {}]
  %s6 = sld [smem:[#allocation0]]
  $region38: #{resnet_forward.19} parent=0
    _
  %s8 = ssub.s32 1, %s6
  %s9 = scalar_select 0, %s8, %s6
  // Predicated region
  $region2: #{resnet_forward.19} parent=0 // pred_check
    _
  $region3: #{resnet_forward.19} parent=0 // pred_check_branch
    %11 = sbr.rel (0) target = $region5
  $region4: #{resnet_forward.19} parent=0 // pred_region
    _
  $region5: #{resnet_forward.19} parent=0 // pred_fallthru
    _
  // Predicated region
  $region6: #{resnet_forward.19} parent=0 // pred_check
    _
  $region7: #{resnet_forward.19} parent=0 // pred_check_branch
    %13 = sbr.rel (0) target = $region9
  $region8: #{resnet_forward.19} parent=0 // pred_region
    _
  $region9: #{resnet_forward.19} parent=0 // pred_fallthru
    _
  // Predicated region
  $region10: #{resnet_forward.19} parent=0 // pred_check
    _
  $region11: #{resnet_forward.19} parent=0 // pred_check_branch
    %15 = sbr.rel (0) target = $region13
  $region12: #{resnet_forward.19} parent=0 // pred_region
    _
  $region13: #{resnet_forward.19} parent=0 // pred_fallthru
    _
  // Predicated region
  $region14: #{resnet_forward.19} parent=0 // pred_check
    _
  $region15: #{resnet_forward.19} parent=0 // pred_check_branch
    %17 = sbr.rel (0) target = $region17
  $region16: #{resnet_forward.19} parent=0 // pred_region
    _
  $region17: #{resnet_forward.19} parent=0 // pred_fallthru
    _
  // Predicated region
  $region18: #{resnet_forward.19} parent=0 // pred_check
    _
  $region19: #{resnet_forward.19} parent=0 // pred_check_branch
    %19 = sbr.rel (0) target = $region21
  $region20: #{resnet_forward.19} parent=0 // pred_region
    _
  $region21: #{resnet_forward.19} parent=0 // pred_fallthru
    _
  %p21 = scmp.eq.s32.totalorder 0, 0
  // Predicated region
  $region22: #{resnet_forward.19} parent=0 // pred_check
    %p22 = pneg %p21
  $region23: #{resnet_forward.19} parent=0 // pred_check_branch
    %24 = sbr.rel (%p22) target = $region25
  $region24: #{resnet_forward.19} parent=0 // pred_region
    %vm25 = vcmask 7168
    %26 = vst.msk [vmem:[#allocation3] sm:$0xff] %vm25, 0.0
    %27 = vst.msk [vmem:[#allocation3 + $0x8] sm:$0xff] %vm25, 0.0
    %28 = vst.msk [vmem:[#allocation4] sm:$0xff] %vm25, 0.0
    %29 = vst.msk [vmem:[#allocation4 + $0x8] sm:$0xff] %vm25, 0.0
  $region25: #{resnet_forward.19} parent=0 // pred_fallthru
    _
  %v30 = vld [vmem:[%s1] sm:$0xff]
  %v31 = vld [vmem:[%s1 + $0x8] sm:$0xff]
  %v32 = vld [vmem:[%s0] sm:$0xf]
  %v33 = vld [vmem:[%s0 + $0x4] sm:$0xf]
  %v34 = vld [vmem:[%s0 + $0x8] sm:$0xf]
  %v35 = vld [vmem:[%s0 + $0xc] sm:$0xf]
  %v36 = vld [vmem:[%s0 + $0x10] sm:$0xf]
  %v37 = vld [vmem:[%s0 + $0x14] sm:$0xf]
  %v38 = vld [vmem:[%s0 + $0x18] sm:$0xf]
  %v39 = vld [vmem:[%s0 + $0x1c] sm:$0xf]
  %v40 = vld [vmem:[%s0 + $0x20] sm:$0xf]
  %v41 = vld [vmem:[%s0 + $0x24] sm:$0xf]
  %v42 = vld [vmem:[%s0 + $0x28] sm:$0xf]
  %v43 = vld [vmem:[%s0 + $0x2c] sm:$0xf]
  %v44 = vld [vmem:[%s0 + $0x30] sm:$0xf]
  %v45 = vld [vmem:[%s0 + $0x34] sm:$0xf]
  %v46 = vld [vmem:[%s0 + $0x38] sm:$0xf]
  %v47 = vld [vmem:[%s0 + $0x3c] sm:$0xf]
  %v48 = vld [vmem:[%s0 + $0x40] sm:$0xf]
  %v49 = vld [vmem:[%s0 + $0x44] sm:$0xf]
  %v52 = vunpack.c.l.b16 %v30
  %v53 = vunpack.c.h.b16 %v30
  %v54 = vunpack.c.l.b16 %v31
  %v55 = vunpack.c.h.b16 %v31
  %v56 = vpack.c.b16 %v54, %v52
  %v57 = vpack.c.b16 %v55, %v53
  %v77 = vunpack.c.l.b16 %v32
  %v78 = vunpack.c.l.b16 %v33
  %v79 = vunpack.c.l.b16 %v34
  %v80 = vunpack.c.l.b16 %v35
  %v81 = vunpack.c.l.b16 %v36
  %v82 = vunpack.c.l.b16 %v37
  %v83 = vunpack.c.l.b16 %v38
  %v84 = vunpack.c.l.b16 %v39
  %v85 = vunpack.c.l.b16 %v40
  %v86 = vunpack.c.l.b16 %v41
  %v87 = vunpack.c.l.b16 %v42
  %v88 = vunpack.c.l.b16 %v43
  %v89 = vunpack.c.l.b16 %v44
  %v90 = vunpack.c.l.b16 %v45
  %v91 = vunpack.c.l.b16 %v46
  %v92 = vunpack.c.l.b16 %v47
  %v93 = vunpack.c.l.b16 %v48
  %v94 = vunpack.c.l.b16 %v49
  %v95 = vpack.c.b16 %v78, %v77
  %v96 = vpack.c.b16 %v80, %v79
  %v97 = vpack.c.b16 %v82, %v81
  %v98 = vpack.c.b16 %v84, %v83
  %v99 = vpack.c.b16 %v86, %v85
  %v100 = vpack.c.b16 %v88, %v87
  %v101 = vpack.c.b16 %v90, %v89
  %v102 = vpack.c.b16 %v92, %v91
  %v103 = vpack.c.b16 %v94, %v93
  %vm113 = vcmask 130048
  %v115 = vsel %vm113, %v57, 0
  %117 = vmatprep.subr.bf16.mxu0 0
  %118 = vmatpush1.bf16.msra.mxu0 %v102
  %119 = vmatprep.subr.bf16.mxu0 0
  %120 = vmatpush1.bf16.msra.mxu0 %v101
  %121 = vmatprep.subr.bf16.mxu0 0
  %122 = vmatpush1.bf16.msra.mxu0 %v100
  %123 = vmatprep.subr.bf16.mxu0 0
  %124 = vmatpush1.bf16.msra.mxu0 %v99
  %125 = vmatprep.subr.bf16.mxu0 0
  %126 = vmatpush1.bf16.msra.mxu0 %v98
  %127 = vmatprep.subr.bf16.mxu0 0
  %128 = vmatpush1.bf16.msra.mxu0 %v97
  %129 = vmatprep.subr.bf16.mxu0 0
  %130 = vmatpush1.bf16.msra.mxu0 %v96
  %131 = vmatprep.subr.bf16.mxu0 0
  %132 = vmatpush1.bf16.msra.mxu0 %v95
  %133 = vmatprep.subr.bf16.mxu0 0
  %134 = vmatpush2.bf16.msra.mxu0 0
  %135 = vmatprep.subr.bf16.mxu0 0
  %136 = vmatpush2.bf16.msra.mxu0 0
  %137 = vmatprep.subr.bf16.mxu0 0
  %138 = vmatpush2.bf16.msra.mxu0 0
  %139 = vmatprep.subr.bf16.mxu0 0
  %140 = vmatpush2.bf16.msra.mxu0 0
  %141 = vmatprep.subr.bf16.mxu0 0
  %142 = vmatpush2.bf16.msra.mxu0 0
  %143 = vmatprep.subr.bf16.mxu0 0
  %144 = vmatpush2.bf16.msra.mxu0 0
  %145 = vmatprep.subr.bf16.mxu0 0
  %146 = vmatpush2.bf16.msra.mxu0 0
  %147 = vmatprep.subr.bf16.mxu0 0
  %148 = vmatpush2.bf16.msra.mxu0 %v103
  %149 = vmatprep.mubr.bf16.mxu0 %v115
  %150 = vmatmul.mubr.bf16.gmra.mxu0 %v56
  %v151 = vpop.f32.mrf.mxu0
  %v152 = vadd.f32 0.0, %v151
  %v153 = vpop.f32.mrf.mxu0
  %v154 = vpop.f32.mrf.mxu0
  %v155 = vadd.f32 0.0, %v154
  %v156 = vpop.f32.mrf.mxu0
  %157 = vdwg.mxu0
  %s158 = smul.u32 0, 16
  %s159 = scalar_lea.vmem [#allocation2], %s158
  %160 = vst [vmem:[%s159] sm:$0xff] %v152
  %161 = vst [vmem:[%s159 + $0x8] sm:$0xff] %v155
  %v162 = vld [vmem:[#allocation3] sm:$0xff]
  %v163 = vld [vmem:[#allocation3 + $0x8] sm:$0xff]
  %164 = vadd.xlane.f32.xlu0 %v152
  %v165 = vpop.xlane.xlu0 %164
  %166 = vadd.xlane.f32.xlu0 %v155
  %v167 = vpop.xlane.xlu0 %166
  %v168 = vadd.f32 %v162, %v165
  %v169 = vadd.f32 %v163, %v167
  %vm170 = vcmask 7168
  %171 = vst.msk [vmem:[#allocation3] sm:$0xff] %vm170, %v168
  %172 = vst.msk [vmem:[#allocation3 + $0x8] sm:$0xff] %vm170, %v169
  %v173 = vld [vmem:[#allocation4] sm:$0xff]
  %v174 = vld [vmem:[#allocation4 + $0x8] sm:$0xff]
  %v175 = vmul.f32 %v152, %v152
  %v176 = vmul.f32 %v155, %v155
  %177 = vadd.xlane.f32.xlu0 %v175
  %v178 = vpop.xlane.xlu0 %177
  %179 = vadd.xlane.f32.xlu0 %v176
  %v180 = vpop.xlane.xlu0 %179
  %v181 = vadd.f32 %v173, %v178
  %v182 = vadd.f32 %v174, %v180
  %183 = vst.msk [vmem:[#allocation4] sm:$0xff] %vm170, %v181
  %184 = vst.msk [vmem:[#allocation4 + $0x8] sm:$0xff] %vm170, %v182
  // Predicated region
  $region26: #{resnet_forward.19} parent=0 // pred_check
    %p185 = pneg %p21
  $region27: #{resnet_forward.19} parent=0 // pred_check_branch
    %187 = sbr.rel (%p185) target = $region29
  $region28: #{resnet_forward.19} parent=0 // pred_region
    %v188 = vld [vmem:[#allocation3] sm:$0xff]
    %v189 = vld [vmem:[#allocation3 + $0x8] sm:$0xff]
    %v190 = vmul.f32 %v188, 0.0078125
    %v191 = vmul.f32 %v189, 0.0078125
    %v192 = vld [vmem:[#allocation4] sm:$0xff]
    %v193 = vld [vmem:[#allocation4 + $0x8] sm:$0xff]
    %v194 = vmul.f32 %v192, 0.0078125
    %v195 = vmul.f32 %v193, 0.0078125
    %v196 = vmul.f32 %v190, %v190
    %v197 = vmul.f32 %v191, %v191
    %v198 = vsub.f32 %v194, %v196
    %v199 = vsub.f32 %v195, %v197
    %v200 = vmax.f32 %v198, 0.0
    %v201 = vmax.f32 %v199, 0.0
    %v202 = vld [vmem:[%s2] sm:$0xff]
    %v203 = vld [vmem:[%s2 + $0x8] sm:$0xff]
    %v204 = vadd.f32 %v200, 1e-05
    %v205 = vadd.f32 %v201, 1e-05
    %v206 = vrsqrt.pop %v204
    %v207 = vrsqrt.pop %v205
    %v208 = vmul.f32 %v202, %v206
    %v209 = vmul.f32 %v203, %v207
    %v210 = vld [vmem:[%s3] sm:$0xff]
    %v211 = vld [vmem:[%s3 + $0x8] sm:$0xff]
    %v212 = vmul.f32 %v190, %v208
    %v213 = vmul.f32 %v191, %v209
    %v214 = vsub.f32 %v210, %v212
    %v215 = vsub.f32 %v211, %v213
    %v216 = vld [vmem:[#allocation2] sm:$0xff]
    %v217 = vld [vmem:[#allocation2 + $0x8] sm:$0xff]
    %219 = vset.pattern.permute.xlu0 0
    %220 = vperm.xlu0 %219, %v208
    %v221 = vpop.permute.xlu0 %220
    %224 = vset.pattern.permute.xlu0 0
    %225 = vperm.xlu0 %224, %v209
    %v226 = vpop.permute.xlu0 %225
    %v228 = vmul.f32 %v216, %v221
    %v229 = vmul.f32 %v217, %v226
    %231 = vset.pattern.permute.xlu0 0
    %232 = vperm.xlu0 %231, %v214
    %v233 = vpop.permute.xlu0 %232
    %236 = vset.pattern.permute.xlu0 0
    %237 = vperm.xlu0 %236, %v215
    %v238 = vpop.permute.xlu0 %237
    %v240 = vadd.f32 %v228, %v233
    %v241 = vadd.f32 %v229, %v238
    %v242 = vld [vmem:[%s4] sm:$0xf]
    %v243 = vld [vmem:[%s4 + $0x4] sm:$0xf]
    %v244 = vunpack.c.l.bf16 %v242
    %v245 = vunpack.c.l.bf16 %v243
    %v246 = vadd.f32 %v240, %v244
    %v247 = vadd.f32 %v241, %v245
    %v248 = vmax.f32 %v246, 0.0
    %v249 = vmax.f32 %v247, 0.0
    %v250 = vpack.c.bf16 %v249, %v248
    %v252 = vunpack.c.l.b16 %v250
    %v253 = vunpack.c.h.b16 %v250
    %v254 = vpack.c.b16 %v252, %v252
    %v255 = vpack.c.b16 %v253, %v253
    %258 = vst [vmem:[%s5] sm:$0xf] %v254
    %259 = vst [vmem:[%s5 + $0x4] sm:$0xf] %v255
  $region29: #{resnet_forward.19} parent=0 // pred_fallthru
    _
  // Predicated region
  $region30: #{resnet_forward.19} parent=0 // pred_check
    _
  $region31: #{resnet_forward.19} parent=0 // pred_check_branch
    %261 = sbr.rel (0) target = $region33
  $region32: #{resnet_forward.19} parent=0 // pred_region
    _
  $region33: #{resnet_forward.19} parent=0 // pred_fallthru
    _
  // Predicated region
  $region34: #{resnet_forward.19} parent=0 // pred_check
    _
  $region35: #{resnet_forward.19} parent=0 // pred_check_branch
    %263 = sbr.rel (0) target = $region37
  $region36: #{resnet_forward.19} parent=0 // pred_region
    _
  $region37: #{resnet_forward.19} parent=0 // pred_fallthru
    _

// kernel: resnet_forward.20
$region0: #{resnet_forward.20}
  #allocation0 [shape = 'u32[]', space=smem, size = 0x4, offset = 0x4, fixed_abs, tag = 'smem constant byte address 0x4 - core index']
  #allocation1 [shape = 'u32[144,128]{1,0:T(1,128)}', space=vmem, size = 0x12000, scoped, tag = 'internal scratch']
  #allocation2 [shape = 'f32[1,32,128]{2,1,0:T(8,128)}', space=vmem, size = 0x4000, scoped, tag = 'scratch operand']
  #allocation3 [shape = 'f32[32,1]{1,0:T(8,128)}', space=vmem, size = 0x4000, scoped, tag = 'scratch operand']
  #allocation4 [shape = 'f32[32,1]{1,0:T(8,128)}', space=vmem, size = 0x4000, scoped, tag = 'scratch operand']
  %s0 = inlined_call_operand.vmem [shape: bf16[144,128], index: 0, kind: input, shape index: {}]
  %s1 = inlined_call_operand.vmem [shape: bf16[32,144], index: 1, kind: input, shape index: {}]
  %s2 = inlined_call_operand.vmem [shape: f32[32,1], index: 2, kind: input, shape index: {}]
  %s3 = inlined_call_operand.vmem [shape: f32[32,1], index: 3, kind: input, shape index: {}]
  %s4 = inlined_call_operand.vmem [shape: bf16[32,128], index: 4, kind: output, shape index: {}]
  %s5 = sld [smem:[#allocation0]]
  $region34: #{resnet_forward.20} parent=0
    _
  %s7 = ssub.s32 1, %s5
  %s8 = scalar_select 0, %s7, %s5
  // Predicated region
  $region2: #{resnet_forward.20} parent=0 // pred_check
    _
  $region3: #{resnet_forward.20} parent=0 // pred_check_branch
    %10 = sbr.rel (0) target = $region5
  $region4: #{resnet_forward.20} parent=0 // pred_region
    _
  $region5: #{resnet_forward.20} parent=0 // pred_fallthru
    _
  // Predicated region
  $region6: #{resnet_forward.20} parent=0 // pred_check
    _
  $region7: #{resnet_forward.20} parent=0 // pred_check_branch
    %12 = sbr.rel (0) target = $region9
  $region8: #{resnet_forward.20} parent=0 // pred_region
    _
  $region9: #{resnet_forward.20} parent=0 // pred_fallthru
    _
  // Predicated region
  $region10: #{resnet_forward.20} parent=0 // pred_check
    _
  $region11: #{resnet_forward.20} parent=0 // pred_check_branch
    %14 = sbr.rel (0) target = $region13
  $region12: #{resnet_forward.20} parent=0 // pred_region
    _
  $region13: #{resnet_forward.20} parent=0 // pred_fallthru
    _
  // Predicated region
  $region14: #{resnet_forward.20} parent=0 // pred_check
    _
  $region15: #{resnet_forward.20} parent=0 // pred_check_branch
    %16 = sbr.rel (0) target = $region17
  $region16: #{resnet_forward.20} parent=0 // pred_region
    _
  $region17: #{resnet_forward.20} parent=0 // pred_fallthru
    _
  %p18 = scmp.eq.s32.totalorder 0, 0
  // Predicated region
  $region18: #{resnet_forward.20} parent=0 // pred_check
    %p19 = pneg %p18
  $region19: #{resnet_forward.20} parent=0 // pred_check_branch
    %21 = sbr.rel (%p19) target = $region21
  $region20: #{resnet_forward.20} parent=0 // pred_region
    %vm22 = vcmask 7168
    %23 = vst.msk [vmem:[#allocation3] sm:$0xff] %vm22, 0.0
    %24 = vst.msk [vmem:[#allocation3 + $0x8] sm:$0xff] %vm22, 0.0
    %25 = vst.msk [vmem:[#allocation3 + $0x10] sm:$0xff] %vm22, 0.0
    %26 = vst.msk [vmem:[#allocation3 + $0x18] sm:$0xff] %vm22, 0.0
    %27 = vst.msk [vmem:[#allocation4] sm:$0xff] %vm22, 0.0
    %28 = vst.msk [vmem:[#allocation4 + $0x8] sm:$0xff] %vm22, 0.0
    %29 = vst.msk [vmem:[#allocation4 + $0x10] sm:$0xff] %vm22, 0.0
    %30 = vst.msk [vmem:[#allocation4 + $0x18] sm:$0xff] %vm22, 0.0
  $region21: #{resnet_forward.20} parent=0 // pred_fallthru
    _
  %v31 = vld [vmem:[%s1] sm:$0xff]
  %v32 = vld [vmem:[%s1 + $0x8] sm:$0xff]
  %v33 = vld [vmem:[%s1 + $0x10] sm:$0xff]
  %v34 = vld [vmem:[%s1 + $0x18] sm:$0xff]
  %v35 = vld [vmem:[%s0] sm:$0xf]
  %v36 = vld [vmem:[%s0 + $0x4] sm:$0xf]
  %v37 = vld [vmem:[%s0 + $0x8] sm:$0xf]
  %v38 = vld [vmem:[%s0 + $0xc] sm:$0xf]
  %v39 = vld [vmem:[%s0 + $0x10] sm:$0xf]
  %v40 = vld [vmem:[%s0 + $0x14] sm:$0xf]
  %v41 = vld [vmem:[%s0 + $0x18] sm:$0xf]
  %v42 = vld [vmem:[%s0 + $0x1c] sm:$0xf]
  %v43 = vld [vmem:[%s0 + $0x20] sm:$0xf]
  %v44 = vld [vmem:[%s0 + $0x24] sm:$0xf]
  %v45 = vld [vmem:[%s0 + $0x28] sm:$0xf]
  %v46 = vld [vmem:[%s0 + $0x2c] sm:$0xf]
  %v47 = vld [vmem:[%s0 + $0x30] sm:$0xf]
  %v48 = vld [vmem:[%s0 + $0x34] sm:$0xf]
  %v49 = vld [vmem:[%s0 + $0x38] sm:$0xf]
  %v50 = vld [vmem:[%s0 + $0x3c] sm:$0xf]
  %v51 = vld [vmem:[%s0 + $0x40] sm:$0xf]
  %v52 = vld [vmem:[%s0 + $0x44] sm:$0xf]
  %v57 = vunpack.c.l.b16 %v31
  %v58 = vunpack.c.h.b16 %v31
  %v59 = vunpack.c.l.b16 %v32
  %v60 = vunpack.c.h.b16 %v32
  %v61 = vunpack.c.l.b16 %v33
  %v62 = vunpack.c.h.b16 %v33
  %v63 = vunpack.c.l.b16 %v34
  %v64 = vunpack.c.h.b16 %v34
  %v65 = vpack.c.b16 %v59, %v57
  %v66 = vpack.c.b16 %v60, %v58
  %v67 = vpack.c.b16 %v63, %v61
  %v68 = vpack.c.b16 %v64, %v62
  %v89 = vunpack.c.l.b16 %v35
  %v90 = vunpack.c.l.b16 %v36
  %v91 = vunpack.c.l.b16 %v37
  %v92 = vunpack.c.l.b16 %v38
  %v93 = vunpack.c.l.b16 %v39
  %v94 = vunpack.c.l.b16 %v40
  %v95 = vunpack.c.l.b16 %v41
  %v96 = vunpack.c.l.b16 %v42
  %v97 = vunpack.c.l.b16 %v43
  %v98 = vunpack.c.l.b16 %v44
  %v99 = vunpack.c.l.b16 %v45
  %v100 = vunpack.c.l.b16 %v46
  %v101 = vunpack.c.l.b16 %v47
  %v102 = vunpack.c.l.b16 %v48
  %v103 = vunpack.c.l.b16 %v49
  %v104 = vunpack.c.l.b16 %v50
  %v105 = vunpack.c.l.b16 %v51
  %v106 = vunpack.c.l.b16 %v52
  %v107 = vpack.c.b16 %v90, %v89
  %v108 = vpack.c.b16 %v92, %v91
  %v109 = vpack.c.b16 %v94, %v93
  %v110 = vpack.c.b16 %v96, %v95
  %v111 = vpack.c.b16 %v98, %v97
  %v112 = vpack.c.b16 %v100, %v99
  %v113 = vpack.c.b16 %v102, %v101
  %v114 = vpack.c.b16 %v104, %v103
  %v115 = vpack.c.b16 %v106, %v105
  %vm125 = vcmask 130048
  %v127 = vsel %vm125, %v66, 0
  %v130 = vsel %vm125, %v68, 0
  %132 = vmatprep.subr.bf16.mxu0 0
  %133 = vmatpush1.bf16.msra.mxu0 %v114
  %134 = vmatprep.subr.bf16.mxu0 0
  %135 = vmatpush1.bf16.msra.mxu0 %v113
  %136 = vmatprep.subr.bf16.mxu0 0
  %137 = vmatpush1.bf16.msra.mxu0 %v112
  %138 = vmatprep.subr.bf16.mxu0 0
  %139 = vmatpush1.bf16.msra.mxu0 %v111
  %140 = vmatprep.subr.bf16.mxu0 0
  %141 = vmatpush1.bf16.msra.mxu0 %v110
  %142 = vmatprep.subr.bf16.mxu0 0
  %143 = vmatpush1.bf16.msra.mxu0 %v109
  %144 = vmatprep.subr.bf16.mxu0 0
  %145 = vmatpush1.bf16.msra.mxu0 %v108
  %146 = vmatprep.subr.bf16.mxu0 0
  %147 = vmatpush1.bf16.msra.mxu0 %v107
  %148 = vmatprep.subr.bf16.mxu0 0
  %149 = vmatpush2.bf16.msra.mxu0 0
  %150 = vmatprep.subr.bf16.mxu0 0
  %151 = vmatpush2.bf16.msra.mxu0 0
  %152 = vmatprep.subr.bf16.mxu0 0
  %153 = vmatpush2.bf16.msra.mxu0 0
  %154 = vmatprep.subr.bf16.mxu0 0
  %155 = vmatpush2.bf16.msra.mxu0 0
  %156 = vmatprep.subr.bf16.mxu0 0
  %157 = vmatpush2.bf16.msra.mxu0 0
  %158 = vmatprep.subr.bf16.mxu0 0
  %159 = vmatpush2.bf16.msra.mxu0 0
  %160 = vmatprep.subr.bf16.mxu0 0
  %161 = vmatpush2.bf16.msra.mxu0 0
  %162 = vmatprep.subr.bf16.mxu0 0
  %163 = vmatpush2.bf16.msra.mxu0 %v115
  %164 = vmatprep.mubr.bf16.mxu0 %v127
  %165 = vmatmul.mubr.bf16.gmra.mxu0 %v65
  %v166 = vpop.f32.mrf.mxu0
  %v167 = vadd.f32 0.0, %v166
  %v168 = vpop.f32.mrf.mxu0
  %v169 = vpop.f32.mrf.mxu0
  %v170 = vadd.f32 0.0, %v169
  %v171 = vpop.f32.mrf.mxu0
  %172 = vmatprep.mubr.bf16.mxu0 %v130
  %173 = vmatmul.mubr.bf16.gmra.mxu0 %v67
  %v174 = vpop.f32.mrf.mxu0
  %v175 = vadd.f32 0.0, %v174
  %v176 = vpop.f32.mrf.mxu0
  %v177 = vpop.f32.mrf.mxu0
  %v178 = vadd.f32 0.0, %v177
  %v179 = vpop.f32.mrf.mxu0
  %180 = vdwg.mxu0
  %s181 = smul.u32 0, 32
  %s182 = scalar_lea.vmem [#allocation2], %s181
  %183 = vst [vmem:[%s182] sm:$0xff] %v167
  %184 = vst [vmem:[%s182 + $0x8] sm:$0xff] %v170
  %185 = vst [vmem:[%s182 + $0x10] sm:$0xff] %v175
  %186 = vst [vmem:[%s182 + $0x18] sm:$0xff] %v178
  %v187 = vld [vmem:[#allocation3] sm:$0xff]
  %v188 = vld [vmem:[#allocation3 + $0x8] sm:$0xff]
  %v189 = vld [vmem:[#allocation3 + $0x10] sm:$0xff]
  %v190 = vld [vmem:[#allocation3 + $0x18] sm:$0xff]
  %191 = vadd.xlane.f32.xlu0 %v167
  %v192 = vpop.xlane.xlu0 %191
  %193 = vadd.xlane.f32.xlu0 %v170
  %v194 = vpop.xlane.xlu0 %193
  %195 = vadd.xlane.f32.xlu0 %v175
  %v196 = vpop.xlane.xlu0 %195
  %197 = vadd.xlane.f32.xlu0 %v178
  %v198 = vpop.xlane.xlu0 %197
  %v199 = vadd.f32 %v187, %v192
  %v200 = vadd.f32 %v188, %v194
  %v201 = vadd.f32 %v189, %v196
  %v202 = vadd.f32 %v190, %v198
  %vm203 = vcmask 7168
  %204 = vst.msk [vmem:[#allocation3] sm:$0xff] %vm203, %v199
  %205 = vst.msk [vmem:[#allocation3 + $0x8] sm:$0xff] %vm203, %v200
  %206 = vst.msk [vmem:[#allocation3 + $0x10] sm:$0xff] %vm203, %v201
  %207 = vst.msk [vmem:[#allocation3 + $0x18] sm:$0xff] %vm203, %v202
  %v208 = vld [vmem:[#allocation4] sm:$0xff]
  %v209 = vld [vmem:[#allocation4 + $0x8] sm:$0xff]
  %v210 = vld [vmem:[#allocation4 + $0x10] sm:$0xff]
  %v211 = vld [vmem:[#allocation4 + $0x18] sm:$0xff]
  %v212 = vmul.f32 %v167, %v167
  %v213 = vmul.f32 %v170, %v170
  %v214 = vmul.f32 %v175, %v175
  %v215 = vmul.f32 %v178, %v178
  %216 = vadd.xlane.f32.xlu0 %v212
  %v217 = vpop.xlane.xlu0 %216
  %218 = vadd.xlane.f32.xlu0 %v213
  %v219 = vpop.xlane.xlu0 %218
  %220 = vadd.xlane.f32.xlu0 %v214
  %v221 = vpop.xlane.xlu0 %220
  %222 = vadd.xlane.f32.xlu0 %v215
  %v223 = vpop.xlane.xlu0 %222
  %v224 = vadd.f32 %v208, %v217
  %v225 = vadd.f32 %v209, %v219
  %v226 = vadd.f32 %v210, %v221
  %v227 = vadd.f32 %v211, %v223
  %228 = vst.msk [vmem:[#allocation4] sm:$0xff] %vm203, %v224
  %229 = vst.msk [vmem:[#allocation4 + $0x8] sm:$0xff] %vm203, %v225
  %230 = vst.msk [vmem:[#allocation4 + $0x10] sm:$0xff] %vm203, %v226
  %231 = vst.msk [vmem:[#allocation4 + $0x18] sm:$0xff] %vm203, %v227
  // Predicated region
  $region22: #{resnet_forward.20} parent=0 // pred_check
    %p232 = pneg %p18
  $region23: #{resnet_forward.20} parent=0 // pred_check_branch
    %234 = sbr.rel (%p232) target = $region25
  $region24: #{resnet_forward.20} parent=0 // pred_region
    %v235 = vld [vmem:[#allocation3] sm:$0xff]
    %v236 = vld [vmem:[#allocation3 + $0x8] sm:$0xff]
    %v237 = vld [vmem:[#allocation3 + $0x10] sm:$0xff]
    %v238 = vld [vmem:[#allocation3 + $0x18] sm:$0xff]
    %v239 = vmul.f32 %v235, 0.03125
    %v240 = vmul.f32 %v236, 0.03125
    %v241 = vmul.f32 %v237, 0.03125
    %v242 = vmul.f32 %v238, 0.03125
    %v243 = vld [vmem:[#allocation4] sm:$0xff]
    %v244 = vld [vmem:[#allocation4 + $0x8] sm:$0xff]
    %v245 = vld [vmem:[#allocation4 + $0x10] sm:$0xff]
    %v246 = vld [vmem:[#allocation4 + $0x18] sm:$0xff]
    %v247 = vmul.f32 %v243, 0.03125
    %v248 = vmul.f32 %v244, 0.03125
    %v249 = vmul.f32 %v245, 0.03125
    %v250 = vmul.f32 %v246, 0.03125
    %v251 = vmul.f32 %v239, %v239
    %v252 = vmul.f32 %v240, %v240
    %v253 = vmul.f32 %v241, %v241
    %v254 = vmul.f32 %v242, %v242
    %v255 = vsub.f32 %v247, %v251
    %v256 = vsub.f32 %v248, %v252
    %v257 = vsub.f32 %v249, %v253
    %v258 = vsub.f32 %v250, %v254
    %v259 = vmax.f32 %v255, 0.0
    %v260 = vmax.f32 %v256, 0.0
    %v261 = vmax.f32 %v257, 0.0
    %v262 = vmax.f32 %v258, 0.0
    %v263 = vld [vmem:[%s2] sm:$0xff]
    %v264 = vld [vmem:[%s2 + $0x8] sm:$0xff]
    %v265 = vld [vmem:[%s2 + $0x10] sm:$0xff]
    %v266 = vld [vmem:[%s2 + $0x18] sm:$0xff]
    %v267 = vadd.f32 %v259, 1e-05
    %v268 = vadd.f32 %v260, 1e-05
    %v269 = vadd.f32 %v261, 1e-05
    %v270 = vadd.f32 %v262, 1e-05
    %v271 = vrsqrt.pop %v267
    %v272 = vrsqrt.pop %v268
    %v273 = vrsqrt.pop %v269
    %v274 = vrsqrt.pop %v270
    %v275 = vmul.f32 %v263, %v271
    %v276 = vmul.f32 %v264, %v272
    %v277 = vmul.f32 %v265, %v273
    %v278 = vmul.f32 %v266, %v274
    %v279 = vld [vmem:[%s3] sm:$0xff]
    %v280 = vld [vmem:[%s3 + $0x8] sm:$0xff]
    %v281 = vld [vmem:[%s3 + $0x10] sm:$0xff]
    %v282 = vld [vmem:[%s3 + $0x18] sm:$0xff]
    %v283 = vmul.f32 %v239, %v275
    %v284 = vmul.f32 %v240, %v276
    %v285 = vmul.f32 %v241, %v277
    %v286 = vmul.f32 %v242, %v278
    %v287 = vsub.f32 %v279, %v283
    %v288 = vsub.f32 %v280, %v284
    %v289 = vsub.f32 %v281, %v285
    %v290 = vsub.f32 %v282, %v286
    %v291 = vld [vmem:[#allocation2] sm:$0xff]
    %v292 = vld [vmem:[#allocation2 + $0x8] sm:$0xff]
    %v293 = vld [vmem:[#allocation2 + $0x10] sm:$0xff]
    %v294 = vld [vmem:[#allocation2 + $0x18] sm:$0xff]
    %296 = vset.pattern.permute.xlu0 0
    %297 = vperm.xlu0 %296, %v275
    %v298 = vpop.permute.xlu0 %297
    %301 = vset.pattern.permute.xlu0 0
    %302 = vperm.xlu0 %301, %v276
    %v303 = vpop.permute.xlu0 %302
    %306 = vset.pattern.permute.xlu0 0
    %307 = vperm.xlu0 %306, %v277
    %v308 = vpop.permute.xlu0 %307
    %311 = vset.pattern.permute.xlu0 0
    %312 = vperm.xlu0 %311, %v278
    %v313 = vpop.permute.xlu0 %312
    %v315 = vmul.f32 %v291, %v298
    %v316 = vmul.f32 %v292, %v303
    %v317 = vmul.f32 %v293, %v308
    %v318 = vmul.f32 %v294, %v313
    %320 = vset.pattern.permute.xlu0 0
    %321 = vperm.xlu0 %320, %v287
    %v322 = vpop.permute.xlu0 %321
    %325 = vset.pattern.permute.xlu0 0
    %326 = vperm.xlu0 %325, %v288
    %v327 = vpop.permute.xlu0 %326
    %330 = vset.pattern.permute.xlu0 0
    %331 = vperm.xlu0 %330, %v289
    %v332 = vpop.permute.xlu0 %331
    %335 = vset.pattern.permute.xlu0 0
    %336 = vperm.xlu0 %335, %v290
    %v337 = vpop.permute.xlu0 %336
    %v339 = vadd.f32 %v315, %v322
    %v340 = vadd.f32 %v316, %v327
    %v341 = vadd.f32 %v317, %v332
    %v342 = vadd.f32 %v318, %v337
    %v343 = vmax.f32 %v339, 0.0
    %v344 = vmax.f32 %v340, 0.0
    %v345 = vmax.f32 %v341, 0.0
    %v346 = vmax.f32 %v342, 0.0
    %v347 = vpack.c.bf16 %v344, %v343
    %v348 = vpack.c.bf16 %v346, %v345
    %v351 = vunpack.c.l.b16 %v347
    %v352 = vunpack.c.h.b16 %v347
    %v353 = vunpack.c.l.b16 %v348
    %v354 = vunpack.c.h.b16 %v348
    %v355 = vpack.c.b16 %v351, %v351
    %v356 = vpack.c.b16 %v352, %v352
    %v357 = vpack.c.b16 %v353, %v353
    %v358 = vpack.c.b16 %v354, %v354
    %363 = vst [vmem:[%s4] sm:$0xf] %v355
    %364 = vst [vmem:[%s4 + $0x4] sm:$0xf] %v356
    %365 = vst [vmem:[%s4 + $0x8] sm:$0xf] %v357
    %366 = vst [vmem:[%s4 + $0xc] sm:$0xf] %v358
  $region25: #{resnet_forward.20} parent=0 // pred_fallthru
    _
  // Predicated region
  $region26: #{resnet_forward.20} parent=0 // pred_check
    _
  $region27: #{resnet_forward.20} parent=0 // pred_check_branch
    %368 = sbr.rel (0) target = $region29
  $region28: #{resnet_forward.20} parent=0 // pred_region
    _
  $region29: #{resnet_forward.20} parent=0 // pred_fallthru
    _
  // Predicated region
  $region30: #{resnet_forward.20} parent=0 // pred_check
    _
  $region31: #{resnet_forward.20} parent=0 // pred_check_branch
    %370 = sbr.rel (0) target = $region33
  $region32: #{resnet_forward.20} parent=0 // pred_region
    _
  $region33: #{resnet_forward.20} parent=0 // pred_fallthru
    _

// kernel: resnet_forward.21
$region0: #{resnet_forward.21}
  #allocation0 [shape = 'u32[]', space=smem, size = 0x4, offset = 0x4, fixed_abs, tag = 'smem constant byte address 0x4 - core index']
  #allocation1 [shape = 'u32[144,128]{1,0:T(1,128)}', space=vmem, size = 0x12000, scoped, tag = 'internal scratch']
  #allocation2 [shape = 'f32[1,32,128]{2,1,0:T(8,128)}', space=vmem, size = 0x4000, scoped, tag = 'scratch operand']
  #allocation3 [shape = 'f32[32,1]{1,0:T(8,128)}', space=vmem, size = 0x4000, scoped, tag = 'scratch operand']
  #allocation4 [shape = 'f32[32,1]{1,0:T(8,128)}', space=vmem, size = 0x4000, scoped, tag = 'scratch operand']
  %s0 = inlined_call_operand.vmem [shape: bf16[16,128], index: 0, kind: input, shape index: {}]
  %s1 = inlined_call_operand.vmem [shape: bf16[32,16], index: 1, kind: input, shape index: {}]
  %s2 = inlined_call_operand.vmem [shape: f32[32,1], index: 2, kind: input, shape index: {}]
  %s3 = inlined_call_operand.vmem [shape: f32[32,1], index: 3, kind: input, shape index: {}]
  %s4 = inlined_call_operand.vmem [shape: bf16[32,128], index: 4, kind: output, shape index: {}]
  %s5 = sld [smem:[#allocation0]]
  $region34: #{resnet_forward.21} parent=0
    _
  %s7 = ssub.s32 1, %s5
  %s8 = scalar_select 0, %s7, %s5
  // Predicated region
  $region2: #{resnet_forward.21} parent=0 // pred_check
    _
  $region3: #{resnet_forward.21} parent=0 // pred_check_branch
    %10 = sbr.rel (0) target = $region5
  $region4: #{resnet_forward.21} parent=0 // pred_region
    _
  $region5: #{resnet_forward.21} parent=0 // pred_fallthru
    _
  // Predicated region
  $region6: #{resnet_forward.21} parent=0 // pred_check
    _
  $region7: #{resnet_forward.21} parent=0 // pred_check_branch
    %12 = sbr.rel (0) target = $region9
  $region8: #{resnet_forward.21} parent=0 // pred_region
    _
  $region9: #{resnet_forward.21} parent=0 // pred_fallthru
    _
  // Predicated region
  $region10: #{resnet_forward.21} parent=0 // pred_check
    _
  $region11: #{resnet_forward.21} parent=0 // pred_check_branch
    %14 = sbr.rel (0) target = $region13
  $region12: #{resnet_forward.21} parent=0 // pred_region
    _
  $region13: #{resnet_forward.21} parent=0 // pred_fallthru
    _
  // Predicated region
  $region14: #{resnet_forward.21} parent=0 // pred_check
    _
  $region15: #{resnet_forward.21} parent=0 // pred_check_branch
    %16 = sbr.rel (0) target = $region17
  $region16: #{resnet_forward.21} parent=0 // pred_region
    _
  $region17: #{resnet_forward.21} parent=0 // pred_fallthru
    _
  %p18 = scmp.eq.s32.totalorder 0, 0
  // Predicated region
  $region18: #{resnet_forward.21} parent=0 // pred_check
    %p19 = pneg %p18
  $region19: #{resnet_forward.21} parent=0 // pred_check_branch
    %21 = sbr.rel (%p19) target = $region21
  $region20: #{resnet_forward.21} parent=0 // pred_region
    %vm22 = vcmask 7168
    %23 = vst.msk [vmem:[#allocation3] sm:$0xff] %vm22, 0.0
    %24 = vst.msk [vmem:[#allocation3 + $0x8] sm:$0xff] %vm22, 0.0
    %25 = vst.msk [vmem:[#allocation3 + $0x10] sm:$0xff] %vm22, 0.0
    %26 = vst.msk [vmem:[#allocation3 + $0x18] sm:$0xff] %vm22, 0.0
    %27 = vst.msk [vmem:[#allocation4] sm:$0xff] %vm22, 0.0
    %28 = vst.msk [vmem:[#allocation4 + $0x8] sm:$0xff] %vm22, 0.0
    %29 = vst.msk [vmem:[#allocation4 + $0x10] sm:$0xff] %vm22, 0.0
    %30 = vst.msk [vmem:[#allocation4 + $0x18] sm:$0xff] %vm22, 0.0
  $region21: #{resnet_forward.21} parent=0 // pred_fallthru
    _
  %v31 = vld [vmem:[%s1] sm:$0xf]
  %v32 = vld [vmem:[%s1 + $0x4] sm:$0xf]
  %v33 = vld [vmem:[%s1 + $0x8] sm:$0xf]
  %v34 = vld [vmem:[%s1 + $0xc] sm:$0xf]
  %v35 = vld [vmem:[%s0] sm:$0xf]
  %v36 = vld [vmem:[%s0 + $0x4] sm:$0xf]
  %v41 = vunpack.c.l.b16 %v31
  %v42 = vunpack.c.l.b16 %v32
  %v43 = vunpack.c.l.b16 %v33
  %v44 = vunpack.c.l.b16 %v34
  %v45 = vpack.c.b16 %v42, %v41
  %v46 = vpack.c.b16 %v44, %v43
  %v49 = vunpack.c.l.b16 %v35
  %v50 = vunpack.c.l.b16 %v36
  %v51 = vpack.c.b16 %v50, %v49
  %vm53 = vcmask 130048
  %v55 = vsel %vm53, %v45, 0
  %v58 = vsel %vm53, %v46, 0
  %60 = vmatprep.subr.bf16.mxu0 0
  %61 = vmatpush1.bf16.msra.mxu0 0
  %62 = vmatprep.subr.bf16.mxu0 0
  %63 = vmatpush1.bf16.msra.mxu0 0
  %64 = vmatprep.subr.bf16.mxu0 0
  %65 = vmatpush1.bf16.msra.mxu0 0
  %66 = vmatprep.subr.bf16.mxu0 0
  %67 = vmatpush1.bf16.msra.mxu0 0
  %68 = vmatprep.subr.bf16.mxu0 0
  %69 = vmatpush1.bf16.msra.mxu0 0
  %70 = vmatprep.subr.bf16.mxu0 0
  %71 = vmatpush1.bf16.msra.mxu0 0
  %72 = vmatprep.subr.bf16.mxu0 0
  %73 = vmatpush1.bf16.msra.mxu0 0
  %74 = vmatprep.subr.bf16.mxu0 0
  %75 = vmatpush1.bf16.msra.mxu0 %v51
  %76 = vmatprep.subr.bf16.mxu0 0
  %77 = vmatpush2.bf16.msra.mxu0 0
  %78 = vmatprep.subr.bf16.mxu0 0
  %79 = vmatpush2.bf16.msra.mxu0 0
  %80 = vmatprep.subr.bf16.mxu0 0
  %81 = vmatpush2.bf16.msra.mxu0 0
  %82 = vmatprep.subr.bf16.mxu0 0
  %83 = vmatpush2.bf16.msra.mxu0 0
  %84 = vmatprep.subr.bf16.mxu0 0
  %85 = vmatpush2.bf16.msra.mxu0 0
  %86 = vmatprep.subr.bf16.mxu0 0
  %87 = vmatpush2.bf16.msra.mxu0 0
  %88 = vmatprep.subr.bf16.mxu0 0
  %89 = vmatpush2.bf16.msra.mxu0 0
  %90 = vmatprep.subr.bf16.mxu0 0
  %91 = vmatpush2.bf16.msra.mxu0 0
  %92 = vmatprep.mubr.bf16.mxu0 0
  %93 = vmatmul.mubr.bf16.gmra.mxu0 %v55
  %v94 = vpop.f32.mrf.mxu0
  %v95 = vadd.f32 0.0, %v94
  %v96 = vpop.f32.mrf.mxu0
  %v97 = vpop.f32.mrf.mxu0
  %v98 = vadd.f32 0.0, %v97
  %v99 = vpop.f32.mrf.mxu0
  %100 = vmatprep.mubr.bf16.mxu0 0
  %101 = vmatmul.mubr.bf16.gmra.mxu0 %v58
  %v102 = vpop.f32.mrf.mxu0
  %v103 = vadd.f32 0.0, %v102
  %v104 = vpop.f32.mrf.mxu0
  %v105 = vpop.f32.mrf.mxu0
  %v106 = vadd.f32 0.0, %v105
  %v107 = vpop.f32.mrf.mxu0
  %108 = vdwg.mxu0
  %s109 = smul.u32 0, 32
  %s110 = scalar_lea.vmem [#allocation2], %s109
  %111 = vst [vmem:[%s110] sm:$0xff] %v95
  %112 = vst [vmem:[%s110 + $0x8] sm:$0xff] %v98
  %113 = vst [vmem:[%s110 + $0x10] sm:$0xff] %v103
  %114 = vst [vmem:[%s110 + $0x18] sm:$0xff] %v106
  %v115 = vld [vmem:[#allocation3] sm:$0xff]
  %v116 = vld [vmem:[#allocation3 + $0x8] sm:$0xff]
  %v117 = vld [vmem:[#allocation3 + $0x10] sm:$0xff]
  %v118 = vld [vmem:[#allocation3 + $0x18] sm:$0xff]
  %119 = vadd.xlane.f32.xlu0 %v95
  %v120 = vpop.xlane.xlu0 %119
  %121 = vadd.xlane.f32.xlu0 %v98
  %v122 = vpop.xlane.xlu0 %121
  %123 = vadd.xlane.f32.xlu0 %v103
  %v124 = vpop.xlane.xlu0 %123
  %125 = vadd.xlane.f32.xlu0 %v106
  %v126 = vpop.xlane.xlu0 %125
  %v127 = vadd.f32 %v115, %v120
  %v128 = vadd.f32 %v116, %v122
  %v129 = vadd.f32 %v117, %v124
  %v130 = vadd.f32 %v118, %v126
  %vm131 = vcmask 7168
  %132 = vst.msk [vmem:[#allocation3] sm:$0xff] %vm131, %v127
  %133 = vst.msk [vmem:[#allocation3 + $0x8] sm:$0xff] %vm131, %v128
  %134 = vst.msk [vmem:[#allocation3 + $0x10] sm:$0xff] %vm131, %v129
  %135 = vst.msk [vmem:[#allocation3 + $0x18] sm:$0xff] %vm131, %v130
  %v136 = vld [vmem:[#allocation4] sm:$0xff]
  %v137 = vld [vmem:[#allocation4 + $0x8] sm:$0xff]
  %v138 = vld [vmem:[#allocation4 + $0x10] sm:$0xff]
  %v139 = vld [vmem:[#allocation4 + $0x18] sm:$0xff]
  %v140 = vmul.f32 %v95, %v95
  %v141 = vmul.f32 %v98, %v98
  %v142 = vmul.f32 %v103, %v103
  %v143 = vmul.f32 %v106, %v106
  %144 = vadd.xlane.f32.xlu0 %v140
  %v145 = vpop.xlane.xlu0 %144
  %146 = vadd.xlane.f32.xlu0 %v141
  %v147 = vpop.xlane.xlu0 %146
  %148 = vadd.xlane.f32.xlu0 %v142
  %v149 = vpop.xlane.xlu0 %148
  %150 = vadd.xlane.f32.xlu0 %v143
  %v151 = vpop.xlane.xlu0 %150
  %v152 = vadd.f32 %v136, %v145
  %v153 = vadd.f32 %v137, %v147
  %v154 = vadd.f32 %v138, %v149
  %v155 = vadd.f32 %v139, %v151
  %156 = vst.msk [vmem:[#allocation4] sm:$0xff] %vm131, %v152
  %157 = vst.msk [vmem:[#allocation4 + $0x8] sm:$0xff] %vm131, %v153
  %158 = vst.msk [vmem:[#allocation4 + $0x10] sm:$0xff] %vm131, %v154
  %159 = vst.msk [vmem:[#allocation4 + $0x18] sm:$0xff] %vm131, %v155
  // Predicated region
  $region22: #{resnet_forward.21} parent=0 // pred_check
    %p160 = pneg %p18
  $region23: #{resnet_forward.21} parent=0 // pred_check_branch
    %162 = sbr.rel (%p160) target = $region25
  $region24: #{resnet_forward.21} parent=0 // pred_region
    %v163 = vld [vmem:[#allocation3] sm:$0xff]
    %v164 = vld [vmem:[#allocation3 + $0x8] sm:$0xff]
    %v165 = vld [vmem:[#allocation3 + $0x10] sm:$0xff]
    %v166 = vld [vmem:[#allocation3 + $0x18] sm:$0xff]
    %v167 = vmul.f32 %v163, 0.03125
    %v168 = vmul.f32 %v164, 0.03125
    %v169 = vmul.f32 %v165, 0.03125
    %v170 = vmul.f32 %v166, 0.03125
    %v171 = vld [vmem:[#allocation4] sm:$0xff]
    %v172 = vld [vmem:[#allocation4 + $0x8] sm:$0xff]
    %v173 = vld [vmem:[#allocation4 + $0x10] sm:$0xff]
    %v174 = vld [vmem:[#allocation4 + $0x18] sm:$0xff]
    %v175 = vmul.f32 %v171, 0.03125
    %v176 = vmul.f32 %v172, 0.03125
    %v177 = vmul.f32 %v173, 0.03125
    %v178 = vmul.f32 %v174, 0.03125
    %v179 = vmul.f32 %v167, %v167
    %v180 = vmul.f32 %v168, %v168
    %v181 = vmul.f32 %v169, %v169
    %v182 = vmul.f32 %v170, %v170
    %v183 = vsub.f32 %v175, %v179
    %v184 = vsub.f32 %v176, %v180
    %v185 = vsub.f32 %v177, %v181
    %v186 = vsub.f32 %v178, %v182
    %v187 = vmax.f32 %v183, 0.0
    %v188 = vmax.f32 %v184, 0.0
    %v189 = vmax.f32 %v185, 0.0
    %v190 = vmax.f32 %v186, 0.0
    %v191 = vld [vmem:[%s2] sm:$0xff]
    %v192 = vld [vmem:[%s2 + $0x8] sm:$0xff]
    %v193 = vld [vmem:[%s2 + $0x10] sm:$0xff]
    %v194 = vld [vmem:[%s2 + $0x18] sm:$0xff]
    %v195 = vadd.f32 %v187, 1e-05
    %v196 = vadd.f32 %v188, 1e-05
    %v197 = vadd.f32 %v189, 1e-05
    %v198 = vadd.f32 %v190, 1e-05
    %v199 = vrsqrt.pop %v195
    %v200 = vrsqrt.pop %v196
    %v201 = vrsqrt.pop %v197
    %v202 = vrsqrt.pop %v198
    %v203 = vmul.f32 %v191, %v199
    %v204 = vmul.f32 %v192, %v200
    %v205 = vmul.f32 %v193, %v201
    %v206 = vmul.f32 %v194, %v202
    %v207 = vld [vmem:[%s3] sm:$0xff]
    %v208 = vld [vmem:[%s3 + $0x8] sm:$0xff]
    %v209 = vld [vmem:[%s3 + $0x10] sm:$0xff]
    %v210 = vld [vmem:[%s3 + $0x18] sm:$0xff]
    %v211 = vmul.f32 %v167, %v203
    %v212 = vmul.f32 %v168, %v204
    %v213 = vmul.f32 %v169, %v205
    %v214 = vmul.f32 %v170, %v206
    %v215 = vsub.f32 %v207, %v211
    %v216 = vsub.f32 %v208, %v212
    %v217 = vsub.f32 %v209, %v213
    %v218 = vsub.f32 %v210, %v214
    %v219 = vld [vmem:[#allocation2] sm:$0xff]
    %v220 = vld [vmem:[#allocation2 + $0x8] sm:$0xff]
    %v221 = vld [vmem:[#allocation2 + $0x10] sm:$0xff]
    %v222 = vld [vmem:[#allocation2 + $0x18] sm:$0xff]
    %224 = vset.pattern.permute.xlu0 0
    %225 = vperm.xlu0 %224, %v203
    %v226 = vpop.permute.xlu0 %225
    %229 = vset.pattern.permute.xlu0 0
    %230 = vperm.xlu0 %229, %v204
    %v231 = vpop.permute.xlu0 %230
    %234 = vset.pattern.permute.xlu0 0
    %235 = vperm.xlu0 %234, %v205
    %v236 = vpop.permute.xlu0 %235
    %239 = vset.pattern.permute.xlu0 0
    %240 = vperm.xlu0 %239, %v206
    %v241 = vpop.permute.xlu0 %240
    %v243 = vmul.f32 %v219, %v226
    %v244 = vmul.f32 %v220, %v231
    %v245 = vmul.f32 %v221, %v236
    %v246 = vmul.f32 %v222, %v241
    %248 = vset.pattern.permute.xlu0 0
    %249 = vperm.xlu0 %248, %v215
    %v250 = vpop.permute.xlu0 %249
    %253 = vset.pattern.permute.xlu0 0
    %254 = vperm.xlu0 %253, %v216
    %v255 = vpop.permute.xlu0 %254
    %258 = vset.pattern.permute.xlu0 0
    %259 = vperm.xlu0 %258, %v217
    %v260 = vpop.permute.xlu0 %259
    %263 = vset.pattern.permute.xlu0 0
    %264 = vperm.xlu0 %263, %v218
    %v265 = vpop.permute.xlu0 %264
    %v267 = vadd.f32 %v243, %v250
    %v268 = vadd.f32 %v244, %v255
    %v269 = vadd.f32 %v245, %v260
    %v270 = vadd.f32 %v246, %v265
    %v271 = vpack.c.bf16 %v268, %v267
    %v272 = vpack.c.bf16 %v270, %v269
    %v275 = vunpack.c.l.b16 %v271
    %v276 = vunpack.c.h.b16 %v271
    %v277 = vunpack.c.l.b16 %v272
    %v278 = vunpack.c.h.b16 %v272
    %v279 = vpack.c.b16 %v275, %v275
    %v280 = vpack.c.b16 %v276, %v276
    %v281 = vpack.c.b16 %v277, %v277
    %v282 = vpack.c.b16 %v278, %v278
    %287 = vst [vmem:[%s4] sm:$0xf] %v279
    %288 = vst [vmem:[%s4 + $0x4] sm:$0xf] %v280
    %289 = vst [vmem:[%s4 + $0x8] sm:$0xf] %v281
    %290 = vst [vmem:[%s4 + $0xc] sm:$0xf] %v282
  $region25: #{resnet_forward.21} parent=0 // pred_fallthru
    _
  // Predicated region
  $region26: #{resnet_forward.21} parent=0 // pred_check
    _
  $region27: #{resnet_forward.21} parent=0 // pred_check_branch
    %292 = sbr.rel (0) target = $region29
  $region28: #{resnet_forward.21} parent=0 // pred_region
    _
  $region29: #{resnet_forward.21} parent=0 // pred_fallthru
    _
  // Predicated region
  $region30: #{resnet_forward.21} parent=0 // pred_check
    _
  $region31: #{resnet_forward.21} parent=0 // pred_check_branch
    %294 = sbr.rel (0) target = $region33
  $region32: #{resnet_forward.21} parent=0 // pred_region
    _
  $region33: #{resnet_forward.21} parent=0 // pred_fallthru
    _

// kernel: resnet_forward.22
$region0: #{resnet_forward.22}
  #allocation0 [shape = 'u32[]', space=smem, size = 0x4, offset = 0x4, fixed_abs, tag = 'smem constant byte address 0x4 - core index']
  #allocation1 [shape = 'u32[144,128]{1,0:T(1,128)}', space=vmem, size = 0x12000, scoped, tag = 'internal scratch']
  #allocation2 [shape = 'f32[1,32,128]{2,1,0:T(8,128)}', space=vmem, size = 0x4000, scoped, tag = 'scratch operand']
  #allocation3 [shape = 'f32[32,1]{1,0:T(8,128)}', space=vmem, size = 0x4000, scoped, tag = 'scratch operand']
  #allocation4 [shape = 'f32[32,1]{1,0:T(8,128)}', space=vmem, size = 0x4000, scoped, tag = 'scratch operand']
  %s0 = inlined_call_operand.vmem [shape: bf16[288,128], index: 0, kind: input, shape index: {}]
  %s1 = inlined_call_operand.vmem [shape: bf16[32,288], index: 1, kind: input, shape index: {}]
  %s2 = inlined_call_operand.vmem [shape: f32[32,1], index: 2, kind: input, shape index: {}]
  %s3 = inlined_call_operand.vmem [shape: f32[32,1], index: 3, kind: input, shape index: {}]
  %s4 = inlined_call_operand.vmem [shape: bf16[32,128], index: 4, kind: input, shape index: {}]
  %s5 = inlined_call_operand.vmem [shape: bf16[32,128], index: 5, kind: output, shape index: {}]
  %s6 = sld [smem:[#allocation0]]
  $region38: #{resnet_forward.22} parent=0
    _
  %s8 = ssub.s32 1, %s6
  %s9 = scalar_select 0, %s8, %s6
  // Predicated region
  $region2: #{resnet_forward.22} parent=0 // pred_check
    _
  $region3: #{resnet_forward.22} parent=0 // pred_check_branch
    %11 = sbr.rel (0) target = $region5
  $region4: #{resnet_forward.22} parent=0 // pred_region
    _
  $region5: #{resnet_forward.22} parent=0 // pred_fallthru
    _
  // Predicated region
  $region6: #{resnet_forward.22} parent=0 // pred_check
    _
  $region7: #{resnet_forward.22} parent=0 // pred_check_branch
    %13 = sbr.rel (0) target = $region9
  $region8: #{resnet_forward.22} parent=0 // pred_region
    _
  $region9: #{resnet_forward.22} parent=0 // pred_fallthru
    _
  // Predicated region
  $region10: #{resnet_forward.22} parent=0 // pred_check
    _
  $region11: #{resnet_forward.22} parent=0 // pred_check_branch
    %15 = sbr.rel (0) target = $region13
  $region12: #{resnet_forward.22} parent=0 // pred_region
    _
  $region13: #{resnet_forward.22} parent=0 // pred_fallthru
    _
  // Predicated region
  $region14: #{resnet_forward.22} parent=0 // pred_check
    _
  $region15: #{resnet_forward.22} parent=0 // pred_check_branch
    %17 = sbr.rel (0) target = $region17
  $region16: #{resnet_forward.22} parent=0 // pred_region
    _
  $region17: #{resnet_forward.22} parent=0 // pred_fallthru
    _
  // Predicated region
  $region18: #{resnet_forward.22} parent=0 // pred_check
    _
  $region19: #{resnet_forward.22} parent=0 // pred_check_branch
    %19 = sbr.rel (0) target = $region21
  $region20: #{resnet_forward.22} parent=0 // pred_region
    _
  $region21: #{resnet_forward.22} parent=0 // pred_fallthru
    _
  %p21 = scmp.eq.s32.totalorder 0, 0
  // Predicated region
  $region22: #{resnet_forward.22} parent=0 // pred_check
    %p22 = pneg %p21
  $region23: #{resnet_forward.22} parent=0 // pred_check_branch
    %24 = sbr.rel (%p22) target = $region25
  $region24: #{resnet_forward.22} parent=0 // pred_region
    %vm25 = vcmask 7168
    %26 = vst.msk [vmem:[#allocation3] sm:$0xff] %vm25, 0.0
    %27 = vst.msk [vmem:[#allocation3 + $0x8] sm:$0xff] %vm25, 0.0
    %28 = vst.msk [vmem:[#allocation3 + $0x10] sm:$0xff] %vm25, 0.0
    %29 = vst.msk [vmem:[#allocation3 + $0x18] sm:$0xff] %vm25, 0.0
    %30 = vst.msk [vmem:[#allocation4] sm:$0xff] %vm25, 0.0
    %31 = vst.msk [vmem:[#allocation4 + $0x8] sm:$0xff] %vm25, 0.0
    %32 = vst.msk [vmem:[#allocation4 + $0x10] sm:$0xff] %vm25, 0.0
    %33 = vst.msk [vmem:[#allocation4 + $0x18] sm:$0xff] %vm25, 0.0
  $region25: #{resnet_forward.22} parent=0 // pred_fallthru
    _
  %v34 = vld [vmem:[%s1] sm:$0xff]
  %v35 = vld [vmem:[%s1 + $0x8] sm:$0xf]
  %v36 = vld [vmem:[%s1 + $0xc] sm:$0xff]
  %v37 = vld [vmem:[%s1 + $0x14] sm:$0xf]
  %v38 = vld [vmem:[%s1 + $0x18] sm:$0xff]
  %v39 = vld [vmem:[%s1 + $0x20] sm:$0xf]
  %v40 = vld [vmem:[%s1 + $0x24] sm:$0xff]
  %v41 = vld [vmem:[%s1 + $0x2c] sm:$0xf]
  %v42 = vld [vmem:[%s0] sm:$0xf]
  %v43 = vld [vmem:[%s0 + $0x4] sm:$0xf]
  %v44 = vld [vmem:[%s0 + $0x8] sm:$0xf]
  %v45 = vld [vmem:[%s0 + $0xc] sm:$0xf]
  %v46 = vld [vmem:[%s0 + $0x10] sm:$0xf]
  %v47 = vld [vmem:[%s0 + $0x14] sm:$0xf]
  %v48 = vld [vmem:[%s0 + $0x18] sm:$0xf]
  %v49 = vld [vmem:[%s0 + $0x1c] sm:$0xf]
  %v50 = vld [vmem:[%s0 + $0x20] sm:$0xf]
  %v51 = vld [vmem:[%s0 + $0x24] sm:$0xf]
  %v52 = vld [vmem:[%s0 + $0x28] sm:$0xf]
  %v53 = vld [vmem:[%s0 + $0x2c] sm:$0xf]
  %v54 = vld [vmem:[%s0 + $0x30] sm:$0xf]
  %v55 = vld [vmem:[%s0 + $0x34] sm:$0xf]
  %v56 = vld [vmem:[%s0 + $0x38] sm:$0xf]
  %v57 = vld [vmem:[%s0 + $0x3c] sm:$0xf]
  %v58 = vld [vmem:[%s0 + $0x40] sm:$0xf]
  %v59 = vld [vmem:[%s0 + $0x44] sm:$0xf]
  %v60 = vld [vmem:[%s0 + $0x48] sm:$0xf]
  %v61 = vld [vmem:[%s0 + $0x4c] sm:$0xf]
  %v62 = vld [vmem:[%s0 + $0x50] sm:$0xf]
  %v63 = vld [vmem:[%s0 + $0x54] sm:$0xf]
  %v64 = vld [vmem:[%s0 + $0x58] sm:$0xf]
  %v65 = vld [vmem:[%s0 + $0x5c] sm:$0xf]
  %v66 = vld [vmem:[%s0 + $0x60] sm:$0xf]
  %v67 = vld [vmem:[%s0 + $0x64] sm:$0xf]
  %v68 = vld [vmem:[%s0 + $0x68] sm:$0xf]
  %v69 = vld [vmem:[%s0 + $0x6c] sm:$0xf]
  %v70 = vld [vmem:[%s0 + $0x70] sm:$0xf]
  %v71 = vld [vmem:[%s0 + $0x74] sm:$0xf]
  %v72 = vld [vmem:[%s0 + $0x78] sm:$0xf]
  %v73 = vld [vmem:[%s0 + $0x7c] sm:$0xf]
  %v74 = vld [vmem:[%s0 + $0x80] sm:$0xf]
  %v75 = vld [vmem:[%s0 + $0x84] sm:$0xf]
  %v76 = vld [vmem:[%s0 + $0x88] sm:$0xf]
  %v77 = vld [vmem:[%s0 + $0x8c] sm:$0xf]
  %v86 = vunpack.c.l.b16 %v34
  %v87 = vunpack.c.h.b16 %v34
  %v88 = vunpack.c.l.b16 %v35
  %v89 = vunpack.c.l.b16 %v36
  %v90 = vunpack.c.h.b16 %v36
  %v91 = vunpack.c.l.b16 %v37
  %v92 = vunpack.c.l.b16 %v38
  %v93 = vunpack.c.h.b16 %v38
  %v94 = vunpack.c.l.b16 %v39
  %v95 = vunpack.c.l.b16 %v40
  %v96 = vunpack.c.h.b16 %v40
  %v97 = vunpack.c.l.b16 %v41
  %v98 = vpack.c.b16 %v89, %v86
  %v99 = vpack.c.b16 %v90, %v87
  %v100 = vpack.c.b16 %v91, %v88
  %v101 = vpack.c.b16 %v95, %v92
  %v102 = vpack.c.b16 %v96, %v93
  %v103 = vpack.c.b16 %v97, %v94
  %v144 = vunpack.c.l.b16 %v42
  %v145 = vunpack.c.l.b16 %v43
  %v146 = vunpack.c.l.b16 %v44
  %v147 = vunpack.c.l.b16 %v45
  %v148 = vunpack.c.l.b16 %v46
  %v149 = vunpack.c.l.b16 %v47
  %v150 = vunpack.c.l.b16 %v48
  %v151 = vunpack.c.l.b16 %v49
  %v152 = vunpack.c.l.b16 %v50
  %v153 = vunpack.c.l.b16 %v51
  %v154 = vunpack.c.l.b16 %v52
  %v155 = vunpack.c.l.b16 %v53
  %v156 = vunpack.c.l.b16 %v54
  %v157 = vunpack.c.l.b16 %v55
  %v158 = vunpack.c.l.b16 %v56
  %v159 = vunpack.c.l.b16 %v57
  %v160 = vunpack.c.l.b16 %v58
  %v161 = vunpack.c.l.b16 %v59
  %v162 = vunpack.c.l.b16 %v60
  %v163 = vunpack.c.l.b16 %v61
  %v164 = vunpack.c.l.b16 %v62
  %v165 = vunpack.c.l.b16 %v63
  %v166 = vunpack.c.l.b16 %v64
  %v167 = vunpack.c.l.b16 %v65
  %v168 = vunpack.c.l.b16 %v66
  %v169 = vunpack.c.l.b16 %v67
  %v170 = vunpack.c.l.b16 %v68
  %v171 = vunpack.c.l.b16 %v69
  %v172 = vunpack.c.l.b16 %v70
  %v173 = vunpack.c.l.b16 %v71
  %v174 = vunpack.c.l.b16 %v72
  %v175 = vunpack.c.l.b16 %v73
  %v176 = vunpack.c.l.b16 %v74
  %v177 = vunpack.c.l.b16 %v75
  %v178 = vunpack.c.l.b16 %v76
  %v179 = vunpack.c.l.b16 %v77
  %v180 = vpack.c.b16 %v145, %v144
  %v181 = vpack.c.b16 %v147, %v146
  %v182 = vpack.c.b16 %v149, %v148
  %v183 = vpack.c.b16 %v151, %v150
  %v184 = vpack.c.b16 %v153, %v152
  %v185 = vpack.c.b16 %v155, %v154
  %v186 = vpack.c.b16 %v157, %v156
  %v187 = vpack.c.b16 %v159, %v158
  %v188 = vpack.c.b16 %v161, %v160
  %v189 = vpack.c.b16 %v163, %v162
  %v190 = vpack.c.b16 %v165, %v164
  %v191 = vpack.c.b16 %v167, %v166
  %v192 = vpack.c.b16 %v169, %v168
  %v193 = vpack.c.b16 %v171, %v170
  %v194 = vpack.c.b16 %v173, %v172
  %v195 = vpack.c.b16 %v175, %v174
  %v196 = vpack.c.b16 %v177, %v176
  %v197 = vpack.c.b16 %v179, %v178
  %vm216 = vcmask 261120
  %v218 = vsel %vm216, %v100, 0
  %v221 = vsel %vm216, %v103, 0
  %223 = vmatprep.subr.bf16.mxu0 0
  %224 = vmatpush1.bf16.msra.mxu0 %v187
  %225 = vmatprep.subr.bf16.mxu0 0
  %226 = vmatpush1.bf16.msra.mxu0 %v186
  %227 = vmatprep.subr.bf16.mxu0 0
  %228 = vmatpush1.bf16.msra.mxu0 %v185
  %229 = vmatprep.subr.bf16.mxu0 0
  %230 = vmatpush1.bf16.msra.mxu0 %v184
  %231 = vmatprep.subr.bf16.mxu0 0
  %232 = vmatpush1.bf16.msra.mxu0 %v183
  %233 = vmatprep.subr.bf16.mxu0 0
  %234 = vmatpush1.bf16.msra.mxu0 %v182
  %235 = vmatprep.subr.bf16.mxu0 0
  %236 = vmatpush1.bf16.msra.mxu0 %v181
  %237 = vmatprep.subr.bf16.mxu0 0
  %238 = vmatpush1.bf16.msra.mxu0 %v180
  %239 = vmatprep.subr.bf16.mxu0 0
  %240 = vmatpush2.bf16.msra.mxu0 %v195
  %241 = vmatprep.subr.bf16.mxu0 0
  %242 = vmatpush2.bf16.msra.mxu0 %v194
  %243 = vmatprep.subr.bf16.mxu0 0
  %244 = vmatpush2.bf16.msra.mxu0 %v193
  %245 = vmatprep.subr.bf16.mxu0 0
  %246 = vmatpush2.bf16.msra.mxu0 %v192
  %247 = vmatprep.subr.bf16.mxu0 0
  %248 = vmatpush2.bf16.msra.mxu0 %v191
  %249 = vmatprep.subr.bf16.mxu0 0
  %250 = vmatpush2.bf16.msra.mxu0 %v190
  %251 = vmatprep.subr.bf16.mxu0 0
  %252 = vmatpush2.bf16.msra.mxu0 %v189
  %253 = vmatprep.subr.bf16.mxu0 0
  %254 = vmatpush2.bf16.msra.mxu0 %v188
  %255 = vmatprep.mubr.bf16.mxu0 %v99
  %256 = vmatmul.mubr.bf16.gmra.mxu0 %v98
  %v257 = vpop.f32.mrf.mxu0
  %v258 = vadd.f32 0.0, %v257
  %v259 = vpop.f32.mrf.mxu0
  %v260 = vpop.f32.mrf.mxu0
  %v261 = vadd.f32 0.0, %v260
  %v262 = vpop.f32.mrf.mxu0
  %263 = vmatprep.mubr.bf16.mxu0 %v102
  %264 = vmatmul.mubr.bf16.gmra.mxu0 %v101
  %v265 = vpop.f32.mrf.mxu0
  %v266 = vadd.f32 0.0, %v265
  %v267 = vpop.f32.mrf.mxu0
  %v268 = vpop.f32.mrf.mxu0
  %v269 = vadd.f32 0.0, %v268
  %v270 = vpop.f32.mrf.mxu0
  %271 = vdwg.mxu0
  %272 = vmatprep.subr.bf16.mxu0 0
  %273 = vmatpush1.bf16.msra.mxu0 0
  %274 = vmatprep.subr.bf16.mxu0 0
  %275 = vmatpush1.bf16.msra.mxu0 0
  %276 = vmatprep.subr.bf16.mxu0 0
  %277 = vmatpush1.bf16.msra.mxu0 0
  %278 = vmatprep.subr.bf16.mxu0 0
  %279 = vmatpush1.bf16.msra.mxu0 0
  %280 = vmatprep.subr.bf16.mxu0 0
  %281 = vmatpush1.bf16.msra.mxu0 0
  %282 = vmatprep.subr.bf16.mxu0 0
  %283 = vmatpush1.bf16.msra.mxu0 0
  %284 = vmatprep.subr.bf16.mxu0 0
  %285 = vmatpush1.bf16.msra.mxu0 %v197
  %286 = vmatprep.subr.bf16.mxu0 0
  %287 = vmatpush1.bf16.msra.mxu0 %v196
  %288 = vmatprep.subr.bf16.mxu0 0
  %289 = vmatpush2.bf16.msra.mxu0 0
  %290 = vmatprep.subr.bf16.mxu0 0
  %291 = vmatpush2.bf16.msra.mxu0 0
  %292 = vmatprep.subr.bf16.mxu0 0
  %293 = vmatpush2.bf16.msra.mxu0 0
  %294 = vmatprep.subr.bf16.mxu0 0
  %295 = vmatpush2.bf16.msra.mxu0 0
  %296 = vmatprep.subr.bf16.mxu0 0
  %297 = vmatpush2.bf16.msra.mxu0 0
  %298 = vmatprep.subr.bf16.mxu0 0
  %299 = vmatpush2.bf16.msra.mxu0 0
  %300 = vmatprep.subr.bf16.mxu0 0
  %301 = vmatpush2.bf16.msra.mxu0 0
  %302 = vmatprep.subr.bf16.mxu0 0
  %303 = vmatpush2.bf16.msra.mxu0 0
  %304 = vmatprep.mubr.bf16.mxu0 0
  %305 = vmatmul.mubr.bf16.gmra.mxu0 %v218
  %v306 = vpop.f32.mrf.mxu0
  %v307 = vadd.f32 %v258, %v306
  %v308 = vpop.f32.mrf.mxu0
  %v309 = vpop.f32.mrf.mxu0
  %v310 = vadd.f32 %v261, %v309
  %v311 = vpop.f32.mrf.mxu0
  %312 = vmatprep.mubr.bf16.mxu0 0
  %313 = vmatmul.mubr.bf16.gmra.mxu0 %v221
  %v314 = vpop.f32.mrf.mxu0
  %v315 = vadd.f32 %v266, %v314
  %v316 = vpop.f32.mrf.mxu0
  %v317 = vpop.f32.mrf.mxu0
  %v318 = vadd.f32 %v269, %v317
  %v319 = vpop.f32.mrf.mxu0
  %320 = vdwg.mxu0
  %s321 = smul.u32 0, 32
  %s322 = scalar_lea.vmem [#allocation2], %s321
  %323 = vst [vmem:[%s322] sm:$0xff] %v307
  %324 = vst [vmem:[%s322 + $0x8] sm:$0xff] %v310
  %325 = vst [vmem:[%s322 + $0x10] sm:$0xff] %v315
  %326 = vst [vmem:[%s322 + $0x18] sm:$0xff] %v318
  %v327 = vld [vmem:[#allocation3] sm:$0xff]
  %v328 = vld [vmem:[#allocation3 + $0x8] sm:$0xff]
  %v329 = vld [vmem:[#allocation3 + $0x10] sm:$0xff]
  %v330 = vld [vmem:[#allocation3 + $0x18] sm:$0xff]
  %331 = vadd.xlane.f32.xlu0 %v307
  %v332 = vpop.xlane.xlu0 %331
  %333 = vadd.xlane.f32.xlu0 %v310
  %v334 = vpop.xlane.xlu0 %333
  %335 = vadd.xlane.f32.xlu0 %v315
  %v336 = vpop.xlane.xlu0 %335
  %337 = vadd.xlane.f32.xlu0 %v318
  %v338 = vpop.xlane.xlu0 %337
  %v339 = vadd.f32 %v327, %v332
  %v340 = vadd.f32 %v328, %v334
  %v341 = vadd.f32 %v329, %v336
  %v342 = vadd.f32 %v330, %v338
  %vm343 = vcmask 7168
  %344 = vst.msk [vmem:[#allocation3] sm:$0xff] %vm343, %v339
  %345 = vst.msk [vmem:[#allocation3 + $0x8] sm:$0xff] %vm343, %v340
  %346 = vst.msk [vmem:[#allocation3 + $0x10] sm:$0xff] %vm343, %v341
  %347 = vst.msk [vmem:[#allocation3 + $0x18] sm:$0xff] %vm343, %v342
  %v348 = vld [vmem:[#allocation4] sm:$0xff]
  %v349 = vld [vmem:[#allocation4 + $0x8] sm:$0xff]
  %v350 = vld [vmem:[#allocation4 + $0x10] sm:$0xff]
  %v351 = vld [vmem:[#allocation4 + $0x18] sm:$0xff]
  %v352 = vmul.f32 %v307, %v307
  %v353 = vmul.f32 %v310, %v310
  %v354 = vmul.f32 %v315, %v315
  %v355 = vmul.f32 %v318, %v318
  %356 = vadd.xlane.f32.xlu0 %v352
  %v357 = vpop.xlane.xlu0 %356
  %358 = vadd.xlane.f32.xlu0 %v353
  %v359 = vpop.xlane.xlu0 %358
  %360 = vadd.xlane.f32.xlu0 %v354
  %v361 = vpop.xlane.xlu0 %360
  %362 = vadd.xlane.f32.xlu0 %v355
  %v363 = vpop.xlane.xlu0 %362
  %v364 = vadd.f32 %v348, %v357
  %v365 = vadd.f32 %v349, %v359
  %v366 = vadd.f32 %v350, %v361
  %v367 = vadd.f32 %v351, %v363
  %368 = vst.msk [vmem:[#allocation4] sm:$0xff] %vm343, %v364
  %369 = vst.msk [vmem:[#allocation4 + $0x8] sm:$0xff] %vm343, %v365
  %370 = vst.msk [vmem:[#allocation4 + $0x10] sm:$0xff] %vm343, %v366
  %371 = vst.msk [vmem:[#allocation4 + $0x18] sm:$0xff] %vm343, %v367
  // Predicated region
  $region26: #{resnet_forward.22} parent=0 // pred_check
    %p372 = pneg %p21
  $region27: #{resnet_forward.22} parent=0 // pred_check_branch
    %374 = sbr.rel (%p372) target = $region29
  $region28: #{resnet_forward.22} parent=0 // pred_region
    %v375 = vld [vmem:[#allocation3] sm:$0xff]
    %v376 = vld [vmem:[#allocation3 + $0x8] sm:$0xff]
    %v377 = vld [vmem:[#allocation3 + $0x10] sm:$0xff]
    %v378 = vld [vmem:[#allocation3 + $0x18] sm:$0xff]
    %v379 = vmul.f32 %v375, 0.03125
    %v380 = vmul.f32 %v376, 0.03125
    %v381 = vmul.f32 %v377, 0.03125
    %v382 = vmul.f32 %v378, 0.03125
    %v383 = vld [vmem:[#allocation4] sm:$0xff]
    %v384 = vld [vmem:[#allocation4 + $0x8] sm:$0xff]
    %v385 = vld [vmem:[#allocation4 + $0x10] sm:$0xff]
    %v386 = vld [vmem:[#allocation4 + $0x18] sm:$0xff]
    %v387 = vmul.f32 %v383, 0.03125
    %v388 = vmul.f32 %v384, 0.03125
    %v389 = vmul.f32 %v385, 0.03125
    %v390 = vmul.f32 %v386, 0.03125
    %v391 = vmul.f32 %v379, %v379
    %v392 = vmul.f32 %v380, %v380
    %v393 = vmul.f32 %v381, %v381
    %v394 = vmul.f32 %v382, %v382
    %v395 = vsub.f32 %v387, %v391
    %v396 = vsub.f32 %v388, %v392
    %v397 = vsub.f32 %v389, %v393
    %v398 = vsub.f32 %v390, %v394
    %v399 = vmax.f32 %v395, 0.0
    %v400 = vmax.f32 %v396, 0.0
    %v401 = vmax.f32 %v397, 0.0
    %v402 = vmax.f32 %v398, 0.0
    %v403 = vld [vmem:[%s2] sm:$0xff]
    %v404 = vld [vmem:[%s2 + $0x8] sm:$0xff]
    %v405 = vld [vmem:[%s2 + $0x10] sm:$0xff]
    %v406 = vld [vmem:[%s2 + $0x18] sm:$0xff]
    %v407 = vadd.f32 %v399, 1e-05
    %v408 = vadd.f32 %v400, 1e-05
    %v409 = vadd.f32 %v401, 1e-05
    %v410 = vadd.f32 %v402, 1e-05
    %v411 = vrsqrt.pop %v407
    %v412 = vrsqrt.pop %v408
    %v413 = vrsqrt.pop %v409
    %v414 = vrsqrt.pop %v410
    %v415 = vmul.f32 %v403, %v411
    %v416 = vmul.f32 %v404, %v412
    %v417 = vmul.f32 %v405, %v413
    %v418 = vmul.f32 %v406, %v414
    %v419 = vld [vmem:[%s3] sm:$0xff]
    %v420 = vld [vmem:[%s3 + $0x8] sm:$0xff]
    %v421 = vld [vmem:[%s3 + $0x10] sm:$0xff]
    %v422 = vld [vmem:[%s3 + $0x18] sm:$0xff]
    %v423 = vmul.f32 %v379, %v415
    %v424 = vmul.f32 %v380, %v416
    %v425 = vmul.f32 %v381, %v417
    %v426 = vmul.f32 %v382, %v418
    %v427 = vsub.f32 %v419, %v423
    %v428 = vsub.f32 %v420, %v424
    %v429 = vsub.f32 %v421, %v425
    %v430 = vsub.f32 %v422, %v426
    %v431 = vld [vmem:[#allocation2] sm:$0xff]
    %v432 = vld [vmem:[#allocation2 + $0x8] sm:$0xff]
    %v433 = vld [vmem:[#allocation2 + $0x10] sm:$0xff]
    %v434 = vld [vmem:[#allocation2 + $0x18] sm:$0xff]
    %436 = vset.pattern.permute.xlu0 0
    %437 = vperm.xlu0 %436, %v415
    %v438 = vpop.permute.xlu0 %437
    %441 = vset.pattern.permute.xlu0 0
    %442 = vperm.xlu0 %441, %v416
    %v443 = vpop.permute.xlu0 %442
    %446 = vset.pattern.permute.xlu0 0
    %447 = vperm.xlu0 %446, %v417
    %v448 = vpop.permute.xlu0 %447
    %451 = vset.pattern.permute.xlu0 0
    %452 = vperm.xlu0 %451, %v418
    %v453 = vpop.permute.xlu0 %452
    %v455 = vmul.f32 %v431, %v438
    %v456 = vmul.f32 %v432, %v443
    %v457 = vmul.f32 %v433, %v448
    %v458 = vmul.f32 %v434, %v453
    %460 = vset.pattern.permute.xlu0 0
    %461 = vperm.xlu0 %460, %v427
    %v462 = vpop.permute.xlu0 %461
    %465 = vset.pattern.permute.xlu0 0
    %466 = vperm.xlu0 %465, %v428
    %v467 = vpop.permute.xlu0 %466
    %470 = vset.pattern.permute.xlu0 0
    %471 = vperm.xlu0 %470, %v429
    %v472 = vpop.permute.xlu0 %471
    %475 = vset.pattern.permute.xlu0 0
    %476 = vperm.xlu0 %475, %v430
    %v477 = vpop.permute.xlu0 %476
    %v479 = vadd.f32 %v455, %v462
    %v480 = vadd.f32 %v456, %v467
    %v481 = vadd.f32 %v457, %v472
    %v482 = vadd.f32 %v458, %v477
    %v483 = vld [vmem:[%s4] sm:$0xf]
    %v484 = vld [vmem:[%s4 + $0x4] sm:$0xf]
    %v485 = vld [vmem:[%s4 + $0x8] sm:$0xf]
    %v486 = vld [vmem:[%s4 + $0xc] sm:$0xf]
    %v487 = vunpack.c.l.bf16 %v483
    %v488 = vunpack.c.l.bf16 %v484
    %v489 = vunpack.c.l.bf16 %v485
    %v490 = vunpack.c.l.bf16 %v486
    %v491 = vadd.f32 %v479, %v487
    %v492 = vadd.f32 %v480, %v488
    %v493 = vadd.f32 %v481, %v489
    %v494 = vadd.f32 %v482, %v490
    %v495 = vmax.f32 %v491, 0.0
    %v496 = vmax.f32 %v492, 0.0
    %v497 = vmax.f32 %v493, 0.0
    %v498 = vmax.f32 %v494, 0.0
    %v499 = vpack.c.bf16 %v496, %v495
    %v500 = vpack.c.bf16 %v498, %v497
    %v503 = vunpack.c.l.b16 %v499
    %v504 = vunpack.c.h.b16 %v499
    %v505 = vunpack.c.l.b16 %v500
    %v506 = vunpack.c.h.b16 %v500
    %v507 = vpack.c.b16 %v503, %v503
    %v508 = vpack.c.b16 %v504, %v504
    %v509 = vpack.c.b16 %v505, %v505
    %v510 = vpack.c.b16 %v506, %v506
    %515 = vst [vmem:[%s5] sm:$0xf] %v507
    %516 = vst [vmem:[%s5 + $0x4] sm:$0xf] %v508
    %517 = vst [vmem:[%s5 + $0x8] sm:$0xf] %v509
    %518 = vst [vmem:[%s5 + $0xc] sm:$0xf] %v510
  $region29: #{resnet_forward.22} parent=0 // pred_fallthru
    _
  // Predicated region
  $region30: #{resnet_forward.22} parent=0 // pred_check
    _
  $region31: #{resnet_forward.22} parent=0 // pred_check_branch
    %520 = sbr.rel (0) target = $region33
  $region32: #{resnet_forward.22} parent=0 // pred_region
    _
  $region33: #{resnet_forward.22} parent=0 // pred_fallthru
    _
  // Predicated region
  $region34: #{resnet_forward.22} parent=0 // pred_check
    _
  $region35: #{resnet_forward.22} parent=0 // pred_check_branch
    %522 = sbr.rel (0) target = $region37
  $region36: #{resnet_forward.22} parent=0 // pred_region
    _
  $region37: #{resnet_forward.22} parent=0 // pred_fallthru
    _

// kernel: resnet_forward.23
$region0: #{resnet_forward.23}
  #allocation0 [shape = 'u32[]', space=smem, size = 0x4, offset = 0x4, fixed_abs, tag = 'smem constant byte address 0x4 - core index']
  #allocation1 [shape = 'u32[144,128]{1,0:T(1,128)}', space=vmem, size = 0x12000, scoped, tag = 'internal scratch']
  #allocation2 [shape = 'f32[1,64,128]{2,1,0:T(8,128)}', space=vmem, size = 0x8000, scoped, tag = 'scratch operand']
  #allocation3 [shape = 'f32[64,1]{1,0:T(8,128)}', space=vmem, size = 0x8000, scoped, tag = 'scratch operand']
  #allocation4 [shape = 'f32[64,1]{1,0:T(8,128)}', space=vmem, size = 0x8000, scoped, tag = 'scratch operand']
  %s0 = inlined_call_operand.vmem [shape: bf16[288,128], index: 0, kind: input, shape index: {}]
  %s1 = inlined_call_operand.vmem [shape: bf16[64,288], index: 1, kind: input, shape index: {}]
  %s2 = inlined_call_operand.vmem [shape: f32[64,1], index: 2, kind: input, shape index: {}]
  %s3 = inlined_call_operand.vmem [shape: f32[64,1], index: 3, kind: input, shape index: {}]
  %s4 = inlined_call_operand.vmem [shape: bf16[64,128], index: 4, kind: output, shape index: {}]
  %s5 = sld [smem:[#allocation0]]
  $region34: #{resnet_forward.23} parent=0
    _
  %s7 = ssub.s32 1, %s5
  %s8 = scalar_select 0, %s7, %s5
  // Predicated region
  $region2: #{resnet_forward.23} parent=0 // pred_check
    _
  $region3: #{resnet_forward.23} parent=0 // pred_check_branch
    %10 = sbr.rel (0) target = $region5
  $region4: #{resnet_forward.23} parent=0 // pred_region
    _
  $region5: #{resnet_forward.23} parent=0 // pred_fallthru
    _
  // Predicated region
  $region6: #{resnet_forward.23} parent=0 // pred_check
    _
  $region7: #{resnet_forward.23} parent=0 // pred_check_branch
    %12 = sbr.rel (0) target = $region9
  $region8: #{resnet_forward.23} parent=0 // pred_region
    _
  $region9: #{resnet_forward.23} parent=0 // pred_fallthru
    _
  // Predicated region
  $region10: #{resnet_forward.23} parent=0 // pred_check
    _
  $region11: #{resnet_forward.23} parent=0 // pred_check_branch
    %14 = sbr.rel (0) target = $region13
  $region12: #{resnet_forward.23} parent=0 // pred_region
    _
  $region13: #{resnet_forward.23} parent=0 // pred_fallthru
    _
  // Predicated region
  $region14: #{resnet_forward.23} parent=0 // pred_check
    _
  $region15: #{resnet_forward.23} parent=0 // pred_check_branch
    %16 = sbr.rel (0) target = $region17
  $region16: #{resnet_forward.23} parent=0 // pred_region
    _
  $region17: #{resnet_forward.23} parent=0 // pred_fallthru
    _
  %p18 = scmp.eq.s32.totalorder 0, 0
  // Predicated region
  $region18: #{resnet_forward.23} parent=0 // pred_check
    %p19 = pneg %p18
  $region19: #{resnet_forward.23} parent=0 // pred_check_branch
    %21 = sbr.rel (%p19) target = $region21
  $region20: #{resnet_forward.23} parent=0 // pred_region
    %vm22 = vcmask 7168
    %23 = vst.msk [vmem:[#allocation3] sm:$0xff] %vm22, 0.0
    %24 = vst.msk [vmem:[#allocation3 + $0x8] sm:$0xff] %vm22, 0.0
    %25 = vst.msk [vmem:[#allocation3 + $0x10] sm:$0xff] %vm22, 0.0
    %26 = vst.msk [vmem:[#allocation3 + $0x18] sm:$0xff] %vm22, 0.0
    %27 = vst.msk [vmem:[#allocation3 + $0x20] sm:$0xff] %vm22, 0.0
    %28 = vst.msk [vmem:[#allocation3 + $0x28] sm:$0xff] %vm22, 0.0
    %29 = vst.msk [vmem:[#allocation3 + $0x30] sm:$0xff] %vm22, 0.0
    %30 = vst.msk [vmem:[#allocation3 + $0x38] sm:$0xff] %vm22, 0.0
    %31 = vst.msk [vmem:[#allocation4] sm:$0xff] %vm22, 0.0
    %32 = vst.msk [vmem:[#allocation4 + $0x8] sm:$0xff] %vm22, 0.0
    %33 = vst.msk [vmem:[#allocation4 + $0x10] sm:$0xff] %vm22, 0.0
    %34 = vst.msk [vmem:[#allocation4 + $0x18] sm:$0xff] %vm22, 0.0
    %35 = vst.msk [vmem:[#allocation4 + $0x20] sm:$0xff] %vm22, 0.0
    %36 = vst.msk [vmem:[#allocation4 + $0x28] sm:$0xff] %vm22, 0.0
    %37 = vst.msk [vmem:[#allocation4 + $0x30] sm:$0xff] %vm22, 0.0
    %38 = vst.msk [vmem:[#allocation4 + $0x38] sm:$0xff] %vm22, 0.0
  $region21: #{resnet_forward.23} parent=0 // pred_fallthru
    _
  %v39 = vld [vmem:[%s1] sm:$0xff]
  %v40 = vld [vmem:[%s1 + $0x8] sm:$0xf]
  %v41 = vld [vmem:[%s1 + $0xc] sm:$0xff]
  %v42 = vld [vmem:[%s1 + $0x14] sm:$0xf]
  %v43 = vld [vmem:[%s1 + $0x18] sm:$0xff]
  %v44 = vld [vmem:[%s1 + $0x20] sm:$0xf]
  %v45 = vld [vmem:[%s1 + $0x24] sm:$0xff]
  %v46 = vld [vmem:[%s1 + $0x2c] sm:$0xf]
  %v47 = vld [vmem:[%s1 + $0x30] sm:$0xff]
  %v48 = vld [vmem:[%s1 + $0x38] sm:$0xf]
  %v49 = vld [vmem:[%s1 + $0x3c] sm:$0xff]
  %v50 = vld [vmem:[%s1 + $0x44] sm:$0xf]
  %v51 = vld [vmem:[%s1 + $0x48] sm:$0xff]
  %v52 = vld [vmem:[%s1 + $0x50] sm:$0xf]
  %v53 = vld [vmem:[%s1 + $0x54] sm:$0xff]
  %v54 = vld [vmem:[%s1 + $0x5c] sm:$0xf]
  %v55 = vld [vmem:[%s0] sm:$0xf]
  %v56 = vld [vmem:[%s0 + $0x4] sm:$0xf]
  %v57 = vld [vmem:[%s0 + $0x8] sm:$0xf]
  %v58 = vld [vmem:[%s0 + $0xc] sm:$0xf]
  %v59 = vld [vmem:[%s0 + $0x10] sm:$0xf]
  %v60 = vld [vmem:[%s0 + $0x14] sm:$0xf]
  %v61 = vld [vmem:[%s0 + $0x18] sm:$0xf]
  %v62 = vld [vmem:[%s0 + $0x1c] sm:$0xf]
  %v63 = vld [vmem:[%s0 + $0x20] sm:$0xf]
  %v64 = vld [vmem:[%s0 + $0x24] sm:$0xf]
  %v65 = vld [vmem:[%s0 + $0x28] sm:$0xf]
  %v66 = vld [vmem:[%s0 + $0x2c] sm:$0xf]
  %v67 = vld [vmem:[%s0 + $0x30] sm:$0xf]
  %v68 = vld [vmem:[%s0 + $0x34] sm:$0xf]
  %v69 = vld [vmem:[%s0 + $0x38] sm:$0xf]
  %v70 = vld [vmem:[%s0 + $0x3c] sm:$0xf]
  %v71 = vld [vmem:[%s0 + $0x40] sm:$0xf]
  %v72 = vld [vmem:[%s0 + $0x44] sm:$0xf]
  %v73 = vld [vmem:[%s0 + $0x48] sm:$0xf]
  %v74 = vld [vmem:[%s0 + $0x4c] sm:$0xf]
  %v75 = vld [vmem:[%s0 + $0x50] sm:$0xf]
  %v76 = vld [vmem:[%s0 + $0x54] sm:$0xf]
  %v77 = vld [vmem:[%s0 + $0x58] sm:$0xf]
  %v78 = vld [vmem:[%s0 + $0x5c] sm:$0xf]
  %v79 = vld [vmem:[%s0 + $0x60] sm:$0xf]
  %v80 = vld [vmem:[%s0 + $0x64] sm:$0xf]
  %v81 = vld [vmem:[%s0 + $0x68] sm:$0xf]
  %v82 = vld [vmem:[%s0 + $0x6c] sm:$0xf]
  %v83 = vld [vmem:[%s0 + $0x70] sm:$0xf]
  %v84 = vld [vmem:[%s0 + $0x74] sm:$0xf]
  %v85 = vld [vmem:[%s0 + $0x78] sm:$0xf]
  %v86 = vld [vmem:[%s0 + $0x7c] sm:$0xf]
  %v87 = vld [vmem:[%s0 + $0x80] sm:$0xf]
  %v88 = vld [vmem:[%s0 + $0x84] sm:$0xf]
  %v89 = vld [vmem:[%s0 + $0x88] sm:$0xf]
  %v90 = vld [vmem:[%s0 + $0x8c] sm:$0xf]
  %v107 = vunpack.c.l.b16 %v39
  %v108 = vunpack.c.h.b16 %v39
  %v109 = vunpack.c.l.b16 %v40
  %v110 = vunpack.c.l.b16 %v41
  %v111 = vunpack.c.h.b16 %v41
  %v112 = vunpack.c.l.b16 %v42
  %v113 = vunpack.c.l.b16 %v43
  %v114 = vunpack.c.h.b16 %v43
  %v115 = vunpack.c.l.b16 %v44
  %v116 = vunpack.c.l.b16 %v45
  %v117 = vunpack.c.h.b16 %v45
  %v118 = vunpack.c.l.b16 %v46
  %v119 = vunpack.c.l.b16 %v47
  %v120 = vunpack.c.h.b16 %v47
  %v121 = vunpack.c.l.b16 %v48
  %v122 = vunpack.c.l.b16 %v49
  %v123 = vunpack.c.h.b16 %v49
  %v124 = vunpack.c.l.b16 %v50
  %v125 = vunpack.c.l.b16 %v51
  %v126 = vunpack.c.h.b16 %v51
  %v127 = vunpack.c.l.b16 %v52
  %v128 = vunpack.c.l.b16 %v53
  %v129 = vunpack.c.h.b16 %v53
  %v130 = vunpack.c.l.b16 %v54
  %v131 = vpack.c.b16 %v110, %v107
  %v132 = vpack.c.b16 %v111, %v108
  %v133 = vpack.c.b16 %v112, %v109
  %v134 = vpack.c.b16 %v116, %v113
  %v135 = vpack.c.b16 %v117, %v114
  %v136 = vpack.c.b16 %v118, %v115
  %v137 = vpack.c.b16 %v122, %v119
  %v138 = vpack.c.b16 %v123, %v120
  %v139 = vpack.c.b16 %v124, %v121
  %v140 = vpack.c.b16 %v128, %v125
  %v141 = vpack.c.b16 %v129, %v126
  %v142 = vpack.c.b16 %v130, %v127
  %v187 = vunpack.c.l.b16 %v55
  %v188 = vunpack.c.l.b16 %v56
  %v189 = vunpack.c.l.b16 %v57
  %v190 = vunpack.c.l.b16 %v58
  %v191 = vunpack.c.l.b16 %v59
  %v192 = vunpack.c.l.b16 %v60
  %v193 = vunpack.c.l.b16 %v61
  %v194 = vunpack.c.l.b16 %v62
  %v195 = vunpack.c.l.b16 %v63
  %v196 = vunpack.c.l.b16 %v64
  %v197 = vunpack.c.l.b16 %v65
  %v198 = vunpack.c.l.b16 %v66
  %v199 = vunpack.c.l.b16 %v67
  %v200 = vunpack.c.l.b16 %v68
  %v201 = vunpack.c.l.b16 %v69
  %v202 = vunpack.c.l.b16 %v70
  %v203 = vunpack.c.l.b16 %v71
  %v204 = vunpack.c.l.b16 %v72
  %v205 = vunpack.c.l.b16 %v73
  %v206 = vunpack.c.l.b16 %v74
  %v207 = vunpack.c.l.b16 %v75
  %v208 = vunpack.c.l.b16 %v76
  %v209 = vunpack.c.l.b16 %v77
  %v210 = vunpack.c.l.b16 %v78
  %v211 = vunpack.c.l.b16 %v79
  %v212 = vunpack.c.l.b16 %v80
  %v213 = vunpack.c.l.b16 %v81
  %v214 = vunpack.c.l.b16 %v82
  %v215 = vunpack.c.l.b16 %v83
  %v216 = vunpack.c.l.b16 %v84
  %v217 = vunpack.c.l.b16 %v85
  %v218 = vunpack.c.l.b16 %v86
  %v219 = vunpack.c.l.b16 %v87
  %v220 = vunpack.c.l.b16 %v88
  %v221 = vunpack.c.l.b16 %v89
  %v222 = vunpack.c.l.b16 %v90
  %v223 = vpack.c.b16 %v188, %v187
  %v224 = vpack.c.b16 %v190, %v189
  %v225 = vpack.c.b16 %v192, %v191
  %v226 = vpack.c.b16 %v194, %v193
  %v227 = vpack.c.b16 %v196, %v195
  %v228 = vpack.c.b16 %v198, %v197
  %v229 = vpack.c.b16 %v200, %v199
  %v230 = vpack.c.b16 %v202, %v201
  %v231 = vpack.c.b16 %v204, %v203
  %v232 = vpack.c.b16 %v206, %v205
  %v233 = vpack.c.b16 %v208, %v207
  %v234 = vpack.c.b16 %v210, %v209
  %v235 = vpack.c.b16 %v212, %v211
  %v236 = vpack.c.b16 %v214, %v213
  %v237 = vpack.c.b16 %v216, %v215
  %v238 = vpack.c.b16 %v218, %v217
  %v239 = vpack.c.b16 %v220, %v219
  %v240 = vpack.c.b16 %v222, %v221
  %vm259 = vcmask 261120
  %v261 = vsel %vm259, %v133, 0
  %v264 = vsel %vm259, %v136, 0
  %v267 = vsel %vm259, %v139, 0
  %v270 = vsel %vm259, %v142, 0
  %272 = vmatprep.subr.bf16.mxu0 0
  %273 = vmatpush1.bf16.msra.mxu0 %v230
  %274 = vmatprep.subr.bf16.mxu0 0
  %275 = vmatpush1.bf16.msra.mxu0 %v229
  %276 = vmatprep.subr.bf16.mxu0 0
  %277 = vmatpush1.bf16.msra.mxu0 %v228
  %278 = vmatprep.subr.bf16.mxu0 0
  %279 = vmatpush1.bf16.msra.mxu0 %v227
  %280 = vmatprep.subr.bf16.mxu0 0
  %281 = vmatpush1.bf16.msra.mxu0 %v226
  %282 = vmatprep.subr.bf16.mxu0 0
  %283 = vmatpush1.bf16.msra.mxu0 %v225
  %284 = vmatprep.subr.bf16.mxu0 0
  %285 = vmatpush1.bf16.msra.mxu0 %v224
  %286 = vmatprep.subr.bf16.mxu0 0
  %287 = vmatpush1.bf16.msra.mxu0 %v223
  %288 = vmatprep.subr.bf16.mxu0 0
  %289 = vmatpush2.bf16.msra.mxu0 %v238
  %290 = vmatprep.subr.bf16.mxu0 0
  %291 = vmatpush2.bf16.msra.mxu0 %v237
  %292 = vmatprep.subr.bf16.mxu0 0
  %293 = vmatpush2.bf16.msra.mxu0 %v236
  %294 = vmatprep.subr.bf16.mxu0 0
  %295 = vmatpush2.bf16.msra.mxu0 %v235
  %296 = vmatprep.subr.bf16.mxu0 0
  %297 = vmatpush2.bf16.msra.mxu0 %v234
  %298 = vmatprep.subr.bf16.mxu0 0
  %299 = vmatpush2.bf16.msra.mxu0 %v233
  %300 = vmatprep.subr.bf16.mxu0 0
  %301 = vmatpush2.bf16.msra.mxu0 %v232
  %302 = vmatprep.subr.bf16.mxu0 0
  %303 = vmatpush2.bf16.msra.mxu0 %v231
  %304 = vmatprep.mubr.bf16.mxu0 %v132
  %305 = vmatmul.mubr.bf16.gmra.mxu0 %v131
  %v306 = vpop.f32.mrf.mxu0
  %v307 = vadd.f32 0.0, %v306
  %v308 = vpop.f32.mrf.mxu0
  %v309 = vpop.f32.mrf.mxu0
  %v310 = vadd.f32 0.0, %v309
  %v311 = vpop.f32.mrf.mxu0
  %312 = vmatprep.mubr.bf16.mxu0 %v135
  %313 = vmatmul.mubr.bf16.gmra.mxu0 %v134
  %v314 = vpop.f32.mrf.mxu0
  %v315 = vadd.f32 0.0, %v314
  %v316 = vpop.f32.mrf.mxu0
  %v317 = vpop.f32.mrf.mxu0
  %v318 = vadd.f32 0.0, %v317
  %v319 = vpop.f32.mrf.mxu0
  %320 = vmatprep.mubr.bf16.mxu0 %v138
  %321 = vmatmul.mubr.bf16.gmra.mxu0 %v137
  %v322 = vpop.f32.mrf.mxu0
  %v323 = vadd.f32 0.0, %v322
  %v324 = vpop.f32.mrf.mxu0
  %v325 = vpop.f32.mrf.mxu0
  %v326 = vadd.f32 0.0, %v325
  %v327 = vpop.f32.mrf.mxu0
  %328 = vmatprep.mubr.bf16.mxu0 %v141
  %329 = vmatmul.mubr.bf16.gmra.mxu0 %v140
  %v330 = vpop.f32.mrf.mxu0
  %v331 = vadd.f32 0.0, %v330
  %v332 = vpop.f32.mrf.mxu0
  %v333 = vpop.f32.mrf.mxu0
  %v334 = vadd.f32 0.0, %v333
  %v335 = vpop.f32.mrf.mxu0
  %336 = vdwg.mxu0
  %337 = vmatprep.subr.bf16.mxu0 0
  %338 = vmatpush1.bf16.msra.mxu0 0
  %339 = vmatprep.subr.bf16.mxu0 0
  %340 = vmatpush1.bf16.msra.mxu0 0
  %341 = vmatprep.subr.bf16.mxu0 0
  %342 = vmatpush1.bf16.msra.mxu0 0
  %343 = vmatprep.subr.bf16.mxu0 0
  %344 = vmatpush1.bf16.msra.mxu0 0
  %345 = vmatprep.subr.bf16.mxu0 0
  %346 = vmatpush1.bf16.msra.mxu0 0
  %347 = vmatprep.subr.bf16.mxu0 0
  %348 = vmatpush1.bf16.msra.mxu0 0
  %349 = vmatprep.subr.bf16.mxu0 0
  %350 = vmatpush1.bf16.msra.mxu0 %v240
  %351 = vmatprep.subr.bf16.mxu0 0
  %352 = vmatpush1.bf16.msra.mxu0 %v239
  %353 = vmatprep.subr.bf16.mxu0 0
  %354 = vmatpush2.bf16.msra.mxu0 0
  %355 = vmatprep.subr.bf16.mxu0 0
  %356 = vmatpush2.bf16.msra.mxu0 0
  %357 = vmatprep.subr.bf16.mxu0 0
  %358 = vmatpush2.bf16.msra.mxu0 0
  %359 = vmatprep.subr.bf16.mxu0 0
  %360 = vmatpush2.bf16.msra.mxu0 0
  %361 = vmatprep.subr.bf16.mxu0 0
  %362 = vmatpush2.bf16.msra.mxu0 0
  %363 = vmatprep.subr.bf16.mxu0 0
  %364 = vmatpush2.bf16.msra.mxu0 0
  %365 = vmatprep.subr.bf16.mxu0 0
  %366 = vmatpush2.bf16.msra.mxu0 0
  %367 = vmatprep.subr.bf16.mxu0 0
  %368 = vmatpush2.bf16.msra.mxu0 0
  %369 = vmatprep.mubr.bf16.mxu0 0
  %370 = vmatmul.mubr.bf16.gmra.mxu0 %v261
  %v371 = vpop.f32.mrf.mxu0
  %v372 = vadd.f32 %v307, %v371
  %v373 = vpop.f32.mrf.mxu0
  %v374 = vpop.f32.mrf.mxu0
  %v375 = vadd.f32 %v310, %v374
  %v376 = vpop.f32.mrf.mxu0
  %377 = vmatprep.mubr.bf16.mxu0 0
  %378 = vmatmul.mubr.bf16.gmra.mxu0 %v264
  %v379 = vpop.f32.mrf.mxu0
  %v380 = vadd.f32 %v315, %v379
  %v381 = vpop.f32.mrf.mxu0
  %v382 = vpop.f32.mrf.mxu0
  %v383 = vadd.f32 %v318, %v382
  %v384 = vpop.f32.mrf.mxu0
  %385 = vmatprep.mubr.bf16.mxu0 0
  %386 = vmatmul.mubr.bf16.gmra.mxu0 %v267
  %v387 = vpop.f32.mrf.mxu0
  %v388 = vadd.f32 %v323, %v387
  %v389 = vpop.f32.mrf.mxu0
  %v390 = vpop.f32.mrf.mxu0
  %v391 = vadd.f32 %v326, %v390
  %v392 = vpop.f32.mrf.mxu0
  %393 = vmatprep.mubr.bf16.mxu0 0
  %394 = vmatmul.mubr.bf16.gmra.mxu0 %v270
  %v395 = vpop.f32.mrf.mxu0
  %v396 = vadd.f32 %v331, %v395
  %v397 = vpop.f32.mrf.mxu0
  %v398 = vpop.f32.mrf.mxu0
  %v399 = vadd.f32 %v334, %v398
  %v400 = vpop.f32.mrf.mxu0
  %401 = vdwg.mxu0
  %s402 = smul.u32 0, 64
  %s403 = scalar_lea.vmem [#allocation2], %s402
  %404 = vst [vmem:[%s403] sm:$0xff] %v372
  %405 = vst [vmem:[%s403 + $0x8] sm:$0xff] %v375
  %406 = vst [vmem:[%s403 + $0x10] sm:$0xff] %v380
  %407 = vst [vmem:[%s403 + $0x18] sm:$0xff] %v383
  %408 = vst [vmem:[%s403 + $0x20] sm:$0xff] %v388
  %409 = vst [vmem:[%s403 + $0x28] sm:$0xff] %v391
  %410 = vst [vmem:[%s403 + $0x30] sm:$0xff] %v396
  %411 = vst [vmem:[%s403 + $0x38] sm:$0xff] %v399
  %v412 = vld [vmem:[#allocation3] sm:$0xff]
  %v413 = vld [vmem:[#allocation3 + $0x8] sm:$0xff]
  %v414 = vld [vmem:[#allocation3 + $0x10] sm:$0xff]
  %v415 = vld [vmem:[#allocation3 + $0x18] sm:$0xff]
  %v416 = vld [vmem:[#allocation3 + $0x20] sm:$0xff]
  %v417 = vld [vmem:[#allocation3 + $0x28] sm:$0xff]
  %v418 = vld [vmem:[#allocation3 + $0x30] sm:$0xff]
  %v419 = vld [vmem:[#allocation3 + $0x38] sm:$0xff]
  %420 = vadd.xlane.f32.xlu0 %v372
  %v421 = vpop.xlane.xlu0 %420
  %422 = vadd.xlane.f32.xlu0 %v375
  %v423 = vpop.xlane.xlu0 %422
  %424 = vadd.xlane.f32.xlu0 %v380
  %v425 = vpop.xlane.xlu0 %424
  %426 = vadd.xlane.f32.xlu0 %v383
  %v427 = vpop.xlane.xlu0 %426
  %428 = vadd.xlane.f32.xlu0 %v388
  %v429 = vpop.xlane.xlu0 %428
  %430 = vadd.xlane.f32.xlu0 %v391
  %v431 = vpop.xlane.xlu0 %430
  %432 = vadd.xlane.f32.xlu0 %v396
  %v433 = vpop.xlane.xlu0 %432
  %434 = vadd.xlane.f32.xlu0 %v399
  %v435 = vpop.xlane.xlu0 %434
  %v436 = vadd.f32 %v412, %v421
  %v437 = vadd.f32 %v413, %v423
  %v438 = vadd.f32 %v414, %v425
  %v439 = vadd.f32 %v415, %v427
  %v440 = vadd.f32 %v416, %v429
  %v441 = vadd.f32 %v417, %v431
  %v442 = vadd.f32 %v418, %v433
  %v443 = vadd.f32 %v419, %v435
  %vm444 = vcmask 7168
  %445 = vst.msk [vmem:[#allocation3] sm:$0xff] %vm444, %v436
  %446 = vst.msk [vmem:[#allocation3 + $0x8] sm:$0xff] %vm444, %v437
  %447 = vst.msk [vmem:[#allocation3 + $0x10] sm:$0xff] %vm444, %v438
  %448 = vst.msk [vmem:[#allocation3 + $0x18] sm:$0xff] %vm444, %v439
  %449 = vst.msk [vmem:[#allocation3 + $0x20] sm:$0xff] %vm444, %v440
  %450 = vst.msk [vmem:[#allocation3 + $0x28] sm:$0xff] %vm444, %v441
  %451 = vst.msk [vmem:[#allocation3 + $0x30] sm:$0xff] %vm444, %v442
  %452 = vst.msk [vmem:[#allocation3 + $0x38] sm:$0xff] %vm444, %v443
  %v453 = vld [vmem:[#allocation4] sm:$0xff]
  %v454 = vld [vmem:[#allocation4 + $0x8] sm:$0xff]
  %v455 = vld [vmem:[#allocation4 + $0x10] sm:$0xff]
  %v456 = vld [vmem:[#allocation4 + $0x18] sm:$0xff]
  %v457 = vld [vmem:[#allocation4 + $0x20] sm:$0xff]
  %v458 = vld [vmem:[#allocation4 + $0x28] sm:$0xff]
  %v459 = vld [vmem:[#allocation4 + $0x30] sm:$0xff]
  %v460 = vld [vmem:[#allocation4 + $0x38] sm:$0xff]
  %v461 = vmul.f32 %v372, %v372
  %v462 = vmul.f32 %v375, %v375
  %v463 = vmul.f32 %v380, %v380
  %v464 = vmul.f32 %v383, %v383
  %v465 = vmul.f32 %v388, %v388
  %v466 = vmul.f32 %v391, %v391
  %v467 = vmul.f32 %v396, %v396
  %v468 = vmul.f32 %v399, %v399
  %469 = vadd.xlane.f32.xlu0 %v461
  %v470 = vpop.xlane.xlu0 %469
  %471 = vadd.xlane.f32.xlu0 %v462
  %v472 = vpop.xlane.xlu0 %471
  %473 = vadd.xlane.f32.xlu0 %v463
  %v474 = vpop.xlane.xlu0 %473
  %475 = vadd.xlane.f32.xlu0 %v464
  %v476 = vpop.xlane.xlu0 %475
  %477 = vadd.xlane.f32.xlu0 %v465
  %v478 = vpop.xlane.xlu0 %477
  %479 = vadd.xlane.f32.xlu0 %v466
  %v480 = vpop.xlane.xlu0 %479
  %481 = vadd.xlane.f32.xlu0 %v467
  %v482 = vpop.xlane.xlu0 %481
  %483 = vadd.xlane.f32.xlu0 %v468
  %v484 = vpop.xlane.xlu0 %483
  %v485 = vadd.f32 %v453, %v470
  %v486 = vadd.f32 %v454, %v472
  %v487 = vadd.f32 %v455, %v474
  %v488 = vadd.f32 %v456, %v476
  %v489 = vadd.f32 %v457, %v478
  %v490 = vadd.f32 %v458, %v480
  %v491 = vadd.f32 %v459, %v482
  %v492 = vadd.f32 %v460, %v484
  %493 = vst.msk [vmem:[#allocation4] sm:$0xff] %vm444, %v485
  %494 = vst.msk [vmem:[#allocation4 + $0x8] sm:$0xff] %vm444, %v486
  %495 = vst.msk [vmem:[#allocation4 + $0x10] sm:$0xff] %vm444, %v487
  %496 = vst.msk [vmem:[#allocation4 + $0x18] sm:$0xff] %vm444, %v488
  %497 = vst.msk [vmem:[#allocation4 + $0x20] sm:$0xff] %vm444, %v489
  %498 = vst.msk [vmem:[#allocation4 + $0x28] sm:$0xff] %vm444, %v490
  %499 = vst.msk [vmem:[#allocation4 + $0x30] sm:$0xff] %vm444, %v491
  %500 = vst.msk [vmem:[#allocation4 + $0x38] sm:$0xff] %vm444, %v492
  // Predicated region
  $region22: #{resnet_forward.23} parent=0 // pred_check
    %p501 = pneg %p18
  $region23: #{resnet_forward.23} parent=0 // pred_check_branch
    %503 = sbr.rel (%p501) target = $region25
  $region24: #{resnet_forward.23} parent=0 // pred_region
    %v504 = vld [vmem:[#allocation3] sm:$0xff]
    %v505 = vld [vmem:[#allocation3 + $0x8] sm:$0xff]
    %v506 = vld [vmem:[#allocation3 + $0x10] sm:$0xff]
    %v507 = vld [vmem:[#allocation3 + $0x18] sm:$0xff]
    %v508 = vld [vmem:[#allocation3 + $0x20] sm:$0xff]
    %v509 = vld [vmem:[#allocation3 + $0x28] sm:$0xff]
    %v510 = vld [vmem:[#allocation3 + $0x30] sm:$0xff]
    %v511 = vld [vmem:[#allocation3 + $0x38] sm:$0xff]
    %v512 = vmul.f32 %v504, 0.125
    %v513 = vmul.f32 %v505, 0.125
    %v514 = vmul.f32 %v506, 0.125
    %v515 = vmul.f32 %v507, 0.125
    %v516 = vmul.f32 %v508, 0.125
    %v517 = vmul.f32 %v509, 0.125
    %v518 = vmul.f32 %v510, 0.125
    %v519 = vmul.f32 %v511, 0.125
    %v520 = vld [vmem:[#allocation4] sm:$0xff]
    %v521 = vld [vmem:[#allocation4 + $0x8] sm:$0xff]
    %v522 = vld [vmem:[#allocation4 + $0x10] sm:$0xff]
    %v523 = vld [vmem:[#allocation4 + $0x18] sm:$0xff]
    %v524 = vld [vmem:[#allocation4 + $0x20] sm:$0xff]
    %v525 = vld [vmem:[#allocation4 + $0x28] sm:$0xff]
    %v526 = vld [vmem:[#allocation4 + $0x30] sm:$0xff]
    %v527 = vld [vmem:[#allocation4 + $0x38] sm:$0xff]
    %v528 = vmul.f32 %v520, 0.125
    %v529 = vmul.f32 %v521, 0.125
    %v530 = vmul.f32 %v522, 0.125
    %v531 = vmul.f32 %v523, 0.125
    %v532 = vmul.f32 %v524, 0.125
    %v533 = vmul.f32 %v525, 0.125
    %v534 = vmul.f32 %v526, 0.125
    %v535 = vmul.f32 %v527, 0.125
    %v536 = vmul.f32 %v512, %v512
    %v537 = vmul.f32 %v513, %v513
    %v538 = vmul.f32 %v514, %v514
    %v539 = vmul.f32 %v515, %v515
    %v540 = vmul.f32 %v516, %v516
    %v541 = vmul.f32 %v517, %v517
    %v542 = vmul.f32 %v518, %v518
    %v543 = vmul.f32 %v519, %v519
    %v544 = vsub.f32 %v528, %v536
    %v545 = vsub.f32 %v529, %v537
    %v546 = vsub.f32 %v530, %v538
    %v547 = vsub.f32 %v531, %v539
    %v548 = vsub.f32 %v532, %v540
    %v549 = vsub.f32 %v533, %v541
    %v550 = vsub.f32 %v534, %v542
    %v551 = vsub.f32 %v535, %v543
    %v552 = vmax.f32 %v544, 0.0
    %v553 = vmax.f32 %v545, 0.0
    %v554 = vmax.f32 %v546, 0.0
    %v555 = vmax.f32 %v547, 0.0
    %v556 = vmax.f32 %v548, 0.0
    %v557 = vmax.f32 %v549, 0.0
    %v558 = vmax.f32 %v550, 0.0
    %v559 = vmax.f32 %v551, 0.0
    %v560 = vld [vmem:[%s2] sm:$0xff]
    %v561 = vld [vmem:[%s2 + $0x8] sm:$0xff]
    %v562 = vld [vmem:[%s2 + $0x10] sm:$0xff]
    %v563 = vld [vmem:[%s2 + $0x18] sm:$0xff]
    %v564 = vld [vmem:[%s2 + $0x20] sm:$0xff]
    %v565 = vld [vmem:[%s2 + $0x28] sm:$0xff]
    %v566 = vld [vmem:[%s2 + $0x30] sm:$0xff]
    %v567 = vld [vmem:[%s2 + $0x38] sm:$0xff]
    %v568 = vadd.f32 %v552, 1e-05
    %v569 = vadd.f32 %v553, 1e-05
    %v570 = vadd.f32 %v554, 1e-05
    %v571 = vadd.f32 %v555, 1e-05
    %v572 = vadd.f32 %v556, 1e-05
    %v573 = vadd.f32 %v557, 1e-05
    %v574 = vadd.f32 %v558, 1e-05
    %v575 = vadd.f32 %v559, 1e-05
    %v576 = vrsqrt.pop %v568
    %v577 = vrsqrt.pop %v569
    %v578 = vrsqrt.pop %v570
    %v579 = vrsqrt.pop %v571
    %v580 = vrsqrt.pop %v572
    %v581 = vrsqrt.pop %v573
    %v582 = vrsqrt.pop %v574
    %v583 = vrsqrt.pop %v575
    %v584 = vmul.f32 %v560, %v576
    %v585 = vmul.f32 %v561, %v577
    %v586 = vmul.f32 %v562, %v578
    %v587 = vmul.f32 %v563, %v579
    %v588 = vmul.f32 %v564, %v580
    %v589 = vmul.f32 %v565, %v581
    %v590 = vmul.f32 %v566, %v582
    %v591 = vmul.f32 %v567, %v583
    %v592 = vld [vmem:[%s3] sm:$0xff]
    %v593 = vld [vmem:[%s3 + $0x8] sm:$0xff]
    %v594 = vld [vmem:[%s3 + $0x10] sm:$0xff]
    %v595 = vld [vmem:[%s3 + $0x18] sm:$0xff]
    %v596 = vld [vmem:[%s3 + $0x20] sm:$0xff]
    %v597 = vld [vmem:[%s3 + $0x28] sm:$0xff]
    %v598 = vld [vmem:[%s3 + $0x30] sm:$0xff]
    %v599 = vld [vmem:[%s3 + $0x38] sm:$0xff]
    %v600 = vmul.f32 %v512, %v584
    %v601 = vmul.f32 %v513, %v585
    %v602 = vmul.f32 %v514, %v586
    %v603 = vmul.f32 %v515, %v587
    %v604 = vmul.f32 %v516, %v588
    %v605 = vmul.f32 %v517, %v589
    %v606 = vmul.f32 %v518, %v590
    %v607 = vmul.f32 %v519, %v591
    %v608 = vsub.f32 %v592, %v600
    %v609 = vsub.f32 %v593, %v601
    %v610 = vsub.f32 %v594, %v602
    %v611 = vsub.f32 %v595, %v603
    %v612 = vsub.f32 %v596, %v604
    %v613 = vsub.f32 %v597, %v605
    %v614 = vsub.f32 %v598, %v606
    %v615 = vsub.f32 %v599, %v607
    %v616 = vld [vmem:[#allocation2] sm:$0xff]
    %v617 = vld [vmem:[#allocation2 + $0x8] sm:$0xff]
    %v618 = vld [vmem:[#allocation2 + $0x10] sm:$0xff]
    %v619 = vld [vmem:[#allocation2 + $0x18] sm:$0xff]
    %v620 = vld [vmem:[#allocation2 + $0x20] sm:$0xff]
    %v621 = vld [vmem:[#allocation2 + $0x28] sm:$0xff]
    %v622 = vld [vmem:[#allocation2 + $0x30] sm:$0xff]
    %v623 = vld [vmem:[#allocation2 + $0x38] sm:$0xff]
    %625 = vset.pattern.permute.xlu0 0
    %626 = vperm.xlu0 %625, %v584
    %v627 = vpop.permute.xlu0 %626
    %630 = vset.pattern.permute.xlu0 0
    %631 = vperm.xlu0 %630, %v585
    %v632 = vpop.permute.xlu0 %631
    %635 = vset.pattern.permute.xlu0 0
    %636 = vperm.xlu0 %635, %v586
    %v637 = vpop.permute.xlu0 %636
    %640 = vset.pattern.permute.xlu0 0
    %641 = vperm.xlu0 %640, %v587
    %v642 = vpop.permute.xlu0 %641
    %645 = vset.pattern.permute.xlu0 0
    %646 = vperm.xlu0 %645, %v588
    %v647 = vpop.permute.xlu0 %646
    %650 = vset.pattern.permute.xlu0 0
    %651 = vperm.xlu0 %650, %v589
    %v652 = vpop.permute.xlu0 %651
    %655 = vset.pattern.permute.xlu0 0
    %656 = vperm.xlu0 %655, %v590
    %v657 = vpop.permute.xlu0 %656
    %660 = vset.pattern.permute.xlu0 0
    %661 = vperm.xlu0 %660, %v591
    %v662 = vpop.permute.xlu0 %661
    %v664 = vmul.f32 %v616, %v627
    %v665 = vmul.f32 %v617, %v632
    %v666 = vmul.f32 %v618, %v637
    %v667 = vmul.f32 %v619, %v642
    %v668 = vmul.f32 %v620, %v647
    %v669 = vmul.f32 %v621, %v652
    %v670 = vmul.f32 %v622, %v657
    %v671 = vmul.f32 %v623, %v662
    %673 = vset.pattern.permute.xlu0 0
    %674 = vperm.xlu0 %673, %v608
    %v675 = vpop.permute.xlu0 %674
    %678 = vset.pattern.permute.xlu0 0
    %679 = vperm.xlu0 %678, %v609
    %v680 = vpop.permute.xlu0 %679
    %683 = vset.pattern.permute.xlu0 0
    %684 = vperm.xlu0 %683, %v610
    %v685 = vpop.permute.xlu0 %684
    %688 = vset.pattern.permute.xlu0 0
    %689 = vperm.xlu0 %688, %v611
    %v690 = vpop.permute.xlu0 %689
    %693 = vset.pattern.permute.xlu0 0
    %694 = vperm.xlu0 %693, %v612
    %v695 = vpop.permute.xlu0 %694
    %698 = vset.pattern.permute.xlu0 0
    %699 = vperm.xlu0 %698, %v613
    %v700 = vpop.permute.xlu0 %699
    %703 = vset.pattern.permute.xlu0 0
    %704 = vperm.xlu0 %703, %v614
    %v705 = vpop.permute.xlu0 %704
    %708 = vset.pattern.permute.xlu0 0
    %709 = vperm.xlu0 %708, %v615
    %v710 = vpop.permute.xlu0 %709
    %v712 = vadd.f32 %v664, %v675
    %v713 = vadd.f32 %v665, %v680
    %v714 = vadd.f32 %v666, %v685
    %v715 = vadd.f32 %v667, %v690
    %v716 = vadd.f32 %v668, %v695
    %v717 = vadd.f32 %v669, %v700
    %v718 = vadd.f32 %v670, %v705
    %v719 = vadd.f32 %v671, %v710
    %v720 = vmax.f32 %v712, 0.0
    %v721 = vmax.f32 %v713, 0.0
    %v722 = vmax.f32 %v714, 0.0
    %v723 = vmax.f32 %v715, 0.0
    %v724 = vmax.f32 %v716, 0.0
    %v725 = vmax.f32 %v717, 0.0
    %v726 = vmax.f32 %v718, 0.0
    %v727 = vmax.f32 %v719, 0.0
    %v728 = vpack.c.bf16 %v721, %v720
    %v729 = vpack.c.bf16 %v723, %v722
    %v730 = vpack.c.bf16 %v725, %v724
    %v731 = vpack.c.bf16 %v727, %v726
    %v736 = vunpack.c.l.b16 %v728
    %v737 = vunpack.c.h.b16 %v728
    %v738 = vunpack.c.l.b16 %v729
    %v739 = vunpack.c.h.b16 %v729
    %v740 = vunpack.c.l.b16 %v730
    %v741 = vunpack.c.h.b16 %v730
    %v742 = vunpack.c.l.b16 %v731
    %v743 = vunpack.c.h.b16 %v731
    %v744 = vpack.c.b16 %v736, %v736
    %v745 = vpack.c.b16 %v737, %v737
    %v746 = vpack.c.b16 %v738, %v738
    %v747 = vpack.c.b16 %v739, %v739
    %v748 = vpack.c.b16 %v740, %v740
    %v749 = vpack.c.b16 %v741, %v741
    %v750 = vpack.c.b16 %v742, %v742
    %v751 = vpack.c.b16 %v743, %v743
    %760 = vst [vmem:[%s4] sm:$0xf] %v744
    %761 = vst [vmem:[%s4 + $0x4] sm:$0xf] %v745
    %762 = vst [vmem:[%s4 + $0x8] sm:$0xf] %v746
    %763 = vst [vmem:[%s4 + $0xc] sm:$0xf] %v747
    %764 = vst [vmem:[%s4 + $0x10] sm:$0xf] %v748
    %765 = vst [vmem:[%s4 + $0x14] sm:$0xf] %v749
    %766 = vst [vmem:[%s4 + $0x18] sm:$0xf] %v750
    %767 = vst [vmem:[%s4 + $0x1c] sm:$0xf] %v751
  $region25: #{resnet_forward.23} parent=0 // pred_fallthru
    _
  // Predicated region
  $region26: #{resnet_forward.23} parent=0 // pred_check
    _
  $region27: #{resnet_forward.23} parent=0 // pred_check_branch
    %769 = sbr.rel (0) target = $region29
  $region28: #{resnet_forward.23} parent=0 // pred_region
    _
  $region29: #{resnet_forward.23} parent=0 // pred_fallthru
    _
  // Predicated region
  $region30: #{resnet_forward.23} parent=0 // pred_check
    _
  $region31: #{resnet_forward.23} parent=0 // pred_check_branch
    %771 = sbr.rel (0) target = $region33
  $region32: #{resnet_forward.23} parent=0 // pred_region
    _
  $region33: #{resnet_forward.23} parent=0 // pred_fallthru
    _

// kernel: resnet_forward.24
$region0: #{resnet_forward.24}
  #allocation0 [shape = 'u32[]', space=smem, size = 0x4, offset = 0x4, fixed_abs, tag = 'smem constant byte address 0x4 - core index']
  #allocation1 [shape = 'u32[144,128]{1,0:T(1,128)}', space=vmem, size = 0x12000, scoped, tag = 'internal scratch']
  #allocation2 [shape = 'f32[1,64,128]{2,1,0:T(8,128)}', space=vmem, size = 0x8000, scoped, tag = 'scratch operand']
  #allocation3 [shape = 'f32[64,1]{1,0:T(8,128)}', space=vmem, size = 0x8000, scoped, tag = 'scratch operand']
  #allocation4 [shape = 'f32[64,1]{1,0:T(8,128)}', space=vmem, size = 0x8000, scoped, tag = 'scratch operand']
  %s0 = inlined_call_operand.vmem [shape: bf16[32,128], index: 0, kind: input, shape index: {}]
  %s1 = inlined_call_operand.vmem [shape: bf16[64,32], index: 1, kind: input, shape index: {}]
  %s2 = inlined_call_operand.vmem [shape: f32[64,1], index: 2, kind: input, shape index: {}]
  %s3 = inlined_call_operand.vmem [shape: f32[64,1], index: 3, kind: input, shape index: {}]
  %s4 = inlined_call_operand.vmem [shape: bf16[64,128], index: 4, kind: output, shape index: {}]
  %s5 = sld [smem:[#allocation0]]
  $region34: #{resnet_forward.24} parent=0
    _
  %s7 = ssub.s32 1, %s5
  %s8 = scalar_select 0, %s7, %s5
  // Predicated region
  $region2: #{resnet_forward.24} parent=0 // pred_check
    _
  $region3: #{resnet_forward.24} parent=0 // pred_check_branch
    %10 = sbr.rel (0) target = $region5
  $region4: #{resnet_forward.24} parent=0 // pred_region
    _
  $region5: #{resnet_forward.24} parent=0 // pred_fallthru
    _
  // Predicated region
  $region6: #{resnet_forward.24} parent=0 // pred_check
    _
  $region7: #{resnet_forward.24} parent=0 // pred_check_branch
    %12 = sbr.rel (0) target = $region9
  $region8: #{resnet_forward.24} parent=0 // pred_region
    _
  $region9: #{resnet_forward.24} parent=0 // pred_fallthru
    _
  // Predicated region
  $region10: #{resnet_forward.24} parent=0 // pred_check
    _
  $region11: #{resnet_forward.24} parent=0 // pred_check_branch
    %14 = sbr.rel (0) target = $region13
  $region12: #{resnet_forward.24} parent=0 // pred_region
    _
  $region13: #{resnet_forward.24} parent=0 // pred_fallthru
    _
  // Predicated region
  $region14: #{resnet_forward.24} parent=0 // pred_check
    _
  $region15: #{resnet_forward.24} parent=0 // pred_check_branch
    %16 = sbr.rel (0) target = $region17
  $region16: #{resnet_forward.24} parent=0 // pred_region
    _
  $region17: #{resnet_forward.24} parent=0 // pred_fallthru
    _
  %p18 = scmp.eq.s32.totalorder 0, 0
  // Predicated region
  $region18: #{resnet_forward.24} parent=0 // pred_check
    %p19 = pneg %p18
  $region19: #{resnet_forward.24} parent=0 // pred_check_branch
    %21 = sbr.rel (%p19) target = $region21
  $region20: #{resnet_forward.24} parent=0 // pred_region
    %vm22 = vcmask 7168
    %23 = vst.msk [vmem:[#allocation3] sm:$0xff] %vm22, 0.0
    %24 = vst.msk [vmem:[#allocation3 + $0x8] sm:$0xff] %vm22, 0.0
    %25 = vst.msk [vmem:[#allocation3 + $0x10] sm:$0xff] %vm22, 0.0
    %26 = vst.msk [vmem:[#allocation3 + $0x18] sm:$0xff] %vm22, 0.0
    %27 = vst.msk [vmem:[#allocation3 + $0x20] sm:$0xff] %vm22, 0.0
    %28 = vst.msk [vmem:[#allocation3 + $0x28] sm:$0xff] %vm22, 0.0
    %29 = vst.msk [vmem:[#allocation3 + $0x30] sm:$0xff] %vm22, 0.0
    %30 = vst.msk [vmem:[#allocation3 + $0x38] sm:$0xff] %vm22, 0.0
    %31 = vst.msk [vmem:[#allocation4] sm:$0xff] %vm22, 0.0
    %32 = vst.msk [vmem:[#allocation4 + $0x8] sm:$0xff] %vm22, 0.0
    %33 = vst.msk [vmem:[#allocation4 + $0x10] sm:$0xff] %vm22, 0.0
    %34 = vst.msk [vmem:[#allocation4 + $0x18] sm:$0xff] %vm22, 0.0
    %35 = vst.msk [vmem:[#allocation4 + $0x20] sm:$0xff] %vm22, 0.0
    %36 = vst.msk [vmem:[#allocation4 + $0x28] sm:$0xff] %vm22, 0.0
    %37 = vst.msk [vmem:[#allocation4 + $0x30] sm:$0xff] %vm22, 0.0
    %38 = vst.msk [vmem:[#allocation4 + $0x38] sm:$0xff] %vm22, 0.0
  $region21: #{resnet_forward.24} parent=0 // pred_fallthru
    _
  %v39 = vld [vmem:[%s1] sm:$0xf]
  %v40 = vld [vmem:[%s1 + $0x4] sm:$0xf]
  %v41 = vld [vmem:[%s1 + $0x8] sm:$0xf]
  %v42 = vld [vmem:[%s1 + $0xc] sm:$0xf]
  %v43 = vld [vmem:[%s1 + $0x10] sm:$0xf]
  %v44 = vld [vmem:[%s1 + $0x14] sm:$0xf]
  %v45 = vld [vmem:[%s1 + $0x18] sm:$0xf]
  %v46 = vld [vmem:[%s1 + $0x1c] sm:$0xf]
  %v47 = vld [vmem:[%s0] sm:$0xf]
  %v48 = vld [vmem:[%s0 + $0x4] sm:$0xf]
  %v49 = vld [vmem:[%s0 + $0x8] sm:$0xf]
  %v50 = vld [vmem:[%s0 + $0xc] sm:$0xf]
  %v59 = vunpack.c.l.b16 %v39
  %v60 = vunpack.c.l.b16 %v40
  %v61 = vunpack.c.l.b16 %v41
  %v62 = vunpack.c.l.b16 %v42
  %v63 = vunpack.c.l.b16 %v43
  %v64 = vunpack.c.l.b16 %v44
  %v65 = vunpack.c.l.b16 %v45
  %v66 = vunpack.c.l.b16 %v46
  %v67 = vpack.c.b16 %v60, %v59
  %v68 = vpack.c.b16 %v62, %v61
  %v69 = vpack.c.b16 %v64, %v63
  %v70 = vpack.c.b16 %v66, %v65
  %v75 = vunpack.c.l.b16 %v47
  %v76 = vunpack.c.l.b16 %v48
  %v77 = vunpack.c.l.b16 %v49
  %v78 = vunpack.c.l.b16 %v50
  %v79 = vpack.c.b16 %v76, %v75
  %v80 = vpack.c.b16 %v78, %v77
  %vm83 = vcmask 261120
  %v85 = vsel %vm83, %v67, 0
  %v88 = vsel %vm83, %v68, 0
  %v91 = vsel %vm83, %v69, 0
  %v94 = vsel %vm83, %v70, 0
  %96 = vmatprep.subr.bf16.mxu0 0
  %97 = vmatpush1.bf16.msra.mxu0 0
  %98 = vmatprep.subr.bf16.mxu0 0
  %99 = vmatpush1.bf16.msra.mxu0 0
  %100 = vmatprep.subr.bf16.mxu0 0
  %101 = vmatpush1.bf16.msra.mxu0 0
  %102 = vmatprep.subr.bf16.mxu0 0
  %103 = vmatpush1.bf16.msra.mxu0 0
  %104 = vmatprep.subr.bf16.mxu0 0
  %105 = vmatpush1.bf16.msra.mxu0 0
  %106 = vmatprep.subr.bf16.mxu0 0
  %107 = vmatpush1.bf16.msra.mxu0 0
  %108 = vmatprep.subr.bf16.mxu0 0
  %109 = vmatpush1.bf16.msra.mxu0 %v80
  %110 = vmatprep.subr.bf16.mxu0 0
  %111 = vmatpush1.bf16.msra.mxu0 %v79
  %112 = vmatprep.subr.bf16.mxu0 0
  %113 = vmatpush2.bf16.msra.mxu0 0
  %114 = vmatprep.subr.bf16.mxu0 0
  %115 = vmatpush2.bf16.msra.mxu0 0
  %116 = vmatprep.subr.bf16.mxu0 0
  %117 = vmatpush2.bf16.msra.mxu0 0
  %118 = vmatprep.subr.bf16.mxu0 0
  %119 = vmatpush2.bf16.msra.mxu0 0
  %120 = vmatprep.subr.bf16.mxu0 0
  %121 = vmatpush2.bf16.msra.mxu0 0
  %122 = vmatprep.subr.bf16.mxu0 0
  %123 = vmatpush2.bf16.msra.mxu0 0
  %124 = vmatprep.subr.bf16.mxu0 0
  %125 = vmatpush2.bf16.msra.mxu0 0
  %126 = vmatprep.subr.bf16.mxu0 0
  %127 = vmatpush2.bf16.msra.mxu0 0
  %128 = vmatprep.mubr.bf16.mxu0 0
  %129 = vmatmul.mubr.bf16.gmra.mxu0 %v85
  %v130 = vpop.f32.mrf.mxu0
  %v131 = vadd.f32 0.0, %v130
  %v132 = vpop.f32.mrf.mxu0
  %v133 = vpop.f32.mrf.mxu0
  %v134 = vadd.f32 0.0, %v133
  %v135 = vpop.f32.mrf.mxu0
  %136 = vmatprep.mubr.bf16.mxu0 0
  %137 = vmatmul.mubr.bf16.gmra.mxu0 %v88
  %v138 = vpop.f32.mrf.mxu0
  %v139 = vadd.f32 0.0, %v138
  %v140 = vpop.f32.mrf.mxu0
  %v141 = vpop.f32.mrf.mxu0
  %v142 = vadd.f32 0.0, %v141
  %v143 = vpop.f32.mrf.mxu0
  %144 = vmatprep.mubr.bf16.mxu0 0
  %145 = vmatmul.mubr.bf16.gmra.mxu0 %v91
  %v146 = vpop.f32.mrf.mxu0
  %v147 = vadd.f32 0.0, %v146
  %v148 = vpop.f32.mrf.mxu0
  %v149 = vpop.f32.mrf.mxu0
  %v150 = vadd.f32 0.0, %v149
  %v151 = vpop.f32.mrf.mxu0
  %152 = vmatprep.mubr.bf16.mxu0 0
  %153 = vmatmul.mubr.bf16.gmra.mxu0 %v94
  %v154 = vpop.f32.mrf.mxu0
  %v155 = vadd.f32 0.0, %v154
  %v156 = vpop.f32.mrf.mxu0
  %v157 = vpop.f32.mrf.mxu0
  %v158 = vadd.f32 0.0, %v157
  %v159 = vpop.f32.mrf.mxu0
  %160 = vdwg.mxu0
  %s161 = smul.u32 0, 64
  %s162 = scalar_lea.vmem [#allocation2], %s161
  %163 = vst [vmem:[%s162] sm:$0xff] %v131
  %164 = vst [vmem:[%s162 + $0x8] sm:$0xff] %v134
  %165 = vst [vmem:[%s162 + $0x10] sm:$0xff] %v139
  %166 = vst [vmem:[%s162 + $0x18] sm:$0xff] %v142
  %167 = vst [vmem:[%s162 + $0x20] sm:$0xff] %v147
  %168 = vst [vmem:[%s162 + $0x28] sm:$0xff] %v150
  %169 = vst [vmem:[%s162 + $0x30] sm:$0xff] %v155
  %170 = vst [vmem:[%s162 + $0x38] sm:$0xff] %v158
  %v171 = vld [vmem:[#allocation3] sm:$0xff]
  %v172 = vld [vmem:[#allocation3 + $0x8] sm:$0xff]
  %v173 = vld [vmem:[#allocation3 + $0x10] sm:$0xff]
  %v174 = vld [vmem:[#allocation3 + $0x18] sm:$0xff]
  %v175 = vld [vmem:[#allocation3 + $0x20] sm:$0xff]
  %v176 = vld [vmem:[#allocation3 + $0x28] sm:$0xff]
  %v177 = vld [vmem:[#allocation3 + $0x30] sm:$0xff]
  %v178 = vld [vmem:[#allocation3 + $0x38] sm:$0xff]
  %179 = vadd.xlane.f32.xlu0 %v131
  %v180 = vpop.xlane.xlu0 %179
  %181 = vadd.xlane.f32.xlu0 %v134
  %v182 = vpop.xlane.xlu0 %181
  %183 = vadd.xlane.f32.xlu0 %v139
  %v184 = vpop.xlane.xlu0 %183
  %185 = vadd.xlane.f32.xlu0 %v142
  %v186 = vpop.xlane.xlu0 %185
  %187 = vadd.xlane.f32.xlu0 %v147
  %v188 = vpop.xlane.xlu0 %187
  %189 = vadd.xlane.f32.xlu0 %v150
  %v190 = vpop.xlane.xlu0 %189
  %191 = vadd.xlane.f32.xlu0 %v155
  %v192 = vpop.xlane.xlu0 %191
  %193 = vadd.xlane.f32.xlu0 %v158
  %v194 = vpop.xlane.xlu0 %193
  %v195 = vadd.f32 %v171, %v180
  %v196 = vadd.f32 %v172, %v182
  %v197 = vadd.f32 %v173, %v184
  %v198 = vadd.f32 %v174, %v186
  %v199 = vadd.f32 %v175, %v188
  %v200 = vadd.f32 %v176, %v190
  %v201 = vadd.f32 %v177, %v192
  %v202 = vadd.f32 %v178, %v194
  %vm203 = vcmask 7168
  %204 = vst.msk [vmem:[#allocation3] sm:$0xff] %vm203, %v195
  %205 = vst.msk [vmem:[#allocation3 + $0x8] sm:$0xff] %vm203, %v196
  %206 = vst.msk [vmem:[#allocation3 + $0x10] sm:$0xff] %vm203, %v197
  %207 = vst.msk [vmem:[#allocation3 + $0x18] sm:$0xff] %vm203, %v198
  %208 = vst.msk [vmem:[#allocation3 + $0x20] sm:$0xff] %vm203, %v199
  %209 = vst.msk [vmem:[#allocation3 + $0x28] sm:$0xff] %vm203, %v200
  %210 = vst.msk [vmem:[#allocation3 + $0x30] sm:$0xff] %vm203, %v201
  %211 = vst.msk [vmem:[#allocation3 + $0x38] sm:$0xff] %vm203, %v202
  %v212 = vld [vmem:[#allocation4] sm:$0xff]
  %v213 = vld [vmem:[#allocation4 + $0x8] sm:$0xff]
  %v214 = vld [vmem:[#allocation4 + $0x10] sm:$0xff]
  %v215 = vld [vmem:[#allocation4 + $0x18] sm:$0xff]
  %v216 = vld [vmem:[#allocation4 + $0x20] sm:$0xff]
  %v217 = vld [vmem:[#allocation4 + $0x28] sm:$0xff]
  %v218 = vld [vmem:[#allocation4 + $0x30] sm:$0xff]
  %v219 = vld [vmem:[#allocation4 + $0x38] sm:$0xff]
  %v220 = vmul.f32 %v131, %v131
  %v221 = vmul.f32 %v134, %v134
  %v222 = vmul.f32 %v139, %v139
  %v223 = vmul.f32 %v142, %v142
  %v224 = vmul.f32 %v147, %v147
  %v225 = vmul.f32 %v150, %v150
  %v226 = vmul.f32 %v155, %v155
  %v227 = vmul.f32 %v158, %v158
  %228 = vadd.xlane.f32.xlu0 %v220
  %v229 = vpop.xlane.xlu0 %228
  %230 = vadd.xlane.f32.xlu0 %v221
  %v231 = vpop.xlane.xlu0 %230
  %232 = vadd.xlane.f32.xlu0 %v222
  %v233 = vpop.xlane.xlu0 %232
  %234 = vadd.xlane.f32.xlu0 %v223
  %v235 = vpop.xlane.xlu0 %234
  %236 = vadd.xlane.f32.xlu0 %v224
  %v237 = vpop.xlane.xlu0 %236
  %238 = vadd.xlane.f32.xlu0 %v225
  %v239 = vpop.xlane.xlu0 %238
  %240 = vadd.xlane.f32.xlu0 %v226
  %v241 = vpop.xlane.xlu0 %240
  %242 = vadd.xlane.f32.xlu0 %v227
  %v243 = vpop.xlane.xlu0 %242
  %v244 = vadd.f32 %v212, %v229
  %v245 = vadd.f32 %v213, %v231
  %v246 = vadd.f32 %v214, %v233
  %v247 = vadd.f32 %v215, %v235
  %v248 = vadd.f32 %v216, %v237
  %v249 = vadd.f32 %v217, %v239
  %v250 = vadd.f32 %v218, %v241
  %v251 = vadd.f32 %v219, %v243
  %252 = vst.msk [vmem:[#allocation4] sm:$0xff] %vm203, %v244
  %253 = vst.msk [vmem:[#allocation4 + $0x8] sm:$0xff] %vm203, %v245
  %254 = vst.msk [vmem:[#allocation4 + $0x10] sm:$0xff] %vm203, %v246
  %255 = vst.msk [vmem:[#allocation4 + $0x18] sm:$0xff] %vm203, %v247
  %256 = vst.msk [vmem:[#allocation4 + $0x20] sm:$0xff] %vm203, %v248
  %257 = vst.msk [vmem:[#allocation4 + $0x28] sm:$0xff] %vm203, %v249
  %258 = vst.msk [vmem:[#allocation4 + $0x30] sm:$0xff] %vm203, %v250
  %259 = vst.msk [vmem:[#allocation4 + $0x38] sm:$0xff] %vm203, %v251
  // Predicated region
  $region22: #{resnet_forward.24} parent=0 // pred_check
    %p260 = pneg %p18
  $region23: #{resnet_forward.24} parent=0 // pred_check_branch
    %262 = sbr.rel (%p260) target = $region25
  $region24: #{resnet_forward.24} parent=0 // pred_region
    %v263 = vld [vmem:[#allocation3] sm:$0xff]
    %v264 = vld [vmem:[#allocation3 + $0x8] sm:$0xff]
    %v265 = vld [vmem:[#allocation3 + $0x10] sm:$0xff]
    %v266 = vld [vmem:[#allocation3 + $0x18] sm:$0xff]
    %v267 = vld [vmem:[#allocation3 + $0x20] sm:$0xff]
    %v268 = vld [vmem:[#allocation3 + $0x28] sm:$0xff]
    %v269 = vld [vmem:[#allocation3 + $0x30] sm:$0xff]
    %v270 = vld [vmem:[#allocation3 + $0x38] sm:$0xff]
    %v271 = vmul.f32 %v263, 0.125
    %v272 = vmul.f32 %v264, 0.125
    %v273 = vmul.f32 %v265, 0.125
    %v274 = vmul.f32 %v266, 0.125
    %v275 = vmul.f32 %v267, 0.125
    %v276 = vmul.f32 %v268, 0.125
    %v277 = vmul.f32 %v269, 0.125
    %v278 = vmul.f32 %v270, 0.125
    %v279 = vld [vmem:[#allocation4] sm:$0xff]
    %v280 = vld [vmem:[#allocation4 + $0x8] sm:$0xff]
    %v281 = vld [vmem:[#allocation4 + $0x10] sm:$0xff]
    %v282 = vld [vmem:[#allocation4 + $0x18] sm:$0xff]
    %v283 = vld [vmem:[#allocation4 + $0x20] sm:$0xff]
    %v284 = vld [vmem:[#allocation4 + $0x28] sm:$0xff]
    %v285 = vld [vmem:[#allocation4 + $0x30] sm:$0xff]
    %v286 = vld [vmem:[#allocation4 + $0x38] sm:$0xff]
    %v287 = vmul.f32 %v279, 0.125
    %v288 = vmul.f32 %v280, 0.125
    %v289 = vmul.f32 %v281, 0.125
    %v290 = vmul.f32 %v282, 0.125
    %v291 = vmul.f32 %v283, 0.125
    %v292 = vmul.f32 %v284, 0.125
    %v293 = vmul.f32 %v285, 0.125
    %v294 = vmul.f32 %v286, 0.125
    %v295 = vmul.f32 %v271, %v271
    %v296 = vmul.f32 %v272, %v272
    %v297 = vmul.f32 %v273, %v273
    %v298 = vmul.f32 %v274, %v274
    %v299 = vmul.f32 %v275, %v275
    %v300 = vmul.f32 %v276, %v276
    %v301 = vmul.f32 %v277, %v277
    %v302 = vmul.f32 %v278, %v278
    %v303 = vsub.f32 %v287, %v295
    %v304 = vsub.f32 %v288, %v296
    %v305 = vsub.f32 %v289, %v297
    %v306 = vsub.f32 %v290, %v298
    %v307 = vsub.f32 %v291, %v299
    %v308 = vsub.f32 %v292, %v300
    %v309 = vsub.f32 %v293, %v301
    %v310 = vsub.f32 %v294, %v302
    %v311 = vmax.f32 %v303, 0.0
    %v312 = vmax.f32 %v304, 0.0
    %v313 = vmax.f32 %v305, 0.0
    %v314 = vmax.f32 %v306, 0.0
    %v315 = vmax.f32 %v307, 0.0
    %v316 = vmax.f32 %v308, 0.0
    %v317 = vmax.f32 %v309, 0.0
    %v318 = vmax.f32 %v310, 0.0
    %v319 = vld [vmem:[%s2] sm:$0xff]
    %v320 = vld [vmem:[%s2 + $0x8] sm:$0xff]
    %v321 = vld [vmem:[%s2 + $0x10] sm:$0xff]
    %v322 = vld [vmem:[%s2 + $0x18] sm:$0xff]
    %v323 = vld [vmem:[%s2 + $0x20] sm:$0xff]
    %v324 = vld [vmem:[%s2 + $0x28] sm:$0xff]
    %v325 = vld [vmem:[%s2 + $0x30] sm:$0xff]
    %v326 = vld [vmem:[%s2 + $0x38] sm:$0xff]
    %v327 = vadd.f32 %v311, 1e-05
    %v328 = vadd.f32 %v312, 1e-05
    %v329 = vadd.f32 %v313, 1e-05
    %v330 = vadd.f32 %v314, 1e-05
    %v331 = vadd.f32 %v315, 1e-05
    %v332 = vadd.f32 %v316, 1e-05
    %v333 = vadd.f32 %v317, 1e-05
    %v334 = vadd.f32 %v318, 1e-05
    %v335 = vrsqrt.pop %v327
    %v336 = vrsqrt.pop %v328
    %v337 = vrsqrt.pop %v329
    %v338 = vrsqrt.pop %v330
    %v339 = vrsqrt.pop %v331
    %v340 = vrsqrt.pop %v332
    %v341 = vrsqrt.pop %v333
    %v342 = vrsqrt.pop %v334
    %v343 = vmul.f32 %v319, %v335
    %v344 = vmul.f32 %v320, %v336
    %v345 = vmul.f32 %v321, %v337
    %v346 = vmul.f32 %v322, %v338
    %v347 = vmul.f32 %v323, %v339
    %v348 = vmul.f32 %v324, %v340
    %v349 = vmul.f32 %v325, %v341
    %v350 = vmul.f32 %v326, %v342
    %v351 = vld [vmem:[%s3] sm:$0xff]
    %v352 = vld [vmem:[%s3 + $0x8] sm:$0xff]
    %v353 = vld [vmem:[%s3 + $0x10] sm:$0xff]
    %v354 = vld [vmem:[%s3 + $0x18] sm:$0xff]
    %v355 = vld [vmem:[%s3 + $0x20] sm:$0xff]
    %v356 = vld [vmem:[%s3 + $0x28] sm:$0xff]
    %v357 = vld [vmem:[%s3 + $0x30] sm:$0xff]
    %v358 = vld [vmem:[%s3 + $0x38] sm:$0xff]
    %v359 = vmul.f32 %v271, %v343
    %v360 = vmul.f32 %v272, %v344
    %v361 = vmul.f32 %v273, %v345
    %v362 = vmul.f32 %v274, %v346
    %v363 = vmul.f32 %v275, %v347
    %v364 = vmul.f32 %v276, %v348
    %v365 = vmul.f32 %v277, %v349
    %v366 = vmul.f32 %v278, %v350
    %v367 = vsub.f32 %v351, %v359
    %v368 = vsub.f32 %v352, %v360
    %v369 = vsub.f32 %v353, %v361
    %v370 = vsub.f32 %v354, %v362
    %v371 = vsub.f32 %v355, %v363
    %v372 = vsub.f32 %v356, %v364
    %v373 = vsub.f32 %v357, %v365
    %v374 = vsub.f32 %v358, %v366
    %v375 = vld [vmem:[#allocation2] sm:$0xff]
    %v376 = vld [vmem:[#allocation2 + $0x8] sm:$0xff]
    %v377 = vld [vmem:[#allocation2 + $0x10] sm:$0xff]
    %v378 = vld [vmem:[#allocation2 + $0x18] sm:$0xff]
    %v379 = vld [vmem:[#allocation2 + $0x20] sm:$0xff]
    %v380 = vld [vmem:[#allocation2 + $0x28] sm:$0xff]
    %v381 = vld [vmem:[#allocation2 + $0x30] sm:$0xff]
    %v382 = vld [vmem:[#allocation2 + $0x38] sm:$0xff]
    %384 = vset.pattern.permute.xlu0 0
    %385 = vperm.xlu0 %384, %v343
    %v386 = vpop.permute.xlu0 %385
    %389 = vset.pattern.permute.xlu0 0
    %390 = vperm.xlu0 %389, %v344
    %v391 = vpop.permute.xlu0 %390
    %394 = vset.pattern.permute.xlu0 0
    %395 = vperm.xlu0 %394, %v345
    %v396 = vpop.permute.xlu0 %395
    %399 = vset.pattern.permute.xlu0 0
    %400 = vperm.xlu0 %399, %v346
    %v401 = vpop.permute.xlu0 %400
    %404 = vset.pattern.permute.xlu0 0
    %405 = vperm.xlu0 %404, %v347
    %v406 = vpop.permute.xlu0 %405
    %409 = vset.pattern.permute.xlu0 0
    %410 = vperm.xlu0 %409, %v348
    %v411 = vpop.permute.xlu0 %410
    %414 = vset.pattern.permute.xlu0 0
    %415 = vperm.xlu0 %414, %v349
    %v416 = vpop.permute.xlu0 %415
    %419 = vset.pattern.permute.xlu0 0
    %420 = vperm.xlu0 %419, %v350
    %v421 = vpop.permute.xlu0 %420
    %v423 = vmul.f32 %v375, %v386
    %v424 = vmul.f32 %v376, %v391
    %v425 = vmul.f32 %v377, %v396
    %v426 = vmul.f32 %v378, %v401
    %v427 = vmul.f32 %v379, %v406
    %v428 = vmul.f32 %v380, %v411
    %v429 = vmul.f32 %v381, %v416
    %v430 = vmul.f32 %v382, %v421
    %432 = vset.pattern.permute.xlu0 0
    %433 = vperm.xlu0 %432, %v367
    %v434 = vpop.permute.xlu0 %433
    %437 = vset.pattern.permute.xlu0 0
    %438 = vperm.xlu0 %437, %v368
    %v439 = vpop.permute.xlu0 %438
    %442 = vset.pattern.permute.xlu0 0
    %443 = vperm.xlu0 %442, %v369
    %v444 = vpop.permute.xlu0 %443
    %447 = vset.pattern.permute.xlu0 0
    %448 = vperm.xlu0 %447, %v370
    %v449 = vpop.permute.xlu0 %448
    %452 = vset.pattern.permute.xlu0 0
    %453 = vperm.xlu0 %452, %v371
    %v454 = vpop.permute.xlu0 %453
    %457 = vset.pattern.permute.xlu0 0
    %458 = vperm.xlu0 %457, %v372
    %v459 = vpop.permute.xlu0 %458
    %462 = vset.pattern.permute.xlu0 0
    %463 = vperm.xlu0 %462, %v373
    %v464 = vpop.permute.xlu0 %463
    %467 = vset.pattern.permute.xlu0 0
    %468 = vperm.xlu0 %467, %v374
    %v469 = vpop.permute.xlu0 %468
    %v471 = vadd.f32 %v423, %v434
    %v472 = vadd.f32 %v424, %v439
    %v473 = vadd.f32 %v425, %v444
    %v474 = vadd.f32 %v426, %v449
    %v475 = vadd.f32 %v427, %v454
    %v476 = vadd.f32 %v428, %v459
    %v477 = vadd.f32 %v429, %v464
    %v478 = vadd.f32 %v430, %v469
    %v479 = vpack.c.bf16 %v472, %v471
    %v480 = vpack.c.bf16 %v474, %v473
    %v481 = vpack.c.bf16 %v476, %v475
    %v482 = vpack.c.bf16 %v478, %v477
    %v487 = vunpack.c.l.b16 %v479
    %v488 = vunpack.c.h.b16 %v479
    %v489 = vunpack.c.l.b16 %v480
    %v490 = vunpack.c.h.b16 %v480
    %v491 = vunpack.c.l.b16 %v481
    %v492 = vunpack.c.h.b16 %v481
    %v493 = vunpack.c.l.b16 %v482
    %v494 = vunpack.c.h.b16 %v482
    %v495 = vpack.c.b16 %v487, %v487
    %v496 = vpack.c.b16 %v488, %v488
    %v497 = vpack.c.b16 %v489, %v489
    %v498 = vpack.c.b16 %v490, %v490
    %v499 = vpack.c.b16 %v491, %v491
    %v500 = vpack.c.b16 %v492, %v492
    %v501 = vpack.c.b16 %v493, %v493
    %v502 = vpack.c.b16 %v494, %v494
    %511 = vst [vmem:[%s4] sm:$0xf] %v495
    %512 = vst [vmem:[%s4 + $0x4] sm:$0xf] %v496
    %513 = vst [vmem:[%s4 + $0x8] sm:$0xf] %v497
    %514 = vst [vmem:[%s4 + $0xc] sm:$0xf] %v498
    %515 = vst [vmem:[%s4 + $0x10] sm:$0xf] %v499
    %516 = vst [vmem:[%s4 + $0x14] sm:$0xf] %v500
    %517 = vst [vmem:[%s4 + $0x18] sm:$0xf] %v501
    %518 = vst [vmem:[%s4 + $0x1c] sm:$0xf] %v502
  $region25: #{resnet_forward.24} parent=0 // pred_fallthru
    _
  // Predicated region
  $region26: #{resnet_forward.24} parent=0 // pred_check
    _
  $region27: #{resnet_forward.24} parent=0 // pred_check_branch
    %520 = sbr.rel (0) target = $region29
  $region28: #{resnet_forward.24} parent=0 // pred_region
    _
  $region29: #{resnet_forward.24} parent=0 // pred_fallthru
    _
  // Predicated region
  $region30: #{resnet_forward.24} parent=0 // pred_check
    _
  $region31: #{resnet_forward.24} parent=0 // pred_check_branch
    %522 = sbr.rel (0) target = $region33
  $region32: #{resnet_forward.24} parent=0 // pred_region
    _
  $region33: #{resnet_forward.24} parent=0 // pred_fallthru
    _

// kernel: resnet_forward.25
$region0: #{resnet_forward.25}
  #allocation0 [shape = 'u32[]', space=smem, size = 0x4, offset = 0x4, fixed_abs, tag = 'smem constant byte address 0x4 - core index']
  #allocation1 [shape = 'u32[144,128]{1,0:T(1,128)}', space=vmem, size = 0x12000, scoped, tag = 'internal scratch']
  #allocation2 [shape = 'f32[1,64,128]{2,1,0:T(8,128)}', space=vmem, size = 0x8000, scoped, tag = 'scratch operand']
  #allocation3 [shape = 'f32[64,1]{1,0:T(8,128)}', space=vmem, size = 0x8000, scoped, tag = 'scratch operand']
  #allocation4 [shape = 'f32[64,1]{1,0:T(8,128)}', space=vmem, size = 0x8000, scoped, tag = 'scratch operand']
  %s0 = inlined_call_operand.vmem [shape: bf16[576,128], index: 0, kind: input, shape index: {}]
  %s1 = inlined_call_operand.vmem [shape: bf16[64,576], index: 1, kind: input, shape index: {}]
  %s2 = inlined_call_operand.vmem [shape: f32[64,1], index: 2, kind: input, shape index: {}]
  %s3 = inlined_call_operand.vmem [shape: f32[64,1], index: 3, kind: input, shape index: {}]
  %s4 = inlined_call_operand.vmem [shape: bf16[64,128], index: 4, kind: input, shape index: {}]
  %s5 = inlined_call_operand.vmem [shape: bf16[64,128], index: 5, kind: output, shape index: {}]
  %s6 = sld [smem:[#allocation0]]
  $region38: #{resnet_forward.25} parent=0
    _
  %s8 = ssub.s32 1, %s6
  %s9 = scalar_select 0, %s8, %s6
  // Predicated region
  $region2: #{resnet_forward.25} parent=0 // pred_check
    _
  $region3: #{resnet_forward.25} parent=0 // pred_check_branch
    %11 = sbr.rel (0) target = $region5
  $region4: #{resnet_forward.25} parent=0 // pred_region
    _
  $region5: #{resnet_forward.25} parent=0 // pred_fallthru
    _
  // Predicated region
  $region6: #{resnet_forward.25} parent=0 // pred_check
    _
  $region7: #{resnet_forward.25} parent=0 // pred_check_branch
    %13 = sbr.rel (0) target = $region9
  $region8: #{resnet_forward.25} parent=0 // pred_region
    _
  $region9: #{resnet_forward.25} parent=0 // pred_fallthru
    _
  // Predicated region
  $region10: #{resnet_forward.25} parent=0 // pred_check
    _
  $region11: #{resnet_forward.25} parent=0 // pred_check_branch
    %15 = sbr.rel (0) target = $region13
  $region12: #{resnet_forward.25} parent=0 // pred_region
    _
  $region13: #{resnet_forward.25} parent=0 // pred_fallthru
    _
  // Predicated region
  $region14: #{resnet_forward.25} parent=0 // pred_check
    _
  $region15: #{resnet_forward.25} parent=0 // pred_check_branch
    %17 = sbr.rel (0) target = $region17
  $region16: #{resnet_forward.25} parent=0 // pred_region
    _
  $region17: #{resnet_forward.25} parent=0 // pred_fallthru
    _
  // Predicated region
  $region18: #{resnet_forward.25} parent=0 // pred_check
    _
  $region19: #{resnet_forward.25} parent=0 // pred_check_branch
    %19 = sbr.rel (0) target = $region21
  $region20: #{resnet_forward.25} parent=0 // pred_region
    _
  $region21: #{resnet_forward.25} parent=0 // pred_fallthru
    _
  %p21 = scmp.eq.s32.totalorder 0, 0
  // Predicated region
  $region22: #{resnet_forward.25} parent=0 // pred_check
    %p22 = pneg %p21
  $region23: #{resnet_forward.25} parent=0 // pred_check_branch
    %24 = sbr.rel (%p22) target = $region25
  $region24: #{resnet_forward.25} parent=0 // pred_region
    %vm25 = vcmask 7168
    %26 = vst.msk [vmem:[#allocation3] sm:$0xff] %vm25, 0.0
    %27 = vst.msk [vmem:[#allocation3 + $0x8] sm:$0xff] %vm25, 0.0
    %28 = vst.msk [vmem:[#allocation3 + $0x10] sm:$0xff] %vm25, 0.0
    %29 = vst.msk [vmem:[#allocation3 + $0x18] sm:$0xff] %vm25, 0.0
    %30 = vst.msk [vmem:[#allocation3 + $0x20] sm:$0xff] %vm25, 0.0
    %31 = vst.msk [vmem:[#allocation3 + $0x28] sm:$0xff] %vm25, 0.0
    %32 = vst.msk [vmem:[#allocation3 + $0x30] sm:$0xff] %vm25, 0.0
    %33 = vst.msk [vmem:[#allocation3 + $0x38] sm:$0xff] %vm25, 0.0
    %34 = vst.msk [vmem:[#allocation4] sm:$0xff] %vm25, 0.0
    %35 = vst.msk [vmem:[#allocation4 + $0x8] sm:$0xff] %vm25, 0.0
    %36 = vst.msk [vmem:[#allocation4 + $0x10] sm:$0xff] %vm25, 0.0
    %37 = vst.msk [vmem:[#allocation4 + $0x18] sm:$0xff] %vm25, 0.0
    %38 = vst.msk [vmem:[#allocation4 + $0x20] sm:$0xff] %vm25, 0.0
    %39 = vst.msk [vmem:[#allocation4 + $0x28] sm:$0xff] %vm25, 0.0
    %40 = vst.msk [vmem:[#allocation4 + $0x30] sm:$0xff] %vm25, 0.0
    %41 = vst.msk [vmem:[#allocation4 + $0x38] sm:$0xff] %vm25, 0.0
  $region25: #{resnet_forward.25} parent=0 // pred_fallthru
    _
  %v42 = vld [vmem:[%s1] sm:$0xff]
  %v43 = vld [vmem:[%s1 + $0x8] sm:$0xff]
  %v44 = vld [vmem:[%s1 + $0x10] sm:$0xf]
  %v45 = vld [vmem:[%s1 + $0x14] sm:$0xff]
  %v46 = vld [vmem:[%s1 + $0x1c] sm:$0xff]
  %v47 = vld [vmem:[%s1 + $0x24] sm:$0xf]
  %v48 = vld [vmem:[%s1 + $0x28] sm:$0xff]
  %v49 = vld [vmem:[%s1 + $0x30] sm:$0xff]
  %v50 = vld [vmem:[%s1 + $0x38] sm:$0xf]
  %v51 = vld [vmem:[%s1 + $0x3c] sm:$0xff]
  %v52 = vld [vmem:[%s1 + $0x44] sm:$0xff]
  %v53 = vld [vmem:[%s1 + $0x4c] sm:$0xf]
  %v54 = vld [vmem:[%s1 + $0x50] sm:$0xff]
  %v55 = vld [vmem:[%s1 + $0x58] sm:$0xff]
  %v56 = vld [vmem:[%s1 + $0x60] sm:$0xf]
  %v57 = vld [vmem:[%s1 + $0x64] sm:$0xff]
  %v58 = vld [vmem:[%s1 + $0x6c] sm:$0xff]
  %v59 = vld [vmem:[%s1 + $0x74] sm:$0xf]
  %v60 = vld [vmem:[%s1 + $0x78] sm:$0xff]
  %v61 = vld [vmem:[%s1 + $0x80] sm:$0xff]
  %v62 = vld [vmem:[%s1 + $0x88] sm:$0xf]
  %v63 = vld [vmem:[%s1 + $0x8c] sm:$0xff]
  %v64 = vld [vmem:[%s1 + $0x94] sm:$0xff]
  %v65 = vld [vmem:[%s1 + $0x9c] sm:$0xf]
  %v66 = vld [vmem:[%s0] sm:$0xf]
  %v67 = vld [vmem:[%s0 + $0x4] sm:$0xf]
  %v68 = vld [vmem:[%s0 + $0x8] sm:$0xf]
  %v69 = vld [vmem:[%s0 + $0xc] sm:$0xf]
  %v70 = vld [vmem:[%s0 + $0x10] sm:$0xf]
  %v71 = vld [vmem:[%s0 + $0x14] sm:$0xf]
  %v72 = vld [vmem:[%s0 + $0x18] sm:$0xf]
  %v73 = vld [vmem:[%s0 + $0x1c] sm:$0xf]
  %v74 = vld [vmem:[%s0 + $0x20] sm:$0xf]
  %v75 = vld [vmem:[%s0 + $0x24] sm:$0xf]
  %v76 = vld [vmem:[%s0 + $0x28] sm:$0xf]
  %v77 = vld [vmem:[%s0 + $0x2c] sm:$0xf]
  %v78 = vld [vmem:[%s0 + $0x30] sm:$0xf]
  %v79 = vld [vmem:[%s0 + $0x34] sm:$0xf]
  %v80 = vld [vmem:[%s0 + $0x38] sm:$0xf]
  %v81 = vld [vmem:[%s0 + $0x3c] sm:$0xf]
  %v82 = vld [vmem:[%s0 + $0x40] sm:$0xf]
  %v83 = vld [vmem:[%s0 + $0x44] sm:$0xf]
  %v84 = vld [vmem:[%s0 + $0x48] sm:$0xf]
  %v85 = vld [vmem:[%s0 + $0x4c] sm:$0xf]
  %v86 = vld [vmem:[%s0 + $0x50] sm:$0xf]
  %v87 = vld [vmem:[%s0 + $0x54] sm:$0xf]
  %v88 = vld [vmem:[%s0 + $0x58] sm:$0xf]
  %v89 = vld [vmem:[%s0 + $0x5c] sm:$0xf]
  %v90 = vld [vmem:[%s0 + $0x60] sm:$0xf]
  %v91 = vld [vmem:[%s0 + $0x64] sm:$0xf]
  %v92 = vld [vmem:[%s0 + $0x68] sm:$0xf]
  %v93 = vld [vmem:[%s0 + $0x6c] sm:$0xf]
  %v94 = vld [vmem:[%s0 + $0x70] sm:$0xf]
  %v95 = vld [vmem:[%s0 + $0x74] sm:$0xf]
  %v96 = vld [vmem:[%s0 + $0x78] sm:$0xf]
  %v97 = vld [vmem:[%s0 + $0x7c] sm:$0xf]
  %v98 = vld [vmem:[%s0 + $0x80] sm:$0xf]
  %v99 = vld [vmem:[%s0 + $0x84] sm:$0xf]
  %v100 = vld [vmem:[%s0 + $0x88] sm:$0xf]
  %v101 = vld [vmem:[%s0 + $0x8c] sm:$0xf]
  %v102 = vld [vmem:[%s0 + $0x90] sm:$0xf]
  %v103 = vld [vmem:[%s0 + $0x94] sm:$0xf]
  %v104 = vld [vmem:[%s0 + $0x98] sm:$0xf]
  %v105 = vld [vmem:[%s0 + $0x9c] sm:$0xf]
  %v106 = vld [vmem:[%s0 + $0xa0] sm:$0xf]
  %v107 = vld [vmem:[%s0 + $0xa4] sm:$0xf]
  %v108 = vld [vmem:[%s0 + $0xa8] sm:$0xf]
  %v109 = vld [vmem:[%s0 + $0xac] sm:$0xf]
  %v110 = vld [vmem:[%s0 + $0xb0] sm:$0xf]
  %v111 = vld [vmem:[%s0 + $0xb4] sm:$0xf]
  %v112 = vld [vmem:[%s0 + $0xb8] sm:$0xf]
  %v113 = vld [vmem:[%s0 + $0xbc] sm:$0xf]
  %v114 = vld [vmem:[%s0 + $0xc0] sm:$0xf]
  %v115 = vld [vmem:[%s0 + $0xc4] sm:$0xf]
  %v116 = vld [vmem:[%s0 + $0xc8] sm:$0xf]
  %v117 = vld [vmem:[%s0 + $0xcc] sm:$0xf]
  %v118 = vld [vmem:[%s0 + $0xd0] sm:$0xf]
  %v119 = vld [vmem:[%s0 + $0xd4] sm:$0xf]
  %v120 = vld [vmem:[%s0 + $0xd8] sm:$0xf]
  %v121 = vld [vmem:[%s0 + $0xdc] sm:$0xf]
  %v122 = vld [vmem:[%s0 + $0xe0] sm:$0xf]
  %v123 = vld [vmem:[%s0 + $0xe4] sm:$0xf]
  %v124 = vld [vmem:[%s0 + $0xe8] sm:$0xf]
  %v125 = vld [vmem:[%s0 + $0xec] sm:$0xf]
  %v126 = vld [vmem:[%s0 + $0xf0] sm:$0xf]
  %v127 = vld [vmem:[%s0 + $0xf4] sm:$0xf]
  %v128 = vld [vmem:[%s0 + $0xf8] sm:$0xf]
  %v129 = vld [vmem:[%s0 + $0xfc] sm:$0xf]
  %v130 = vld [vmem:[%s0 + $0x100] sm:$0xf]
  %v131 = vld [vmem:[%s0 + $0x104] sm:$0xf]
  %v132 = vld [vmem:[%s0 + $0x108] sm:$0xf]
  %v133 = vld [vmem:[%s0 + $0x10c] sm:$0xf]
  %v134 = vld [vmem:[%s0 + $0x110] sm:$0xf]
  %v135 = vld [vmem:[%s0 + $0x114] sm:$0xf]
  %v136 = vld [vmem:[%s0 + $0x118] sm:$0xf]
  %v137 = vld [vmem:[%s0 + $0x11c] sm:$0xf]
  %v162 = vunpack.c.l.b16 %v42
  %v163 = vunpack.c.h.b16 %v42
  %v164 = vunpack.c.l.b16 %v43
  %v165 = vunpack.c.h.b16 %v43
  %v166 = vunpack.c.l.b16 %v44
  %v167 = vunpack.c.l.b16 %v45
  %v168 = vunpack.c.h.b16 %v45
  %v169 = vunpack.c.l.b16 %v46
  %v170 = vunpack.c.h.b16 %v46
  %v171 = vunpack.c.l.b16 %v47
  %v172 = vunpack.c.l.b16 %v48
  %v173 = vunpack.c.h.b16 %v48
  %v174 = vunpack.c.l.b16 %v49
  %v175 = vunpack.c.h.b16 %v49
  %v176 = vunpack.c.l.b16 %v50
  %v177 = vunpack.c.l.b16 %v51
  %v178 = vunpack.c.h.b16 %v51
  %v179 = vunpack.c.l.b16 %v52
  %v180 = vunpack.c.h.b16 %v52
  %v181 = vunpack.c.l.b16 %v53
  %v182 = vunpack.c.l.b16 %v54
  %v183 = vunpack.c.h.b16 %v54
  %v184 = vunpack.c.l.b16 %v55
  %v185 = vunpack.c.h.b16 %v55
  %v186 = vunpack.c.l.b16 %v56
  %v187 = vunpack.c.l.b16 %v57
  %v188 = vunpack.c.h.b16 %v57
  %v189 = vunpack.c.l.b16 %v58
  %v190 = vunpack.c.h.b16 %v58
  %v191 = vunpack.c.l.b16 %v59
  %v192 = vunpack.c.l.b16 %v60
  %v193 = vunpack.c.h.b16 %v60
  %v194 = vunpack.c.l.b16 %v61
  %v195 = vunpack.c.h.b16 %v61
  %v196 = vunpack.c.l.b16 %v62
  %v197 = vunpack.c.l.b16 %v63
  %v198 = vunpack.c.h.b16 %v63
  %v199 = vunpack.c.l.b16 %v64
  %v200 = vunpack.c.h.b16 %v64
  %v201 = vunpack.c.l.b16 %v65
  %v202 = vpack.c.b16 %v167, %v162
  %v203 = vpack.c.b16 %v168, %v163
  %v204 = vpack.c.b16 %v169, %v164
  %v205 = vpack.c.b16 %v170, %v165
  %v206 = vpack.c.b16 %v171, %v166
  %v207 = vpack.c.b16 %v177, %v172
  %v208 = vpack.c.b16 %v178, %v173
  %v209 = vpack.c.b16 %v179, %v174
  %v210 = vpack.c.b16 %v180, %v175
  %v211 = vpack.c.b16 %v181, %v176
  %v212 = vpack.c.b16 %v187, %v182
  %v213 = vpack.c.b16 %v188, %v183
  %v214 = vpack.c.b16 %v189, %v184
  %v215 = vpack.c.b16 %v190, %v185
  %v216 = vpack.c.b16 %v191, %v186
  %v217 = vpack.c.b16 %v197, %v192
  %v218 = vpack.c.b16 %v198, %v193
  %v219 = vpack.c.b16 %v199, %v194
  %v220 = vpack.c.b16 %v200, %v195
  %v221 = vpack.c.b16 %v201, %v196
  %v310 = vunpack.c.l.b16 %v66
  %v311 = vunpack.c.l.b16 %v67
  %v312 = vunpack.c.l.b16 %v68
  %v313 = vunpack.c.l.b16 %v69
  %v314 = vunpack.c.l.b16 %v70
  %v315 = vunpack.c.l.b16 %v71
  %v316 = vunpack.c.l.b16 %v72
  %v317 = vunpack.c.l.b16 %v73
  %v318 = vunpack.c.l.b16 %v74
  %v319 = vunpack.c.l.b16 %v75
  %v320 = vunpack.c.l.b16 %v76
  %v321 = vunpack.c.l.b16 %v77
  %v322 = vunpack.c.l.b16 %v78
  %v323 = vunpack.c.l.b16 %v79
  %v324 = vunpack.c.l.b16 %v80
  %v325 = vunpack.c.l.b16 %v81
  %v326 = vunpack.c.l.b16 %v82
  %v327 = vunpack.c.l.b16 %v83
  %v328 = vunpack.c.l.b16 %v84
  %v329 = vunpack.c.l.b16 %v85
  %v330 = vunpack.c.l.b16 %v86
  %v331 = vunpack.c.l.b16 %v87
  %v332 = vunpack.c.l.b16 %v88
  %v333 = vunpack.c.l.b16 %v89
  %v334 = vunpack.c.l.b16 %v90
  %v335 = vunpack.c.l.b16 %v91
  %v336 = vunpack.c.l.b16 %v92
  %v337 = vunpack.c.l.b16 %v93
  %v338 = vunpack.c.l.b16 %v94
  %v339 = vunpack.c.l.b16 %v95
  %v340 = vunpack.c.l.b16 %v96
  %v341 = vunpack.c.l.b16 %v97
  %v342 = vunpack.c.l.b16 %v98
  %v343 = vunpack.c.l.b16 %v99
  %v344 = vunpack.c.l.b16 %v100
  %v345 = vunpack.c.l.b16 %v101
  %v346 = vunpack.c.l.b16 %v102
  %v347 = vunpack.c.l.b16 %v103
  %v348 = vunpack.c.l.b16 %v104
  %v349 = vunpack.c.l.b16 %v105
  %v350 = vunpack.c.l.b16 %v106
  %v351 = vunpack.c.l.b16 %v107
  %v352 = vunpack.c.l.b16 %v108
  %v353 = vunpack.c.l.b16 %v109
  %v354 = vunpack.c.l.b16 %v110
  %v355 = vunpack.c.l.b16 %v111
  %v356 = vunpack.c.l.b16 %v112
  %v357 = vunpack.c.l.b16 %v113
  %v358 = vunpack.c.l.b16 %v114
  %v359 = vunpack.c.l.b16 %v115
  %v360 = vunpack.c.l.b16 %v116
  %v361 = vunpack.c.l.b16 %v117
  %v362 = vunpack.c.l.b16 %v118
  %v363 = vunpack.c.l.b16 %v119
  %v364 = vunpack.c.l.b16 %v120
  %v365 = vunpack.c.l.b16 %v121
  %v366 = vunpack.c.l.b16 %v122
  %v367 = vunpack.c.l.b16 %v123
  %v368 = vunpack.c.l.b16 %v124
  %v369 = vunpack.c.l.b16 %v125
  %v370 = vunpack.c.l.b16 %v126
  %v371 = vunpack.c.l.b16 %v127
  %v372 = vunpack.c.l.b16 %v128
  %v373 = vunpack.c.l.b16 %v129
  %v374 = vunpack.c.l.b16 %v130
  %v375 = vunpack.c.l.b16 %v131
  %v376 = vunpack.c.l.b16 %v132
  %v377 = vunpack.c.l.b16 %v133
  %v378 = vunpack.c.l.b16 %v134
  %v379 = vunpack.c.l.b16 %v135
  %v380 = vunpack.c.l.b16 %v136
  %v381 = vunpack.c.l.b16 %v137
  %v382 = vpack.c.b16 %v311, %v310
  %v383 = vpack.c.b16 %v313, %v312
  %v384 = vpack.c.b16 %v315, %v314
  %v385 = vpack.c.b16 %v317, %v316
  %v386 = vpack.c.b16 %v319, %v318
  %v387 = vpack.c.b16 %v321, %v320
  %v388 = vpack.c.b16 %v323, %v322
  %v389 = vpack.c.b16 %v325, %v324
  %v390 = vpack.c.b16 %v327, %v326
  %v391 = vpack.c.b16 %v329, %v328
  %v392 = vpack.c.b16 %v331, %v330
  %v393 = vpack.c.b16 %v333, %v332
  %v394 = vpack.c.b16 %v335, %v334
  %v395 = vpack.c.b16 %v337, %v336
  %v396 = vpack.c.b16 %v339, %v338
  %v397 = vpack.c.b16 %v341, %v340
  %v398 = vpack.c.b16 %v343, %v342
  %v399 = vpack.c.b16 %v345, %v344
  %v400 = vpack.c.b16 %v347, %v346
  %v401 = vpack.c.b16 %v349, %v348
  %v402 = vpack.c.b16 %v351, %v350
  %v403 = vpack.c.b16 %v353, %v352
  %v404 = vpack.c.b16 %v355, %v354
  %v405 = vpack.c.b16 %v357, %v356
  %v406 = vpack.c.b16 %v359, %v358
  %v407 = vpack.c.b16 %v361, %v360
  %v408 = vpack.c.b16 %v363, %v362
  %v409 = vpack.c.b16 %v365, %v364
  %v410 = vpack.c.b16 %v367, %v366
  %v411 = vpack.c.b16 %v369, %v368
  %v412 = vpack.c.b16 %v371, %v370
  %v413 = vpack.c.b16 %v373, %v372
  %v414 = vpack.c.b16 %v375, %v374
  %v415 = vpack.c.b16 %v377, %v376
  %v416 = vpack.c.b16 %v379, %v378
  %v417 = vpack.c.b16 %v381, %v380
  %vm454 = vcmask 523264
  %v456 = vsel %vm454, %v206, 0
  %v459 = vsel %vm454, %v211, 0
  %v462 = vsel %vm454, %v216, 0
  %v465 = vsel %vm454, %v221, 0
  %467 = vmatprep.subr.bf16.mxu0 0
  %468 = vmatpush1.bf16.msra.mxu0 %v389
  %469 = vmatprep.subr.bf16.mxu0 0
  %470 = vmatpush1.bf16.msra.mxu0 %v388
  %471 = vmatprep.subr.bf16.mxu0 0
  %472 = vmatpush1.bf16.msra.mxu0 %v387
  %473 = vmatprep.subr.bf16.mxu0 0
  %474 = vmatpush1.bf16.msra.mxu0 %v386
  %475 = vmatprep.subr.bf16.mxu0 0
  %476 = vmatpush1.bf16.msra.mxu0 %v385
  %477 = vmatprep.subr.bf16.mxu0 0
  %478 = vmatpush1.bf16.msra.mxu0 %v384
  %479 = vmatprep.subr.bf16.mxu0 0
  %480 = vmatpush1.bf16.msra.mxu0 %v383
  %481 = vmatprep.subr.bf16.mxu0 0
  %482 = vmatpush1.bf16.msra.mxu0 %v382
  %483 = vmatprep.subr.bf16.mxu0 0
  %484 = vmatpush2.bf16.msra.mxu0 %v397
  %485 = vmatprep.subr.bf16.mxu0 0
  %486 = vmatpush2.bf16.msra.mxu0 %v396
  %487 = vmatprep.subr.bf16.mxu0 0
  %488 = vmatpush2.bf16.msra.mxu0 %v395
  %489 = vmatprep.subr.bf16.mxu0 0
  %490 = vmatpush2.bf16.msra.mxu0 %v394
  %491 = vmatprep.subr.bf16.mxu0 0
  %492 = vmatpush2.bf16.msra.mxu0 %v393
  %493 = vmatprep.subr.bf16.mxu0 0
  %494 = vmatpush2.bf16.msra.mxu0 %v392
  %495 = vmatprep.subr.bf16.mxu0 0
  %496 = vmatpush2.bf16.msra.mxu0 %v391
  %497 = vmatprep.subr.bf16.mxu0 0
  %498 = vmatpush2.bf16.msra.mxu0 %v390
  %499 = vmatprep.mubr.bf16.mxu0 %v203
  %500 = vmatmul.mubr.bf16.gmra.mxu0 %v202
  %v501 = vpop.f32.mrf.mxu0
  %v502 = vadd.f32 0.0, %v501
  %v503 = vpop.f32.mrf.mxu0
  %v504 = vpop.f32.mrf.mxu0
  %v505 = vadd.f32 0.0, %v504
  %v506 = vpop.f32.mrf.mxu0
  %507 = vmatprep.mubr.bf16.mxu0 %v208
  %508 = vmatmul.mubr.bf16.gmra.mxu0 %v207
  %v509 = vpop.f32.mrf.mxu0
  %v510 = vadd.f32 0.0, %v509
  %v511 = vpop.f32.mrf.mxu0
  %v512 = vpop.f32.mrf.mxu0
  %v513 = vadd.f32 0.0, %v512
  %v514 = vpop.f32.mrf.mxu0
  %515 = vmatprep.mubr.bf16.mxu0 %v213
  %516 = vmatmul.mubr.bf16.gmra.mxu0 %v212
  %v517 = vpop.f32.mrf.mxu0
  %v518 = vadd.f32 0.0, %v517
  %v519 = vpop.f32.mrf.mxu0
  %v520 = vpop.f32.mrf.mxu0
  %v521 = vadd.f32 0.0, %v520
  %v522 = vpop.f32.mrf.mxu0
  %523 = vmatprep.mubr.bf16.mxu0 %v218
  %524 = vmatmul.mubr.bf16.gmra.mxu0 %v217
  %v525 = vpop.f32.mrf.mxu0
  %v526 = vadd.f32 0.0, %v525
  %v527 = vpop.f32.mrf.mxu0
  %v528 = vpop.f32.mrf.mxu0
  %v529 = vadd.f32 0.0, %v528
  %v530 = vpop.f32.mrf.mxu0
  %531 = vdwg.mxu0
  %532 = vmatprep.subr.bf16.mxu0 0
  %533 = vmatpush1.bf16.msra.mxu0 %v405
  %534 = vmatprep.subr.bf16.mxu0 0
  %535 = vmatpush1.bf16.msra.mxu0 %v404
  %536 = vmatprep.subr.bf16.mxu0 0
  %537 = vmatpush1.bf16.msra.mxu0 %v403
  %538 = vmatprep.subr.bf16.mxu0 0
  %539 = vmatpush1.bf16.msra.mxu0 %v402
  %540 = vmatprep.subr.bf16.mxu0 0
  %541 = vmatpush1.bf16.msra.mxu0 %v401
  %542 = vmatprep.subr.bf16.mxu0 0
  %543 = vmatpush1.bf16.msra.mxu0 %v400
  %544 = vmatprep.subr.bf16.mxu0 0
  %545 = vmatpush1.bf16.msra.mxu0 %v399
  %546 = vmatprep.subr.bf16.mxu0 0
  %547 = vmatpush1.bf16.msra.mxu0 %v398
  %548 = vmatprep.subr.bf16.mxu0 0
  %549 = vmatpush2.bf16.msra.mxu0 %v413
  %550 = vmatprep.subr.bf16.mxu0 0
  %551 = vmatpush2.bf16.msra.mxu0 %v412
  %552 = vmatprep.subr.bf16.mxu0 0
  %553 = vmatpush2.bf16.msra.mxu0 %v411
  %554 = vmatprep.subr.bf16.mxu0 0
  %555 = vmatpush2.bf16.msra.mxu0 %v410
  %556 = vmatprep.subr.bf16.mxu0 0
  %557 = vmatpush2.bf16.msra.mxu0 %v409
  %558 = vmatprep.subr.bf16.mxu0 0
  %559 = vmatpush2.bf16.msra.mxu0 %v408
  %560 = vmatprep.subr.bf16.mxu0 0
  %561 = vmatpush2.bf16.msra.mxu0 %v407
  %562 = vmatprep.subr.bf16.mxu0 0
  %563 = vmatpush2.bf16.msra.mxu0 %v406
  %564 = vmatprep.mubr.bf16.mxu0 %v205
  %565 = vmatmul.mubr.bf16.gmra.mxu0 %v204
  %v566 = vpop.f32.mrf.mxu0
  %v567 = vadd.f32 %v502, %v566
  %v568 = vpop.f32.mrf.mxu0
  %v569 = vpop.f32.mrf.mxu0
  %v570 = vadd.f32 %v505, %v569
  %v571 = vpop.f32.mrf.mxu0
  %572 = vmatprep.mubr.bf16.mxu0 %v210
  %573 = vmatmul.mubr.bf16.gmra.mxu0 %v209
  %v574 = vpop.f32.mrf.mxu0
  %v575 = vadd.f32 %v510, %v574
  %v576 = vpop.f32.mrf.mxu0
  %v577 = vpop.f32.mrf.mxu0
  %v578 = vadd.f32 %v513, %v577
  %v579 = vpop.f32.mrf.mxu0
  %580 = vmatprep.mubr.bf16.mxu0 %v215
  %581 = vmatmul.mubr.bf16.gmra.mxu0 %v214
  %v582 = vpop.f32.mrf.mxu0
  %v583 = vadd.f32 %v518, %v582
  %v584 = vpop.f32.mrf.mxu0
  %v585 = vpop.f32.mrf.mxu0
  %v586 = vadd.f32 %v521, %v585
  %v587 = vpop.f32.mrf.mxu0
  %588 = vmatprep.mubr.bf16.mxu0 %v220
  %589 = vmatmul.mubr.bf16.gmra.mxu0 %v219
  %v590 = vpop.f32.mrf.mxu0
  %v591 = vadd.f32 %v526, %v590
  %v592 = vpop.f32.mrf.mxu0
  %v593 = vpop.f32.mrf.mxu0
  %v594 = vadd.f32 %v529, %v593
  %v595 = vpop.f32.mrf.mxu0
  %596 = vdwg.mxu0
  %597 = vmatprep.subr.bf16.mxu0 0
  %598 = vmatpush1.bf16.msra.mxu0 0
  %599 = vmatprep.subr.bf16.mxu0 0
  %600 = vmatpush1.bf16.msra.mxu0 0
  %601 = vmatprep.subr.bf16.mxu0 0
  %602 = vmatpush1.bf16.msra.mxu0 0
  %603 = vmatprep.subr.bf16.mxu0 0
  %604 = vmatpush1.bf16.msra.mxu0 0
  %605 = vmatprep.subr.bf16.mxu0 0
  %606 = vmatpush1.bf16.msra.mxu0 %v417
  %607 = vmatprep.subr.bf16.mxu0 0
  %608 = vmatpush1.bf16.msra.mxu0 %v416
  %609 = vmatprep.subr.bf16.mxu0 0
  %610 = vmatpush1.bf16.msra.mxu0 %v415
  %611 = vmatprep.subr.bf16.mxu0 0
  %612 = vmatpush1.bf16.msra.mxu0 %v414
  %613 = vmatprep.subr.bf16.mxu0 0
  %614 = vmatpush2.bf16.msra.mxu0 0
  %615 = vmatprep.subr.bf16.mxu0 0
  %616 = vmatpush2.bf16.msra.mxu0 0
  %617 = vmatprep.subr.bf16.mxu0 0
  %618 = vmatpush2.bf16.msra.mxu0 0
  %619 = vmatprep.subr.bf16.mxu0 0
  %620 = vmatpush2.bf16.msra.mxu0 0
  %621 = vmatprep.subr.bf16.mxu0 0
  %622 = vmatpush2.bf16.msra.mxu0 0
  %623 = vmatprep.subr.bf16.mxu0 0
  %624 = vmatpush2.bf16.msra.mxu0 0
  %625 = vmatprep.subr.bf16.mxu0 0
  %626 = vmatpush2.bf16.msra.mxu0 0
  %627 = vmatprep.subr.bf16.mxu0 0
  %628 = vmatpush2.bf16.msra.mxu0 0
  %629 = vmatprep.mubr.bf16.mxu0 0
  %630 = vmatmul.mubr.bf16.gmra.mxu0 %v456
  %v631 = vpop.f32.mrf.mxu0
  %v632 = vadd.f32 %v567, %v631
  %v633 = vpop.f32.mrf.mxu0
  %v634 = vpop.f32.mrf.mxu0
  %v635 = vadd.f32 %v570, %v634
  %v636 = vpop.f32.mrf.mxu0
  %637 = vmatprep.mubr.bf16.mxu0 0
  %638 = vmatmul.mubr.bf16.gmra.mxu0 %v459
  %v639 = vpop.f32.mrf.mxu0
  %v640 = vadd.f32 %v575, %v639
  %v641 = vpop.f32.mrf.mxu0
  %v642 = vpop.f32.mrf.mxu0
  %v643 = vadd.f32 %v578, %v642
  %v644 = vpop.f32.mrf.mxu0
  %645 = vmatprep.mubr.bf16.mxu0 0
  %646 = vmatmul.mubr.bf16.gmra.mxu0 %v462
  %v647 = vpop.f32.mrf.mxu0
  %v648 = vadd.f32 %v583, %v647
  %v649 = vpop.f32.mrf.mxu0
  %v650 = vpop.f32.mrf.mxu0
  %v651 = vadd.f32 %v586, %v650
  %v652 = vpop.f32.mrf.mxu0
  %653 = vmatprep.mubr.bf16.mxu0 0
  %654 = vmatmul.mubr.bf16.gmra.mxu0 %v465
  %v655 = vpop.f32.mrf.mxu0
  %v656 = vadd.f32 %v591, %v655
  %v657 = vpop.f32.mrf.mxu0
  %v658 = vpop.f32.mrf.mxu0
  %v659 = vadd.f32 %v594, %v658
  %v660 = vpop.f32.mrf.mxu0
  %661 = vdwg.mxu0
  %s662 = smul.u32 0, 64
  %s663 = scalar_lea.vmem [#allocation2], %s662
  %664 = vst [vmem:[%s663] sm:$0xff] %v632
  %665 = vst [vmem:[%s663 + $0x8] sm:$0xff] %v635
  %666 = vst [vmem:[%s663 + $0x10] sm:$0xff] %v640
  %667 = vst [vmem:[%s663 + $0x18] sm:$0xff] %v643
  %668 = vst [vmem:[%s663 + $0x20] sm:$0xff] %v648
  %669 = vst [vmem:[%s663 + $0x28] sm:$0xff] %v651
  %670 = vst [vmem:[%s663 + $0x30] sm:$0xff] %v656
  %671 = vst [vmem:[%s663 + $0x38] sm:$0xff] %v659
  %v672 = vld [vmem:[#allocation3] sm:$0xff]
  %v673 = vld [vmem:[#allocation3 + $0x8] sm:$0xff]
  %v674 = vld [vmem:[#allocation3 + $0x10] sm:$0xff]
  %v675 = vld [vmem:[#allocation3 + $0x18] sm:$0xff]
  %v676 = vld [vmem:[#allocation3 + $0x20] sm:$0xff]
  %v677 = vld [vmem:[#allocation3 + $0x28] sm:$0xff]
  %v678 = vld [vmem:[#allocation3 + $0x30] sm:$0xff]
  %v679 = vld [vmem:[#allocation3 + $0x38] sm:$0xff]
  %680 = vadd.xlane.f32.xlu0 %v632
  %v681 = vpop.xlane.xlu0 %680
  %682 = vadd.xlane.f32.xlu0 %v635
  %v683 = vpop.xlane.xlu0 %682
  %684 = vadd.xlane.f32.xlu0 %v640
  %v685 = vpop.xlane.xlu0 %684
  %686 = vadd.xlane.f32.xlu0 %v643
  %v687 = vpop.xlane.xlu0 %686
  %688 = vadd.xlane.f32.xlu0 %v648
  %v689 = vpop.xlane.xlu0 %688
  %690 = vadd.xlane.f32.xlu0 %v651
  %v691 = vpop.xlane.xlu0 %690
  %692 = vadd.xlane.f32.xlu0 %v656
  %v693 = vpop.xlane.xlu0 %692
  %694 = vadd.xlane.f32.xlu0 %v659
  %v695 = vpop.xlane.xlu0 %694
  %v696 = vadd.f32 %v672, %v681
  %v697 = vadd.f32 %v673, %v683
  %v698 = vadd.f32 %v674, %v685
  %v699 = vadd.f32 %v675, %v687
  %v700 = vadd.f32 %v676, %v689
  %v701 = vadd.f32 %v677, %v691
  %v702 = vadd.f32 %v678, %v693
  %v703 = vadd.f32 %v679, %v695
  %vm704 = vcmask 7168
  %705 = vst.msk [vmem:[#allocation3] sm:$0xff] %vm704, %v696
  %706 = vst.msk [vmem:[#allocation3 + $0x8] sm:$0xff] %vm704, %v697
  %707 = vst.msk [vmem:[#allocation3 + $0x10] sm:$0xff] %vm704, %v698
  %708 = vst.msk [vmem:[#allocation3 + $0x18] sm:$0xff] %vm704, %v699
  %709 = vst.msk [vmem:[#allocation3 + $0x20] sm:$0xff] %vm704, %v700
  %710 = vst.msk [vmem:[#allocation3 + $0x28] sm:$0xff] %vm704, %v701
  %711 = vst.msk [vmem:[#allocation3 + $0x30] sm:$0xff] %vm704, %v702
  %712 = vst.msk [vmem:[#allocation3 + $0x38] sm:$0xff] %vm704, %v703
  %v713 = vld [vmem:[#allocation4] sm:$0xff]
  %v714 = vld [vmem:[#allocation4 + $0x8] sm:$0xff]
  %v715 = vld [vmem:[#allocation4 + $0x10] sm:$0xff]
  %v716 = vld [vmem:[#allocation4 + $0x18] sm:$0xff]
  %v717 = vld [vmem:[#allocation4 + $0x20] sm:$0xff]
  %v718 = vld [vmem:[#allocation4 + $0x28] sm:$0xff]
  %v719 = vld [vmem:[#allocation4 + $0x30] sm:$0xff]
  %v720 = vld [vmem:[#allocation4 + $0x38] sm:$0xff]
  %v721 = vmul.f32 %v632, %v632
  %v722 = vmul.f32 %v635, %v635
  %v723 = vmul.f32 %v640, %v640
  %v724 = vmul.f32 %v643, %v643
  %v725 = vmul.f32 %v648, %v648
  %v726 = vmul.f32 %v651, %v651
  %v727 = vmul.f32 %v656, %v656
  %v728 = vmul.f32 %v659, %v659
  %729 = vadd.xlane.f32.xlu0 %v721
  %v730 = vpop.xlane.xlu0 %729
  %731 = vadd.xlane.f32.xlu0 %v722
  %v732 = vpop.xlane.xlu0 %731
  %733 = vadd.xlane.f32.xlu0 %v723
  %v734 = vpop.xlane.xlu0 %733
  %735 = vadd.xlane.f32.xlu0 %v724
  %v736 = vpop.xlane.xlu0 %735
  %737 = vadd.xlane.f32.xlu0 %v725
  %v738 = vpop.xlane.xlu0 %737
  %739 = vadd.xlane.f32.xlu0 %v726
  %v740 = vpop.xlane.xlu0 %739
  %741 = vadd.xlane.f32.xlu0 %v727
  %v742 = vpop.xlane.xlu0 %741
  %743 = vadd.xlane.f32.xlu0 %v728
  %v744 = vpop.xlane.xlu0 %743
  %v745 = vadd.f32 %v713, %v730
  %v746 = vadd.f32 %v714, %v732
  %v747 = vadd.f32 %v715, %v734
  %v748 = vadd.f32 %v716, %v736
  %v749 = vadd.f32 %v717, %v738
  %v750 = vadd.f32 %v718, %v740
  %v751 = vadd.f32 %v719, %v742
  %v752 = vadd.f32 %v720, %v744
  %753 = vst.msk [vmem:[#allocation4] sm:$0xff] %vm704, %v745
  %754 = vst.msk [vmem:[#allocation4 + $0x8] sm:$0xff] %vm704, %v746
  %755 = vst.msk [vmem:[#allocation4 + $0x10] sm:$0xff] %vm704, %v747
  %756 = vst.msk [vmem:[#allocation4 + $0x18] sm:$0xff] %vm704, %v748
  %757 = vst.msk [vmem:[#allocation4 + $0x20] sm:$0xff] %vm704, %v749
  %758 = vst.msk [vmem:[#allocation4 + $0x28] sm:$0xff] %vm704, %v750
  %759 = vst.msk [vmem:[#allocation4 + $0x30] sm:$0xff] %vm704, %v751
  %760 = vst.msk [vmem:[#allocation4 + $0x38] sm:$0xff] %vm704, %v752
  // Predicated region
  $region26: #{resnet_forward.25} parent=0 // pred_check
    %p761 = pneg %p21
  $region27: #{resnet_forward.25} parent=0 // pred_check_branch
    %763 = sbr.rel (%p761) target = $region29
  $region28: #{resnet_forward.25} parent=0 // pred_region
    %v764 = vld [vmem:[#allocation3] sm:$0xff]
    %v765 = vld [vmem:[#allocation3 + $0x8] sm:$0xff]
    %v766 = vld [vmem:[#allocation3 + $0x10] sm:$0xff]
    %v767 = vld [vmem:[#allocation3 + $0x18] sm:$0xff]
    %v768 = vld [vmem:[#allocation3 + $0x20] sm:$0xff]
    %v769 = vld [vmem:[#allocation3 + $0x28] sm:$0xff]
    %v770 = vld [vmem:[#allocation3 + $0x30] sm:$0xff]
    %v771 = vld [vmem:[#allocation3 + $0x38] sm:$0xff]
    %v772 = vmul.f32 %v764, 0.125
    %v773 = vmul.f32 %v765, 0.125
    %v774 = vmul.f32 %v766, 0.125
    %v775 = vmul.f32 %v767, 0.125
    %v776 = vmul.f32 %v768, 0.125
    %v777 = vmul.f32 %v769, 0.125
    %v778 = vmul.f32 %v770, 0.125
    %v779 = vmul.f32 %v771, 0.125
    %v780 = vld [vmem:[#allocation4] sm:$0xff]
    %v781 = vld [vmem:[#allocation4 + $0x8] sm:$0xff]
    %v782 = vld [vmem:[#allocation4 + $0x10] sm:$0xff]
    %v783 = vld [vmem:[#allocation4 + $0x18] sm:$0xff]
    %v784 = vld [vmem:[#allocation4 + $0x20] sm:$0xff]
    %v785 = vld [vmem:[#allocation4 + $0x28] sm:$0xff]
    %v786 = vld [vmem:[#allocation4 + $0x30] sm:$0xff]
    %v787 = vld [vmem:[#allocation4 + $0x38] sm:$0xff]
    %v788 = vmul.f32 %v780, 0.125
    %v789 = vmul.f32 %v781, 0.125
    %v790 = vmul.f32 %v782, 0.125
    %v791 = vmul.f32 %v783, 0.125
    %v792 = vmul.f32 %v784, 0.125
    %v793 = vmul.f32 %v785, 0.125
    %v794 = vmul.f32 %v786, 0.125
    %v795 = vmul.f32 %v787, 0.125
    %v796 = vmul.f32 %v772, %v772
    %v797 = vmul.f32 %v773, %v773
    %v798 = vmul.f32 %v774, %v774
    %v799 = vmul.f32 %v775, %v775
    %v800 = vmul.f32 %v776, %v776
    %v801 = vmul.f32 %v777, %v777
    %v802 = vmul.f32 %v778, %v778
    %v803 = vmul.f32 %v779, %v779
    %v804 = vsub.f32 %v788, %v796
    %v805 = vsub.f32 %v789, %v797
    %v806 = vsub.f32 %v790, %v798
    %v807 = vsub.f32 %v791, %v799
    %v808 = vsub.f32 %v792, %v800
    %v809 = vsub.f32 %v793, %v801
    %v810 = vsub.f32 %v794, %v802
    %v811 = vsub.f32 %v795, %v803
    %v812 = vmax.f32 %v804, 0.0
    %v813 = vmax.f32 %v805, 0.0
    %v814 = vmax.f32 %v806, 0.0
    %v815 = vmax.f32 %v807, 0.0
    %v816 = vmax.f32 %v808, 0.0
    %v817 = vmax.f32 %v809, 0.0
    %v818 = vmax.f32 %v810, 0.0
    %v819 = vmax.f32 %v811, 0.0
    %v820 = vld [vmem:[%s2] sm:$0xff]
    %v821 = vld [vmem:[%s2 + $0x8] sm:$0xff]
    %v822 = vld [vmem:[%s2 + $0x10] sm:$0xff]
    %v823 = vld [vmem:[%s2 + $0x18] sm:$0xff]
    %v824 = vld [vmem:[%s2 + $0x20] sm:$0xff]
    %v825 = vld [vmem:[%s2 + $0x28] sm:$0xff]
    %v826 = vld [vmem:[%s2 + $0x30] sm:$0xff]
    %v827 = vld [vmem:[%s2 + $0x38] sm:$0xff]
    %v828 = vadd.f32 %v812, 1e-05
    %v829 = vadd.f32 %v813, 1e-05
    %v830 = vadd.f32 %v814, 1e-05
    %v831 = vadd.f32 %v815, 1e-05
    %v832 = vadd.f32 %v816, 1e-05
    %v833 = vadd.f32 %v817, 1e-05
    %v834 = vadd.f32 %v818, 1e-05
    %v835 = vadd.f32 %v819, 1e-05
    %v836 = vrsqrt.pop %v828
    %v837 = vrsqrt.pop %v829
    %v838 = vrsqrt.pop %v830
    %v839 = vrsqrt.pop %v831
    %v840 = vrsqrt.pop %v832
    %v841 = vrsqrt.pop %v833
    %v842 = vrsqrt.pop %v834
    %v843 = vrsqrt.pop %v835
    %v844 = vmul.f32 %v820, %v836
    %v845 = vmul.f32 %v821, %v837
    %v846 = vmul.f32 %v822, %v838
    %v847 = vmul.f32 %v823, %v839
    %v848 = vmul.f32 %v824, %v840
    %v849 = vmul.f32 %v825, %v841
    %v850 = vmul.f32 %v826, %v842
    %v851 = vmul.f32 %v827, %v843
    %v852 = vld [vmem:[%s3] sm:$0xff]
    %v853 = vld [vmem:[%s3 + $0x8] sm:$0xff]
    %v854 = vld [vmem:[%s3 + $0x10] sm:$0xff]
    %v855 = vld [vmem:[%s3 + $0x18] sm:$0xff]
    %v856 = vld [vmem:[%s3 + $0x20] sm:$0xff]
    %v857 = vld [vmem:[%s3 + $0x28] sm:$0xff]
    %v858 = vld [vmem:[%s3 + $0x30] sm:$0xff]
    %v859 = vld [vmem:[%s3 + $0x38] sm:$0xff]
    %v860 = vmul.f32 %v772, %v844
    %v861 = vmul.f32 %v773, %v845
    %v862 = vmul.f32 %v774, %v846
    %v863 = vmul.f32 %v775, %v847
    %v864 = vmul.f32 %v776, %v848
    %v865 = vmul.f32 %v777, %v849
    %v866 = vmul.f32 %v778, %v850
    %v867 = vmul.f32 %v779, %v851
    %v868 = vsub.f32 %v852, %v860
    %v869 = vsub.f32 %v853, %v861
    %v870 = vsub.f32 %v854, %v862
    %v871 = vsub.f32 %v855, %v863
    %v872 = vsub.f32 %v856, %v864
    %v873 = vsub.f32 %v857, %v865
    %v874 = vsub.f32 %v858, %v866
    %v875 = vsub.f32 %v859, %v867
    %v876 = vld [vmem:[#allocation2] sm:$0xff]
    %v877 = vld [vmem:[#allocation2 + $0x8] sm:$0xff]
    %v878 = vld [vmem:[#allocation2 + $0x10] sm:$0xff]
    %v879 = vld [vmem:[#allocation2 + $0x18] sm:$0xff]
    %v880 = vld [vmem:[#allocation2 + $0x20] sm:$0xff]
    %v881 = vld [vmem:[#allocation2 + $0x28] sm:$0xff]
    %v882 = vld [vmem:[#allocation2 + $0x30] sm:$0xff]
    %v883 = vld [vmem:[#allocation2 + $0x38] sm:$0xff]
    %885 = vset.pattern.permute.xlu0 0
    %886 = vperm.xlu0 %885, %v844
    %v887 = vpop.permute.xlu0 %886
    %890 = vset.pattern.permute.xlu0 0
    %891 = vperm.xlu0 %890, %v845
    %v892 = vpop.permute.xlu0 %891
    %895 = vset.pattern.permute.xlu0 0
    %896 = vperm.xlu0 %895, %v846
    %v897 = vpop.permute.xlu0 %896
    %900 = vset.pattern.permute.xlu0 0
    %901 = vperm.xlu0 %900, %v847
    %v902 = vpop.permute.xlu0 %901
    %905 = vset.pattern.permute.xlu0 0
    %906 = vperm.xlu0 %905, %v848
    %v907 = vpop.permute.xlu0 %906
    %910 = vset.pattern.permute.xlu0 0
    %911 = vperm.xlu0 %910, %v849
    %v912 = vpop.permute.xlu0 %911
    %915 = vset.pattern.permute.xlu0 0
    %916 = vperm.xlu0 %915, %v850
    %v917 = vpop.permute.xlu0 %916
    %920 = vset.pattern.permute.xlu0 0
    %921 = vperm.xlu0 %920, %v851
    %v922 = vpop.permute.xlu0 %921
    %v924 = vmul.f32 %v876, %v887
    %v925 = vmul.f32 %v877, %v892
    %v926 = vmul.f32 %v878, %v897
    %v927 = vmul.f32 %v879, %v902
    %v928 = vmul.f32 %v880, %v907
    %v929 = vmul.f32 %v881, %v912
    %v930 = vmul.f32 %v882, %v917
    %v931 = vmul.f32 %v883, %v922
    %933 = vset.pattern.permute.xlu0 0
    %934 = vperm.xlu0 %933, %v868
    %v935 = vpop.permute.xlu0 %934
    %938 = vset.pattern.permute.xlu0 0
    %939 = vperm.xlu0 %938, %v869
    %v940 = vpop.permute.xlu0 %939
    %943 = vset.pattern.permute.xlu0 0
    %944 = vperm.xlu0 %943, %v870
    %v945 = vpop.permute.xlu0 %944
    %948 = vset.pattern.permute.xlu0 0
    %949 = vperm.xlu0 %948, %v871
    %v950 = vpop.permute.xlu0 %949
    %953 = vset.pattern.permute.xlu0 0
    %954 = vperm.xlu0 %953, %v872
    %v955 = vpop.permute.xlu0 %954
    %958 = vset.pattern.permute.xlu0 0
    %959 = vperm.xlu0 %958, %v873
    %v960 = vpop.permute.xlu0 %959
    %963 = vset.pattern.permute.xlu0 0
    %964 = vperm.xlu0 %963, %v874
    %v965 = vpop.permute.xlu0 %964
    %968 = vset.pattern.permute.xlu0 0
    %969 = vperm.xlu0 %968, %v875
    %v970 = vpop.permute.xlu0 %969
    %v972 = vadd.f32 %v924, %v935
    %v973 = vadd.f32 %v925, %v940
    %v974 = vadd.f32 %v926, %v945
    %v975 = vadd.f32 %v927, %v950
    %v976 = vadd.f32 %v928, %v955
    %v977 = vadd.f32 %v929, %v960
    %v978 = vadd.f32 %v930, %v965
    %v979 = vadd.f32 %v931, %v970
    %v980 = vld [vmem:[%s4] sm:$0xf]
    %v981 = vld [vmem:[%s4 + $0x4] sm:$0xf]
    %v982 = vld [vmem:[%s4 + $0x8] sm:$0xf]
    %v983 = vld [vmem:[%s4 + $0xc] sm:$0xf]
    %v984 = vld [vmem:[%s4 + $0x10] sm:$0xf]
    %v985 = vld [vmem:[%s4 + $0x14] sm:$0xf]
    %v986 = vld [vmem:[%s4 + $0x18] sm:$0xf]
    %v987 = vld [vmem:[%s4 + $0x1c] sm:$0xf]
    %v988 = vunpack.c.l.bf16 %v980
    %v989 = vunpack.c.l.bf16 %v981
    %v990 = vunpack.c.l.bf16 %v982
    %v991 = vunpack.c.l.bf16 %v983
    %v992 = vunpack.c.l.bf16 %v984
    %v993 = vunpack.c.l.bf16 %v985
    %v994 = vunpack.c.l.bf16 %v986
    %v995 = vunpack.c.l.bf16 %v987
    %v996 = vadd.f32 %v972, %v988
    %v997 = vadd.f32 %v973, %v989
    %v998 = vadd.f32 %v974, %v990
    %v999 = vadd.f32 %v975, %v991
    %v1000 = vadd.f32 %v976, %v992
    %v1001 = vadd.f32 %v977, %v993
    %v1002 = vadd.f32 %v978, %v994
    %v1003 = vadd.f32 %v979, %v995
    %v1004 = vmax.f32 %v996, 0.0
    %v1005 = vmax.f32 %v997, 0.0
    %v1006 = vmax.f32 %v998, 0.0
    %v1007 = vmax.f32 %v999, 0.0
    %v1008 = vmax.f32 %v1000, 0.0
    %v1009 = vmax.f32 %v1001, 0.0
    %v1010 = vmax.f32 %v1002, 0.0
    %v1011 = vmax.f32 %v1003, 0.0
    %v1012 = vpack.c.bf16 %v1005, %v1004
    %v1013 = vpack.c.bf16 %v1007, %v1006
    %v1014 = vpack.c.bf16 %v1009, %v1008
    %v1015 = vpack.c.bf16 %v1011, %v1010
    %v1020 = vunpack.c.l.b16 %v1012
    %v1021 = vunpack.c.h.b16 %v1012
    %v1022 = vunpack.c.l.b16 %v1013
    %v1023 = vunpack.c.h.b16 %v1013
    %v1024 = vunpack.c.l.b16 %v1014
    %v1025 = vunpack.c.h.b16 %v1014
    %v1026 = vunpack.c.l.b16 %v1015
    %v1027 = vunpack.c.h.b16 %v1015
    %v1028 = vpack.c.b16 %v1020, %v1020
    %v1029 = vpack.c.b16 %v1021, %v1021
    %v1030 = vpack.c.b16 %v1022, %v1022
    %v1031 = vpack.c.b16 %v1023, %v1023
    %v1032 = vpack.c.b16 %v1024, %v1024
    %v1033 = vpack.c.b16 %v1025, %v1025
    %v1034 = vpack.c.b16 %v1026, %v1026
    %v1035 = vpack.c.b16 %v1027, %v1027
    %1044 = vst [vmem:[%s5] sm:$0xf] %v1028
    %1045 = vst [vmem:[%s5 + $0x4] sm:$0xf] %v1029
    %1046 = vst [vmem:[%s5 + $0x8] sm:$0xf] %v1030
    %1047 = vst [vmem:[%s5 + $0xc] sm:$0xf] %v1031
    %1048 = vst [vmem:[%s5 + $0x10] sm:$0xf] %v1032
    %1049 = vst [vmem:[%s5 + $0x14] sm:$0xf] %v1033
    %1050 = vst [vmem:[%s5 + $0x18] sm:$0xf] %v1034
    %1051 = vst [vmem:[%s5 + $0x1c] sm:$0xf] %v1035
  $region29: #{resnet_forward.25} parent=0 // pred_fallthru
    _
  // Predicated region
  $region30: #{resnet_forward.25} parent=0 // pred_check
    _
  $region31: #{resnet_forward.25} parent=0 // pred_check_branch
    %1053 = sbr.rel (0) target = $region33
  $region32: #{resnet_forward.25} parent=0 // pred_region
    _
  $region33: #{resnet_forward.25} parent=0 // pred_fallthru
    _
  // Predicated region
  $region34: #{resnet_forward.25} parent=0 // pred_check
    _
  $region35: #{resnet_forward.25} parent=0 // pred_check_branch
    %1055 = sbr.rel (0) target = $region37
  $region36: #{resnet_forward.25} parent=0 // pred_region
    _
  $region37: #{resnet_forward.25} parent=0 // pred_fallthru
    _

</llo_original>
